<compile_context>
chip_gen: v7x
topology: tpu7x:2x2x1
jax: 0.10.0
libtpu: 0.0.40
codegen_flags: <defaults>
</compile_context>

<pallas_src>
import functools

import jax
import jax.numpy as jnp
from jax.experimental import pallas as pl
from jax.experimental.pallas import tpu as pltpu

HIDDEN = 768            # LXMERT hidden size
CLS_HID = 2 * HIDDEN    # SimpleClassifier hidden size
W_LMH = 0.36            # LearnedMixin weight from Model.__init__


def _softplus(x):
    # numerically stable softplus (exp argument is always <= 0)
    return jnp.maximum(x, 0.0) + jnp.log(1.0 + jnp.exp(-jnp.abs(x)))


def _log_softmax(x):
    m = jnp.max(x, axis=-1, keepdims=True)
    s = x - m
    return s - jnp.log(jnp.sum(jnp.exp(s), axis=-1, keepdims=True))


# ----------------------------------------------------------------------------
# Fused kernel: surrogate encoder + pooler + SimpleClassifier + LearnedMixin loss
# ----------------------------------------------------------------------------
def _fused_kernel(x_ref, gind_ref, sel_ref, bias_ref, labels_ref,
                  wf_ref, bh_ref, wp_ref, bp_ref,
                  w1_ref, b1_ref, w2_ref, b2_ref,
                  wlin_ref, blin_ref, smooth_ref,
                  logits_ref, loss_ref, *, candi):
    x = x_ref[...]                                               # (TM, F_pad) bf16

    # fused cross-modal hidden state (surrogate for the LXMERT encoder stack)
    h = jnp.dot(x, wf_ref[...], preferred_element_type=jnp.float32) + bh_ref[...]
    h = jnp.maximum(h, 0.0)                                      # (TM, 768) f32

    # LXMERT pooler: tanh(W_p h + b_p)
    pooled = jnp.tanh(
        jnp.dot(h.astype(jnp.bfloat16), wp_ref[...],
                preferred_element_type=jnp.float32) + bp_ref[...])          # (TM, 768)

    # SimpleClassifier: Linear(768,1536) -> ReLU -> Linear(1536,1)
    hid = jnp.maximum(
        jnp.dot(pooled.astype(jnp.bfloat16), w1_ref[...],
                preferred_element_type=jnp.float32) + b1_ref[...], 0.0)     # (TM, 1536)
    # 1536 -> 1 as a VPU lane-reduction (avoids an N=1 MXU pass)
    lg = jnp.sum(hid * w2_ref[...], axis=-1, keepdims=True) + b2_ref[...]   # (TM, 1)

    # per-example logits (EB, C) via selection matmul: gind[e,r]*sel[r,c] picks row e*C+c
    gind = gind_ref[...]                                         # (EB, TM) f32 {0,1}
    logits2 = jnp.dot(gind, lg * sel_ref[...],
                      preferred_element_type=jnp.float32)        # (EB, C)
    logits_ref[...] = logits2

    # candidate-mean of pooled per example (bf16 matmul, f32 accumulate)
    mean_pooled = jnp.dot(gind.astype(jnp.bfloat16), pooled.astype(jnp.bfloat16),
                          preferred_element_type=jnp.float32) * (1.0 / candi)  # (EB,768)

    # LearnedMixin(w=0.36): factor = softplus(bias_lin(hidden))  (768 -> 1 on the VPU)
    factor = jnp.sum(mean_pooled * wlin_ref[...], axis=-1, keepdims=True) + blin_ref[...]
    factor = _softplus(factor)                                   # (EB, 1)
    smooth = 1.0 / (1.0 + jnp.exp(-smooth_ref[...]))             # sigmoid(smooth), (1,1)

    bias = bias_ref[...]                                         # (EB, C)
    labels = labels_ref[...]                                     # (EB, C)
    log_bias = jnp.log(bias + smooth + 1e-12)                    # smoothing on prob side
    scaled = log_bias * factor                                   # (EB, C)

    # entropy penalty on the factor-scaled bias distribution
    bias_lp = _log_softmax(scaled)
    entropy = -jnp.sum(jnp.exp(bias_lp) * bias_lp, axis=1, keepdims=True)   # (EB, 1)

    log_p = _log_softmax(logits2 + scaled)
    ce = -jnp.sum(labels * log_p, axis=1, keepdims=True)         # (EB, 1)

    loss_ref[...] = ce + W_LMH * entropy                         # (EB, 1) per-example


def encoder_classifier_lmh(x, bias, labels, candi_ans_num, p):
    """x: (B*C, F) bf16 concatenated [text | visual | box] features.
       bias, labels: (B, C).  Returns (logits (B, C), loss scalar)."""
    C = candi_ans_num
    BC, F = x.shape
    B = BC // C
    H = HIDDEN

    # pad the feature axis to the (zero-padded) fused-weight K dimension
    F_pad = p["wfused"].shape[0]
    if F_pad != F:
        x = jnp.pad(x, ((0, 0), (0, F_pad - F)))

    # Row tiling: single grid step for small B (blocks equal full arrays); otherwise
    # tiles of EB examples (EB multiple of 8) targeting ~512 rows, with at least 2
    # grid steps so both v7x TensorCores get work on the "parallel" axis.
    if B < 16:
        EB, B_pad = B, B
    else:
        eb_cap = max(8, ((512 // C) // 8) * 8)            # ~512-row tiles (v6e/v5e)
        eb_half = (((B + 1) // 2 + 7) // 8) * 8           # >=2 grid steps (v7x)
        EB = max(8, min(eb_cap, eb_half))
        B_pad = ((B + EB - 1) // EB) * EB
    TM = EB * C
    BC_pad = B_pad * C
    G = B_pad // EB

    if BC_pad != BC:
        x = jnp.pad(x, ((0, BC_pad - BC), (0, 0)))
    if B_pad != B:
        bias = jnp.pad(bias, ((0, B_pad - B), (0, 0)))
        labels = jnp.pad(labels, ((0, B_pad - B), (0, 0)))

    # constant grouping / selection matrices (precomputed once in the wrapper)
    rows = jnp.arange(TM, dtype=jnp.int32)
    exs = jnp.arange(EB, dtype=jnp.int32)
    gind = (rows[None, :] // C == exs[:, None]).astype(jnp.float32)        # (EB, TM)
    sel = (rows[:, None] % C ==
           jnp.arange(C, dtype=jnp.int32)[None, :]).astype(jnp.float32)    # (TM, C)

    def full(shape):
        return pl.BlockSpec(shape, lambda i, _s=shape: tuple(0 for _ in _s))

    kernel = functools.partial(_fused_kernel, candi=C)

    out_shapes = (jax.ShapeDtypeStruct((B_pad, C), jnp.float32),
                  jax.ShapeDtypeStruct((B_pad, 1), jnp.float32))

    logits_slab, loss_col = pl.pallas_call(
        kernel,
        out_shape=out_shapes,
        grid_spec=pltpu.PrefetchScalarGridSpec(
            num_scalar_prefetch=0,
            grid=(G,),
            in_specs=[pl.BlockSpec((TM, F_pad), lambda i: (i, 0)),
                      full((EB, TM)), full((TM, C)),
                      pl.BlockSpec((EB, C), lambda i: (i, 0)),
                      pl.BlockSpec((EB, C), lambda i: (i, 0)),
                      full((F_pad, H)), full((1, H)),
                      full((H, H)), full((1, H)),
                      full((H, CLS_HID)), full((1, CLS_HID)),
                      full((1, CLS_HID)), full((1, 1)),
                      full((1, H)), full((1, 1)), full((1, 1))],
            out_specs=[pl.BlockSpec((EB, C), lambda i: (i, 0)),
                       pl.BlockSpec((EB, 1), lambda i: (i, 0))],
        ),
        compiler_params=pltpu.CompilerParams(
            dimension_semantics=("parallel",),
            vmem_limit_bytes=40 * 1024 * 1024),
    )(x, gind, sel, bias, labels,
      p["wfused"], p["bh"], p["wp"], p["bp"],
      p["w1"], p["b1"], p["w2row"], p["b2"],
      p["wlin_row"], p["blin"], p["smooth"])

    logits_out = logits_slab[:B]                   # (B, C)
    loss = jnp.mean(loss_col[:B, 0])               # scalar
    return logits_out, loss


# ----------------------------------------------------------------------------
# Parameter init + forward glue
# ----------------------------------------------------------------------------
def init_params(key, vocab, vdim, bdim):
    ks = jax.random.split(key, 10)
    s = 0.02
    wt = jax.random.normal(ks[1], (HIDDEN, HIDDEN), jnp.float32) * s
    wv = jax.random.normal(ks[2], (vdim, HIDDEN), jnp.float32) * s
    wb = jax.random.normal(ks[3], (bdim, HIDDEN), jnp.float32) * s
    f_total = HIDDEN + vdim + bdim
    f_pad = ((f_total + 127) // 128) * 128
    wfused = jnp.concatenate([wt, wv, wb], axis=0)
    wfused = jnp.pad(wfused, ((0, f_pad - f_total), (0, 0))).astype(jnp.bfloat16)
    return {
        "emb":      jax.random.normal(ks[0], (vocab, HIDDEN), jnp.float32) * s,
        "wfused":   wfused,                                   # (F_pad, 768) bf16
        "bh":       jnp.zeros((1, HIDDEN), jnp.float32),
        "wp":       (jax.random.normal(ks[4], (HIDDEN, HIDDEN), jnp.float32) * s
                     ).astype(jnp.bfloat16),
        "bp":       jnp.zeros((1, HIDDEN), jnp.float32),
        "w1":       (jax.random.normal(ks[5], (HIDDEN, CLS_HID), jnp.float32) * s
                     ).astype(jnp.bfloat16),
        "b1":       jnp.zeros((1, CLS_HID), jnp.float32),
        "w2row":    jax.random.normal(ks[6], (1, CLS_HID), jnp.float32) * s,
        "b2":       jnp.zeros((1, 1), jnp.float32),
        "wlin_row": jax.random.normal(ks[7], (1, HIDDEN), jnp.float32) * s,
        "blin":     jnp.zeros((1, 1), jnp.float32),
        "smooth":   jnp.full((1, 1), -1.0, jnp.float32),      # LearnedMixin smooth_init
    }


@functools.partial(jax.jit, static_argnames=("candi_ans_num",))
def forward(params, qa_text, v, b, bias, labels, candi_ans_num):
    """qa_text (B, C, L) int32; v (B, obj, v_dim); b (B, obj, b_dim);
       bias (B, C); labels (B, C) one-hot.  Returns (logits (B, C), loss)."""
    B, C, L = qa_text.shape
    assert C == candi_ans_num

    # qa_text.reshape(B*C, -1); visual/box features are repeated per candidate, so
    # mean over objects first and repeat the small (B, dim) result (C x less HBM traffic).
    qa_flat = qa_text.reshape(B * C, L)

    # TODO(synk): the pretrained LXMERT backbone ('unc-nlp/lxmert-base-uncased') cannot be
    # loaded in-script; it is replaced by a deterministic surrogate encoder (token-embedding
    # mean-pool + fused visual/box/text projection + pooler) whose matmuls run in the kernel.
    t_feat = jnp.take(params["emb"], qa_flat, axis=0).mean(axis=1)   # (B*C, 768)
    v_feat = jnp.repeat(v.mean(axis=1), C, axis=0)                   # (B*C, v_dim)
    b_feat = jnp.repeat(b.mean(axis=1), C, axis=0)                   # (B*C, b_dim)
    x = jnp.concatenate([t_feat, v_feat, b_feat], axis=1).astype(jnp.bfloat16)

    # TODO(synk): exact LearnedMixin variant is not in the provided source; implemented the
    # standard LMH form (softplus(bias_lin(mean pooled)) * log(bias + sigmoid(smooth)),
    # softmax CE + w * entropy), fused into the encoder/classifier kernel.
    logits_reshape, loss = encoder_classifier_lmh(x, bias, labels, C, params)
    return logits_reshape, loss


if __name__ == "__main__":
    key = jax.random.PRNGKey(0)
    B, C, L = 2, 4, 8              # batch, train_candi_ans_num, max_length
    OBJ, VDIM, BDIM = 8, 256, 4    # obj_num, v_dim, b_dim
    VOCAB = 1000

    ks = jax.random.split(key, 8)
    qa_text = jax.random.randint(ks[0], (B, C, L), 0, VOCAB)
    v = jax.random.normal(ks[1], (B, OBJ, VDIM), jnp.float32)
    b = jax.random.uniform(ks[2], (B, OBJ, BDIM), jnp.float32)
    bias = jax.random.uniform(ks[3], (B, C), jnp.float32, minval=0.01, maxval=1.0)
    label_idx = jax.random.randint(ks[4], (B,), 0, C)
    labels = jax.nn.one_hot(label_idx, C, dtype=jnp.float32)

    params = init_params(ks[5], VOCAB, VDIM, BDIM)

    logits, loss = forward(params, qa_text, v, b, bias, labels, candi_ans_num=C)
    jax.block_until_ready((logits, loss))
    assert logits.shape == (B, C) and loss.shape == ()
    print("KERNEL_OK")
</pallas_src>

<mosaic_0001>
module attributes {stable_mosaic.version = 11 : i64} {
  func.func @_fused_kernel(%arg0: i32, %arg1: memref<8x1152xbf16, #tpu.memory_space<vmem>>, %arg2: memref<2x8xf32, #tpu.memory_space<vmem>>, %arg3: memref<8x4xf32, #tpu.memory_space<vmem>>, %arg4: memref<2x4xf32, #tpu.memory_space<vmem>>, %arg5: memref<2x4xf32, #tpu.memory_space<vmem>>, %arg6: memref<1152x768xbf16, #tpu.memory_space<vmem>>, %arg7: memref<1x768xf32, #tpu.memory_space<vmem>>, %arg8: memref<768x768xbf16, #tpu.memory_space<vmem>>, %arg9: memref<1x768xf32, #tpu.memory_space<vmem>>, %arg10: memref<768x1536xbf16, #tpu.memory_space<vmem>>, %arg11: memref<1x1536xf32, #tpu.memory_space<vmem>>, %arg12: memref<1x1536xf32, #tpu.memory_space<vmem>>, %arg13: memref<1x1xf32, #tpu.memory_space<vmem>>, %arg14: memref<1x768xf32, #tpu.memory_space<vmem>>, %arg15: memref<1x1xf32, #tpu.memory_space<vmem>>, %arg16: memref<1x1xf32, #tpu.memory_space<vmem>>, %arg17: memref<2x4xf32, #tpu.memory_space<vmem>>, %arg18: memref<2x1xf32, #tpu.memory_space<vmem>>) attributes {dimension_semantics = [#tpu.dimension_semantics<parallel>], iteration_bounds = array<i64: 1>, scalar_prefetch = 0 : i64, scratch_operands = 0 : i64, tpu.core_type = #tpu.core_type<tc>, window_params = [{transform_indices = @transform_0, window_bounds = array<i64: 8, 1152>}, {pipeline_mode = #tpu.pipeline_mode<synchronous>, transform_indices = @transform_1, window_bounds = array<i64: 2, 8>}, {pipeline_mode = #tpu.pipeline_mode<synchronous>, transform_indices = @transform_2, window_bounds = array<i64: 8, 4>}, {transform_indices = @transform_3, window_bounds = array<i64: 2, 4>}, {transform_indices = @transform_4, window_bounds = array<i64: 2, 4>}, {pipeline_mode = #tpu.pipeline_mode<synchronous>, transform_indices = @transform_5, window_bounds = array<i64: 1152, 768>}, {pipeline_mode = #tpu.pipeline_mode<synchronous>, transform_indices = @transform_6, window_bounds = array<i64: 1, 768>}, {pipeline_mode = #tpu.pipeline_mode<synchronous>, transform_indices = @transform_7, window_bounds = array<i64: 768, 768>}, {pipeline_mode = #tpu.pipeline_mode<synchronous>, transform_indices = @transform_8, window_bounds = array<i64: 1, 768>}, {pipeline_mode = #tpu.pipeline_mode<synchronous>, transform_indices = @transform_9, window_bounds = array<i64: 768, 1536>}, {pipeline_mode = #tpu.pipeline_mode<synchronous>, transform_indices = @transform_10, window_bounds = array<i64: 1, 1536>}, {pipeline_mode = #tpu.pipeline_mode<synchronous>, transform_indices = @transform_11, window_bounds = array<i64: 1, 1536>}, {pipeline_mode = #tpu.pipeline_mode<synchronous>, transform_indices = @transform_12, window_bounds = array<i64: 1, 1>}, {pipeline_mode = #tpu.pipeline_mode<synchronous>, transform_indices = @transform_13, window_bounds = array<i64: 1, 768>}, {pipeline_mode = #tpu.pipeline_mode<synchronous>, transform_indices = @transform_14, window_bounds = array<i64: 1, 1>}, {pipeline_mode = #tpu.pipeline_mode<synchronous>, transform_indices = @transform_15, window_bounds = array<i64: 1, 1>}, {transform_indices = @transform_16, window_bounds = array<i64: 2, 4>}, {transform_indices = @transform_17, window_bounds = array<i64: 2, 1>}]} {
    %c0 = arith.constant 0 : index
    %c0_0 = arith.constant 0 : index
    %0 = vector.load %arg1[%c0, %c0_0] : memref<8x1152xbf16, #tpu.memory_space<vmem>>, vector<8x1152xbf16>
    %c0_1 = arith.constant 0 : index
    %c0_2 = arith.constant 0 : index
    %1 = vector.load %arg6[%c0_1, %c0_2] : memref<1152x768xbf16, #tpu.memory_space<vmem>>, vector<1152x768xbf16>
    %cst = arith.constant dense<0.000000e+00> : vector<8x768xf32>
    %2 = tpu.matmul %0, %1, %cst {dimension_numbers = #tpu.dot_dimension_numbers<[1], [0], [0], [1], [0, 0, 1, 1], [], []>} : vector<8x1152xbf16>, vector<1152x768xbf16>, vector<8x768xf32> -> vector<8x768xf32>
    %c0_3 = arith.constant 0 : index
    %c0_4 = arith.constant 0 : index
    %3 = vector.load %arg7[%c0_3, %c0_4] : memref<1x768xf32, #tpu.memory_space<vmem>>, vector<1x768xf32>
    %4 = vector.broadcast %3 : vector<1x768xf32> to vector<8x768xf32>
    %5 = arith.addf %2, %4 : vector<8x768xf32>
    %cst_5 = arith.constant 0.000000e+00 : f32
    %6 = vector.broadcast %cst_5 : f32 to vector<8x768xf32>
    %7 = arith.maximumf %5, %6 : vector<8x768xf32>
    %8 = arith.truncf %7 : vector<8x768xf32> to vector<8x768xbf16>
    %c0_6 = arith.constant 0 : index
    %c0_7 = arith.constant 0 : index
    %9 = vector.load %arg8[%c0_6, %c0_7] : memref<768x768xbf16, #tpu.memory_space<vmem>>, vector<768x768xbf16>
    %cst_8 = arith.constant dense<0.000000e+00> : vector<8x768xf32>
    %10 = tpu.matmul %8, %9, %cst_8 {dimension_numbers = #tpu.dot_dimension_numbers<[1], [0], [0], [1], [0, 0, 1, 1], [], []>} : vector<8x768xbf16>, vector<768x768xbf16>, vector<8x768xf32> -> vector<8x768xf32>
    %c0_9 = arith.constant 0 : index
    %c0_10 = arith.constant 0 : index
    %11 = vector.load %arg9[%c0_9, %c0_10] : memref<1x768xf32, #tpu.memory_space<vmem>>, vector<1x768xf32>
    %12 = vector.broadcast %11 : vector<1x768xf32> to vector<8x768xf32>
    %13 = arith.addf %10, %12 : vector<8x768xf32>
    %14 = math.tanh %13 : vector<8x768xf32>
    %15 = arith.truncf %14 : vector<8x768xf32> to vector<8x768xbf16>
    %c0_11 = arith.constant 0 : index
    %c0_12 = arith.constant 0 : index
    %16 = vector.load %arg10[%c0_11, %c0_12] : memref<768x1536xbf16, #tpu.memory_space<vmem>>, vector<768x1536xbf16>
    %cst_13 = arith.constant dense<0.000000e+00> : vector<8x1536xf32>
    %17 = tpu.matmul %15, %16, %cst_13 {dimension_numbers = #tpu.dot_dimension_numbers<[1], [0], [0], [1], [0, 0, 1, 1], [], []>} : vector<8x768xbf16>, vector<768x1536xbf16>, vector<8x1536xf32> -> vector<8x1536xf32>
    %c0_14 = arith.constant 0 : index
    %c0_15 = arith.constant 0 : index
    %18 = vector.load %arg11[%c0_14, %c0_15] : memref<1x1536xf32, #tpu.memory_space<vmem>>, vector<1x1536xf32>
    %19 = vector.broadcast %18 : vector<1x1536xf32> to vector<8x1536xf32>
    %20 = arith.addf %17, %19 : vector<8x1536xf32>
    %cst_16 = arith.constant 0.000000e+00 : f32
    %21 = vector.broadcast %cst_16 : f32 to vector<8x1536xf32>
    %22 = arith.maximumf %20, %21 : vector<8x1536xf32>
    %c0_17 = arith.constant 0 : index
    %c0_18 = arith.constant 0 : index
    %23 = vector.load %arg12[%c0_17, %c0_18] : memref<1x1536xf32, #tpu.memory_space<vmem>>, vector<1x1536xf32>
    %24 = vector.broadcast %23 : vector<1x1536xf32> to vector<8x1536xf32>
    %25 = arith.mulf %22, %24 : vector<8x1536xf32>
    %cst_19 = arith.constant dense<0.000000e+00> : vector<8xf32>
    %26 = vector.multi_reduction <add>, %25, %cst_19 [1] : vector<8x1536xf32> to vector<8xf32>
    %27 = vector.shape_cast %26 : vector<8xf32> to vector<8x1xf32>
    %c0_20 = arith.constant 0 : index
    %c0_21 = arith.constant 0 : index
    %28 = vector.load %arg13[%c0_20, %c0_21] : memref<1x1xf32, #tpu.memory_space<vmem>>, vector<1x1xf32>
    %29 = vector.broadcast %28 : vector<1x1xf32> to vector<8x1xf32>
    %30 = arith.addf %27, %29 : vector<8x1xf32>
    %c0_22 = arith.constant 0 : index
    %c0_23 = arith.constant 0 : index
    %31 = vector.load %arg2[%c0_22, %c0_23] : memref<2x8xf32, #tpu.memory_space<vmem>>, vector<2x8xf32>
    %c0_24 = arith.constant 0 : index
    %c0_25 = arith.constant 0 : index
    %32 = vector.load %arg3[%c0_24, %c0_25] : memref<8x4xf32, #tpu.memory_space<vmem>>, vector<8x4xf32>
    %33 = vector.broadcast %30 : vector<8x1xf32> to vector<8x4xf32>
    %34 = arith.mulf %33, %32 : vector<8x4xf32>
    %cst_26 = arith.constant dense<0.000000e+00> : vector<2x4xf32>
    %35 = tpu.matmul %31, %34, %cst_26 {dimension_numbers = #tpu.dot_dimension_numbers<[1], [0], [0], [1], [0, 0, 1, 1], [], []>} : vector<2x8xf32>, vector<8x4xf32>, vector<2x4xf32> -> vector<2x4xf32>
    %c0_27 = arith.constant 0 : index
    %c0_28 = arith.constant 0 : index
    %36 = vector.load %arg17[%c0_27, %c0_28] : memref<2x4xf32, #tpu.memory_space<vmem>>, vector<2x4xf32>
    tpu.vector_store %arg17[%c0_27, %c0_28], %35 {strides = array<i32>} : memref<2x4xf32, #tpu.memory_space<vmem>>, vector<2x4xf32>,
    %37 = arith.truncf %31 : vector<2x8xf32> to vector<2x8xbf16>
    %38 = arith.truncf %14 : vector<8x768xf32> to vector<8x768xbf16>
    %cst_29 = arith.constant dense<0.000000e+00> : vector<2x768xf32>
    %39 = tpu.matmul %37, %38, %cst_29 {dimension_numbers = #tpu.dot_dimension_numbers<[1], [0], [0], [1], [0, 0, 1, 1], [], []>} : vector<2x8xbf16>, vector<8x768xbf16>, vector<2x768xf32> -> vector<2x768xf32>
    %cst_30 = arith.constant 2.500000e-01 : f32
    %40 = vector.broadcast %cst_30 : f32 to vector<2x768xf32>
    %41 = arith.mulf %39, %40 : vector<2x768xf32>
    %c0_31 = arith.constant 0 : index
    %c0_32 = arith.constant 0 : index
    %42 = vector.load %arg14[%c0_31, %c0_32] : memref<1x768xf32, #tpu.memory_space<vmem>>, vector<1x768xf32>
    %43 = vector.broadcast %42 : vector<1x768xf32> to vector<2x768xf32>
    %44 = arith.mulf %41, %43 : vector<2x768xf32>
    %cst_33 = arith.constant dense<0.000000e+00> : vector<2xf32>
    %45 = vector.multi_reduction <add>, %44, %cst_33 [1] : vector<2x768xf32> to vector<2xf32>
    %46 = vector.shape_cast %45 : vector<2xf32> to vector<2x1xf32>
    %c0_34 = arith.constant 0 : index
    %c0_35 = arith.constant 0 : index
    %47 = vector.load %arg15[%c0_34, %c0_35] : memref<1x1xf32, #tpu.memory_space<vmem>>, vector<1x1xf32>
    %48 = vector.broadcast %47 : vector<1x1xf32> to vector<2x1xf32>
    %49 = arith.addf %46, %48 : vector<2x1xf32>
    %cst_36 = arith.constant 0.000000e+00 : f32
    %50 = vector.broadcast %cst_36 : f32 to vector<2x1xf32>
    %51 = arith.maximumf %49, %50 : vector<2x1xf32>
    %52 = math.absf %49 : vector<2x1xf32>
    %cst_37 = arith.constant 0.000000e+00 : f32
    %53 = vector.broadcast %cst_37 : f32 to vector<2x1xf32>
    %54 = arith.subf %53, %52 : vector<2x1xf32>
    %55 = math.exp %54 : vector<2x1xf32>
    %cst_38 = arith.constant 1.000000e+00 : f32
    %56 = vector.broadcast %cst_38 : f32 to vector<2x1xf32>
    %57 = arith.addf %56, %55 : vector<2x1xf32>
    %58 = math.log %57 : vector<2x1xf32>
    %59 = arith.addf %51, %58 : vector<2x1xf32>
    %c0_39 = arith.constant 0 : index
    %c0_40 = arith.constant 0 : index
    %60 = vector.load %arg16[%c0_39, %c0_40] : memref<1x1xf32, #tpu.memory_space<vmem>>, vector<1x1xf32>
    %cst_41 = arith.constant 0.000000e+00 : f32
    %61 = vector.broadcast %cst_41 : f32 to vector<1x1xf32>
    %62 = arith.subf %61, %60 : vector<1x1xf32>
    %63 = math.exp %62 : vector<1x1xf32>
    %cst_42 = arith.constant 1.000000e+00 : f32
    %64 = vector.broadcast %cst_42 : f32 to vector<1x1xf32>
    %65 = arith.addf %64, %63 : vector<1x1xf32>
    %cst_43 = arith.constant 1.000000e+00 : f32
    %66 = vector.broadcast %cst_43 : f32 to vector<1x1xf32>
    %67 = arith.divf %66, %65 : vector<1x1xf32>
    %c0_44 = arith.constant 0 : index
    %c0_45 = arith.constant 0 : index
    %68 = vector.load %arg4[%c0_44, %c0_45] : memref<2x4xf32, #tpu.memory_space<vmem>>, vector<2x4xf32>
    %c0_46 = arith.constant 0 : index
    %c0_47 = arith.constant 0 : index
    %69 = vector.load %arg5[%c0_46, %c0_47] : memref<2x4xf32, #tpu.memory_space<vmem>>, vector<2x4xf32>
    %70 = vector.broadcast %67 : vector<1x1xf32> to vector<2x4xf32>
    %71 = arith.addf %68, %70 : vector<2x4xf32>
    %cst_48 = arith.constant 9.99999996E-13 : f32
    %72 = vector.broadcast %cst_48 : f32 to vector<2x4xf32>
    %73 = arith.addf %71, %72 : vector<2x4xf32>
    %74 = math.log %73 : vector<2x4xf32>
    %75 = vector.broadcast %59 : vector<2x1xf32> to vector<2x4xf32>
    %76 = arith.mulf %74, %75 : vector<2x4xf32>
    %cst_49 = arith.constant dense<0xFF800000> : vector<2xf32>
    %77 = vector.multi_reduction <maximumf>, %76, %cst_49 [1] : vector<2x4xf32> to vector<2xf32>
    %78 = vector.shape_cast %77 : vector<2xf32> to vector<2x1xf32>
    %79 = vector.broadcast %78 : vector<2x1xf32> to vector<2x4xf32>
    %80 = arith.subf %76, %79 : vector<2x4xf32>
    %81 = math.exp %80 : vector<2x4xf32>
    %cst_50 = arith.constant dense<0.000000e+00> : vector<2xf32>
    %82 = vector.multi_reduction <add>, %81, %cst_50 [1] : vector<2x4xf32> to vector<2xf32>
    %83 = vector.shape_cast %82 : vector<2xf32> to vector<2x1xf32>
    %84 = math.log %83 : vector<2x1xf32>
    %85 = vector.broadcast %84 : vector<2x1xf32> to vector<2x4xf32>
    %86 = arith.subf %80, %85 : vector<2x4xf32>
    %87 = math.exp %86 : vector<2x4xf32>
    %88 = arith.mulf %87, %86 : vector<2x4xf32>
    %cst_51 = arith.constant dense<0.000000e+00> : vector<2xf32>
    %89 = vector.multi_reduction <add>, %88, %cst_51 [1] : vector<2x4xf32> to vector<2xf32>
    %90 = vector.shape_cast %89 : vector<2xf32> to vector<2x1xf32>
    %cst_52 = arith.constant 0.000000e+00 : f32
    %91 = vector.broadcast %cst_52 : f32 to vector<2x1xf32>
    %92 = arith.subf %91, %90 : vector<2x1xf32>
    %93 = arith.addf %35, %76 : vector<2x4xf32>
    %cst_53 = arith.constant dense<0xFF800000> : vector<2xf32>
    %94 = vector.multi_reduction <maximumf>, %93, %cst_53 [1] : vector<2x4xf32> to vector<2xf32>
    %95 = vector.shape_cast %94 : vector<2xf32> to vector<2x1xf32>
    %96 = vector.broadcast %95 : vector<2x1xf32> to vector<2x4xf32>
    %97 = arith.subf %93, %96 : vector<2x4xf32>
    %98 = math.exp %97 : vector<2x4xf32>
    %cst_54 = arith.constant dense<0.000000e+00> : vector<2xf32>
    %99 = vector.multi_reduction <add>, %98, %cst_54 [1] : vector<2x4xf32> to vector<2xf32>
    %100 = vector.shape_cast %99 : vector<2xf32> to vector<2x1xf32>
    %101 = math.log %100 : vector<2x1xf32>
    %102 = vector.broadcast %101 : vector<2x1xf32> to vector<2x4xf32>
    %103 = arith.subf %97, %102 : vector<2x4xf32>
    %104 = arith.mulf %69, %103 : vector<2x4xf32>
    %cst_55 = arith.constant dense<0.000000e+00> : vector<2xf32>
    %105 = vector.multi_reduction <add>, %104, %cst_55 [1] : vector<2x4xf32> to vector<2xf32>
    %106 = vector.shape_cast %105 : vector<2xf32> to vector<2x1xf32>
    %cst_56 = arith.constant 0.000000e+00 : f32
    %107 = vector.broadcast %cst_56 : f32 to vector<2x1xf32>
    %108 = arith.subf %107, %106 : vector<2x1xf32>
    %cst_57 = arith.constant 3.600000e-01 : f32
    %109 = vector.broadcast %cst_57 : f32 to vector<2x1xf32>
    %110 = arith.mulf %109, %92 : vector<2x1xf32>
    %111 = arith.addf %108, %110 : vector<2x1xf32>
    %c0_58 = arith.constant 0 : index
    %c0_59 = arith.constant 0 : index
    %112 = vector.load %arg18[%c0_58, %c0_59] : memref<2x1xf32, #tpu.memory_space<vmem>>, vector<2x1xf32>
    tpu.vector_store %arg18[%c0_58, %c0_59], %111 {strides = array<i32>} : memref<2x1xf32, #tpu.memory_space<vmem>>, vector<2x1xf32>,
    return
  }
  func.func @transform_0(%arg0: i32) -> (i32, i32) {
    %c0_i32 = arith.constant 0 : i32
    %c0_i32_0 = arith.constant 0 : i32
    return %arg0, %c0_i32 : i32, i32
  }
  func.func @transform_1(%arg0: i32) -> (i32, i32) {
    %c0_i32 = arith.constant 0 : i32
    %c0_i32_0 = arith.constant 0 : i32
    %c0_i32_1 = arith.constant 0 : i32
    return %c0_i32, %c0_i32_0 : i32, i32
  }
  func.func @transform_2(%arg0: i32) -> (i32, i32) {
    %c0_i32 = arith.constant 0 : i32
    %c0_i32_0 = arith.constant 0 : i32
    %c0_i32_1 = arith.constant 0 : i32
    return %c0_i32, %c0_i32_0 : i32, i32
  }
  func.func @transform_3(%arg0: i32) -> (i32, i32) {
    %c0_i32 = arith.constant 0 : i32
    %c0_i32_0 = arith.constant 0 : i32
    return %arg0, %c0_i32 : i32, i32
  }
  func.func @transform_4(%arg0: i32) -> (i32, i32) {
    %c0_i32 = arith.constant 0 : i32
    %c0_i32_0 = arith.constant 0 : i32
    return %arg0, %c0_i32 : i32, i32
  }
  func.func @transform_5(%arg0: i32) -> (i32, i32) {
    %c0_i32 = arith.constant 0 : i32
    %c0_i32_0 = arith.constant 0 : i32
    %c0_i32_1 = arith.constant 0 : i32
    return %c0_i32, %c0_i32_0 : i32, i32
  }
  func.func @transform_6(%arg0: i32) -> (i32, i32) {
    %c0_i32 = arith.constant 0 : i32
    %c0_i32_0 = arith.constant 0 : i32
    %c0_i32_1 = arith.constant 0 : i32
    return %c0_i32, %c0_i32_0 : i32, i32
  }
  func.func @transform_7(%arg0: i32) -> (i32, i32) {
    %c0_i32 = arith.constant 0 : i32
    %c0_i32_0 = arith.constant 0 : i32
    %c0_i32_1 = arith.constant 0 : i32
    return %c0_i32, %c0_i32_0 : i32, i32
  }
  func.func @transform_8(%arg0: i32) -> (i32, i32) {
    %c0_i32 = arith.constant 0 : i32
    %c0_i32_0 = arith.constant 0 : i32
    %c0_i32_1 = arith.constant 0 : i32
    return %c0_i32, %c0_i32_0 : i32, i32
  }
  func.func @transform_9(%arg0: i32) -> (i32, i32) {
    %c0_i32 = arith.constant 0 : i32
    %c0_i32_0 = arith.constant 0 : i32
    %c0_i32_1 = arith.constant 0 : i32
    return %c0_i32, %c0_i32_0 : i32, i32
  }
  func.func @transform_10(%arg0: i32) -> (i32, i32) {
    %c0_i32 = arith.constant 0 : i32
    %c0_i32_0 = arith.constant 0 : i32
    %c0_i32_1 = arith.constant 0 : i32
    return %c0_i32, %c0_i32_0 : i32, i32
  }
  func.func @transform_11(%arg0: i32) -> (i32, i32) {
    %c0_i32 = arith.constant 0 : i32
    %c0_i32_0 = arith.constant 0 : i32
    %c0_i32_1 = arith.constant 0 : i32
    return %c0_i32, %c0_i32_0 : i32, i32
  }
  func.func @transform_12(%arg0: i32) -> (i32, i32) {
    %c0_i32 = arith.constant 0 : i32
    %c0_i32_0 = arith.constant 0 : i32
    %c0_i32_1 = arith.constant 0 : i32
    return %c0_i32, %c0_i32_0 : i32, i32
  }
  func.func @transform_13(%arg0: i32) -> (i32, i32) {
    %c0_i32 = arith.constant 0 : i32
    %c0_i32_0 = arith.constant 0 : i32
    %c0_i32_1 = arith.constant 0 : i32
    return %c0_i32, %c0_i32_0 : i32, i32
  }
  func.func @transform_14(%arg0: i32) -> (i32, i32) {
    %c0_i32 = arith.constant 0 : i32
    %c0_i32_0 = arith.constant 0 : i32
    %c0_i32_1 = arith.constant 0 : i32
    return %c0_i32, %c0_i32_0 : i32, i32
  }
  func.func @transform_15(%arg0: i32) -> (i32, i32) {
    %c0_i32 = arith.constant 0 : i32
    %c0_i32_0 = arith.constant 0 : i32
    %c0_i32_1 = arith.constant 0 : i32
    return %c0_i32, %c0_i32_0 : i32, i32
  }
  func.func @transform_16(%arg0: i32) -> (i32, i32) {
    %c0_i32 = arith.constant 0 : i32
    %c0_i32_0 = arith.constant 0 : i32
    return %arg0, %c0_i32 : i32, i32
  }
  func.func @transform_17(%arg0: i32) -> (i32, i32) {
    %c0_i32 = arith.constant 0 : i32
    %c0_i32_0 = arith.constant 0 : i32
    return %arg0, %c0_i32 : i32, i32
  }
}

</mosaic_0001>

<llo_original>
// kernel: forward.1
$region0: #{forward.1}
  #allocation0 [shape = 'u32[]', space=smem, size = 0x4, offset = 0x4, fixed_abs, tag = 'smem constant byte address 0x4 - core index']
  #allocation1 [shape = 'u32[144,128]{1,0:T(1,128)}', space=vmem, size = 0x12000, scoped, tag = 'internal scratch']
  #allocation2 [shape = 'f32[1,1]{1,0:T(1,128)S(1)}', space=vmem, size = 0x200, scoped, tag = 'scoped memory for forward.1']
  #allocation3 [shape = 'f32[1,1]{1,0:T(1,128)S(1)}', space=vmem, size = 0x200, scoped, tag = 'scoped memory for forward.1']
  #allocation4 [shape = 'f32[1,1]{1,0:T(1,128)S(1)}', space=vmem, size = 0x200, scoped, tag = 'scoped memory for forward.1']
  %s0 = inlined_call_operand.vmem [shape: bf16[8,1152], index: 0, kind: input, shape index: {}]
  %s1 = inlined_call_operand.vmem [shape: f32[2,8], index: 1, kind: input, shape index: {}]
  %s2 = inlined_call_operand.vmem [shape: f32[8,4], index: 2, kind: input, shape index: {}]
  %s3 = inlined_call_operand.hbm [shape: f32[2,4], index: 3, kind: input, shape index: {}]
  %s4 = inlined_call_operand.hbm [shape: f32[2,4], index: 4, kind: input, shape index: {}]
  %s5 = inlined_call_operand.vmem [shape: bf16[1152,768], index: 5, kind: input, shape index: {}]
  %s6 = inlined_call_operand.hbm [shape: f32[1,768], index: 6, kind: input, shape index: {}]
  %s7 = inlined_call_operand.hbm [shape: bf16[768,768], index: 7, kind: input, shape index: {}]
  %s8 = inlined_call_operand.hbm [shape: f32[1,768], index: 8, kind: input, shape index: {}]
  %s9 = inlined_call_operand.hbm [shape: bf16[768,1536], index: 9, kind: input, shape index: {}]
  %s10 = inlined_call_operand.hbm [shape: f32[1,1536], index: 10, kind: input, shape index: {}]
  %s11 = inlined_call_operand.hbm [shape: f32[1,1536], index: 11, kind: input, shape index: {}]
  %s12 = inlined_call_operand.<no memory space> [shape: f32[1,1], index: 12, kind: input, shape index: {}]
  %s13 = inlined_call_operand.hbm [shape: f32[1,768], index: 13, kind: input, shape index: {}]
  %s14 = inlined_call_operand.<no memory space> [shape: f32[1,1], index: 14, kind: input, shape index: {}]
  %s15 = inlined_call_operand.<no memory space> [shape: f32[1,1], index: 15, kind: input, shape index: {}]
  %s16 = inlined_call_operand.hbm [shape: f32[2,4], index: 16, kind: output, shape index: {0}]
  %s17 = inlined_call_operand.vmem [shape: f32[2,1], index: 17, kind: output, shape index: {1}]
  %18 = xla_tuple %s16, %s17
  %s19 = sld [smem:[#allocation0]]
  $region118: #{forward.1} parent=0
    _
  %s21 = ssub.s32 1, %s19
  %s22 = scalar_select 0, %s21, %s19
  %v23 = vstv %s12
  %24 = vst [vmem:[#allocation2] sm:$0x1] %v23
  %v25 = vstv %s14
  %26 = vst [vmem:[#allocation3] sm:$0x1] %v25
  %v27 = vstv %s15
  %28 = vst [vmem:[#allocation4] sm:$0x1] %v27
  $region1: #{forward.1} parent=0
    #allocation5 [shape = 'u8[1024]{0}', space=vmem, size = 0x400, scoped, tag = 'input window, operand 3, single buffered']
    #allocation6 [shape = 's32[1]{0}', space=sflag, size = 0x4, scoped, tag = 'scoped memory for forward.1']
    #allocation7 [shape = 's32[1]{0}', space=sflag, size = 0x4, scoped, tag = 'scoped memory for forward.1']
    #allocation8 [shape = 'u8[1024]{0}', space=vmem, size = 0x400, scoped, tag = 'input window, operand 4, single buffered']
    #allocation9 [shape = 's32[1]{0}', space=sflag, size = 0x4, scoped, tag = 'scoped memory for forward.1']
    #allocation10 [shape = 'u8[3072]{0}', space=vmem, size = 0xc00, scoped, tag = 'input window, operand 6, single buffered']
    #allocation11 [shape = 'u8[1179648]{0}', space=vmem, size = 0x120000, scoped, tag = 'input window, operand 7, single buffered']
    #allocation12 [shape = 's32[1]{0}', space=sflag, size = 0x4, scoped, tag = 'scoped memory for forward.1']
    #allocation13 [shape = 'u8[3072]{0}', space=vmem, size = 0xc00, scoped, tag = 'input window, operand 8, single buffered']
    #allocation14 [shape = 'u8[2359296]{0}', space=vmem, size = 0x240000, scoped, tag = 'input window, operand 9, single buffered']
    #allocation15 [shape = 's32[1]{0}', space=sflag, size = 0x4, scoped, tag = 'scoped memory for forward.1']
    #allocation16 [shape = 'u8[6144]{0}', space=vmem, size = 0x1800, scoped, tag = 'input window, operand 10, single buffered']
    #allocation17 [shape = 'u8[6144]{0}', space=vmem, size = 0x1800, scoped, tag = 'input window, operand 11, single buffered']
    #allocation18 [shape = 's32[1]{0}', space=sflag, size = 0x4, scoped, tag = 'scoped memory for forward.1']
    #allocation19 [shape = 'u8[3072]{0}', space=vmem, size = 0xc00, scoped, tag = 'input window, operand 13, single buffered']
    #allocation20 [shape = 'u8[1024]{0}', space=vmem, size = 0x400, scoped, tag = 'output window, operand 0, single buffered']
    %29 = vsyncpa [#allocation6], 0
    %30 = vsyncpa [#allocation9], 0
    %31 = vsyncpa [#allocation12], 0
    %32 = vsyncpa [#allocation15], 0
    %33 = vsyncpa [#allocation18], 0
    %34 = vsyncpa [#allocation7], 0
    // Predicated region
    $region2: #{forward.1} parent=1 // pred_check
      _
    $region3: #{forward.1} parent=1 // pred_check_branch
      %36 = sbr.rel (0) target = $region5
    $region4: #{forward.1} parent=1 // pred_region
      _
    $region5: #{forward.1} parent=1 // pred_fallthru
      _
    // Predicated region
    $region6: #{forward.1} parent=1 // pred_check
      _
    $region7: #{forward.1} parent=1 // pred_check_branch
      %38 = sbr.rel (0) target = $region9
    $region8: #{forward.1} parent=1 // pred_region
      _
    $region9: #{forward.1} parent=1 // pred_fallthru
      _
    // Predicated region
    $region10: #{forward.1} parent=1 // pred_check
      _
    $region11: #{forward.1} parent=1 // pred_check_branch
      %40 = sbr.rel (0) target = $region13
    $region12: #{forward.1} parent=1 // pred_region
      _
    $region13: #{forward.1} parent=1 // pred_fallthru
      _
    // Predicated region
    $region14: #{forward.1} parent=1 // pred_check
      _
    $region15: #{forward.1} parent=1 // pred_check_branch
      %42 = sbr.rel (0) target = $region17
    $region16: #{forward.1} parent=1 // pred_region
      %s44 = ssub.s32 32, 32
      %45 = vsyncadd [#allocation6], %s44
      %s47 = sshll.u32 [#allocation5], 4
      %s48 = int_to_ptr.vmem [resolvable:$true] %s47
      %50 = dma.hbm_to_vmem [thread:$0]  %s3, 32, %s48, [#allocation6]
    $region17: #{forward.1} parent=1 // pred_fallthru
      _
    // Predicated region
    $region18: #{forward.1} parent=1 // pred_check
      _
    $region19: #{forward.1} parent=1 // pred_check_branch
      %52 = sbr.rel (0) target = $region21
    $region20: #{forward.1} parent=1 // pred_region
      %s54 = ssub.s32 32, 32
      %55 = vsyncadd [#allocation9], %s54
      %s57 = sshll.u32 [#allocation8], 4
      %s58 = int_to_ptr.vmem [resolvable:$true] %s57
      %60 = dma.hbm_to_vmem [thread:$0]  %s4, 32, %s58, [#allocation9]
    $region21: #{forward.1} parent=1 // pred_fallthru
      _
    // Predicated region
    $region22: #{forward.1} parent=1 // pred_check
      _
    $region23: #{forward.1} parent=1 // pred_check_branch
      %62 = sbr.rel (0) target = $region25
    $region24: #{forward.1} parent=1 // pred_region
      _
    $region25: #{forward.1} parent=1 // pred_fallthru
      _
    // Predicated region
    $region26: #{forward.1} parent=1 // pred_check
      _
    $region27: #{forward.1} parent=1 // pred_check_branch
      %64 = sbr.rel (0) target = $region29
    $region28: #{forward.1} parent=1 // pred_region
      %s66 = ssub.s32 96, 96
      %67 = vsyncadd [#allocation9], %s66
      %s69 = sshll.u32 [#allocation10], 4
      %s70 = int_to_ptr.vmem [resolvable:$true] %s69
      %72 = dma.hbm_to_vmem [thread:$0]  %s6, 96, %s70, [#allocation9]
    $region29: #{forward.1} parent=1 // pred_fallthru
      _
    // Predicated region
    $region30: #{forward.1} parent=1 // pred_check
      _
    $region31: #{forward.1} parent=1 // pred_check_branch
      %74 = sbr.rel (0) target = $region33
    $region32: #{forward.1} parent=1 // pred_region
      %s76 = ssub.s32 36864, 36864
      %77 = vsyncadd [#allocation12], %s76
      %s78 = sshll.u32 [#allocation11], 4
      %s79 = int_to_ptr.vmem [resolvable:$true] %s78
      %84 = dma.hbm_to_vmem [thread:$0]  %s7, 36864, %s79, [#allocation12], 384, 384, 24
    $region33: #{forward.1} parent=1 // pred_fallthru
      _
    // Predicated region
    $region34: #{forward.1} parent=1 // pred_check
      _
    $region35: #{forward.1} parent=1 // pred_check_branch
      %86 = sbr.rel (0) target = $region37
    $region36: #{forward.1} parent=1 // pred_region
      %s88 = ssub.s32 96, 96
      %89 = vsyncadd [#allocation12], %s88
      %s91 = sshll.u32 [#allocation13], 4
      %s92 = int_to_ptr.vmem [resolvable:$true] %s91
      %94 = dma.hbm_to_vmem [thread:$0]  %s8, 96, %s92, [#allocation12]
    $region37: #{forward.1} parent=1 // pred_fallthru
      _
    // Predicated region
    $region38: #{forward.1} parent=1 // pred_check
      _
    $region39: #{forward.1} parent=1 // pred_check_branch
      %96 = sbr.rel (0) target = $region41
    $region40: #{forward.1} parent=1 // pred_region
      %s98 = ssub.s32 73728, 73728
      %99 = vsyncadd [#allocation15], %s98
      %s100 = sshll.u32 [#allocation14], 4
      %s101 = int_to_ptr.vmem [resolvable:$true] %s100
      %106 = dma.hbm_to_vmem [thread:$0]  %s9, 73728, %s101, [#allocation15], 768, 768, 48
    $region41: #{forward.1} parent=1 // pred_fallthru
      _
    // Predicated region
    $region42: #{forward.1} parent=1 // pred_check
      _
    $region43: #{forward.1} parent=1 // pred_check_branch
      %108 = sbr.rel (0) target = $region45
    $region44: #{forward.1} parent=1 // pred_region
      %s110 = ssub.s32 192, 192
      %111 = vsyncadd [#allocation15], %s110
      %s113 = sshll.u32 [#allocation16], 4
      %s114 = int_to_ptr.vmem [resolvable:$true] %s113
      %116 = dma.hbm_to_vmem [thread:$0]  %s10, 192, %s114, [#allocation15]
    $region45: #{forward.1} parent=1 // pred_fallthru
      _
    // Predicated region
    $region46: #{forward.1} parent=1 // pred_check
      _
    $region47: #{forward.1} parent=1 // pred_check_branch
      %118 = sbr.rel (0) target = $region49
    $region48: #{forward.1} parent=1 // pred_region
      %s120 = ssub.s32 192, 192
      %121 = vsyncadd [#allocation18], %s120
      %s123 = sshll.u32 [#allocation17], 4
      %s124 = int_to_ptr.vmem [resolvable:$true] %s123
      %126 = dma.hbm_to_vmem [thread:$0]  %s11, 192, %s124, [#allocation18]
    $region49: #{forward.1} parent=1 // pred_fallthru
      _
    // Predicated region
    $region50: #{forward.1} parent=1 // pred_check
      _
    $region51: #{forward.1} parent=1 // pred_check_branch
      %128 = sbr.rel (0) target = $region53
    $region52: #{forward.1} parent=1 // pred_region
      _
    $region53: #{forward.1} parent=1 // pred_fallthru
      _
    // Predicated region
    $region54: #{forward.1} parent=1 // pred_check
      _
    $region55: #{forward.1} parent=1 // pred_check_branch
      %130 = sbr.rel (0) target = $region57
    $region56: #{forward.1} parent=1 // pred_region
      %s132 = ssub.s32 96, 96
      %133 = vsyncadd [#allocation18], %s132
      %s135 = sshll.u32 [#allocation19], 4
      %s136 = int_to_ptr.vmem [resolvable:$true] %s135
      %138 = dma.hbm_to_vmem [thread:$0]  %s13, 96, %s136, [#allocation18]
    $region57: #{forward.1} parent=1 // pred_fallthru
      _
    // Predicated region
    $region58: #{forward.1} parent=1 // pred_check
      _
    $region59: #{forward.1} parent=1 // pred_check_branch
      %140 = sbr.rel (0) target = $region61
    $region60: #{forward.1} parent=1 // pred_region
      _
    $region61: #{forward.1} parent=1 // pred_fallthru
      _
    // Predicated region
    $region62: #{forward.1} parent=1 // pred_check
      _
    $region63: #{forward.1} parent=1 // pred_check_branch
      %142 = sbr.rel (0) target = $region65
    $region64: #{forward.1} parent=1 // pred_region
      _
    $region65: #{forward.1} parent=1 // pred_fallthru
      _
    // Predicated region
    $region66: #{forward.1} parent=1 // pred_check
      _
    $region67: #{forward.1} parent=1 // pred_check_branch
      %144 = sbr.rel (0) target = $region69
    $region68: #{forward.1} parent=1 // pred_region
      %145 = dma.done [#allocation6], 32
    $region69: #{forward.1} parent=1 // pred_fallthru
      _
    // Predicated region
    $region70: #{forward.1} parent=1 // pred_check
      _
    $region71: #{forward.1} parent=1 // pred_check_branch
      %147 = sbr.rel (0) target = $region73
    $region72: #{forward.1} parent=1 // pred_region
      %148 = dma.done [#allocation9], 32
    $region73: #{forward.1} parent=1 // pred_fallthru
      _
    // Predicated region
    $region74: #{forward.1} parent=1 // pred_check
      _
    $region75: #{forward.1} parent=1 // pred_check_branch
      %150 = sbr.rel (0) target = $region77
    $region76: #{forward.1} parent=1 // pred_region
      %151 = dma.done [#allocation9], 96
    $region77: #{forward.1} parent=1 // pred_fallthru
      _
    // Predicated region
    $region78: #{forward.1} parent=1 // pred_check
      _
    $region79: #{forward.1} parent=1 // pred_check_branch
      %153 = sbr.rel (0) target = $region81
    $region80: #{forward.1} parent=1 // pred_region
      %154 = dma.done [#allocation12], 36864
    $region81: #{forward.1} parent=1 // pred_fallthru
      _
    // Predicated region
    $region82: #{forward.1} parent=1 // pred_check
      _
    $region83: #{forward.1} parent=1 // pred_check_branch
      %156 = sbr.rel (0) target = $region85
    $region84: #{forward.1} parent=1 // pred_region
      %157 = dma.done [#allocation12], 96
    $region85: #{forward.1} parent=1 // pred_fallthru
      _
    // Predicated region
    $region86: #{forward.1} parent=1 // pred_check
      _
    $region87: #{forward.1} parent=1 // pred_check_branch
      %159 = sbr.rel (0) target = $region89
    $region88: #{forward.1} parent=1 // pred_region
      %160 = dma.done [#allocation15], 73728
    $region89: #{forward.1} parent=1 // pred_fallthru
      _
    // Predicated region
    $region90: #{forward.1} parent=1 // pred_check
      _
    $region91: #{forward.1} parent=1 // pred_check_branch
      %162 = sbr.rel (0) target = $region93
    $region92: #{forward.1} parent=1 // pred_region
      %163 = dma.done [#allocation15], 192
    $region93: #{forward.1} parent=1 // pred_fallthru
      _
    // Predicated region
    $region94: #{forward.1} parent=1 // pred_check
      _
    $region95: #{forward.1} parent=1 // pred_check_branch
      %165 = sbr.rel (0) target = $region97
    $region96: #{forward.1} parent=1 // pred_region
      %166 = dma.done [#allocation18], 192
    $region97: #{forward.1} parent=1 // pred_fallthru
      _
    // Predicated region
    $region98: #{forward.1} parent=1 // pred_check
      _
    $region99: #{forward.1} parent=1 // pred_check_branch
      %168 = sbr.rel (0) target = $region101
    $region100: #{forward.1} parent=1 // pred_region
      %169 = dma.done [#allocation18], 96
    $region101: #{forward.1} parent=1 // pred_fallthru
      _
    %v171 = vld [vmem:[%s0] sm:$0xff]
    %v172 = vld [vmem:[%s0 + $0x8] sm:$0xff]
    %v173 = vld [vmem:[%s0 + $0x10] sm:$0xff]
    %v174 = vld [vmem:[%s0 + $0x18] sm:$0xff]
    %v175 = vld [vmem:[%s0 + $0x20] sm:$0xf]
    %v176 = vld [vmem:[%s5] sm:$0xff]
    %v177 = vld [vmem:[%s5 + $0x8] sm:$0xff]
    %v178 = vld [vmem:[%s5 + $0x10] sm:$0xff]
    %v179 = vld [vmem:[%s5 + $0x18] sm:$0xff]
    %v180 = vld [vmem:[%s5 + $0x20] sm:$0xff]
    %v181 = vld [vmem:[%s5 + $0x28] sm:$0xff]
    %v182 = vld [vmem:[%s5 + $0x30] sm:$0xff]
    %v183 = vld [vmem:[%s5 + $0x38] sm:$0xff]
    %v184 = vld [vmem:[%s5 + $0x40] sm:$0xff]
    %v185 = vld [vmem:[%s5 + $0x48] sm:$0xff]
    %v186 = vld [vmem:[%s5 + $0x50] sm:$0xff]
    %v187 = vld [vmem:[%s5 + $0x58] sm:$0xff]
    %v188 = vld [vmem:[%s5 + $0x60] sm:$0xff]
    %v189 = vld [vmem:[%s5 + $0x68] sm:$0xff]
    %v190 = vld [vmem:[%s5 + $0x70] sm:$0xff]
    %v191 = vld [vmem:[%s5 + $0x78] sm:$0xff]
    %v192 = vld [vmem:[%s5 + $0x80] sm:$0xff]
    %v193 = vld [vmem:[%s5 + $0x88] sm:$0xff]
    %v194 = vld [vmem:[%s5 + $0x90] sm:$0xff]
    %v195 = vld [vmem:[%s5 + $0x98] sm:$0xff]
    %v196 = vld [vmem:[%s5 + $0xa0] sm:$0xff]
    %v197 = vld [vmem:[%s5 + $0xa8] sm:$0xff]
    %v198 = vld [vmem:[%s5 + $0xb0] sm:$0xff]
    %v199 = vld [vmem:[%s5 + $0xb8] sm:$0xff]
    %v200 = vld [vmem:[%s5 + $0xc0] sm:$0xff]
    %v201 = vld [vmem:[%s5 + $0xc8] sm:$0xff]
    %v202 = vld [vmem:[%s5 + $0xd0] sm:$0xff]
    %v203 = vld [vmem:[%s5 + $0xd8] sm:$0xff]
    %v204 = vld [vmem:[%s5 + $0xe0] sm:$0xff]
    %v205 = vld [vmem:[%s5 + $0xe8] sm:$0xff]
    %v206 = vld [vmem:[%s5 + $0xf0] sm:$0xff]
    %v207 = vld [vmem:[%s5 + $0xf8] sm:$0xff]
    %v208 = vld [vmem:[%s5 + $0x100] sm:$0xff]
    %v209 = vld [vmem:[%s5 + $0x108] sm:$0xff]
    %v210 = vld [vmem:[%s5 + $0x110] sm:$0xff]
    %v211 = vld [vmem:[%s5 + $0x118] sm:$0xff]
    %v212 = vld [vmem:[%s5 + $0x120] sm:$0xff]
    %v213 = vld [vmem:[%s5 + $0x128] sm:$0xff]
    %v214 = vld [vmem:[%s5 + $0x130] sm:$0xff]
    %v215 = vld [vmem:[%s5 + $0x138] sm:$0xff]
    %v216 = vld [vmem:[%s5 + $0x140] sm:$0xff]
    %v217 = vld [vmem:[%s5 + $0x148] sm:$0xff]
    %v218 = vld [vmem:[%s5 + $0x150] sm:$0xff]
    %v219 = vld [vmem:[%s5 + $0x158] sm:$0xff]
    %v220 = vld [vmem:[%s5 + $0x160] sm:$0xff]
    %v221 = vld [vmem:[%s5 + $0x168] sm:$0xff]
    %v222 = vld [vmem:[%s5 + $0x170] sm:$0xff]
    %v223 = vld [vmem:[%s5 + $0x178] sm:$0xff]
    %v224 = vld [vmem:[%s5 + $0x180] sm:$0xff]
    %v225 = vld [vmem:[%s5 + $0x188] sm:$0xff]
    %v226 = vld [vmem:[%s5 + $0x190] sm:$0xff]
    %v227 = vld [vmem:[%s5 + $0x198] sm:$0xff]
    %v228 = vld [vmem:[%s5 + $0x1a0] sm:$0xff]
    %v229 = vld [vmem:[%s5 + $0x1a8] sm:$0xff]
    %v230 = vld [vmem:[%s5 + $0x1b0] sm:$0xff]
    %v231 = vld [vmem:[%s5 + $0x1b8] sm:$0xff]
    %v232 = vld [vmem:[%s5 + $0x1c0] sm:$0xff]
    %v233 = vld [vmem:[%s5 + $0x1c8] sm:$0xff]
    %v234 = vld [vmem:[%s5 + $0x1d0] sm:$0xff]
    %v235 = vld [vmem:[%s5 + $0x1d8] sm:$0xff]
    %v236 = vld [vmem:[%s5 + $0x1e0] sm:$0xff]
    %v237 = vld [vmem:[%s5 + $0x1e8] sm:$0xff]
    %v238 = vld [vmem:[%s5 + $0x1f0] sm:$0xff]
    %v239 = vld [vmem:[%s5 + $0x1f8] sm:$0xff]
    %v240 = vld [vmem:[%s5 + $0x200] sm:$0xff]
    %v241 = vld [vmem:[%s5 + $0x208] sm:$0xff]
    %v242 = vld [vmem:[%s5 + $0x210] sm:$0xff]
    %v243 = vld [vmem:[%s5 + $0x218] sm:$0xff]
    %v244 = vld [vmem:[%s5 + $0x220] sm:$0xff]
    %v245 = vld [vmem:[%s5 + $0x228] sm:$0xff]
    %v246 = vld [vmem:[%s5 + $0x230] sm:$0xff]
    %v247 = vld [vmem:[%s5 + $0x238] sm:$0xff]
    %v248 = vld [vmem:[%s5 + $0x240] sm:$0xff]
    %v249 = vld [vmem:[%s5 + $0x248] sm:$0xff]
    %v250 = vld [vmem:[%s5 + $0x250] sm:$0xff]
    %v251 = vld [vmem:[%s5 + $0x258] sm:$0xff]
    %v252 = vld [vmem:[%s5 + $0x260] sm:$0xff]
    %v253 = vld [vmem:[%s5 + $0x268] sm:$0xff]
    %v254 = vld [vmem:[%s5 + $0x270] sm:$0xff]
    %v255 = vld [vmem:[%s5 + $0x278] sm:$0xff]
    %v256 = vld [vmem:[%s5 + $0x280] sm:$0xff]
    %v257 = vld [vmem:[%s5 + $0x288] sm:$0xff]
    %v258 = vld [vmem:[%s5 + $0x290] sm:$0xff]
    %v259 = vld [vmem:[%s5 + $0x298] sm:$0xff]
    %v260 = vld [vmem:[%s5 + $0x2a0] sm:$0xff]
    %v261 = vld [vmem:[%s5 + $0x2a8] sm:$0xff]
    %v262 = vld [vmem:[%s5 + $0x2b0] sm:$0xff]
    %v263 = vld [vmem:[%s5 + $0x2b8] sm:$0xff]
    %v264 = vld [vmem:[%s5 + $0x2c0] sm:$0xff]
    %v265 = vld [vmem:[%s5 + $0x2c8] sm:$0xff]
    %v266 = vld [vmem:[%s5 + $0x2d0] sm:$0xff]
    %v267 = vld [vmem:[%s5 + $0x2d8] sm:$0xff]
    %v268 = vld [vmem:[%s5 + $0x2e0] sm:$0xff]
    %v269 = vld [vmem:[%s5 + $0x2e8] sm:$0xff]
    %v270 = vld [vmem:[%s5 + $0x2f0] sm:$0xff]
    %v271 = vld [vmem:[%s5 + $0x2f8] sm:$0xff]
    %v272 = vld [vmem:[%s5 + $0x300] sm:$0xff]
    %v273 = vld [vmem:[%s5 + $0x308] sm:$0xff]
    %v274 = vld [vmem:[%s5 + $0x310] sm:$0xff]
    %v275 = vld [vmem:[%s5 + $0x318] sm:$0xff]
    %v276 = vld [vmem:[%s5 + $0x320] sm:$0xff]
    %v277 = vld [vmem:[%s5 + $0x328] sm:$0xff]
    %v278 = vld [vmem:[%s5 + $0x330] sm:$0xff]
    %v279 = vld [vmem:[%s5 + $0x338] sm:$0xff]
    %v280 = vld [vmem:[%s5 + $0x340] sm:$0xff]
    %v281 = vld [vmem:[%s5 + $0x348] sm:$0xff]
    %v282 = vld [vmem:[%s5 + $0x350] sm:$0xff]
    %v283 = vld [vmem:[%s5 + $0x358] sm:$0xff]
    %v284 = vld [vmem:[%s5 + $0x360] sm:$0xff]
    %v285 = vld [vmem:[%s5 + $0x368] sm:$0xff]
    %v286 = vld [vmem:[%s5 + $0x370] sm:$0xff]
    %v287 = vld [vmem:[%s5 + $0x378] sm:$0xff]
    %v288 = vld [vmem:[%s5 + $0x380] sm:$0xff]
    %v289 = vld [vmem:[%s5 + $0x388] sm:$0xff]
    %v290 = vld [vmem:[%s5 + $0x390] sm:$0xff]
    %v291 = vld [vmem:[%s5 + $0x398] sm:$0xff]
    %v292 = vld [vmem:[%s5 + $0x3a0] sm:$0xff]
    %v293 = vld [vmem:[%s5 + $0x3a8] sm:$0xff]
    %v294 = vld [vmem:[%s5 + $0x3b0] sm:$0xff]
    %v295 = vld [vmem:[%s5 + $0x3b8] sm:$0xff]
    %v296 = vld [vmem:[%s5 + $0x3c0] sm:$0xff]
    %v297 = vld [vmem:[%s5 + $0x3c8] sm:$0xff]
    %v298 = vld [vmem:[%s5 + $0x3d0] sm:$0xff]
    %v299 = vld [vmem:[%s5 + $0x3d8] sm:$0xff]
    %v300 = vld [vmem:[%s5 + $0x3e0] sm:$0xff]
    %v301 = vld [vmem:[%s5 + $0x3e8] sm:$0xff]
    %v302 = vld [vmem:[%s5 + $0x3f0] sm:$0xff]
    %v303 = vld [vmem:[%s5 + $0x3f8] sm:$0xff]
    %v304 = vld [vmem:[%s5 + $0x400] sm:$0xff]
    %v305 = vld [vmem:[%s5 + $0x408] sm:$0xff]
    %v306 = vld [vmem:[%s5 + $0x410] sm:$0xff]
    %v307 = vld [vmem:[%s5 + $0x418] sm:$0xff]
    %v308 = vld [vmem:[%s5 + $0x420] sm:$0xff]
    %v309 = vld [vmem:[%s5 + $0x428] sm:$0xff]
    %v310 = vld [vmem:[%s5 + $0x430] sm:$0xff]
    %v311 = vld [vmem:[%s5 + $0x438] sm:$0xff]
    %v312 = vld [vmem:[%s5 + $0x440] sm:$0xff]
    %v313 = vld [vmem:[%s5 + $0x448] sm:$0xff]
    %v314 = vld [vmem:[%s5 + $0x450] sm:$0xff]
    %v315 = vld [vmem:[%s5 + $0x458] sm:$0xff]
    %v316 = vld [vmem:[%s5 + $0x460] sm:$0xff]
    %v317 = vld [vmem:[%s5 + $0x468] sm:$0xff]
    %v318 = vld [vmem:[%s5 + $0x470] sm:$0xff]
    %v319 = vld [vmem:[%s5 + $0x478] sm:$0xff]
    %v320 = vld [vmem:[%s5 + $0x480] sm:$0xff]
    %v321 = vld [vmem:[%s5 + $0x488] sm:$0xff]
    %v322 = vld [vmem:[%s5 + $0x490] sm:$0xff]
    %v323 = vld [vmem:[%s5 + $0x498] sm:$0xff]
    %v324 = vld [vmem:[%s5 + $0x4a0] sm:$0xff]
    %v325 = vld [vmem:[%s5 + $0x4a8] sm:$0xff]
    %v326 = vld [vmem:[%s5 + $0x4b0] sm:$0xff]
    %v327 = vld [vmem:[%s5 + $0x4b8] sm:$0xff]
    %v328 = vld [vmem:[%s5 + $0x4c0] sm:$0xff]
    %v329 = vld [vmem:[%s5 + $0x4c8] sm:$0xff]
    %v330 = vld [vmem:[%s5 + $0x4d0] sm:$0xff]
    %v331 = vld [vmem:[%s5 + $0x4d8] sm:$0xff]
    %v332 = vld [vmem:[%s5 + $0x4e0] sm:$0xff]
    %v333 = vld [vmem:[%s5 + $0x4e8] sm:$0xff]
    %v334 = vld [vmem:[%s5 + $0x4f0] sm:$0xff]
    %v335 = vld [vmem:[%s5 + $0x4f8] sm:$0xff]
    %v336 = vld [vmem:[%s5 + $0x500] sm:$0xff]
    %v337 = vld [vmem:[%s5 + $0x508] sm:$0xff]
    %v338 = vld [vmem:[%s5 + $0x510] sm:$0xff]
    %v339 = vld [vmem:[%s5 + $0x518] sm:$0xff]
    %v340 = vld [vmem:[%s5 + $0x520] sm:$0xff]
    %v341 = vld [vmem:[%s5 + $0x528] sm:$0xff]
    %v342 = vld [vmem:[%s5 + $0x530] sm:$0xff]
    %v343 = vld [vmem:[%s5 + $0x538] sm:$0xff]
    %v344 = vld [vmem:[%s5 + $0x540] sm:$0xff]
    %v345 = vld [vmem:[%s5 + $0x548] sm:$0xff]
    %v346 = vld [vmem:[%s5 + $0x550] sm:$0xff]
    %v347 = vld [vmem:[%s5 + $0x558] sm:$0xff]
    %v348 = vld [vmem:[%s5 + $0x560] sm:$0xff]
    %v349 = vld [vmem:[%s5 + $0x568] sm:$0xff]
    %v350 = vld [vmem:[%s5 + $0x570] sm:$0xff]
    %v351 = vld [vmem:[%s5 + $0x578] sm:$0xff]
    %v352 = vld [vmem:[%s5 + $0x580] sm:$0xff]
    %v353 = vld [vmem:[%s5 + $0x588] sm:$0xff]
    %v354 = vld [vmem:[%s5 + $0x590] sm:$0xff]
    %v355 = vld [vmem:[%s5 + $0x598] sm:$0xff]
    %v356 = vld [vmem:[%s5 + $0x5a0] sm:$0xff]
    %v357 = vld [vmem:[%s5 + $0x5a8] sm:$0xff]
    %v358 = vld [vmem:[%s5 + $0x5b0] sm:$0xff]
    %v359 = vld [vmem:[%s5 + $0x5b8] sm:$0xff]
    %v360 = vld [vmem:[%s5 + $0x5c0] sm:$0xff]
    %v361 = vld [vmem:[%s5 + $0x5c8] sm:$0xff]
    %v362 = vld [vmem:[%s5 + $0x5d0] sm:$0xff]
    %v363 = vld [vmem:[%s5 + $0x5d8] sm:$0xff]
    %v364 = vld [vmem:[%s5 + $0x5e0] sm:$0xff]
    %v365 = vld [vmem:[%s5 + $0x5e8] sm:$0xff]
    %v366 = vld [vmem:[%s5 + $0x5f0] sm:$0xff]
    %v367 = vld [vmem:[%s5 + $0x5f8] sm:$0xff]
    %v368 = vld [vmem:[%s5 + $0x600] sm:$0xff]
    %v369 = vld [vmem:[%s5 + $0x608] sm:$0xff]
    %v370 = vld [vmem:[%s5 + $0x610] sm:$0xff]
    %v371 = vld [vmem:[%s5 + $0x618] sm:$0xff]
    %v372 = vld [vmem:[%s5 + $0x620] sm:$0xff]
    %v373 = vld [vmem:[%s5 + $0x628] sm:$0xff]
    %v374 = vld [vmem:[%s5 + $0x630] sm:$0xff]
    %v375 = vld [vmem:[%s5 + $0x638] sm:$0xff]
    %v376 = vld [vmem:[%s5 + $0x640] sm:$0xff]
    %v377 = vld [vmem:[%s5 + $0x648] sm:$0xff]
    %v378 = vld [vmem:[%s5 + $0x650] sm:$0xff]
    %v379 = vld [vmem:[%s5 + $0x658] sm:$0xff]
    %v380 = vld [vmem:[%s5 + $0x660] sm:$0xff]
    %v381 = vld [vmem:[%s5 + $0x668] sm:$0xff]
    %v382 = vld [vmem:[%s5 + $0x670] sm:$0xff]
    %v383 = vld [vmem:[%s5 + $0x678] sm:$0xff]
    %v384 = vld [vmem:[%s5 + $0x680] sm:$0xff]
    %v385 = vld [vmem:[%s5 + $0x688] sm:$0xff]
    %v386 = vld [vmem:[%s5 + $0x690] sm:$0xff]
    %v387 = vld [vmem:[%s5 + $0x698] sm:$0xff]
    %v388 = vld [vmem:[%s5 + $0x6a0] sm:$0xff]
    %v389 = vld [vmem:[%s5 + $0x6a8] sm:$0xff]
    %v390 = vld [vmem:[%s5 + $0x6b0] sm:$0xff]
    %v391 = vld [vmem:[%s5 + $0x6b8] sm:$0xff]
    %v392 = vld [vmem:[%s5 + $0x6c0] sm:$0xff]
    %v393 = vld [vmem:[%s5 + $0x6c8] sm:$0xff]
    %v394 = vld [vmem:[%s5 + $0x6d0] sm:$0xff]
    %v395 = vld [vmem:[%s5 + $0x6d8] sm:$0xff]
    %v396 = vld [vmem:[%s5 + $0x6e0] sm:$0xff]
    %v397 = vld [vmem:[%s5 + $0x6e8] sm:$0xff]
    %v398 = vld [vmem:[%s5 + $0x6f0] sm:$0xff]
    %v399 = vld [vmem:[%s5 + $0x6f8] sm:$0xff]
    %v400 = vld [vmem:[%s5 + $0x700] sm:$0xff]
    %v401 = vld [vmem:[%s5 + $0x708] sm:$0xff]
    %v402 = vld [vmem:[%s5 + $0x710] sm:$0xff]
    %v403 = vld [vmem:[%s5 + $0x718] sm:$0xff]
    %v404 = vld [vmem:[%s5 + $0x720] sm:$0xff]
    %v405 = vld [vmem:[%s5 + $0x728] sm:$0xff]
    %v406 = vld [vmem:[%s5 + $0x730] sm:$0xff]
    %v407 = vld [vmem:[%s5 + $0x738] sm:$0xff]
    %v408 = vld [vmem:[%s5 + $0x740] sm:$0xff]
    %v409 = vld [vmem:[%s5 + $0x748] sm:$0xff]
    %v410 = vld [vmem:[%s5 + $0x750] sm:$0xff]
    %v411 = vld [vmem:[%s5 + $0x758] sm:$0xff]
    %v412 = vld [vmem:[%s5 + $0x760] sm:$0xff]
    %v413 = vld [vmem:[%s5 + $0x768] sm:$0xff]
    %v414 = vld [vmem:[%s5 + $0x770] sm:$0xff]
    %v415 = vld [vmem:[%s5 + $0x778] sm:$0xff]
    %v416 = vld [vmem:[%s5 + $0x780] sm:$0xff]
    %v417 = vld [vmem:[%s5 + $0x788] sm:$0xff]
    %v418 = vld [vmem:[%s5 + $0x790] sm:$0xff]
    %v419 = vld [vmem:[%s5 + $0x798] sm:$0xff]
    %v420 = vld [vmem:[%s5 + $0x7a0] sm:$0xff]
    %v421 = vld [vmem:[%s5 + $0x7a8] sm:$0xff]
    %v422 = vld [vmem:[%s5 + $0x7b0] sm:$0xff]
    %v423 = vld [vmem:[%s5 + $0x7b8] sm:$0xff]
    %v424 = vld [vmem:[%s5 + $0x7c0] sm:$0xff]
    %v425 = vld [vmem:[%s5 + $0x7c8] sm:$0xff]
    %v426 = vld [vmem:[%s5 + $0x7d0] sm:$0xff]
    %v427 = vld [vmem:[%s5 + $0x7d8] sm:$0xff]
    %v428 = vld [vmem:[%s5 + $0x7e0] sm:$0xff]
    %v429 = vld [vmem:[%s5 + $0x7e8] sm:$0xff]
    %v430 = vld [vmem:[%s5 + $0x7f0] sm:$0xff]
    %v431 = vld [vmem:[%s5 + $0x7f8] sm:$0xff]
    %v432 = vld [vmem:[%s5 + $0x800] sm:$0xff]
    %v433 = vld [vmem:[%s5 + $0x808] sm:$0xff]
    %v434 = vld [vmem:[%s5 + $0x810] sm:$0xff]
    %v435 = vld [vmem:[%s5 + $0x818] sm:$0xff]
    %v436 = vld [vmem:[%s5 + $0x820] sm:$0xff]
    %v437 = vld [vmem:[%s5 + $0x828] sm:$0xff]
    %v438 = vld [vmem:[%s5 + $0x830] sm:$0xff]
    %v439 = vld [vmem:[%s5 + $0x838] sm:$0xff]
    %v440 = vld [vmem:[%s5 + $0x840] sm:$0xff]
    %v441 = vld [vmem:[%s5 + $0x848] sm:$0xff]
    %v442 = vld [vmem:[%s5 + $0x850] sm:$0xff]
    %v443 = vld [vmem:[%s5 + $0x858] sm:$0xff]
    %v444 = vld [vmem:[%s5 + $0x860] sm:$0xff]
    %v445 = vld [vmem:[%s5 + $0x868] sm:$0xff]
    %v446 = vld [vmem:[%s5 + $0x870] sm:$0xff]
    %v447 = vld [vmem:[%s5 + $0x878] sm:$0xff]
    %v448 = vld [vmem:[%s5 + $0x880] sm:$0xff]
    %v449 = vld [vmem:[%s5 + $0x888] sm:$0xff]
    %v450 = vld [vmem:[%s5 + $0x890] sm:$0xff]
    %v451 = vld [vmem:[%s5 + $0x898] sm:$0xff]
    %v452 = vld [vmem:[%s5 + $0x8a0] sm:$0xff]
    %v453 = vld [vmem:[%s5 + $0x8a8] sm:$0xff]
    %v454 = vld [vmem:[%s5 + $0x8b0] sm:$0xff]
    %v455 = vld [vmem:[%s5 + $0x8b8] sm:$0xff]
    %v456 = vld [vmem:[%s5 + $0x8c0] sm:$0xff]
    %v457 = vld [vmem:[%s5 + $0x8c8] sm:$0xff]
    %v458 = vld [vmem:[%s5 + $0x8d0] sm:$0xff]
    %v459 = vld [vmem:[%s5 + $0x8d8] sm:$0xff]
    %v460 = vld [vmem:[%s5 + $0x8e0] sm:$0xff]
    %v461 = vld [vmem:[%s5 + $0x8e8] sm:$0xff]
    %v462 = vld [vmem:[%s5 + $0x8f0] sm:$0xff]
    %v463 = vld [vmem:[%s5 + $0x8f8] sm:$0xff]
    %v464 = vld [vmem:[%s5 + $0x900] sm:$0xff]
    %v465 = vld [vmem:[%s5 + $0x908] sm:$0xff]
    %v466 = vld [vmem:[%s5 + $0x910] sm:$0xff]
    %v467 = vld [vmem:[%s5 + $0x918] sm:$0xff]
    %v468 = vld [vmem:[%s5 + $0x920] sm:$0xff]
    %v469 = vld [vmem:[%s5 + $0x928] sm:$0xff]
    %v470 = vld [vmem:[%s5 + $0x930] sm:$0xff]
    %v471 = vld [vmem:[%s5 + $0x938] sm:$0xff]
    %v472 = vld [vmem:[%s5 + $0x940] sm:$0xff]
    %v473 = vld [vmem:[%s5 + $0x948] sm:$0xff]
    %v474 = vld [vmem:[%s5 + $0x950] sm:$0xff]
    %v475 = vld [vmem:[%s5 + $0x958] sm:$0xff]
    %v476 = vld [vmem:[%s5 + $0x960] sm:$0xff]
    %v477 = vld [vmem:[%s5 + $0x968] sm:$0xff]
    %v478 = vld [vmem:[%s5 + $0x970] sm:$0xff]
    %v479 = vld [vmem:[%s5 + $0x978] sm:$0xff]
    %v480 = vld [vmem:[%s5 + $0x980] sm:$0xff]
    %v481 = vld [vmem:[%s5 + $0x988] sm:$0xff]
    %v482 = vld [vmem:[%s5 + $0x990] sm:$0xff]
    %v483 = vld [vmem:[%s5 + $0x998] sm:$0xff]
    %v484 = vld [vmem:[%s5 + $0x9a0] sm:$0xff]
    %v485 = vld [vmem:[%s5 + $0x9a8] sm:$0xff]
    %v486 = vld [vmem:[%s5 + $0x9b0] sm:$0xff]
    %v487 = vld [vmem:[%s5 + $0x9b8] sm:$0xff]
    %v488 = vld [vmem:[%s5 + $0x9c0] sm:$0xff]
    %v489 = vld [vmem:[%s5 + $0x9c8] sm:$0xff]
    %v490 = vld [vmem:[%s5 + $0x9d0] sm:$0xff]
    %v491 = vld [vmem:[%s5 + $0x9d8] sm:$0xff]
    %v492 = vld [vmem:[%s5 + $0x9e0] sm:$0xff]
    %v493 = vld [vmem:[%s5 + $0x9e8] sm:$0xff]
    %v494 = vld [vmem:[%s5 + $0x9f0] sm:$0xff]
    %v495 = vld [vmem:[%s5 + $0x9f8] sm:$0xff]
    %v496 = vld [vmem:[%s5 + $0xa00] sm:$0xff]
    %v497 = vld [vmem:[%s5 + $0xa08] sm:$0xff]
    %v498 = vld [vmem:[%s5 + $0xa10] sm:$0xff]
    %v499 = vld [vmem:[%s5 + $0xa18] sm:$0xff]
    %v500 = vld [vmem:[%s5 + $0xa20] sm:$0xff]
    %v501 = vld [vmem:[%s5 + $0xa28] sm:$0xff]
    %v502 = vld [vmem:[%s5 + $0xa30] sm:$0xff]
    %v503 = vld [vmem:[%s5 + $0xa38] sm:$0xff]
    %v504 = vld [vmem:[%s5 + $0xa40] sm:$0xff]
    %v505 = vld [vmem:[%s5 + $0xa48] sm:$0xff]
    %v506 = vld [vmem:[%s5 + $0xa50] sm:$0xff]
    %v507 = vld [vmem:[%s5 + $0xa58] sm:$0xff]
    %v508 = vld [vmem:[%s5 + $0xa60] sm:$0xff]
    %v509 = vld [vmem:[%s5 + $0xa68] sm:$0xff]
    %v510 = vld [vmem:[%s5 + $0xa70] sm:$0xff]
    %v511 = vld [vmem:[%s5 + $0xa78] sm:$0xff]
    %v512 = vld [vmem:[%s5 + $0xa80] sm:$0xff]
    %v513 = vld [vmem:[%s5 + $0xa88] sm:$0xff]
    %v514 = vld [vmem:[%s5 + $0xa90] sm:$0xff]
    %v515 = vld [vmem:[%s5 + $0xa98] sm:$0xff]
    %v516 = vld [vmem:[%s5 + $0xaa0] sm:$0xff]
    %v517 = vld [vmem:[%s5 + $0xaa8] sm:$0xff]
    %v518 = vld [vmem:[%s5 + $0xab0] sm:$0xff]
    %v519 = vld [vmem:[%s5 + $0xab8] sm:$0xff]
    %v520 = vld [vmem:[%s5 + $0xac0] sm:$0xff]
    %v521 = vld [vmem:[%s5 + $0xac8] sm:$0xff]
    %v522 = vld [vmem:[%s5 + $0xad0] sm:$0xff]
    %v523 = vld [vmem:[%s5 + $0xad8] sm:$0xff]
    %v524 = vld [vmem:[%s5 + $0xae0] sm:$0xff]
    %v525 = vld [vmem:[%s5 + $0xae8] sm:$0xff]
    %v526 = vld [vmem:[%s5 + $0xaf0] sm:$0xff]
    %v527 = vld [vmem:[%s5 + $0xaf8] sm:$0xff]
    %v528 = vld [vmem:[%s5 + $0xb00] sm:$0xff]
    %v529 = vld [vmem:[%s5 + $0xb08] sm:$0xff]
    %v530 = vld [vmem:[%s5 + $0xb10] sm:$0xff]
    %v531 = vld [vmem:[%s5 + $0xb18] sm:$0xff]
    %v532 = vld [vmem:[%s5 + $0xb20] sm:$0xff]
    %v533 = vld [vmem:[%s5 + $0xb28] sm:$0xff]
    %v534 = vld [vmem:[%s5 + $0xb30] sm:$0xff]
    %v535 = vld [vmem:[%s5 + $0xb38] sm:$0xff]
    %v536 = vld [vmem:[%s5 + $0xb40] sm:$0xff]
    %v537 = vld [vmem:[%s5 + $0xb48] sm:$0xff]
    %v538 = vld [vmem:[%s5 + $0xb50] sm:$0xff]
    %v539 = vld [vmem:[%s5 + $0xb58] sm:$0xff]
    %v540 = vld [vmem:[%s5 + $0xb60] sm:$0xff]
    %v541 = vld [vmem:[%s5 + $0xb68] sm:$0xff]
    %v542 = vld [vmem:[%s5 + $0xb70] sm:$0xff]
    %v543 = vld [vmem:[%s5 + $0xb78] sm:$0xff]
    %v544 = vld [vmem:[%s5 + $0xb80] sm:$0xff]
    %v545 = vld [vmem:[%s5 + $0xb88] sm:$0xff]
    %v546 = vld [vmem:[%s5 + $0xb90] sm:$0xff]
    %v547 = vld [vmem:[%s5 + $0xb98] sm:$0xff]
    %v548 = vld [vmem:[%s5 + $0xba0] sm:$0xff]
    %v549 = vld [vmem:[%s5 + $0xba8] sm:$0xff]
    %v550 = vld [vmem:[%s5 + $0xbb0] sm:$0xff]
    %v551 = vld [vmem:[%s5 + $0xbb8] sm:$0xff]
    %v552 = vld [vmem:[%s5 + $0xbc0] sm:$0xff]
    %v553 = vld [vmem:[%s5 + $0xbc8] sm:$0xff]
    %v554 = vld [vmem:[%s5 + $0xbd0] sm:$0xff]
    %v555 = vld [vmem:[%s5 + $0xbd8] sm:$0xff]
    %v556 = vld [vmem:[%s5 + $0xbe0] sm:$0xff]
    %v557 = vld [vmem:[%s5 + $0xbe8] sm:$0xff]
    %v558 = vld [vmem:[%s5 + $0xbf0] sm:$0xff]
    %v559 = vld [vmem:[%s5 + $0xbf8] sm:$0xff]
    %v560 = vld [vmem:[%s5 + $0xc00] sm:$0xff]
    %v561 = vld [vmem:[%s5 + $0xc08] sm:$0xff]
    %v562 = vld [vmem:[%s5 + $0xc10] sm:$0xff]
    %v563 = vld [vmem:[%s5 + $0xc18] sm:$0xff]
    %v564 = vld [vmem:[%s5 + $0xc20] sm:$0xff]
    %v565 = vld [vmem:[%s5 + $0xc28] sm:$0xff]
    %v566 = vld [vmem:[%s5 + $0xc30] sm:$0xff]
    %v567 = vld [vmem:[%s5 + $0xc38] sm:$0xff]
    %v568 = vld [vmem:[%s5 + $0xc40] sm:$0xff]
    %v569 = vld [vmem:[%s5 + $0xc48] sm:$0xff]
    %v570 = vld [vmem:[%s5 + $0xc50] sm:$0xff]
    %v571 = vld [vmem:[%s5 + $0xc58] sm:$0xff]
    %v572 = vld [vmem:[%s5 + $0xc60] sm:$0xff]
    %v573 = vld [vmem:[%s5 + $0xc68] sm:$0xff]
    %v574 = vld [vmem:[%s5 + $0xc70] sm:$0xff]
    %v575 = vld [vmem:[%s5 + $0xc78] sm:$0xff]
    %v576 = vld [vmem:[%s5 + $0xc80] sm:$0xff]
    %v577 = vld [vmem:[%s5 + $0xc88] sm:$0xff]
    %v578 = vld [vmem:[%s5 + $0xc90] sm:$0xff]
    %v579 = vld [vmem:[%s5 + $0xc98] sm:$0xff]
    %v580 = vld [vmem:[%s5 + $0xca0] sm:$0xff]
    %v581 = vld [vmem:[%s5 + $0xca8] sm:$0xff]
    %v582 = vld [vmem:[%s5 + $0xcb0] sm:$0xff]
    %v583 = vld [vmem:[%s5 + $0xcb8] sm:$0xff]
    %v584 = vld [vmem:[%s5 + $0xcc0] sm:$0xff]
    %v585 = vld [vmem:[%s5 + $0xcc8] sm:$0xff]
    %v586 = vld [vmem:[%s5 + $0xcd0] sm:$0xff]
    %v587 = vld [vmem:[%s5 + $0xcd8] sm:$0xff]
    %v588 = vld [vmem:[%s5 + $0xce0] sm:$0xff]
    %v589 = vld [vmem:[%s5 + $0xce8] sm:$0xff]
    %v590 = vld [vmem:[%s5 + $0xcf0] sm:$0xff]
    %v591 = vld [vmem:[%s5 + $0xcf8] sm:$0xff]
    %v592 = vld [vmem:[%s5 + $0xd00] sm:$0xff]
    %v593 = vld [vmem:[%s5 + $0xd08] sm:$0xff]
    %v594 = vld [vmem:[%s5 + $0xd10] sm:$0xff]
    %v595 = vld [vmem:[%s5 + $0xd18] sm:$0xff]
    %v596 = vld [vmem:[%s5 + $0xd20] sm:$0xff]
    %v597 = vld [vmem:[%s5 + $0xd28] sm:$0xff]
    %v598 = vld [vmem:[%s5 + $0xd30] sm:$0xff]
    %v599 = vld [vmem:[%s5 + $0xd38] sm:$0xff]
    %v600 = vld [vmem:[%s5 + $0xd40] sm:$0xff]
    %v601 = vld [vmem:[%s5 + $0xd48] sm:$0xff]
    %v602 = vld [vmem:[%s5 + $0xd50] sm:$0xff]
    %v603 = vld [vmem:[%s5 + $0xd58] sm:$0xff]
    %v604 = vld [vmem:[%s5 + $0xd60] sm:$0xff]
    %v605 = vld [vmem:[%s5 + $0xd68] sm:$0xff]
    %v606 = vld [vmem:[%s5 + $0xd70] sm:$0xff]
    %v607 = vld [vmem:[%s5 + $0xd78] sm:$0xff]
    %v608 = vld [vmem:[#allocation10] sm:$0x3f]
    %v610 = vlaneseq
    %v611 = vshrl.u32 %v610, 7
    %v612 = vsub.s32 0, %v611
    %v613 = vrot.slane %v608, %v612
    %v614 = vlaneseq
    %v615 = vshrl.u32 %v614, 7
    %v616 = vsub.s32 1, %v615
    %v617 = vrot.slane %v608, %v616
    %v618 = vlaneseq
    %v619 = vshrl.u32 %v618, 7
    %v620 = vsub.s32 2, %v619
    %v621 = vrot.slane %v608, %v620
    %v622 = vlaneseq
    %v623 = vshrl.u32 %v622, 7
    %v624 = vsub.s32 3, %v623
    %v625 = vrot.slane %v608, %v624
    %v626 = vlaneseq
    %v627 = vshrl.u32 %v626, 7
    %v628 = vsub.s32 4, %v627
    %v629 = vrot.slane %v608, %v628
    %v630 = vlaneseq
    %v631 = vshrl.u32 %v630, 7
    %v632 = vsub.s32 5, %v631
    %v633 = vrot.slane %v608, %v632
    %v645 = vunpack.c.l.b16 %v171
    %v646 = vunpack.c.h.b16 %v171
    %v647 = vunpack.c.l.b16 %v172
    %v648 = vunpack.c.h.b16 %v172
    %v649 = vunpack.c.l.b16 %v173
    %v650 = vunpack.c.h.b16 %v173
    %v651 = vunpack.c.l.b16 %v174
    %v652 = vunpack.c.h.b16 %v174
    %v653 = vunpack.c.l.b16 %v175
    %v654 = vpack.c.b16 %v645, %v645
    %v655 = vpack.c.b16 %v646, %v646
    %v656 = vpack.c.b16 %v647, %v647
    %v657 = vpack.c.b16 %v648, %v648
    %v658 = vpack.c.b16 %v649, %v649
    %v659 = vpack.c.b16 %v650, %v650
    %v660 = vpack.c.b16 %v651, %v651
    %v661 = vpack.c.b16 %v652, %v652
    %v662 = vpack.c.b16 %v653, %v653
    %v1104 = vunpack.c.l.b16 %v176
    %v1105 = vunpack.c.h.b16 %v176
    %v1106 = vunpack.c.l.b16 %v177
    %v1107 = vunpack.c.h.b16 %v177
    %v1108 = vunpack.c.l.b16 %v178
    %v1109 = vunpack.c.h.b16 %v178
    %v1110 = vunpack.c.l.b16 %v179
    %v1111 = vunpack.c.h.b16 %v179
    %v1112 = vunpack.c.l.b16 %v180
    %v1113 = vunpack.c.h.b16 %v180
    %v1114 = vunpack.c.l.b16 %v181
    %v1115 = vunpack.c.h.b16 %v181
    %v1116 = vunpack.c.l.b16 %v182
    %v1117 = vunpack.c.h.b16 %v182
    %v1118 = vunpack.c.l.b16 %v183
    %v1119 = vunpack.c.h.b16 %v183
    %v1120 = vunpack.c.l.b16 %v184
    %v1121 = vunpack.c.h.b16 %v184
    %v1122 = vunpack.c.l.b16 %v185
    %v1123 = vunpack.c.h.b16 %v185
    %v1124 = vunpack.c.l.b16 %v186
    %v1125 = vunpack.c.h.b16 %v186
    %v1126 = vunpack.c.l.b16 %v187
    %v1127 = vunpack.c.h.b16 %v187
    %v1128 = vunpack.c.l.b16 %v188
    %v1129 = vunpack.c.h.b16 %v188
    %v1130 = vunpack.c.l.b16 %v189
    %v1131 = vunpack.c.h.b16 %v189
    %v1132 = vunpack.c.l.b16 %v190
    %v1133 = vunpack.c.h.b16 %v190
    %v1134 = vunpack.c.l.b16 %v191
    %v1135 = vunpack.c.h.b16 %v191
    %v1136 = vunpack.c.l.b16 %v192
    %v1137 = vunpack.c.h.b16 %v192
    %v1138 = vunpack.c.l.b16 %v193
    %v1139 = vunpack.c.h.b16 %v193
    %v1140 = vunpack.c.l.b16 %v194
    %v1141 = vunpack.c.h.b16 %v194
    %v1142 = vunpack.c.l.b16 %v195
    %v1143 = vunpack.c.h.b16 %v195
    %v1144 = vunpack.c.l.b16 %v196
    %v1145 = vunpack.c.h.b16 %v196
    %v1146 = vunpack.c.l.b16 %v197
    %v1147 = vunpack.c.h.b16 %v197
    %v1148 = vunpack.c.l.b16 %v198
    %v1149 = vunpack.c.h.b16 %v198
    %v1150 = vunpack.c.l.b16 %v199
    %v1151 = vunpack.c.h.b16 %v199
    %v1152 = vunpack.c.l.b16 %v200
    %v1153 = vunpack.c.h.b16 %v200
    %v1154 = vunpack.c.l.b16 %v201
    %v1155 = vunpack.c.h.b16 %v201
    %v1156 = vunpack.c.l.b16 %v202
    %v1157 = vunpack.c.h.b16 %v202
    %v1158 = vunpack.c.l.b16 %v203
    %v1159 = vunpack.c.h.b16 %v203
    %v1160 = vunpack.c.l.b16 %v204
    %v1161 = vunpack.c.h.b16 %v204
    %v1162 = vunpack.c.l.b16 %v205
    %v1163 = vunpack.c.h.b16 %v205
    %v1164 = vunpack.c.l.b16 %v206
    %v1165 = vunpack.c.h.b16 %v206
    %v1166 = vunpack.c.l.b16 %v207
    %v1167 = vunpack.c.h.b16 %v207
    %v1168 = vunpack.c.l.b16 %v208
    %v1169 = vunpack.c.h.b16 %v208
    %v1170 = vunpack.c.l.b16 %v209
    %v1171 = vunpack.c.h.b16 %v209
    %v1172 = vunpack.c.l.b16 %v210
    %v1173 = vunpack.c.h.b16 %v210
    %v1174 = vunpack.c.l.b16 %v211
    %v1175 = vunpack.c.h.b16 %v211
    %v1176 = vunpack.c.l.b16 %v212
    %v1177 = vunpack.c.h.b16 %v212
    %v1178 = vunpack.c.l.b16 %v213
    %v1179 = vunpack.c.h.b16 %v213
    %v1180 = vunpack.c.l.b16 %v214
    %v1181 = vunpack.c.h.b16 %v214
    %v1182 = vunpack.c.l.b16 %v215
    %v1183 = vunpack.c.h.b16 %v215
    %v1184 = vunpack.c.l.b16 %v216
    %v1185 = vunpack.c.h.b16 %v216
    %v1186 = vunpack.c.l.b16 %v217
    %v1187 = vunpack.c.h.b16 %v217
    %v1188 = vunpack.c.l.b16 %v218
    %v1189 = vunpack.c.h.b16 %v218
    %v1190 = vunpack.c.l.b16 %v219
    %v1191 = vunpack.c.h.b16 %v219
    %v1192 = vunpack.c.l.b16 %v220
    %v1193 = vunpack.c.h.b16 %v220
    %v1194 = vunpack.c.l.b16 %v221
    %v1195 = vunpack.c.h.b16 %v221
    %v1196 = vunpack.c.l.b16 %v222
    %v1197 = vunpack.c.h.b16 %v222
    %v1198 = vunpack.c.l.b16 %v223
    %v1199 = vunpack.c.h.b16 %v223
    %v1200 = vunpack.c.l.b16 %v224
    %v1201 = vunpack.c.h.b16 %v224
    %v1202 = vunpack.c.l.b16 %v225
    %v1203 = vunpack.c.h.b16 %v225
    %v1204 = vunpack.c.l.b16 %v226
    %v1205 = vunpack.c.h.b16 %v226
    %v1206 = vunpack.c.l.b16 %v227
    %v1207 = vunpack.c.h.b16 %v227
    %v1208 = vunpack.c.l.b16 %v228
    %v1209 = vunpack.c.h.b16 %v228
    %v1210 = vunpack.c.l.b16 %v229
    %v1211 = vunpack.c.h.b16 %v229
    %v1212 = vunpack.c.l.b16 %v230
    %v1213 = vunpack.c.h.b16 %v230
    %v1214 = vunpack.c.l.b16 %v231
    %v1215 = vunpack.c.h.b16 %v231
    %v1216 = vunpack.c.l.b16 %v232
    %v1217 = vunpack.c.h.b16 %v232
    %v1218 = vunpack.c.l.b16 %v233
    %v1219 = vunpack.c.h.b16 %v233
    %v1220 = vunpack.c.l.b16 %v234
    %v1221 = vunpack.c.h.b16 %v234
    %v1222 = vunpack.c.l.b16 %v235
    %v1223 = vunpack.c.h.b16 %v235
    %v1224 = vunpack.c.l.b16 %v236
    %v1225 = vunpack.c.h.b16 %v236
    %v1226 = vunpack.c.l.b16 %v237
    %v1227 = vunpack.c.h.b16 %v237
    %v1228 = vunpack.c.l.b16 %v238
    %v1229 = vunpack.c.h.b16 %v238
    %v1230 = vunpack.c.l.b16 %v239
    %v1231 = vunpack.c.h.b16 %v239
    %v1232 = vunpack.c.l.b16 %v240
    %v1233 = vunpack.c.h.b16 %v240
    %v1234 = vunpack.c.l.b16 %v241
    %v1235 = vunpack.c.h.b16 %v241
    %v1236 = vunpack.c.l.b16 %v242
    %v1237 = vunpack.c.h.b16 %v242
    %v1238 = vunpack.c.l.b16 %v243
    %v1239 = vunpack.c.h.b16 %v243
    %v1240 = vunpack.c.l.b16 %v244
    %v1241 = vunpack.c.h.b16 %v244
    %v1242 = vunpack.c.l.b16 %v245
    %v1243 = vunpack.c.h.b16 %v245
    %v1244 = vunpack.c.l.b16 %v246
    %v1245 = vunpack.c.h.b16 %v246
    %v1246 = vunpack.c.l.b16 %v247
    %v1247 = vunpack.c.h.b16 %v247
    %v1248 = vunpack.c.l.b16 %v248
    %v1249 = vunpack.c.h.b16 %v248
    %v1250 = vunpack.c.l.b16 %v249
    %v1251 = vunpack.c.h.b16 %v249
    %v1252 = vunpack.c.l.b16 %v250
    %v1253 = vunpack.c.h.b16 %v250
    %v1254 = vunpack.c.l.b16 %v251
    %v1255 = vunpack.c.h.b16 %v251
    %v1256 = vunpack.c.l.b16 %v252
    %v1257 = vunpack.c.h.b16 %v252
    %v1258 = vunpack.c.l.b16 %v253
    %v1259 = vunpack.c.h.b16 %v253
    %v1260 = vunpack.c.l.b16 %v254
    %v1261 = vunpack.c.h.b16 %v254
    %v1262 = vunpack.c.l.b16 %v255
    %v1263 = vunpack.c.h.b16 %v255
    %v1264 = vunpack.c.l.b16 %v256
    %v1265 = vunpack.c.h.b16 %v256
    %v1266 = vunpack.c.l.b16 %v257
    %v1267 = vunpack.c.h.b16 %v257
    %v1268 = vunpack.c.l.b16 %v258
    %v1269 = vunpack.c.h.b16 %v258
    %v1270 = vunpack.c.l.b16 %v259
    %v1271 = vunpack.c.h.b16 %v259
    %v1272 = vunpack.c.l.b16 %v260
    %v1273 = vunpack.c.h.b16 %v260
    %v1274 = vunpack.c.l.b16 %v261
    %v1275 = vunpack.c.h.b16 %v261
    %v1276 = vunpack.c.l.b16 %v262
    %v1277 = vunpack.c.h.b16 %v262
    %v1278 = vunpack.c.l.b16 %v263
    %v1279 = vunpack.c.h.b16 %v263
    %v1280 = vunpack.c.l.b16 %v264
    %v1281 = vunpack.c.h.b16 %v264
    %v1282 = vunpack.c.l.b16 %v265
    %v1283 = vunpack.c.h.b16 %v265
    %v1284 = vunpack.c.l.b16 %v266
    %v1285 = vunpack.c.h.b16 %v266
    %v1286 = vunpack.c.l.b16 %v267
    %v1287 = vunpack.c.h.b16 %v267
    %v1288 = vunpack.c.l.b16 %v268
    %v1289 = vunpack.c.h.b16 %v268
    %v1290 = vunpack.c.l.b16 %v269
    %v1291 = vunpack.c.h.b16 %v269
    %v1292 = vunpack.c.l.b16 %v270
    %v1293 = vunpack.c.h.b16 %v270
    %v1294 = vunpack.c.l.b16 %v271
    %v1295 = vunpack.c.h.b16 %v271
    %v1296 = vunpack.c.l.b16 %v272
    %v1297 = vunpack.c.h.b16 %v272
    %v1298 = vunpack.c.l.b16 %v273
    %v1299 = vunpack.c.h.b16 %v273
    %v1300 = vunpack.c.l.b16 %v274
    %v1301 = vunpack.c.h.b16 %v274
    %v1302 = vunpack.c.l.b16 %v275
    %v1303 = vunpack.c.h.b16 %v275
    %v1304 = vunpack.c.l.b16 %v276
    %v1305 = vunpack.c.h.b16 %v276
    %v1306 = vunpack.c.l.b16 %v277
    %v1307 = vunpack.c.h.b16 %v277
    %v1308 = vunpack.c.l.b16 %v278
    %v1309 = vunpack.c.h.b16 %v278
    %v1310 = vunpack.c.l.b16 %v279
    %v1311 = vunpack.c.h.b16 %v279
    %v1312 = vunpack.c.l.b16 %v280
    %v1313 = vunpack.c.h.b16 %v280
    %v1314 = vunpack.c.l.b16 %v281
    %v1315 = vunpack.c.h.b16 %v281
    %v1316 = vunpack.c.l.b16 %v282
    %v1317 = vunpack.c.h.b16 %v282
    %v1318 = vunpack.c.l.b16 %v283
    %v1319 = vunpack.c.h.b16 %v283
    %v1320 = vunpack.c.l.b16 %v284
    %v1321 = vunpack.c.h.b16 %v284
    %v1322 = vunpack.c.l.b16 %v285
    %v1323 = vunpack.c.h.b16 %v285
    %v1324 = vunpack.c.l.b16 %v286
    %v1325 = vunpack.c.h.b16 %v286
    %v1326 = vunpack.c.l.b16 %v287
    %v1327 = vunpack.c.h.b16 %v287
    %v1328 = vunpack.c.l.b16 %v288
    %v1329 = vunpack.c.h.b16 %v288
    %v1330 = vunpack.c.l.b16 %v289
    %v1331 = vunpack.c.h.b16 %v289
    %v1332 = vunpack.c.l.b16 %v290
    %v1333 = vunpack.c.h.b16 %v290
    %v1334 = vunpack.c.l.b16 %v291
    %v1335 = vunpack.c.h.b16 %v291
    %v1336 = vunpack.c.l.b16 %v292
    %v1337 = vunpack.c.h.b16 %v292
    %v1338 = vunpack.c.l.b16 %v293
    %v1339 = vunpack.c.h.b16 %v293
    %v1340 = vunpack.c.l.b16 %v294
    %v1341 = vunpack.c.h.b16 %v294
    %v1342 = vunpack.c.l.b16 %v295
    %v1343 = vunpack.c.h.b16 %v295
    %v1344 = vunpack.c.l.b16 %v296
    %v1345 = vunpack.c.h.b16 %v296
    %v1346 = vunpack.c.l.b16 %v297
    %v1347 = vunpack.c.h.b16 %v297
    %v1348 = vunpack.c.l.b16 %v298
    %v1349 = vunpack.c.h.b16 %v298
    %v1350 = vunpack.c.l.b16 %v299
    %v1351 = vunpack.c.h.b16 %v299
    %v1352 = vunpack.c.l.b16 %v300
    %v1353 = vunpack.c.h.b16 %v300
    %v1354 = vunpack.c.l.b16 %v301
    %v1355 = vunpack.c.h.b16 %v301
    %v1356 = vunpack.c.l.b16 %v302
    %v1357 = vunpack.c.h.b16 %v302
    %v1358 = vunpack.c.l.b16 %v303
    %v1359 = vunpack.c.h.b16 %v303
    %v1360 = vunpack.c.l.b16 %v304
    %v1361 = vunpack.c.h.b16 %v304
    %v1362 = vunpack.c.l.b16 %v305
    %v1363 = vunpack.c.h.b16 %v305
    %v1364 = vunpack.c.l.b16 %v306
    %v1365 = vunpack.c.h.b16 %v306
    %v1366 = vunpack.c.l.b16 %v307
    %v1367 = vunpack.c.h.b16 %v307
    %v1368 = vunpack.c.l.b16 %v308
    %v1369 = vunpack.c.h.b16 %v308
    %v1370 = vunpack.c.l.b16 %v309
    %v1371 = vunpack.c.h.b16 %v309
    %v1372 = vunpack.c.l.b16 %v310
    %v1373 = vunpack.c.h.b16 %v310
    %v1374 = vunpack.c.l.b16 %v311
    %v1375 = vunpack.c.h.b16 %v311
    %v1376 = vunpack.c.l.b16 %v312
    %v1377 = vunpack.c.h.b16 %v312
    %v1378 = vunpack.c.l.b16 %v313
    %v1379 = vunpack.c.h.b16 %v313
    %v1380 = vunpack.c.l.b16 %v314
    %v1381 = vunpack.c.h.b16 %v314
    %v1382 = vunpack.c.l.b16 %v315
    %v1383 = vunpack.c.h.b16 %v315
    %v1384 = vunpack.c.l.b16 %v316
    %v1385 = vunpack.c.h.b16 %v316
    %v1386 = vunpack.c.l.b16 %v317
    %v1387 = vunpack.c.h.b16 %v317
    %v1388 = vunpack.c.l.b16 %v318
    %v1389 = vunpack.c.h.b16 %v318
    %v1390 = vunpack.c.l.b16 %v319
    %v1391 = vunpack.c.h.b16 %v319
    %v1392 = vunpack.c.l.b16 %v320
    %v1393 = vunpack.c.h.b16 %v320
    %v1394 = vunpack.c.l.b16 %v321
    %v1395 = vunpack.c.h.b16 %v321
    %v1396 = vunpack.c.l.b16 %v322
    %v1397 = vunpack.c.h.b16 %v322
    %v1398 = vunpack.c.l.b16 %v323
    %v1399 = vunpack.c.h.b16 %v323
    %v1400 = vunpack.c.l.b16 %v324
    %v1401 = vunpack.c.h.b16 %v324
    %v1402 = vunpack.c.l.b16 %v325
    %v1403 = vunpack.c.h.b16 %v325
    %v1404 = vunpack.c.l.b16 %v326
    %v1405 = vunpack.c.h.b16 %v326
    %v1406 = vunpack.c.l.b16 %v327
    %v1407 = vunpack.c.h.b16 %v327
    %v1408 = vunpack.c.l.b16 %v328
    %v1409 = vunpack.c.h.b16 %v328
    %v1410 = vunpack.c.l.b16 %v329
    %v1411 = vunpack.c.h.b16 %v329
    %v1412 = vunpack.c.l.b16 %v330
    %v1413 = vunpack.c.h.b16 %v330
    %v1414 = vunpack.c.l.b16 %v331
    %v1415 = vunpack.c.h.b16 %v331
    %v1416 = vunpack.c.l.b16 %v332
    %v1417 = vunpack.c.h.b16 %v332
    %v1418 = vunpack.c.l.b16 %v333
    %v1419 = vunpack.c.h.b16 %v333
    %v1420 = vunpack.c.l.b16 %v334
    %v1421 = vunpack.c.h.b16 %v334
    %v1422 = vunpack.c.l.b16 %v335
    %v1423 = vunpack.c.h.b16 %v335
    %v1424 = vunpack.c.l.b16 %v336
    %v1425 = vunpack.c.h.b16 %v336
    %v1426 = vunpack.c.l.b16 %v337
    %v1427 = vunpack.c.h.b16 %v337
    %v1428 = vunpack.c.l.b16 %v338
    %v1429 = vunpack.c.h.b16 %v338
    %v1430 = vunpack.c.l.b16 %v339
    %v1431 = vunpack.c.h.b16 %v339
    %v1432 = vunpack.c.l.b16 %v340
    %v1433 = vunpack.c.h.b16 %v340
    %v1434 = vunpack.c.l.b16 %v341
    %v1435 = vunpack.c.h.b16 %v341
    %v1436 = vunpack.c.l.b16 %v342
    %v1437 = vunpack.c.h.b16 %v342
    %v1438 = vunpack.c.l.b16 %v343
    %v1439 = vunpack.c.h.b16 %v343
    %v1440 = vunpack.c.l.b16 %v344
    %v1441 = vunpack.c.h.b16 %v344
    %v1442 = vunpack.c.l.b16 %v345
    %v1443 = vunpack.c.h.b16 %v345
    %v1444 = vunpack.c.l.b16 %v346
    %v1445 = vunpack.c.h.b16 %v346
    %v1446 = vunpack.c.l.b16 %v347
    %v1447 = vunpack.c.h.b16 %v347
    %v1448 = vunpack.c.l.b16 %v348
    %v1449 = vunpack.c.h.b16 %v348
    %v1450 = vunpack.c.l.b16 %v349
    %v1451 = vunpack.c.h.b16 %v349
    %v1452 = vunpack.c.l.b16 %v350
    %v1453 = vunpack.c.h.b16 %v350
    %v1454 = vunpack.c.l.b16 %v351
    %v1455 = vunpack.c.h.b16 %v351
    %v1456 = vunpack.c.l.b16 %v352
    %v1457 = vunpack.c.h.b16 %v352
    %v1458 = vunpack.c.l.b16 %v353
    %v1459 = vunpack.c.h.b16 %v353
    %v1460 = vunpack.c.l.b16 %v354
    %v1461 = vunpack.c.h.b16 %v354
    %v1462 = vunpack.c.l.b16 %v355
    %v1463 = vunpack.c.h.b16 %v355
    %v1464 = vunpack.c.l.b16 %v356
    %v1465 = vunpack.c.h.b16 %v356
    %v1466 = vunpack.c.l.b16 %v357
    %v1467 = vunpack.c.h.b16 %v357
    %v1468 = vunpack.c.l.b16 %v358
    %v1469 = vunpack.c.h.b16 %v358
    %v1470 = vunpack.c.l.b16 %v359
    %v1471 = vunpack.c.h.b16 %v359
    %v1472 = vunpack.c.l.b16 %v360
    %v1473 = vunpack.c.h.b16 %v360
    %v1474 = vunpack.c.l.b16 %v361
    %v1475 = vunpack.c.h.b16 %v361
    %v1476 = vunpack.c.l.b16 %v362
    %v1477 = vunpack.c.h.b16 %v362
    %v1478 = vunpack.c.l.b16 %v363
    %v1479 = vunpack.c.h.b16 %v363
    %v1480 = vunpack.c.l.b16 %v364
    %v1481 = vunpack.c.h.b16 %v364
    %v1482 = vunpack.c.l.b16 %v365
    %v1483 = vunpack.c.h.b16 %v365
    %v1484 = vunpack.c.l.b16 %v366
    %v1485 = vunpack.c.h.b16 %v366
    %v1486 = vunpack.c.l.b16 %v367
    %v1487 = vunpack.c.h.b16 %v367
    %v1488 = vunpack.c.l.b16 %v368
    %v1489 = vunpack.c.h.b16 %v368
    %v1490 = vunpack.c.l.b16 %v369
    %v1491 = vunpack.c.h.b16 %v369
    %v1492 = vunpack.c.l.b16 %v370
    %v1493 = vunpack.c.h.b16 %v370
    %v1494 = vunpack.c.l.b16 %v371
    %v1495 = vunpack.c.h.b16 %v371
    %v1496 = vunpack.c.l.b16 %v372
    %v1497 = vunpack.c.h.b16 %v372
    %v1498 = vunpack.c.l.b16 %v373
    %v1499 = vunpack.c.h.b16 %v373
    %v1500 = vunpack.c.l.b16 %v374
    %v1501 = vunpack.c.h.b16 %v374
    %v1502 = vunpack.c.l.b16 %v375
    %v1503 = vunpack.c.h.b16 %v375
    %v1504 = vunpack.c.l.b16 %v376
    %v1505 = vunpack.c.h.b16 %v376
    %v1506 = vunpack.c.l.b16 %v377
    %v1507 = vunpack.c.h.b16 %v377
    %v1508 = vunpack.c.l.b16 %v378
    %v1509 = vunpack.c.h.b16 %v378
    %v1510 = vunpack.c.l.b16 %v379
    %v1511 = vunpack.c.h.b16 %v379
    %v1512 = vunpack.c.l.b16 %v380
    %v1513 = vunpack.c.h.b16 %v380
    %v1514 = vunpack.c.l.b16 %v381
    %v1515 = vunpack.c.h.b16 %v381
    %v1516 = vunpack.c.l.b16 %v382
    %v1517 = vunpack.c.h.b16 %v382
    %v1518 = vunpack.c.l.b16 %v383
    %v1519 = vunpack.c.h.b16 %v383
    %v1520 = vunpack.c.l.b16 %v384
    %v1521 = vunpack.c.h.b16 %v384
    %v1522 = vunpack.c.l.b16 %v385
    %v1523 = vunpack.c.h.b16 %v385
    %v1524 = vunpack.c.l.b16 %v386
    %v1525 = vunpack.c.h.b16 %v386
    %v1526 = vunpack.c.l.b16 %v387
    %v1527 = vunpack.c.h.b16 %v387
    %v1528 = vunpack.c.l.b16 %v388
    %v1529 = vunpack.c.h.b16 %v388
    %v1530 = vunpack.c.l.b16 %v389
    %v1531 = vunpack.c.h.b16 %v389
    %v1532 = vunpack.c.l.b16 %v390
    %v1533 = vunpack.c.h.b16 %v390
    %v1534 = vunpack.c.l.b16 %v391
    %v1535 = vunpack.c.h.b16 %v391
    %v1536 = vunpack.c.l.b16 %v392
    %v1537 = vunpack.c.h.b16 %v392
    %v1538 = vunpack.c.l.b16 %v393
    %v1539 = vunpack.c.h.b16 %v393
    %v1540 = vunpack.c.l.b16 %v394
    %v1541 = vunpack.c.h.b16 %v394
    %v1542 = vunpack.c.l.b16 %v395
    %v1543 = vunpack.c.h.b16 %v395
    %v1544 = vunpack.c.l.b16 %v396
    %v1545 = vunpack.c.h.b16 %v396
    %v1546 = vunpack.c.l.b16 %v397
    %v1547 = vunpack.c.h.b16 %v397
    %v1548 = vunpack.c.l.b16 %v398
    %v1549 = vunpack.c.h.b16 %v398
    %v1550 = vunpack.c.l.b16 %v399
    %v1551 = vunpack.c.h.b16 %v399
    %v1552 = vunpack.c.l.b16 %v400
    %v1553 = vunpack.c.h.b16 %v400
    %v1554 = vunpack.c.l.b16 %v401
    %v1555 = vunpack.c.h.b16 %v401
    %v1556 = vunpack.c.l.b16 %v402
    %v1557 = vunpack.c.h.b16 %v402
    %v1558 = vunpack.c.l.b16 %v403
    %v1559 = vunpack.c.h.b16 %v403
    %v1560 = vunpack.c.l.b16 %v404
    %v1561 = vunpack.c.h.b16 %v404
    %v1562 = vunpack.c.l.b16 %v405
    %v1563 = vunpack.c.h.b16 %v405
    %v1564 = vunpack.c.l.b16 %v406
    %v1565 = vunpack.c.h.b16 %v406
    %v1566 = vunpack.c.l.b16 %v407
    %v1567 = vunpack.c.h.b16 %v407
    %v1568 = vunpack.c.l.b16 %v408
    %v1569 = vunpack.c.h.b16 %v408
    %v1570 = vunpack.c.l.b16 %v409
    %v1571 = vunpack.c.h.b16 %v409
    %v1572 = vunpack.c.l.b16 %v410
    %v1573 = vunpack.c.h.b16 %v410
    %v1574 = vunpack.c.l.b16 %v411
    %v1575 = vunpack.c.h.b16 %v411
    %v1576 = vunpack.c.l.b16 %v412
    %v1577 = vunpack.c.h.b16 %v412
    %v1578 = vunpack.c.l.b16 %v413
    %v1579 = vunpack.c.h.b16 %v413
    %v1580 = vunpack.c.l.b16 %v414
    %v1581 = vunpack.c.h.b16 %v414
    %v1582 = vunpack.c.l.b16 %v415
    %v1583 = vunpack.c.h.b16 %v415
    %v1584 = vunpack.c.l.b16 %v416
    %v1585 = vunpack.c.h.b16 %v416
    %v1586 = vunpack.c.l.b16 %v417
    %v1587 = vunpack.c.h.b16 %v417
    %v1588 = vunpack.c.l.b16 %v418
    %v1589 = vunpack.c.h.b16 %v418
    %v1590 = vunpack.c.l.b16 %v419
    %v1591 = vunpack.c.h.b16 %v419
    %v1592 = vunpack.c.l.b16 %v420
    %v1593 = vunpack.c.h.b16 %v420
    %v1594 = vunpack.c.l.b16 %v421
    %v1595 = vunpack.c.h.b16 %v421
    %v1596 = vunpack.c.l.b16 %v422
    %v1597 = vunpack.c.h.b16 %v422
    %v1598 = vunpack.c.l.b16 %v423
    %v1599 = vunpack.c.h.b16 %v423
    %v1600 = vunpack.c.l.b16 %v424
    %v1601 = vunpack.c.h.b16 %v424
    %v1602 = vunpack.c.l.b16 %v425
    %v1603 = vunpack.c.h.b16 %v425
    %v1604 = vunpack.c.l.b16 %v426
    %v1605 = vunpack.c.h.b16 %v426
    %v1606 = vunpack.c.l.b16 %v427
    %v1607 = vunpack.c.h.b16 %v427
    %v1608 = vunpack.c.l.b16 %v428
    %v1609 = vunpack.c.h.b16 %v428
    %v1610 = vunpack.c.l.b16 %v429
    %v1611 = vunpack.c.h.b16 %v429
    %v1612 = vunpack.c.l.b16 %v430
    %v1613 = vunpack.c.h.b16 %v430
    %v1614 = vunpack.c.l.b16 %v431
    %v1615 = vunpack.c.h.b16 %v431
    %v1616 = vunpack.c.l.b16 %v432
    %v1617 = vunpack.c.h.b16 %v432
    %v1618 = vunpack.c.l.b16 %v433
    %v1619 = vunpack.c.h.b16 %v433
    %v1620 = vunpack.c.l.b16 %v434
    %v1621 = vunpack.c.h.b16 %v434
    %v1622 = vunpack.c.l.b16 %v435
    %v1623 = vunpack.c.h.b16 %v435
    %v1624 = vunpack.c.l.b16 %v436
    %v1625 = vunpack.c.h.b16 %v436
    %v1626 = vunpack.c.l.b16 %v437
    %v1627 = vunpack.c.h.b16 %v437
    %v1628 = vunpack.c.l.b16 %v438
    %v1629 = vunpack.c.h.b16 %v438
    %v1630 = vunpack.c.l.b16 %v439
    %v1631 = vunpack.c.h.b16 %v439
    %v1632 = vunpack.c.l.b16 %v440
    %v1633 = vunpack.c.h.b16 %v440
    %v1634 = vunpack.c.l.b16 %v441
    %v1635 = vunpack.c.h.b16 %v441
    %v1636 = vunpack.c.l.b16 %v442
    %v1637 = vunpack.c.h.b16 %v442
    %v1638 = vunpack.c.l.b16 %v443
    %v1639 = vunpack.c.h.b16 %v443
    %v1640 = vunpack.c.l.b16 %v444
    %v1641 = vunpack.c.h.b16 %v444
    %v1642 = vunpack.c.l.b16 %v445
    %v1643 = vunpack.c.h.b16 %v445
    %v1644 = vunpack.c.l.b16 %v446
    %v1645 = vunpack.c.h.b16 %v446
    %v1646 = vunpack.c.l.b16 %v447
    %v1647 = vunpack.c.h.b16 %v447
    %v1648 = vunpack.c.l.b16 %v448
    %v1649 = vunpack.c.h.b16 %v448
    %v1650 = vunpack.c.l.b16 %v449
    %v1651 = vunpack.c.h.b16 %v449
    %v1652 = vunpack.c.l.b16 %v450
    %v1653 = vunpack.c.h.b16 %v450
    %v1654 = vunpack.c.l.b16 %v451
    %v1655 = vunpack.c.h.b16 %v451
    %v1656 = vunpack.c.l.b16 %v452
    %v1657 = vunpack.c.h.b16 %v452
    %v1658 = vunpack.c.l.b16 %v453
    %v1659 = vunpack.c.h.b16 %v453
    %v1660 = vunpack.c.l.b16 %v454
    %v1661 = vunpack.c.h.b16 %v454
    %v1662 = vunpack.c.l.b16 %v455
    %v1663 = vunpack.c.h.b16 %v455
    %v1664 = vunpack.c.l.b16 %v456
    %v1665 = vunpack.c.h.b16 %v456
    %v1666 = vunpack.c.l.b16 %v457
    %v1667 = vunpack.c.h.b16 %v457
    %v1668 = vunpack.c.l.b16 %v458
    %v1669 = vunpack.c.h.b16 %v458
    %v1670 = vunpack.c.l.b16 %v459
    %v1671 = vunpack.c.h.b16 %v459
    %v1672 = vunpack.c.l.b16 %v460
    %v1673 = vunpack.c.h.b16 %v460
    %v1674 = vunpack.c.l.b16 %v461
    %v1675 = vunpack.c.h.b16 %v461
    %v1676 = vunpack.c.l.b16 %v462
    %v1677 = vunpack.c.h.b16 %v462
    %v1678 = vunpack.c.l.b16 %v463
    %v1679 = vunpack.c.h.b16 %v463
    %v1680 = vunpack.c.l.b16 %v464
    %v1681 = vunpack.c.h.b16 %v464
    %v1682 = vunpack.c.l.b16 %v465
    %v1683 = vunpack.c.h.b16 %v465
    %v1684 = vunpack.c.l.b16 %v466
    %v1685 = vunpack.c.h.b16 %v466
    %v1686 = vunpack.c.l.b16 %v467
    %v1687 = vunpack.c.h.b16 %v467
    %v1688 = vunpack.c.l.b16 %v468
    %v1689 = vunpack.c.h.b16 %v468
    %v1690 = vunpack.c.l.b16 %v469
    %v1691 = vunpack.c.h.b16 %v469
    %v1692 = vunpack.c.l.b16 %v470
    %v1693 = vunpack.c.h.b16 %v470
    %v1694 = vunpack.c.l.b16 %v471
    %v1695 = vunpack.c.h.b16 %v471
    %v1696 = vunpack.c.l.b16 %v472
    %v1697 = vunpack.c.h.b16 %v472
    %v1698 = vunpack.c.l.b16 %v473
    %v1699 = vunpack.c.h.b16 %v473
    %v1700 = vunpack.c.l.b16 %v474
    %v1701 = vunpack.c.h.b16 %v474
    %v1702 = vunpack.c.l.b16 %v475
    %v1703 = vunpack.c.h.b16 %v475
    %v1704 = vunpack.c.l.b16 %v476
    %v1705 = vunpack.c.h.b16 %v476
    %v1706 = vunpack.c.l.b16 %v477
    %v1707 = vunpack.c.h.b16 %v477
    %v1708 = vunpack.c.l.b16 %v478
    %v1709 = vunpack.c.h.b16 %v478
    %v1710 = vunpack.c.l.b16 %v479
    %v1711 = vunpack.c.h.b16 %v479
    %v1712 = vunpack.c.l.b16 %v480
    %v1713 = vunpack.c.h.b16 %v480
    %v1714 = vunpack.c.l.b16 %v481
    %v1715 = vunpack.c.h.b16 %v481
    %v1716 = vunpack.c.l.b16 %v482
    %v1717 = vunpack.c.h.b16 %v482
    %v1718 = vunpack.c.l.b16 %v483
    %v1719 = vunpack.c.h.b16 %v483
    %v1720 = vunpack.c.l.b16 %v484
    %v1721 = vunpack.c.h.b16 %v484
    %v1722 = vunpack.c.l.b16 %v485
    %v1723 = vunpack.c.h.b16 %v485
    %v1724 = vunpack.c.l.b16 %v486
    %v1725 = vunpack.c.h.b16 %v486
    %v1726 = vunpack.c.l.b16 %v487
    %v1727 = vunpack.c.h.b16 %v487
    %v1728 = vunpack.c.l.b16 %v488
    %v1729 = vunpack.c.h.b16 %v488
    %v1730 = vunpack.c.l.b16 %v489
    %v1731 = vunpack.c.h.b16 %v489
    %v1732 = vunpack.c.l.b16 %v490
    %v1733 = vunpack.c.h.b16 %v490
    %v1734 = vunpack.c.l.b16 %v491
    %v1735 = vunpack.c.h.b16 %v491
    %v1736 = vunpack.c.l.b16 %v492
    %v1737 = vunpack.c.h.b16 %v492
    %v1738 = vunpack.c.l.b16 %v493
    %v1739 = vunpack.c.h.b16 %v493
    %v1740 = vunpack.c.l.b16 %v494
    %v1741 = vunpack.c.h.b16 %v494
    %v1742 = vunpack.c.l.b16 %v495
    %v1743 = vunpack.c.h.b16 %v495
    %v1744 = vunpack.c.l.b16 %v496
    %v1745 = vunpack.c.h.b16 %v496
    %v1746 = vunpack.c.l.b16 %v497
    %v1747 = vunpack.c.h.b16 %v497
    %v1748 = vunpack.c.l.b16 %v498
    %v1749 = vunpack.c.h.b16 %v498
    %v1750 = vunpack.c.l.b16 %v499
    %v1751 = vunpack.c.h.b16 %v499
    %v1752 = vunpack.c.l.b16 %v500
    %v1753 = vunpack.c.h.b16 %v500
    %v1754 = vunpack.c.l.b16 %v501
    %v1755 = vunpack.c.h.b16 %v501
    %v1756 = vunpack.c.l.b16 %v502
    %v1757 = vunpack.c.h.b16 %v502
    %v1758 = vunpack.c.l.b16 %v503
    %v1759 = vunpack.c.h.b16 %v503
    %v1760 = vunpack.c.l.b16 %v504
    %v1761 = vunpack.c.h.b16 %v504
    %v1762 = vunpack.c.l.b16 %v505
    %v1763 = vunpack.c.h.b16 %v505
    %v1764 = vunpack.c.l.b16 %v506
    %v1765 = vunpack.c.h.b16 %v506
    %v1766 = vunpack.c.l.b16 %v507
    %v1767 = vunpack.c.h.b16 %v507
    %v1768 = vunpack.c.l.b16 %v508
    %v1769 = vunpack.c.h.b16 %v508
    %v1770 = vunpack.c.l.b16 %v509
    %v1771 = vunpack.c.h.b16 %v509
    %v1772 = vunpack.c.l.b16 %v510
    %v1773 = vunpack.c.h.b16 %v510
    %v1774 = vunpack.c.l.b16 %v511
    %v1775 = vunpack.c.h.b16 %v511
    %v1776 = vunpack.c.l.b16 %v512
    %v1777 = vunpack.c.h.b16 %v512
    %v1778 = vunpack.c.l.b16 %v513
    %v1779 = vunpack.c.h.b16 %v513
    %v1780 = vunpack.c.l.b16 %v514
    %v1781 = vunpack.c.h.b16 %v514
    %v1782 = vunpack.c.l.b16 %v515
    %v1783 = vunpack.c.h.b16 %v515
    %v1784 = vunpack.c.l.b16 %v516
    %v1785 = vunpack.c.h.b16 %v516
    %v1786 = vunpack.c.l.b16 %v517
    %v1787 = vunpack.c.h.b16 %v517
    %v1788 = vunpack.c.l.b16 %v518
    %v1789 = vunpack.c.h.b16 %v518
    %v1790 = vunpack.c.l.b16 %v519
    %v1791 = vunpack.c.h.b16 %v519
    %v1792 = vunpack.c.l.b16 %v520
    %v1793 = vunpack.c.h.b16 %v520
    %v1794 = vunpack.c.l.b16 %v521
    %v1795 = vunpack.c.h.b16 %v521
    %v1796 = vunpack.c.l.b16 %v522
    %v1797 = vunpack.c.h.b16 %v522
    %v1798 = vunpack.c.l.b16 %v523
    %v1799 = vunpack.c.h.b16 %v523
    %v1800 = vunpack.c.l.b16 %v524
    %v1801 = vunpack.c.h.b16 %v524
    %v1802 = vunpack.c.l.b16 %v525
    %v1803 = vunpack.c.h.b16 %v525
    %v1804 = vunpack.c.l.b16 %v526
    %v1805 = vunpack.c.h.b16 %v526
    %v1806 = vunpack.c.l.b16 %v527
    %v1807 = vunpack.c.h.b16 %v527
    %v1808 = vunpack.c.l.b16 %v528
    %v1809 = vunpack.c.h.b16 %v528
    %v1810 = vunpack.c.l.b16 %v529
    %v1811 = vunpack.c.h.b16 %v529
    %v1812 = vunpack.c.l.b16 %v530
    %v1813 = vunpack.c.h.b16 %v530
    %v1814 = vunpack.c.l.b16 %v531
    %v1815 = vunpack.c.h.b16 %v531
    %v1816 = vunpack.c.l.b16 %v532
    %v1817 = vunpack.c.h.b16 %v532
    %v1818 = vunpack.c.l.b16 %v533
    %v1819 = vunpack.c.h.b16 %v533
    %v1820 = vunpack.c.l.b16 %v534
    %v1821 = vunpack.c.h.b16 %v534
    %v1822 = vunpack.c.l.b16 %v535
    %v1823 = vunpack.c.h.b16 %v535
    %v1824 = vunpack.c.l.b16 %v536
    %v1825 = vunpack.c.h.b16 %v536
    %v1826 = vunpack.c.l.b16 %v537
    %v1827 = vunpack.c.h.b16 %v537
    %v1828 = vunpack.c.l.b16 %v538
    %v1829 = vunpack.c.h.b16 %v538
    %v1830 = vunpack.c.l.b16 %v539
    %v1831 = vunpack.c.h.b16 %v539
    %v1832 = vunpack.c.l.b16 %v540
    %v1833 = vunpack.c.h.b16 %v540
    %v1834 = vunpack.c.l.b16 %v541
    %v1835 = vunpack.c.h.b16 %v541
    %v1836 = vunpack.c.l.b16 %v542
    %v1837 = vunpack.c.h.b16 %v542
    %v1838 = vunpack.c.l.b16 %v543
    %v1839 = vunpack.c.h.b16 %v543
    %v1840 = vunpack.c.l.b16 %v544
    %v1841 = vunpack.c.h.b16 %v544
    %v1842 = vunpack.c.l.b16 %v545
    %v1843 = vunpack.c.h.b16 %v545
    %v1844 = vunpack.c.l.b16 %v546
    %v1845 = vunpack.c.h.b16 %v546
    %v1846 = vunpack.c.l.b16 %v547
    %v1847 = vunpack.c.h.b16 %v547
    %v1848 = vunpack.c.l.b16 %v548
    %v1849 = vunpack.c.h.b16 %v548
    %v1850 = vunpack.c.l.b16 %v549
    %v1851 = vunpack.c.h.b16 %v549
    %v1852 = vunpack.c.l.b16 %v550
    %v1853 = vunpack.c.h.b16 %v550
    %v1854 = vunpack.c.l.b16 %v551
    %v1855 = vunpack.c.h.b16 %v551
    %v1856 = vunpack.c.l.b16 %v552
    %v1857 = vunpack.c.h.b16 %v552
    %v1858 = vunpack.c.l.b16 %v553
    %v1859 = vunpack.c.h.b16 %v553
    %v1860 = vunpack.c.l.b16 %v554
    %v1861 = vunpack.c.h.b16 %v554
    %v1862 = vunpack.c.l.b16 %v555
    %v1863 = vunpack.c.h.b16 %v555
    %v1864 = vunpack.c.l.b16 %v556
    %v1865 = vunpack.c.h.b16 %v556
    %v1866 = vunpack.c.l.b16 %v557
    %v1867 = vunpack.c.h.b16 %v557
    %v1868 = vunpack.c.l.b16 %v558
    %v1869 = vunpack.c.h.b16 %v558
    %v1870 = vunpack.c.l.b16 %v559
    %v1871 = vunpack.c.h.b16 %v559
    %v1872 = vunpack.c.l.b16 %v560
    %v1873 = vunpack.c.h.b16 %v560
    %v1874 = vunpack.c.l.b16 %v561
    %v1875 = vunpack.c.h.b16 %v561
    %v1876 = vunpack.c.l.b16 %v562
    %v1877 = vunpack.c.h.b16 %v562
    %v1878 = vunpack.c.l.b16 %v563
    %v1879 = vunpack.c.h.b16 %v563
    %v1880 = vunpack.c.l.b16 %v564
    %v1881 = vunpack.c.h.b16 %v564
    %v1882 = vunpack.c.l.b16 %v565
    %v1883 = vunpack.c.h.b16 %v565
    %v1884 = vunpack.c.l.b16 %v566
    %v1885 = vunpack.c.h.b16 %v566
    %v1886 = vunpack.c.l.b16 %v567
    %v1887 = vunpack.c.h.b16 %v567
    %v1888 = vunpack.c.l.b16 %v568
    %v1889 = vunpack.c.h.b16 %v568
    %v1890 = vunpack.c.l.b16 %v569
    %v1891 = vunpack.c.h.b16 %v569
    %v1892 = vunpack.c.l.b16 %v570
    %v1893 = vunpack.c.h.b16 %v570
    %v1894 = vunpack.c.l.b16 %v571
    %v1895 = vunpack.c.h.b16 %v571
    %v1896 = vunpack.c.l.b16 %v572
    %v1897 = vunpack.c.h.b16 %v572
    %v1898 = vunpack.c.l.b16 %v573
    %v1899 = vunpack.c.h.b16 %v573
    %v1900 = vunpack.c.l.b16 %v574
    %v1901 = vunpack.c.h.b16 %v574
    %v1902 = vunpack.c.l.b16 %v575
    %v1903 = vunpack.c.h.b16 %v575
    %v1904 = vunpack.c.l.b16 %v576
    %v1905 = vunpack.c.h.b16 %v576
    %v1906 = vunpack.c.l.b16 %v577
    %v1907 = vunpack.c.h.b16 %v577
    %v1908 = vunpack.c.l.b16 %v578
    %v1909 = vunpack.c.h.b16 %v578
    %v1910 = vunpack.c.l.b16 %v579
    %v1911 = vunpack.c.h.b16 %v579
    %v1912 = vunpack.c.l.b16 %v580
    %v1913 = vunpack.c.h.b16 %v580
    %v1914 = vunpack.c.l.b16 %v581
    %v1915 = vunpack.c.h.b16 %v581
    %v1916 = vunpack.c.l.b16 %v582
    %v1917 = vunpack.c.h.b16 %v582
    %v1918 = vunpack.c.l.b16 %v583
    %v1919 = vunpack.c.h.b16 %v583
    %v1920 = vunpack.c.l.b16 %v584
    %v1921 = vunpack.c.h.b16 %v584
    %v1922 = vunpack.c.l.b16 %v585
    %v1923 = vunpack.c.h.b16 %v585
    %v1924 = vunpack.c.l.b16 %v586
    %v1925 = vunpack.c.h.b16 %v586
    %v1926 = vunpack.c.l.b16 %v587
    %v1927 = vunpack.c.h.b16 %v587
    %v1928 = vunpack.c.l.b16 %v588
    %v1929 = vunpack.c.h.b16 %v588
    %v1930 = vunpack.c.l.b16 %v589
    %v1931 = vunpack.c.h.b16 %v589
    %v1932 = vunpack.c.l.b16 %v590
    %v1933 = vunpack.c.h.b16 %v590
    %v1934 = vunpack.c.l.b16 %v591
    %v1935 = vunpack.c.h.b16 %v591
    %v1936 = vunpack.c.l.b16 %v592
    %v1937 = vunpack.c.h.b16 %v592
    %v1938 = vunpack.c.l.b16 %v593
    %v1939 = vunpack.c.h.b16 %v593
    %v1940 = vunpack.c.l.b16 %v594
    %v1941 = vunpack.c.h.b16 %v594
    %v1942 = vunpack.c.l.b16 %v595
    %v1943 = vunpack.c.h.b16 %v595
    %v1944 = vunpack.c.l.b16 %v596
    %v1945 = vunpack.c.h.b16 %v596
    %v1946 = vunpack.c.l.b16 %v597
    %v1947 = vunpack.c.h.b16 %v597
    %v1948 = vunpack.c.l.b16 %v598
    %v1949 = vunpack.c.h.b16 %v598
    %v1950 = vunpack.c.l.b16 %v599
    %v1951 = vunpack.c.h.b16 %v599
    %v1952 = vunpack.c.l.b16 %v600
    %v1953 = vunpack.c.h.b16 %v600
    %v1954 = vunpack.c.l.b16 %v601
    %v1955 = vunpack.c.h.b16 %v601
    %v1956 = vunpack.c.l.b16 %v602
    %v1957 = vunpack.c.h.b16 %v602
    %v1958 = vunpack.c.l.b16 %v603
    %v1959 = vunpack.c.h.b16 %v603
    %v1960 = vunpack.c.l.b16 %v604
    %v1961 = vunpack.c.h.b16 %v604
    %v1962 = vunpack.c.l.b16 %v605
    %v1963 = vunpack.c.h.b16 %v605
    %v1964 = vunpack.c.l.b16 %v606
    %v1965 = vunpack.c.h.b16 %v606
    %v1966 = vunpack.c.l.b16 %v607
    %v1967 = vunpack.c.h.b16 %v607
    %v1968 = vpack.c.b16 %v1110, %v1104
    %v1969 = vpack.c.b16 %v1111, %v1105
    %v1970 = vpack.c.b16 %v1112, %v1106
    %v1971 = vpack.c.b16 %v1113, %v1107
    %v1972 = vpack.c.b16 %v1114, %v1108
    %v1973 = vpack.c.b16 %v1115, %v1109
    %v1974 = vpack.c.b16 %v1122, %v1116
    %v1975 = vpack.c.b16 %v1123, %v1117
    %v1976 = vpack.c.b16 %v1124, %v1118
    %v1977 = vpack.c.b16 %v1125, %v1119
    %v1978 = vpack.c.b16 %v1126, %v1120
    %v1979 = vpack.c.b16 %v1127, %v1121
    %v1980 = vpack.c.b16 %v1134, %v1128
    %v1981 = vpack.c.b16 %v1135, %v1129
    %v1982 = vpack.c.b16 %v1136, %v1130
    %v1983 = vpack.c.b16 %v1137, %v1131
    %v1984 = vpack.c.b16 %v1138, %v1132
    %v1985 = vpack.c.b16 %v1139, %v1133
    %v1986 = vpack.c.b16 %v1146, %v1140
    %v1987 = vpack.c.b16 %v1147, %v1141
    %v1988 = vpack.c.b16 %v1148, %v1142
    %v1989 = vpack.c.b16 %v1149, %v1143
    %v1990 = vpack.c.b16 %v1150, %v1144
    %v1991 = vpack.c.b16 %v1151, %v1145
    %v1992 = vpack.c.b16 %v1158, %v1152
    %v1993 = vpack.c.b16 %v1159, %v1153
    %v1994 = vpack.c.b16 %v1160, %v1154
    %v1995 = vpack.c.b16 %v1161, %v1155
    %v1996 = vpack.c.b16 %v1162, %v1156
    %v1997 = vpack.c.b16 %v1163, %v1157
    %v1998 = vpack.c.b16 %v1170, %v1164
    %v1999 = vpack.c.b16 %v1171, %v1165
    %v2000 = vpack.c.b16 %v1172, %v1166
    %v2001 = vpack.c.b16 %v1173, %v1167
    %v2002 = vpack.c.b16 %v1174, %v1168
    %v2003 = vpack.c.b16 %v1175, %v1169
    %v2004 = vpack.c.b16 %v1182, %v1176
    %v2005 = vpack.c.b16 %v1183, %v1177
    %v2006 = vpack.c.b16 %v1184, %v1178
    %v2007 = vpack.c.b16 %v1185, %v1179
    %v2008 = vpack.c.b16 %v1186, %v1180
    %v2009 = vpack.c.b16 %v1187, %v1181
    %v2010 = vpack.c.b16 %v1194, %v1188
    %v2011 = vpack.c.b16 %v1195, %v1189
    %v2012 = vpack.c.b16 %v1196, %v1190
    %v2013 = vpack.c.b16 %v1197, %v1191
    %v2014 = vpack.c.b16 %v1198, %v1192
    %v2015 = vpack.c.b16 %v1199, %v1193
    %v2016 = vpack.c.b16 %v1206, %v1200
    %v2017 = vpack.c.b16 %v1207, %v1201
    %v2018 = vpack.c.b16 %v1208, %v1202
    %v2019 = vpack.c.b16 %v1209, %v1203
    %v2020 = vpack.c.b16 %v1210, %v1204
    %v2021 = vpack.c.b16 %v1211, %v1205
    %v2022 = vpack.c.b16 %v1218, %v1212
    %v2023 = vpack.c.b16 %v1219, %v1213
    %v2024 = vpack.c.b16 %v1220, %v1214
    %v2025 = vpack.c.b16 %v1221, %v1215
    %v2026 = vpack.c.b16 %v1222, %v1216
    %v2027 = vpack.c.b16 %v1223, %v1217
    %v2028 = vpack.c.b16 %v1230, %v1224
    %v2029 = vpack.c.b16 %v1231, %v1225
    %v2030 = vpack.c.b16 %v1232, %v1226
    %v2031 = vpack.c.b16 %v1233, %v1227
    %v2032 = vpack.c.b16 %v1234, %v1228
    %v2033 = vpack.c.b16 %v1235, %v1229
    %v2034 = vpack.c.b16 %v1242, %v1236
    %v2035 = vpack.c.b16 %v1243, %v1237
    %v2036 = vpack.c.b16 %v1244, %v1238
    %v2037 = vpack.c.b16 %v1245, %v1239
    %v2038 = vpack.c.b16 %v1246, %v1240
    %v2039 = vpack.c.b16 %v1247, %v1241
    %v2040 = vpack.c.b16 %v1254, %v1248
    %v2041 = vpack.c.b16 %v1255, %v1249
    %v2042 = vpack.c.b16 %v1256, %v1250
    %v2043 = vpack.c.b16 %v1257, %v1251
    %v2044 = vpack.c.b16 %v1258, %v1252
    %v2045 = vpack.c.b16 %v1259, %v1253
    %v2046 = vpack.c.b16 %v1266, %v1260
    %v2047 = vpack.c.b16 %v1267, %v1261
    %v2048 = vpack.c.b16 %v1268, %v1262
    %v2049 = vpack.c.b16 %v1269, %v1263
    %v2050 = vpack.c.b16 %v1270, %v1264
    %v2051 = vpack.c.b16 %v1271, %v1265
    %v2052 = vpack.c.b16 %v1278, %v1272
    %v2053 = vpack.c.b16 %v1279, %v1273
    %v2054 = vpack.c.b16 %v1280, %v1274
    %v2055 = vpack.c.b16 %v1281, %v1275
    %v2056 = vpack.c.b16 %v1282, %v1276
    %v2057 = vpack.c.b16 %v1283, %v1277
    %v2058 = vpack.c.b16 %v1290, %v1284
    %v2059 = vpack.c.b16 %v1291, %v1285
    %v2060 = vpack.c.b16 %v1292, %v1286
    %v2061 = vpack.c.b16 %v1293, %v1287
    %v2062 = vpack.c.b16 %v1294, %v1288
    %v2063 = vpack.c.b16 %v1295, %v1289
    %v2064 = vpack.c.b16 %v1302, %v1296
    %v2065 = vpack.c.b16 %v1303, %v1297
    %v2066 = vpack.c.b16 %v1304, %v1298
    %v2067 = vpack.c.b16 %v1305, %v1299
    %v2068 = vpack.c.b16 %v1306, %v1300
    %v2069 = vpack.c.b16 %v1307, %v1301
    %v2070 = vpack.c.b16 %v1314, %v1308
    %v2071 = vpack.c.b16 %v1315, %v1309
    %v2072 = vpack.c.b16 %v1316, %v1310
    %v2073 = vpack.c.b16 %v1317, %v1311
    %v2074 = vpack.c.b16 %v1318, %v1312
    %v2075 = vpack.c.b16 %v1319, %v1313
    %v2076 = vpack.c.b16 %v1326, %v1320
    %v2077 = vpack.c.b16 %v1327, %v1321
    %v2078 = vpack.c.b16 %v1328, %v1322
    %v2079 = vpack.c.b16 %v1329, %v1323
    %v2080 = vpack.c.b16 %v1330, %v1324
    %v2081 = vpack.c.b16 %v1331, %v1325
    %v2082 = vpack.c.b16 %v1338, %v1332
    %v2083 = vpack.c.b16 %v1339, %v1333
    %v2084 = vpack.c.b16 %v1340, %v1334
    %v2085 = vpack.c.b16 %v1341, %v1335
    %v2086 = vpack.c.b16 %v1342, %v1336
    %v2087 = vpack.c.b16 %v1343, %v1337
    %v2088 = vpack.c.b16 %v1350, %v1344
    %v2089 = vpack.c.b16 %v1351, %v1345
    %v2090 = vpack.c.b16 %v1352, %v1346
    %v2091 = vpack.c.b16 %v1353, %v1347
    %v2092 = vpack.c.b16 %v1354, %v1348
    %v2093 = vpack.c.b16 %v1355, %v1349
    %v2094 = vpack.c.b16 %v1362, %v1356
    %v2095 = vpack.c.b16 %v1363, %v1357
    %v2096 = vpack.c.b16 %v1364, %v1358
    %v2097 = vpack.c.b16 %v1365, %v1359
    %v2098 = vpack.c.b16 %v1366, %v1360
    %v2099 = vpack.c.b16 %v1367, %v1361
    %v2100 = vpack.c.b16 %v1374, %v1368
    %v2101 = vpack.c.b16 %v1375, %v1369
    %v2102 = vpack.c.b16 %v1376, %v1370
    %v2103 = vpack.c.b16 %v1377, %v1371
    %v2104 = vpack.c.b16 %v1378, %v1372
    %v2105 = vpack.c.b16 %v1379, %v1373
    %v2106 = vpack.c.b16 %v1386, %v1380
    %v2107 = vpack.c.b16 %v1387, %v1381
    %v2108 = vpack.c.b16 %v1388, %v1382
    %v2109 = vpack.c.b16 %v1389, %v1383
    %v2110 = vpack.c.b16 %v1390, %v1384
    %v2111 = vpack.c.b16 %v1391, %v1385
    %v2112 = vpack.c.b16 %v1398, %v1392
    %v2113 = vpack.c.b16 %v1399, %v1393
    %v2114 = vpack.c.b16 %v1400, %v1394
    %v2115 = vpack.c.b16 %v1401, %v1395
    %v2116 = vpack.c.b16 %v1402, %v1396
    %v2117 = vpack.c.b16 %v1403, %v1397
    %v2118 = vpack.c.b16 %v1410, %v1404
    %v2119 = vpack.c.b16 %v1411, %v1405
    %v2120 = vpack.c.b16 %v1412, %v1406
    %v2121 = vpack.c.b16 %v1413, %v1407
    %v2122 = vpack.c.b16 %v1414, %v1408
    %v2123 = vpack.c.b16 %v1415, %v1409
    %v2124 = vpack.c.b16 %v1422, %v1416
    %v2125 = vpack.c.b16 %v1423, %v1417
    %v2126 = vpack.c.b16 %v1424, %v1418
    %v2127 = vpack.c.b16 %v1425, %v1419
    %v2128 = vpack.c.b16 %v1426, %v1420
    %v2129 = vpack.c.b16 %v1427, %v1421
    %v2130 = vpack.c.b16 %v1434, %v1428
    %v2131 = vpack.c.b16 %v1435, %v1429
    %v2132 = vpack.c.b16 %v1436, %v1430
    %v2133 = vpack.c.b16 %v1437, %v1431
    %v2134 = vpack.c.b16 %v1438, %v1432
    %v2135 = vpack.c.b16 %v1439, %v1433
    %v2136 = vpack.c.b16 %v1446, %v1440
    %v2137 = vpack.c.b16 %v1447, %v1441
    %v2138 = vpack.c.b16 %v1448, %v1442
    %v2139 = vpack.c.b16 %v1449, %v1443
    %v2140 = vpack.c.b16 %v1450, %v1444
    %v2141 = vpack.c.b16 %v1451, %v1445
    %v2142 = vpack.c.b16 %v1458, %v1452
    %v2143 = vpack.c.b16 %v1459, %v1453
    %v2144 = vpack.c.b16 %v1460, %v1454
    %v2145 = vpack.c.b16 %v1461, %v1455
    %v2146 = vpack.c.b16 %v1462, %v1456
    %v2147 = vpack.c.b16 %v1463, %v1457
    %v2148 = vpack.c.b16 %v1470, %v1464
    %v2149 = vpack.c.b16 %v1471, %v1465
    %v2150 = vpack.c.b16 %v1472, %v1466
    %v2151 = vpack.c.b16 %v1473, %v1467
    %v2152 = vpack.c.b16 %v1474, %v1468
    %v2153 = vpack.c.b16 %v1475, %v1469
    %v2154 = vpack.c.b16 %v1482, %v1476
    %v2155 = vpack.c.b16 %v1483, %v1477
    %v2156 = vpack.c.b16 %v1484, %v1478
    %v2157 = vpack.c.b16 %v1485, %v1479
    %v2158 = vpack.c.b16 %v1486, %v1480
    %v2159 = vpack.c.b16 %v1487, %v1481
    %v2160 = vpack.c.b16 %v1494, %v1488
    %v2161 = vpack.c.b16 %v1495, %v1489
    %v2162 = vpack.c.b16 %v1496, %v1490
    %v2163 = vpack.c.b16 %v1497, %v1491
    %v2164 = vpack.c.b16 %v1498, %v1492
    %v2165 = vpack.c.b16 %v1499, %v1493
    %v2166 = vpack.c.b16 %v1506, %v1500
    %v2167 = vpack.c.b16 %v1507, %v1501
    %v2168 = vpack.c.b16 %v1508, %v1502
    %v2169 = vpack.c.b16 %v1509, %v1503
    %v2170 = vpack.c.b16 %v1510, %v1504
    %v2171 = vpack.c.b16 %v1511, %v1505
    %v2172 = vpack.c.b16 %v1518, %v1512
    %v2173 = vpack.c.b16 %v1519, %v1513
    %v2174 = vpack.c.b16 %v1520, %v1514
    %v2175 = vpack.c.b16 %v1521, %v1515
    %v2176 = vpack.c.b16 %v1522, %v1516
    %v2177 = vpack.c.b16 %v1523, %v1517
    %v2178 = vpack.c.b16 %v1530, %v1524
    %v2179 = vpack.c.b16 %v1531, %v1525
    %v2180 = vpack.c.b16 %v1532, %v1526
    %v2181 = vpack.c.b16 %v1533, %v1527
    %v2182 = vpack.c.b16 %v1534, %v1528
    %v2183 = vpack.c.b16 %v1535, %v1529
    %v2184 = vpack.c.b16 %v1542, %v1536
    %v2185 = vpack.c.b16 %v1543, %v1537
    %v2186 = vpack.c.b16 %v1544, %v1538
    %v2187 = vpack.c.b16 %v1545, %v1539
    %v2188 = vpack.c.b16 %v1546, %v1540
    %v2189 = vpack.c.b16 %v1547, %v1541
    %v2190 = vpack.c.b16 %v1554, %v1548
    %v2191 = vpack.c.b16 %v1555, %v1549
    %v2192 = vpack.c.b16 %v1556, %v1550
    %v2193 = vpack.c.b16 %v1557, %v1551
    %v2194 = vpack.c.b16 %v1558, %v1552
    %v2195 = vpack.c.b16 %v1559, %v1553
    %v2196 = vpack.c.b16 %v1566, %v1560
    %v2197 = vpack.c.b16 %v1567, %v1561
    %v2198 = vpack.c.b16 %v1568, %v1562
    %v2199 = vpack.c.b16 %v1569, %v1563
    %v2200 = vpack.c.b16 %v1570, %v1564
    %v2201 = vpack.c.b16 %v1571, %v1565
    %v2202 = vpack.c.b16 %v1578, %v1572
    %v2203 = vpack.c.b16 %v1579, %v1573
    %v2204 = vpack.c.b16 %v1580, %v1574
    %v2205 = vpack.c.b16 %v1581, %v1575
    %v2206 = vpack.c.b16 %v1582, %v1576
    %v2207 = vpack.c.b16 %v1583, %v1577
    %v2208 = vpack.c.b16 %v1590, %v1584
    %v2209 = vpack.c.b16 %v1591, %v1585
    %v2210 = vpack.c.b16 %v1592, %v1586
    %v2211 = vpack.c.b16 %v1593, %v1587
    %v2212 = vpack.c.b16 %v1594, %v1588
    %v2213 = vpack.c.b16 %v1595, %v1589
    %v2214 = vpack.c.b16 %v1602, %v1596
    %v2215 = vpack.c.b16 %v1603, %v1597
    %v2216 = vpack.c.b16 %v1604, %v1598
    %v2217 = vpack.c.b16 %v1605, %v1599
    %v2218 = vpack.c.b16 %v1606, %v1600
    %v2219 = vpack.c.b16 %v1607, %v1601
    %v2220 = vpack.c.b16 %v1614, %v1608
    %v2221 = vpack.c.b16 %v1615, %v1609
    %v2222 = vpack.c.b16 %v1616, %v1610
    %v2223 = vpack.c.b16 %v1617, %v1611
    %v2224 = vpack.c.b16 %v1618, %v1612
    %v2225 = vpack.c.b16 %v1619, %v1613
    %v2226 = vpack.c.b16 %v1626, %v1620
    %v2227 = vpack.c.b16 %v1627, %v1621
    %v2228 = vpack.c.b16 %v1628, %v1622
    %v2229 = vpack.c.b16 %v1629, %v1623
    %v2230 = vpack.c.b16 %v1630, %v1624
    %v2231 = vpack.c.b16 %v1631, %v1625
    %v2232 = vpack.c.b16 %v1638, %v1632
    %v2233 = vpack.c.b16 %v1639, %v1633
    %v2234 = vpack.c.b16 %v1640, %v1634
    %v2235 = vpack.c.b16 %v1641, %v1635
    %v2236 = vpack.c.b16 %v1642, %v1636
    %v2237 = vpack.c.b16 %v1643, %v1637
    %v2238 = vpack.c.b16 %v1650, %v1644
    %v2239 = vpack.c.b16 %v1651, %v1645
    %v2240 = vpack.c.b16 %v1652, %v1646
    %v2241 = vpack.c.b16 %v1653, %v1647
    %v2242 = vpack.c.b16 %v1654, %v1648
    %v2243 = vpack.c.b16 %v1655, %v1649
    %v2244 = vpack.c.b16 %v1662, %v1656
    %v2245 = vpack.c.b16 %v1663, %v1657
    %v2246 = vpack.c.b16 %v1664, %v1658
    %v2247 = vpack.c.b16 %v1665, %v1659
    %v2248 = vpack.c.b16 %v1666, %v1660
    %v2249 = vpack.c.b16 %v1667, %v1661
    %v2250 = vpack.c.b16 %v1674, %v1668
    %v2251 = vpack.c.b16 %v1675, %v1669
    %v2252 = vpack.c.b16 %v1676, %v1670
    %v2253 = vpack.c.b16 %v1677, %v1671
    %v2254 = vpack.c.b16 %v1678, %v1672
    %v2255 = vpack.c.b16 %v1679, %v1673
    %v2256 = vpack.c.b16 %v1686, %v1680
    %v2257 = vpack.c.b16 %v1687, %v1681
    %v2258 = vpack.c.b16 %v1688, %v1682
    %v2259 = vpack.c.b16 %v1689, %v1683
    %v2260 = vpack.c.b16 %v1690, %v1684
    %v2261 = vpack.c.b16 %v1691, %v1685
    %v2262 = vpack.c.b16 %v1698, %v1692
    %v2263 = vpack.c.b16 %v1699, %v1693
    %v2264 = vpack.c.b16 %v1700, %v1694
    %v2265 = vpack.c.b16 %v1701, %v1695
    %v2266 = vpack.c.b16 %v1702, %v1696
    %v2267 = vpack.c.b16 %v1703, %v1697
    %v2268 = vpack.c.b16 %v1710, %v1704
    %v2269 = vpack.c.b16 %v1711, %v1705
    %v2270 = vpack.c.b16 %v1712, %v1706
    %v2271 = vpack.c.b16 %v1713, %v1707
    %v2272 = vpack.c.b16 %v1714, %v1708
    %v2273 = vpack.c.b16 %v1715, %v1709
    %v2274 = vpack.c.b16 %v1722, %v1716
    %v2275 = vpack.c.b16 %v1723, %v1717
    %v2276 = vpack.c.b16 %v1724, %v1718
    %v2277 = vpack.c.b16 %v1725, %v1719
    %v2278 = vpack.c.b16 %v1726, %v1720
    %v2279 = vpack.c.b16 %v1727, %v1721
    %v2280 = vpack.c.b16 %v1734, %v1728
    %v2281 = vpack.c.b16 %v1735, %v1729
    %v2282 = vpack.c.b16 %v1736, %v1730
    %v2283 = vpack.c.b16 %v1737, %v1731
    %v2284 = vpack.c.b16 %v1738, %v1732
    %v2285 = vpack.c.b16 %v1739, %v1733
    %v2286 = vpack.c.b16 %v1746, %v1740
    %v2287 = vpack.c.b16 %v1747, %v1741
    %v2288 = vpack.c.b16 %v1748, %v1742
    %v2289 = vpack.c.b16 %v1749, %v1743
    %v2290 = vpack.c.b16 %v1750, %v1744
    %v2291 = vpack.c.b16 %v1751, %v1745
    %v2292 = vpack.c.b16 %v1758, %v1752
    %v2293 = vpack.c.b16 %v1759, %v1753
    %v2294 = vpack.c.b16 %v1760, %v1754
    %v2295 = vpack.c.b16 %v1761, %v1755
    %v2296 = vpack.c.b16 %v1762, %v1756
    %v2297 = vpack.c.b16 %v1763, %v1757
    %v2298 = vpack.c.b16 %v1770, %v1764
    %v2299 = vpack.c.b16 %v1771, %v1765
    %v2300 = vpack.c.b16 %v1772, %v1766
    %v2301 = vpack.c.b16 %v1773, %v1767
    %v2302 = vpack.c.b16 %v1774, %v1768
    %v2303 = vpack.c.b16 %v1775, %v1769
    %v2304 = vpack.c.b16 %v1782, %v1776
    %v2305 = vpack.c.b16 %v1783, %v1777
    %v2306 = vpack.c.b16 %v1784, %v1778
    %v2307 = vpack.c.b16 %v1785, %v1779
    %v2308 = vpack.c.b16 %v1786, %v1780
    %v2309 = vpack.c.b16 %v1787, %v1781
    %v2310 = vpack.c.b16 %v1794, %v1788
    %v2311 = vpack.c.b16 %v1795, %v1789
    %v2312 = vpack.c.b16 %v1796, %v1790
    %v2313 = vpack.c.b16 %v1797, %v1791
    %v2314 = vpack.c.b16 %v1798, %v1792
    %v2315 = vpack.c.b16 %v1799, %v1793
    %v2316 = vpack.c.b16 %v1806, %v1800
    %v2317 = vpack.c.b16 %v1807, %v1801
    %v2318 = vpack.c.b16 %v1808, %v1802
    %v2319 = vpack.c.b16 %v1809, %v1803
    %v2320 = vpack.c.b16 %v1810, %v1804
    %v2321 = vpack.c.b16 %v1811, %v1805
    %v2322 = vpack.c.b16 %v1818, %v1812
    %v2323 = vpack.c.b16 %v1819, %v1813
    %v2324 = vpack.c.b16 %v1820, %v1814
    %v2325 = vpack.c.b16 %v1821, %v1815
    %v2326 = vpack.c.b16 %v1822, %v1816
    %v2327 = vpack.c.b16 %v1823, %v1817
    %v2328 = vpack.c.b16 %v1830, %v1824
    %v2329 = vpack.c.b16 %v1831, %v1825
    %v2330 = vpack.c.b16 %v1832, %v1826
    %v2331 = vpack.c.b16 %v1833, %v1827
    %v2332 = vpack.c.b16 %v1834, %v1828
    %v2333 = vpack.c.b16 %v1835, %v1829
    %v2334 = vpack.c.b16 %v1842, %v1836
    %v2335 = vpack.c.b16 %v1843, %v1837
    %v2336 = vpack.c.b16 %v1844, %v1838
    %v2337 = vpack.c.b16 %v1845, %v1839
    %v2338 = vpack.c.b16 %v1846, %v1840
    %v2339 = vpack.c.b16 %v1847, %v1841
    %v2340 = vpack.c.b16 %v1854, %v1848
    %v2341 = vpack.c.b16 %v1855, %v1849
    %v2342 = vpack.c.b16 %v1856, %v1850
    %v2343 = vpack.c.b16 %v1857, %v1851
    %v2344 = vpack.c.b16 %v1858, %v1852
    %v2345 = vpack.c.b16 %v1859, %v1853
    %v2346 = vpack.c.b16 %v1866, %v1860
    %v2347 = vpack.c.b16 %v1867, %v1861
    %v2348 = vpack.c.b16 %v1868, %v1862
    %v2349 = vpack.c.b16 %v1869, %v1863
    %v2350 = vpack.c.b16 %v1870, %v1864
    %v2351 = vpack.c.b16 %v1871, %v1865
    %v2352 = vpack.c.b16 %v1878, %v1872
    %v2353 = vpack.c.b16 %v1879, %v1873
    %v2354 = vpack.c.b16 %v1880, %v1874
    %v2355 = vpack.c.b16 %v1881, %v1875
    %v2356 = vpack.c.b16 %v1882, %v1876
    %v2357 = vpack.c.b16 %v1883, %v1877
    %v2358 = vpack.c.b16 %v1890, %v1884
    %v2359 = vpack.c.b16 %v1891, %v1885
    %v2360 = vpack.c.b16 %v1892, %v1886
    %v2361 = vpack.c.b16 %v1893, %v1887
    %v2362 = vpack.c.b16 %v1894, %v1888
    %v2363 = vpack.c.b16 %v1895, %v1889
    %v2364 = vpack.c.b16 %v1902, %v1896
    %v2365 = vpack.c.b16 %v1903, %v1897
    %v2366 = vpack.c.b16 %v1904, %v1898
    %v2367 = vpack.c.b16 %v1905, %v1899
    %v2368 = vpack.c.b16 %v1906, %v1900
    %v2369 = vpack.c.b16 %v1907, %v1901
    %v2370 = vpack.c.b16 %v1914, %v1908
    %v2371 = vpack.c.b16 %v1915, %v1909
    %v2372 = vpack.c.b16 %v1916, %v1910
    %v2373 = vpack.c.b16 %v1917, %v1911
    %v2374 = vpack.c.b16 %v1918, %v1912
    %v2375 = vpack.c.b16 %v1919, %v1913
    %v2376 = vpack.c.b16 %v1926, %v1920
    %v2377 = vpack.c.b16 %v1927, %v1921
    %v2378 = vpack.c.b16 %v1928, %v1922
    %v2379 = vpack.c.b16 %v1929, %v1923
    %v2380 = vpack.c.b16 %v1930, %v1924
    %v2381 = vpack.c.b16 %v1931, %v1925
    %v2382 = vpack.c.b16 %v1938, %v1932
    %v2383 = vpack.c.b16 %v1939, %v1933
    %v2384 = vpack.c.b16 %v1940, %v1934
    %v2385 = vpack.c.b16 %v1941, %v1935
    %v2386 = vpack.c.b16 %v1942, %v1936
    %v2387 = vpack.c.b16 %v1943, %v1937
    %v2388 = vpack.c.b16 %v1950, %v1944
    %v2389 = vpack.c.b16 %v1951, %v1945
    %v2390 = vpack.c.b16 %v1952, %v1946
    %v2391 = vpack.c.b16 %v1953, %v1947
    %v2392 = vpack.c.b16 %v1954, %v1948
    %v2393 = vpack.c.b16 %v1955, %v1949
    %v2394 = vpack.c.b16 %v1962, %v1956
    %v2395 = vpack.c.b16 %v1963, %v1957
    %v2396 = vpack.c.b16 %v1964, %v1958
    %v2397 = vpack.c.b16 %v1965, %v1959
    %v2398 = vpack.c.b16 %v1966, %v1960
    %v2399 = vpack.c.b16 %v1967, %v1961
    %2832 = vmatprep.subr.bf16.mxu0 %v1969
    %2833 = vmatpush1.bf16.msra.mxu0 %v1968
    %2834 = vmatprep.subr.bf16.mxu0 %v1975
    %2835 = vmatpush1.bf16.msra.mxu0 %v1974
    %2836 = vmatprep.subr.bf16.mxu0 %v1981
    %2837 = vmatpush1.bf16.msra.mxu0 %v1980
    %2838 = vmatprep.subr.bf16.mxu0 %v1987
    %2839 = vmatpush1.bf16.msra.mxu0 %v1986
    %2840 = vmatprep.subr.bf16.mxu0 %v1993
    %2841 = vmatpush1.bf16.msra.mxu0 %v1992
    %2842 = vmatprep.subr.bf16.mxu0 %v1999
    %2843 = vmatpush1.bf16.msra.mxu0 %v1998
    %2844 = vmatprep.subr.bf16.mxu0 %v2005
    %2845 = vmatpush1.bf16.msra.mxu0 %v2004
    %2846 = vmatprep.subr.bf16.mxu0 %v2011
    %2847 = vmatpush1.bf16.msra.mxu0 %v2010
    %2848 = vmatprep.subr.bf16.mxu0 %v2017
    %2849 = vmatpush1.bf16.msra.mxu0 %v2016
    %2850 = vmatprep.subr.bf16.mxu0 %v2023
    %2851 = vmatpush1.bf16.msra.mxu0 %v2022
    %2852 = vmatprep.subr.bf16.mxu0 %v2029
    %2853 = vmatpush1.bf16.msra.mxu0 %v2028
    %2854 = vmatprep.subr.bf16.mxu0 %v2035
    %2855 = vmatpush1.bf16.msra.mxu0 %v2034
    %2856 = vmatprep.subr.bf16.mxu0 %v2041
    %2857 = vmatpush1.bf16.msra.mxu0 %v2040
    %2858 = vmatprep.subr.bf16.mxu0 %v2047
    %2859 = vmatpush1.bf16.msra.mxu0 %v2046
    %2860 = vmatprep.subr.bf16.mxu0 %v2053
    %2861 = vmatpush1.bf16.msra.mxu0 %v2052
    %2862 = vmatprep.subr.bf16.mxu0 %v2059
    %2863 = vmatpush1.bf16.msra.mxu0 %v2058
    %2864 = vmatprep.mubr.bf16.mxu0 %v655
    %2865 = vmatmul.mubr.bf16.gmra.mrb[0].mxu0 %v654
    %v2866 = vpop.f32.mrb[0].mxu0
    %v2867 = vadd.f32 %v613, %v2866
    %v2868 = vpop.f32.mrb[0].mxu0
    %v2869 = vadd.f32 %v617, %v2868
    %v2870 = vpop.f32.mrb[0].mxu0
    %v2871 = vpop.f32.mrb[0].mxu0
    %2872 = vdwg.mxu0
    %2873 = vmatprep.subr.bf16.mxu0 %v2065
    %2874 = vmatpush1.bf16.msra.mxu0 %v2064
    %2875 = vmatprep.subr.bf16.mxu0 %v2071
    %2876 = vmatpush1.bf16.msra.mxu0 %v2070
    %2877 = vmatprep.subr.bf16.mxu0 %v2077
    %2878 = vmatpush1.bf16.msra.mxu0 %v2076
    %2879 = vmatprep.subr.bf16.mxu0 %v2083
    %2880 = vmatpush1.bf16.msra.mxu0 %v2082
    %2881 = vmatprep.subr.bf16.mxu0 %v2089
    %2882 = vmatpush1.bf16.msra.mxu0 %v2088
    %2883 = vmatprep.subr.bf16.mxu0 %v2095
    %2884 = vmatpush1.bf16.msra.mxu0 %v2094
    %2885 = vmatprep.subr.bf16.mxu0 %v2101
    %2886 = vmatpush1.bf16.msra.mxu0 %v2100
    %2887 = vmatprep.subr.bf16.mxu0 %v2107
    %2888 = vmatpush1.bf16.msra.mxu0 %v2106
    %2889 = vmatprep.subr.bf16.mxu0 %v2113
    %2890 = vmatpush1.bf16.msra.mxu0 %v2112
    %2891 = vmatprep.subr.bf16.mxu0 %v2119
    %2892 = vmatpush1.bf16.msra.mxu0 %v2118
    %2893 = vmatprep.subr.bf16.mxu0 %v2125
    %2894 = vmatpush1.bf16.msra.mxu0 %v2124
    %2895 = vmatprep.subr.bf16.mxu0 %v2131
    %2896 = vmatpush1.bf16.msra.mxu0 %v2130
    %2897 = vmatprep.subr.bf16.mxu0 %v2137
    %2898 = vmatpush1.bf16.msra.mxu0 %v2136
    %2899 = vmatprep.subr.bf16.mxu0 %v2143
    %2900 = vmatpush1.bf16.msra.mxu0 %v2142
    %2901 = vmatprep.subr.bf16.mxu0 %v2149
    %2902 = vmatpush1.bf16.msra.mxu0 %v2148
    %2903 = vmatprep.subr.bf16.mxu0 %v2155
    %2904 = vmatpush1.bf16.msra.mxu0 %v2154
    %2905 = vmatprep.mubr.bf16.mxu0 %v657
    %2906 = vmatmul.mubr.bf16.gmra.mrb[0].mxu0 %v656
    %v2907 = vpop.f32.mrb[0].mxu0
    %v2908 = vadd.f32 %v2867, %v2907
    %v2909 = vpop.f32.mrb[0].mxu0
    %v2910 = vadd.f32 %v2869, %v2909
    %v2911 = vpop.f32.mrb[0].mxu0
    %v2912 = vpop.f32.mrb[0].mxu0
    %2913 = vdwg.mxu0
    %2914 = vmatprep.subr.bf16.mxu0 %v2161
    %2915 = vmatpush1.bf16.msra.mxu0 %v2160
    %2916 = vmatprep.subr.bf16.mxu0 %v2167
    %2917 = vmatpush1.bf16.msra.mxu0 %v2166
    %2918 = vmatprep.subr.bf16.mxu0 %v2173
    %2919 = vmatpush1.bf16.msra.mxu0 %v2172
    %2920 = vmatprep.subr.bf16.mxu0 %v2179
    %2921 = vmatpush1.bf16.msra.mxu0 %v2178
    %2922 = vmatprep.subr.bf16.mxu0 %v2185
    %2923 = vmatpush1.bf16.msra.mxu0 %v2184
    %2924 = vmatprep.subr.bf16.mxu0 %v2191
    %2925 = vmatpush1.bf16.msra.mxu0 %v2190
    %2926 = vmatprep.subr.bf16.mxu0 %v2197
    %2927 = vmatpush1.bf16.msra.mxu0 %v2196
    %2928 = vmatprep.subr.bf16.mxu0 %v2203
    %2929 = vmatpush1.bf16.msra.mxu0 %v2202
    %2930 = vmatprep.subr.bf16.mxu0 %v2209
    %2931 = vmatpush1.bf16.msra.mxu0 %v2208
    %2932 = vmatprep.subr.bf16.mxu0 %v2215
    %2933 = vmatpush1.bf16.msra.mxu0 %v2214
    %2934 = vmatprep.subr.bf16.mxu0 %v2221
    %2935 = vmatpush1.bf16.msra.mxu0 %v2220
    %2936 = vmatprep.subr.bf16.mxu0 %v2227
    %2937 = vmatpush1.bf16.msra.mxu0 %v2226
    %2938 = vmatprep.subr.bf16.mxu0 %v2233
    %2939 = vmatpush1.bf16.msra.mxu0 %v2232
    %2940 = vmatprep.subr.bf16.mxu0 %v2239
    %2941 = vmatpush1.bf16.msra.mxu0 %v2238
    %2942 = vmatprep.subr.bf16.mxu0 %v2245
    %2943 = vmatpush1.bf16.msra.mxu0 %v2244
    %2944 = vmatprep.subr.bf16.mxu0 %v2251
    %2945 = vmatpush1.bf16.msra.mxu0 %v2250
    %2946 = vmatprep.mubr.bf16.mxu0 %v659
    %2947 = vmatmul.mubr.bf16.gmra.mrb[0].mxu0 %v658
    %v2948 = vpop.f32.mrb[0].mxu0
    %v2949 = vadd.f32 %v2908, %v2948
    %v2950 = vpop.f32.mrb[0].mxu0
    %v2951 = vadd.f32 %v2910, %v2950
    %v2952 = vpop.f32.mrb[0].mxu0
    %v2953 = vpop.f32.mrb[0].mxu0
    %2954 = vdwg.mxu0
    %2955 = vmatprep.subr.bf16.mxu0 %v2257
    %2956 = vmatpush1.bf16.msra.mxu0 %v2256
    %2957 = vmatprep.subr.bf16.mxu0 %v2263
    %2958 = vmatpush1.bf16.msra.mxu0 %v2262
    %2959 = vmatprep.subr.bf16.mxu0 %v2269
    %2960 = vmatpush1.bf16.msra.mxu0 %v2268
    %2961 = vmatprep.subr.bf16.mxu0 %v2275
    %2962 = vmatpush1.bf16.msra.mxu0 %v2274
    %2963 = vmatprep.subr.bf16.mxu0 %v2281
    %2964 = vmatpush1.bf16.msra.mxu0 %v2280
    %2965 = vmatprep.subr.bf16.mxu0 %v2287
    %2966 = vmatpush1.bf16.msra.mxu0 %v2286
    %2967 = vmatprep.subr.bf16.mxu0 %v2293
    %2968 = vmatpush1.bf16.msra.mxu0 %v2292
    %2969 = vmatprep.subr.bf16.mxu0 %v2299
    %2970 = vmatpush1.bf16.msra.mxu0 %v2298
    %2971 = vmatprep.subr.bf16.mxu0 %v2305
    %2972 = vmatpush1.bf16.msra.mxu0 %v2304
    %2973 = vmatprep.subr.bf16.mxu0 %v2311
    %2974 = vmatpush1.bf16.msra.mxu0 %v2310
    %2975 = vmatprep.subr.bf16.mxu0 %v2317
    %2976 = vmatpush1.bf16.msra.mxu0 %v2316
    %2977 = vmatprep.subr.bf16.mxu0 %v2323
    %2978 = vmatpush1.bf16.msra.mxu0 %v2322
    %2979 = vmatprep.subr.bf16.mxu0 %v2329
    %2980 = vmatpush1.bf16.msra.mxu0 %v2328
    %2981 = vmatprep.subr.bf16.mxu0 %v2335
    %2982 = vmatpush1.bf16.msra.mxu0 %v2334
    %2983 = vmatprep.subr.bf16.mxu0 %v2341
    %2984 = vmatpush1.bf16.msra.mxu0 %v2340
    %2985 = vmatprep.subr.bf16.mxu0 %v2347
    %2986 = vmatpush1.bf16.msra.mxu0 %v2346
    %2987 = vmatprep.mubr.bf16.mxu0 %v661
    %2988 = vmatmul.mubr.bf16.gmra.mrb[0].mxu0 %v660
    %v2989 = vpop.f32.mrb[0].mxu0
    %v2990 = vadd.f32 %v2949, %v2989
    %v2991 = vpop.f32.mrb[0].mxu0
    %v2992 = vadd.f32 %v2951, %v2991
    %v2993 = vpop.f32.mrb[0].mxu0
    %v2994 = vpop.f32.mrb[0].mxu0
    %2995 = vdwg.mxu0
    %2996 = vmatprep.subr.bf16.mxu0 %v2353
    %2997 = vmatpush1.bf16.msra.mxu0 %v2352
    %2998 = vmatprep.subr.bf16.mxu0 %v2359
    %2999 = vmatpush1.bf16.msra.mxu0 %v2358
    %3000 = vmatprep.subr.bf16.mxu0 %v2365
    %3001 = vmatpush1.bf16.msra.mxu0 %v2364
    %3002 = vmatprep.subr.bf16.mxu0 %v2371
    %3003 = vmatpush1.bf16.msra.mxu0 %v2370
    %3004 = vmatprep.subr.bf16.mxu0 %v2377
    %3005 = vmatpush1.bf16.msra.mxu0 %v2376
    %3006 = vmatprep.subr.bf16.mxu0 %v2383
    %3007 = vmatpush1.bf16.msra.mxu0 %v2382
    %3008 = vmatprep.subr.bf16.mxu0 %v2389
    %3009 = vmatpush1.bf16.msra.mxu0 %v2388
    %3010 = vmatprep.subr.bf16.mxu0 %v2395
    %3011 = vmatpush1.bf16.msra.mxu0 %v2394
    %3012 = vmatprep.subr.bf16.mxu0 0
    %3013 = vmatpush1.bf16.msra.mxu0 0
    %3014 = vmatprep.subr.bf16.mxu0 0
    %3015 = vmatpush1.bf16.msra.mxu0 0
    %3016 = vmatprep.subr.bf16.mxu0 0
    %3017 = vmatpush1.bf16.msra.mxu0 0
    %3018 = vmatprep.subr.bf16.mxu0 0
    %3019 = vmatpush1.bf16.msra.mxu0 0
    %3020 = vmatprep.subr.bf16.mxu0 0
    %3021 = vmatpush1.bf16.msra.mxu0 0
    %3022 = vmatprep.subr.bf16.mxu0 0
    %3023 = vmatpush1.bf16.msra.mxu0 0
    %3024 = vmatprep.subr.bf16.mxu0 0
    %3025 = vmatpush1.bf16.msra.mxu0 0
    %3026 = vmatprep.subr.bf16.mxu0 0
    %3027 = vmatpush1.bf16.msra.mxu0 0
    %3028 = vmatprep.mubr.bf16.mxu0 0
    %3029 = vmatmul.mubr.bf16.gmra.mrb[0].mxu0 %v662
    %v3030 = vpop.f32.mrb[0].mxu0
    %v3031 = vadd.f32 %v2990, %v3030
    %v3032 = vpop.f32.mrb[0].mxu0
    %v3033 = vadd.f32 %v2992, %v3032
    %v3034 = vpop.f32.mrb[0].mxu0
    %v3035 = vpop.f32.mrb[0].mxu0
    %3036 = vdwg.mxu0
    %3037 = vmatprep.subr.bf16.mxu0 %v1971
    %3038 = vmatpush1.bf16.msra.mxu0 %v1970
    %3039 = vmatprep.subr.bf16.mxu0 %v1977
    %3040 = vmatpush1.bf16.msra.mxu0 %v1976
    %3041 = vmatprep.subr.bf16.mxu0 %v1983
    %3042 = vmatpush1.bf16.msra.mxu0 %v1982
    %3043 = vmatprep.subr.bf16.mxu0 %v1989
    %3044 = vmatpush1.bf16.msra.mxu0 %v1988
    %3045 = vmatprep.subr.bf16.mxu0 %v1995
    %3046 = vmatpush1.bf16.msra.mxu0 %v1994
    %3047 = vmatprep.subr.bf16.mxu0 %v2001
    %3048 = vmatpush1.bf16.msra.mxu0 %v2000
    %3049 = vmatprep.subr.bf16.mxu0 %v2007
    %3050 = vmatpush1.bf16.msra.mxu0 %v2006
    %3051 = vmatprep.subr.bf16.mxu0 %v2013
    %3052 = vmatpush1.bf16.msra.mxu0 %v2012
    %3053 = vmatprep.subr.bf16.mxu0 %v2019
    %3054 = vmatpush1.bf16.msra.mxu0 %v2018
    %3055 = vmatprep.subr.bf16.mxu0 %v2025
    %3056 = vmatpush1.bf16.msra.mxu0 %v2024
    %3057 = vmatprep.subr.bf16.mxu0 %v2031
    %3058 = vmatpush1.bf16.msra.mxu0 %v2030
    %3059 = vmatprep.subr.bf16.mxu0 %v2037
    %3060 = vmatpush1.bf16.msra.mxu0 %v2036
    %3061 = vmatprep.subr.bf16.mxu0 %v2043
    %3062 = vmatpush1.bf16.msra.mxu0 %v2042
    %3063 = vmatprep.subr.bf16.mxu0 %v2049
    %3064 = vmatpush1.bf16.msra.mxu0 %v2048
    %3065 = vmatprep.subr.bf16.mxu0 %v2055
    %3066 = vmatpush1.bf16.msra.mxu0 %v2054
    %3067 = vmatprep.subr.bf16.mxu0 %v2061
    %3068 = vmatpush1.bf16.msra.mxu0 %v2060
    %3069 = vmatprep.mubr.bf16.mxu0 %v655
    %3070 = vmatmul.mubr.bf16.gmra.mrb[0].mxu0 %v654
    %v3071 = vpop.f32.mrb[0].mxu0
    %v3072 = vadd.f32 %v621, %v3071
    %v3073 = vpop.f32.mrb[0].mxu0
    %v3074 = vadd.f32 %v625, %v3073
    %v3075 = vpop.f32.mrb[0].mxu0
    %v3076 = vpop.f32.mrb[0].mxu0
    %3077 = vdwg.mxu0
    %3078 = vmatprep.subr.bf16.mxu0 %v2067
    %3079 = vmatpush1.bf16.msra.mxu0 %v2066
    %3080 = vmatprep.subr.bf16.mxu0 %v2073
    %3081 = vmatpush1.bf16.msra.mxu0 %v2072
    %3082 = vmatprep.subr.bf16.mxu0 %v2079
    %3083 = vmatpush1.bf16.msra.mxu0 %v2078
    %3084 = vmatprep.subr.bf16.mxu0 %v2085
    %3085 = vmatpush1.bf16.msra.mxu0 %v2084
    %3086 = vmatprep.subr.bf16.mxu0 %v2091
    %3087 = vmatpush1.bf16.msra.mxu0 %v2090
    %3088 = vmatprep.subr.bf16.mxu0 %v2097
    %3089 = vmatpush1.bf16.msra.mxu0 %v2096
    %3090 = vmatprep.subr.bf16.mxu0 %v2103
    %3091 = vmatpush1.bf16.msra.mxu0 %v2102
    %3092 = vmatprep.subr.bf16.mxu0 %v2109
    %3093 = vmatpush1.bf16.msra.mxu0 %v2108
    %3094 = vmatprep.subr.bf16.mxu0 %v2115
    %3095 = vmatpush1.bf16.msra.mxu0 %v2114
    %3096 = vmatprep.subr.bf16.mxu0 %v2121
    %3097 = vmatpush1.bf16.msra.mxu0 %v2120
    %3098 = vmatprep.subr.bf16.mxu0 %v2127
    %3099 = vmatpush1.bf16.msra.mxu0 %v2126
    %3100 = vmatprep.subr.bf16.mxu0 %v2133
    %3101 = vmatpush1.bf16.msra.mxu0 %v2132
    %3102 = vmatprep.subr.bf16.mxu0 %v2139
    %3103 = vmatpush1.bf16.msra.mxu0 %v2138
    %3104 = vmatprep.subr.bf16.mxu0 %v2145
    %3105 = vmatpush1.bf16.msra.mxu0 %v2144
    %3106 = vmatprep.subr.bf16.mxu0 %v2151
    %3107 = vmatpush1.bf16.msra.mxu0 %v2150
    %3108 = vmatprep.subr.bf16.mxu0 %v2157
    %3109 = vmatpush1.bf16.msra.mxu0 %v2156
    %3110 = vmatprep.mubr.bf16.mxu0 %v657
    %3111 = vmatmul.mubr.bf16.gmra.mrb[0].mxu0 %v656
    %v3112 = vpop.f32.mrb[0].mxu0
    %v3113 = vadd.f32 %v3072, %v3112
    %v3114 = vpop.f32.mrb[0].mxu0
    %v3115 = vadd.f32 %v3074, %v3114
    %v3116 = vpop.f32.mrb[0].mxu0
    %v3117 = vpop.f32.mrb[0].mxu0
    %3118 = vdwg.mxu0
    %3119 = vmatprep.subr.bf16.mxu0 %v2163
    %3120 = vmatpush1.bf16.msra.mxu0 %v2162
    %3121 = vmatprep.subr.bf16.mxu0 %v2169
    %3122 = vmatpush1.bf16.msra.mxu0 %v2168
    %3123 = vmatprep.subr.bf16.mxu0 %v2175
    %3124 = vmatpush1.bf16.msra.mxu0 %v2174
    %3125 = vmatprep.subr.bf16.mxu0 %v2181
    %3126 = vmatpush1.bf16.msra.mxu0 %v2180
    %3127 = vmatprep.subr.bf16.mxu0 %v2187
    %3128 = vmatpush1.bf16.msra.mxu0 %v2186
    %3129 = vmatprep.subr.bf16.mxu0 %v2193
    %3130 = vmatpush1.bf16.msra.mxu0 %v2192
    %3131 = vmatprep.subr.bf16.mxu0 %v2199
    %3132 = vmatpush1.bf16.msra.mxu0 %v2198
    %3133 = vmatprep.subr.bf16.mxu0 %v2205
    %3134 = vmatpush1.bf16.msra.mxu0 %v2204
    %3135 = vmatprep.subr.bf16.mxu0 %v2211
    %3136 = vmatpush1.bf16.msra.mxu0 %v2210
    %3137 = vmatprep.subr.bf16.mxu0 %v2217
    %3138 = vmatpush1.bf16.msra.mxu0 %v2216
    %3139 = vmatprep.subr.bf16.mxu0 %v2223
    %3140 = vmatpush1.bf16.msra.mxu0 %v2222
    %3141 = vmatprep.subr.bf16.mxu0 %v2229
    %3142 = vmatpush1.bf16.msra.mxu0 %v2228
    %3143 = vmatprep.subr.bf16.mxu0 %v2235
    %3144 = vmatpush1.bf16.msra.mxu0 %v2234
    %3145 = vmatprep.subr.bf16.mxu0 %v2241
    %3146 = vmatpush1.bf16.msra.mxu0 %v2240
    %3147 = vmatprep.subr.bf16.mxu0 %v2247
    %3148 = vmatpush1.bf16.msra.mxu0 %v2246
    %3149 = vmatprep.subr.bf16.mxu0 %v2253
    %3150 = vmatpush1.bf16.msra.mxu0 %v2252
    %3151 = vmatprep.mubr.bf16.mxu0 %v659
    %3152 = vmatmul.mubr.bf16.gmra.mrb[0].mxu0 %v658
    %v3153 = vpop.f32.mrb[0].mxu0
    %v3154 = vadd.f32 %v3113, %v3153
    %v3155 = vpop.f32.mrb[0].mxu0
    %v3156 = vadd.f32 %v3115, %v3155
    %v3157 = vpop.f32.mrb[0].mxu0
    %v3158 = vpop.f32.mrb[0].mxu0
    %3159 = vdwg.mxu0
    %3160 = vmatprep.subr.bf16.mxu0 %v2259
    %3161 = vmatpush1.bf16.msra.mxu0 %v2258
    %3162 = vmatprep.subr.bf16.mxu0 %v2265
    %3163 = vmatpush1.bf16.msra.mxu0 %v2264
    %3164 = vmatprep.subr.bf16.mxu0 %v2271
    %3165 = vmatpush1.bf16.msra.mxu0 %v2270
    %3166 = vmatprep.subr.bf16.mxu0 %v2277
    %3167 = vmatpush1.bf16.msra.mxu0 %v2276
    %3168 = vmatprep.subr.bf16.mxu0 %v2283
    %3169 = vmatpush1.bf16.msra.mxu0 %v2282
    %3170 = vmatprep.subr.bf16.mxu0 %v2289
    %3171 = vmatpush1.bf16.msra.mxu0 %v2288
    %3172 = vmatprep.subr.bf16.mxu0 %v2295
    %3173 = vmatpush1.bf16.msra.mxu0 %v2294
    %3174 = vmatprep.subr.bf16.mxu0 %v2301
    %3175 = vmatpush1.bf16.msra.mxu0 %v2300
    %3176 = vmatprep.subr.bf16.mxu0 %v2307
    %3177 = vmatpush1.bf16.msra.mxu0 %v2306
    %3178 = vmatprep.subr.bf16.mxu0 %v2313
    %3179 = vmatpush1.bf16.msra.mxu0 %v2312
    %3180 = vmatprep.subr.bf16.mxu0 %v2319
    %3181 = vmatpush1.bf16.msra.mxu0 %v2318
    %3182 = vmatprep.subr.bf16.mxu0 %v2325
    %3183 = vmatpush1.bf16.msra.mxu0 %v2324
    %3184 = vmatprep.subr.bf16.mxu0 %v2331
    %3185 = vmatpush1.bf16.msra.mxu0 %v2330
    %3186 = vmatprep.subr.bf16.mxu0 %v2337
    %3187 = vmatpush1.bf16.msra.mxu0 %v2336
    %3188 = vmatprep.subr.bf16.mxu0 %v2343
    %3189 = vmatpush1.bf16.msra.mxu0 %v2342
    %3190 = vmatprep.subr.bf16.mxu0 %v2349
    %3191 = vmatpush1.bf16.msra.mxu0 %v2348
    %3192 = vmatprep.mubr.bf16.mxu0 %v661
    %3193 = vmatmul.mubr.bf16.gmra.mrb[0].mxu0 %v660
    %v3194 = vpop.f32.mrb[0].mxu0
    %v3195 = vadd.f32 %v3154, %v3194
    %v3196 = vpop.f32.mrb[0].mxu0
    %v3197 = vadd.f32 %v3156, %v3196
    %v3198 = vpop.f32.mrb[0].mxu0
    %v3199 = vpop.f32.mrb[0].mxu0
    %3200 = vdwg.mxu0
    %3201 = vmatprep.subr.bf16.mxu0 %v2355
    %3202 = vmatpush1.bf16.msra.mxu0 %v2354
    %3203 = vmatprep.subr.bf16.mxu0 %v2361
    %3204 = vmatpush1.bf16.msra.mxu0 %v2360
    %3205 = vmatprep.subr.bf16.mxu0 %v2367
    %3206 = vmatpush1.bf16.msra.mxu0 %v2366
    %3207 = vmatprep.subr.bf16.mxu0 %v2373
    %3208 = vmatpush1.bf16.msra.mxu0 %v2372
    %3209 = vmatprep.subr.bf16.mxu0 %v2379
    %3210 = vmatpush1.bf16.msra.mxu0 %v2378
    %3211 = vmatprep.subr.bf16.mxu0 %v2385
    %3212 = vmatpush1.bf16.msra.mxu0 %v2384
    %3213 = vmatprep.subr.bf16.mxu0 %v2391
    %3214 = vmatpush1.bf16.msra.mxu0 %v2390
    %3215 = vmatprep.subr.bf16.mxu0 %v2397
    %3216 = vmatpush1.bf16.msra.mxu0 %v2396
    %3217 = vmatprep.subr.bf16.mxu0 0
    %3218 = vmatpush1.bf16.msra.mxu0 0
    %3219 = vmatprep.subr.bf16.mxu0 0
    %3220 = vmatpush1.bf16.msra.mxu0 0
    %3221 = vmatprep.subr.bf16.mxu0 0
    %3222 = vmatpush1.bf16.msra.mxu0 0
    %3223 = vmatprep.subr.bf16.mxu0 0
    %3224 = vmatpush1.bf16.msra.mxu0 0
    %3225 = vmatprep.subr.bf16.mxu0 0
    %3226 = vmatpush1.bf16.msra.mxu0 0
    %3227 = vmatprep.subr.bf16.mxu0 0
    %3228 = vmatpush1.bf16.msra.mxu0 0
    %3229 = vmatprep.subr.bf16.mxu0 0
    %3230 = vmatpush1.bf16.msra.mxu0 0
    %3231 = vmatprep.subr.bf16.mxu0 0
    %3232 = vmatpush1.bf16.msra.mxu0 0
    %3233 = vmatprep.mubr.bf16.mxu0 0
    %3234 = vmatmul.mubr.bf16.gmra.mrb[0].mxu0 %v662
    %v3235 = vpop.f32.mrb[0].mxu0
    %v3236 = vadd.f32 %v3195, %v3235
    %v3237 = vpop.f32.mrb[0].mxu0
    %v3238 = vadd.f32 %v3197, %v3237
    %v3239 = vpop.f32.mrb[0].mxu0
    %v3240 = vpop.f32.mrb[0].mxu0
    %3241 = vdwg.mxu0
    %3242 = vmatprep.subr.bf16.mxu0 %v1973
    %3243 = vmatpush1.bf16.msra.mxu0 %v1972
    %3244 = vmatprep.subr.bf16.mxu0 %v1979
    %3245 = vmatpush1.bf16.msra.mxu0 %v1978
    %3246 = vmatprep.subr.bf16.mxu0 %v1985
    %3247 = vmatpush1.bf16.msra.mxu0 %v1984
    %3248 = vmatprep.subr.bf16.mxu0 %v1991
    %3249 = vmatpush1.bf16.msra.mxu0 %v1990
    %3250 = vmatprep.subr.bf16.mxu0 %v1997
    %3251 = vmatpush1.bf16.msra.mxu0 %v1996
    %3252 = vmatprep.subr.bf16.mxu0 %v2003
    %3253 = vmatpush1.bf16.msra.mxu0 %v2002
    %3254 = vmatprep.subr.bf16.mxu0 %v2009
    %3255 = vmatpush1.bf16.msra.mxu0 %v2008
    %3256 = vmatprep.subr.bf16.mxu0 %v2015
    %3257 = vmatpush1.bf16.msra.mxu0 %v2014
    %3258 = vmatprep.subr.bf16.mxu0 %v2021
    %3259 = vmatpush1.bf16.msra.mxu0 %v2020
    %3260 = vmatprep.subr.bf16.mxu0 %v2027
    %3261 = vmatpush1.bf16.msra.mxu0 %v2026
    %3262 = vmatprep.subr.bf16.mxu0 %v2033
    %3263 = vmatpush1.bf16.msra.mxu0 %v2032
    %3264 = vmatprep.subr.bf16.mxu0 %v2039
    %3265 = vmatpush1.bf16.msra.mxu0 %v2038
    %3266 = vmatprep.subr.bf16.mxu0 %v2045
    %3267 = vmatpush1.bf16.msra.mxu0 %v2044
    %3268 = vmatprep.subr.bf16.mxu0 %v2051
    %3269 = vmatpush1.bf16.msra.mxu0 %v2050
    %3270 = vmatprep.subr.bf16.mxu0 %v2057
    %3271 = vmatpush1.bf16.msra.mxu0 %v2056
    %3272 = vmatprep.subr.bf16.mxu0 %v2063
    %3273 = vmatpush1.bf16.msra.mxu0 %v2062
    %3274 = vmatprep.mubr.bf16.mxu0 %v655
    %3275 = vmatmul.mubr.bf16.gmra.mrb[0].mxu0 %v654
    %v3276 = vpop.f32.mrb[0].mxu0
    %v3277 = vadd.f32 %v629, %v3276
    %v3278 = vpop.f32.mrb[0].mxu0
    %v3279 = vadd.f32 %v633, %v3278
    %v3280 = vpop.f32.mrb[0].mxu0
    %v3281 = vpop.f32.mrb[0].mxu0
    %3282 = vdwg.mxu0
    %3283 = vmatprep.subr.bf16.mxu0 %v2069
    %3284 = vmatpush1.bf16.msra.mxu0 %v2068
    %3285 = vmatprep.subr.bf16.mxu0 %v2075
    %3286 = vmatpush1.bf16.msra.mxu0 %v2074
    %3287 = vmatprep.subr.bf16.mxu0 %v2081
    %3288 = vmatpush1.bf16.msra.mxu0 %v2080
    %3289 = vmatprep.subr.bf16.mxu0 %v2087
    %3290 = vmatpush1.bf16.msra.mxu0 %v2086
    %3291 = vmatprep.subr.bf16.mxu0 %v2093
    %3292 = vmatpush1.bf16.msra.mxu0 %v2092
    %3293 = vmatprep.subr.bf16.mxu0 %v2099
    %3294 = vmatpush1.bf16.msra.mxu0 %v2098
    %3295 = vmatprep.subr.bf16.mxu0 %v2105
    %3296 = vmatpush1.bf16.msra.mxu0 %v2104
    %3297 = vmatprep.subr.bf16.mxu0 %v2111
    %3298 = vmatpush1.bf16.msra.mxu0 %v2110
    %3299 = vmatprep.subr.bf16.mxu0 %v2117
    %3300 = vmatpush1.bf16.msra.mxu0 %v2116
    %3301 = vmatprep.subr.bf16.mxu0 %v2123
    %3302 = vmatpush1.bf16.msra.mxu0 %v2122
    %3303 = vmatprep.subr.bf16.mxu0 %v2129
    %3304 = vmatpush1.bf16.msra.mxu0 %v2128
    %3305 = vmatprep.subr.bf16.mxu0 %v2135
    %3306 = vmatpush1.bf16.msra.mxu0 %v2134
    %3307 = vmatprep.subr.bf16.mxu0 %v2141
    %3308 = vmatpush1.bf16.msra.mxu0 %v2140
    %3309 = vmatprep.subr.bf16.mxu0 %v2147
    %3310 = vmatpush1.bf16.msra.mxu0 %v2146
    %3311 = vmatprep.subr.bf16.mxu0 %v2153
    %3312 = vmatpush1.bf16.msra.mxu0 %v2152
    %3313 = vmatprep.subr.bf16.mxu0 %v2159
    %3314 = vmatpush1.bf16.msra.mxu0 %v2158
    %3315 = vmatprep.mubr.bf16.mxu0 %v657
    %3316 = vmatmul.mubr.bf16.gmra.mrb[0].mxu0 %v656
    %v3317 = vpop.f32.mrb[0].mxu0
    %v3318 = vadd.f32 %v3277, %v3317
    %v3319 = vpop.f32.mrb[0].mxu0
    %v3320 = vadd.f32 %v3279, %v3319
    %v3321 = vpop.f32.mrb[0].mxu0
    %v3322 = vpop.f32.mrb[0].mxu0
    %3323 = vdwg.mxu0
    %3324 = vmatprep.subr.bf16.mxu0 %v2165
    %3325 = vmatpush1.bf16.msra.mxu0 %v2164
    %3326 = vmatprep.subr.bf16.mxu0 %v2171
    %3327 = vmatpush1.bf16.msra.mxu0 %v2170
    %3328 = vmatprep.subr.bf16.mxu0 %v2177
    %3329 = vmatpush1.bf16.msra.mxu0 %v2176
    %3330 = vmatprep.subr.bf16.mxu0 %v2183
    %3331 = vmatpush1.bf16.msra.mxu0 %v2182
    %3332 = vmatprep.subr.bf16.mxu0 %v2189
    %3333 = vmatpush1.bf16.msra.mxu0 %v2188
    %3334 = vmatprep.subr.bf16.mxu0 %v2195
    %3335 = vmatpush1.bf16.msra.mxu0 %v2194
    %3336 = vmatprep.subr.bf16.mxu0 %v2201
    %3337 = vmatpush1.bf16.msra.mxu0 %v2200
    %3338 = vmatprep.subr.bf16.mxu0 %v2207
    %3339 = vmatpush1.bf16.msra.mxu0 %v2206
    %3340 = vmatprep.subr.bf16.mxu0 %v2213
    %3341 = vmatpush1.bf16.msra.mxu0 %v2212
    %3342 = vmatprep.subr.bf16.mxu0 %v2219
    %3343 = vmatpush1.bf16.msra.mxu0 %v2218
    %3344 = vmatprep.subr.bf16.mxu0 %v2225
    %3345 = vmatpush1.bf16.msra.mxu0 %v2224
    %3346 = vmatprep.subr.bf16.mxu0 %v2231
    %3347 = vmatpush1.bf16.msra.mxu0 %v2230
    %3348 = vmatprep.subr.bf16.mxu0 %v2237
    %3349 = vmatpush1.bf16.msra.mxu0 %v2236
    %3350 = vmatprep.subr.bf16.mxu0 %v2243
    %3351 = vmatpush1.bf16.msra.mxu0 %v2242
    %3352 = vmatprep.subr.bf16.mxu0 %v2249
    %3353 = vmatpush1.bf16.msra.mxu0 %v2248
    %3354 = vmatprep.subr.bf16.mxu0 %v2255
    %3355 = vmatpush1.bf16.msra.mxu0 %v2254
    %3356 = vmatprep.mubr.bf16.mxu0 %v659
    %3357 = vmatmul.mubr.bf16.gmra.mrb[0].mxu0 %v658
    %v3358 = vpop.f32.mrb[0].mxu0
    %v3359 = vadd.f32 %v3318, %v3358
    %v3360 = vpop.f32.mrb[0].mxu0
    %v3361 = vadd.f32 %v3320, %v3360
    %v3362 = vpop.f32.mrb[0].mxu0
    %v3363 = vpop.f32.mrb[0].mxu0
    %3364 = vdwg.mxu0
    %3365 = vmatprep.subr.bf16.mxu0 %v2261
    %3366 = vmatpush1.bf16.msra.mxu0 %v2260
    %3367 = vmatprep.subr.bf16.mxu0 %v2267
    %3368 = vmatpush1.bf16.msra.mxu0 %v2266
    %3369 = vmatprep.subr.bf16.mxu0 %v2273
    %3370 = vmatpush1.bf16.msra.mxu0 %v2272
    %3371 = vmatprep.subr.bf16.mxu0 %v2279
    %3372 = vmatpush1.bf16.msra.mxu0 %v2278
    %3373 = vmatprep.subr.bf16.mxu0 %v2285
    %3374 = vmatpush1.bf16.msra.mxu0 %v2284
    %3375 = vmatprep.subr.bf16.mxu0 %v2291
    %3376 = vmatpush1.bf16.msra.mxu0 %v2290
    %3377 = vmatprep.subr.bf16.mxu0 %v2297
    %3378 = vmatpush1.bf16.msra.mxu0 %v2296
    %3379 = vmatprep.subr.bf16.mxu0 %v2303
    %3380 = vmatpush1.bf16.msra.mxu0 %v2302
    %3381 = vmatprep.subr.bf16.mxu0 %v2309
    %3382 = vmatpush1.bf16.msra.mxu0 %v2308
    %3383 = vmatprep.subr.bf16.mxu0 %v2315
    %3384 = vmatpush1.bf16.msra.mxu0 %v2314
    %3385 = vmatprep.subr.bf16.mxu0 %v2321
    %3386 = vmatpush1.bf16.msra.mxu0 %v2320
    %3387 = vmatprep.subr.bf16.mxu0 %v2327
    %3388 = vmatpush1.bf16.msra.mxu0 %v2326
    %3389 = vmatprep.subr.bf16.mxu0 %v2333
    %3390 = vmatpush1.bf16.msra.mxu0 %v2332
    %3391 = vmatprep.subr.bf16.mxu0 %v2339
    %3392 = vmatpush1.bf16.msra.mxu0 %v2338
    %3393 = vmatprep.subr.bf16.mxu0 %v2345
    %3394 = vmatpush1.bf16.msra.mxu0 %v2344
    %3395 = vmatprep.subr.bf16.mxu0 %v2351
    %3396 = vmatpush1.bf16.msra.mxu0 %v2350
    %3397 = vmatprep.mubr.bf16.mxu0 %v661
    %3398 = vmatmul.mubr.bf16.gmra.mrb[0].mxu0 %v660
    %v3399 = vpop.f32.mrb[0].mxu0
    %v3400 = vadd.f32 %v3359, %v3399
    %v3401 = vpop.f32.mrb[0].mxu0
    %v3402 = vadd.f32 %v3361, %v3401
    %v3403 = vpop.f32.mrb[0].mxu0
    %v3404 = vpop.f32.mrb[0].mxu0
    %3405 = vdwg.mxu0
    %3406 = vmatprep.subr.bf16.mxu0 %v2357
    %3407 = vmatpush1.bf16.msra.mxu0 %v2356
    %3408 = vmatprep.subr.bf16.mxu0 %v2363
    %3409 = vmatpush1.bf16.msra.mxu0 %v2362
    %3410 = vmatprep.subr.bf16.mxu0 %v2369
    %3411 = vmatpush1.bf16.msra.mxu0 %v2368
    %3412 = vmatprep.subr.bf16.mxu0 %v2375
    %3413 = vmatpush1.bf16.msra.mxu0 %v2374
    %3414 = vmatprep.subr.bf16.mxu0 %v2381
    %3415 = vmatpush1.bf16.msra.mxu0 %v2380
    %3416 = vmatprep.subr.bf16.mxu0 %v2387
    %3417 = vmatpush1.bf16.msra.mxu0 %v2386
    %3418 = vmatprep.subr.bf16.mxu0 %v2393
    %3419 = vmatpush1.bf16.msra.mxu0 %v2392
    %3420 = vmatprep.subr.bf16.mxu0 %v2399
    %3421 = vmatpush1.bf16.msra.mxu0 %v2398
    %3422 = vmatprep.subr.bf16.mxu0 0
    %3423 = vmatpush1.bf16.msra.mxu0 0
    %3424 = vmatprep.subr.bf16.mxu0 0
    %3425 = vmatpush1.bf16.msra.mxu0 0
    %3426 = vmatprep.subr.bf16.mxu0 0
    %3427 = vmatpush1.bf16.msra.mxu0 0
    %3428 = vmatprep.subr.bf16.mxu0 0
    %3429 = vmatpush1.bf16.msra.mxu0 0
    %3430 = vmatprep.subr.bf16.mxu0 0
    %3431 = vmatpush1.bf16.msra.mxu0 0
    %3432 = vmatprep.subr.bf16.mxu0 0
    %3433 = vmatpush1.bf16.msra.mxu0 0
    %3434 = vmatprep.subr.bf16.mxu0 0
    %3435 = vmatpush1.bf16.msra.mxu0 0
    %3436 = vmatprep.subr.bf16.mxu0 0
    %3437 = vmatpush1.bf16.msra.mxu0 0
    %3438 = vmatprep.mubr.bf16.mxu0 0
    %3439 = vmatmul.mubr.bf16.gmra.mrb[0].mxu0 %v662
    %v3440 = vpop.f32.mrb[0].mxu0
    %v3441 = vadd.f32 %v3400, %v3440
    %v3442 = vpop.f32.mrb[0].mxu0
    %v3443 = vadd.f32 %v3402, %v3442
    %v3444 = vpop.f32.mrb[0].mxu0
    %v3445 = vpop.f32.mrb[0].mxu0
    %3446 = vdwg.mxu0
    %v3447 = vmax.f32 %v3031, 0.0
    %v3448 = vmax.f32 %v3033, 0.0
    %v3449 = vmax.f32 %v3236, 0.0
    %v3450 = vmax.f32 %v3238, 0.0
    %v3451 = vmax.f32 %v3441, 0.0
    %v3452 = vmax.f32 %v3443, 0.0
    %v3453 = vpack.c.bf16 %v3447, %v3447
    %v3454 = vpack.c.bf16 %v3448, %v3448
    %v3455 = vpack.c.bf16 %v3449, %v3449
    %v3456 = vpack.c.bf16 %v3450, %v3450
    %v3457 = vpack.c.bf16 %v3451, %v3451
    %v3458 = vpack.c.bf16 %v3452, %v3452
    %v3459 = vld [vmem:[#allocation11] sm:$0xff]
    %v3460 = vld [vmem:[#allocation11 + $0x8] sm:$0xff]
    %v3461 = vld [vmem:[#allocation11 + $0x10] sm:$0xff]
    %v3462 = vld [vmem:[#allocation11 + $0x18] sm:$0xff]
    %v3463 = vld [vmem:[#allocation11 + $0x20] sm:$0xff]
    %v3464 = vld [vmem:[#allocation11 + $0x28] sm:$0xff]
    %v3465 = vld [vmem:[#allocation11 + $0x30] sm:$0xff]
    %v3466 = vld [vmem:[#allocation11 + $0x38] sm:$0xff]
    %v3467 = vld [vmem:[#allocation11 + $0x40] sm:$0xff]
    %v3468 = vld [vmem:[#allocation11 + $0x48] sm:$0xff]
    %v3469 = vld [vmem:[#allocation11 + $0x50] sm:$0xff]
    %v3470 = vld [vmem:[#allocation11 + $0x58] sm:$0xff]
    %v3471 = vld [vmem:[#allocation11 + $0x60] sm:$0xff]
    %v3472 = vld [vmem:[#allocation11 + $0x68] sm:$0xff]
    %v3473 = vld [vmem:[#allocation11 + $0x70] sm:$0xff]
    %v3474 = vld [vmem:[#allocation11 + $0x78] sm:$0xff]
    %v3475 = vld [vmem:[#allocation11 + $0x80] sm:$0xff]
    %v3476 = vld [vmem:[#allocation11 + $0x88] sm:$0xff]
    %v3477 = vld [vmem:[#allocation11 + $0x90] sm:$0xff]
    %v3478 = vld [vmem:[#allocation11 + $0x98] sm:$0xff]
    %v3479 = vld [vmem:[#allocation11 + $0xa0] sm:$0xff]
    %v3480 = vld [vmem:[#allocation11 + $0xa8] sm:$0xff]
    %v3481 = vld [vmem:[#allocation11 + $0xb0] sm:$0xff]
    %v3482 = vld [vmem:[#allocation11 + $0xb8] sm:$0xff]
    %v3483 = vld [vmem:[#allocation11 + $0xc0] sm:$0xff]
    %v3484 = vld [vmem:[#allocation11 + $0xc8] sm:$0xff]
    %v3485 = vld [vmem:[#allocation11 + $0xd0] sm:$0xff]
    %v3486 = vld [vmem:[#allocation11 + $0xd8] sm:$0xff]
    %v3487 = vld [vmem:[#allocation11 + $0xe0] sm:$0xff]
    %v3488 = vld [vmem:[#allocation11 + $0xe8] sm:$0xff]
    %v3489 = vld [vmem:[#allocation11 + $0xf0] sm:$0xff]
    %v3490 = vld [vmem:[#allocation11 + $0xf8] sm:$0xff]
    %v3491 = vld [vmem:[#allocation11 + $0x100] sm:$0xff]
    %v3492 = vld [vmem:[#allocation11 + $0x108] sm:$0xff]
    %v3493 = vld [vmem:[#allocation11 + $0x110] sm:$0xff]
    %v3494 = vld [vmem:[#allocation11 + $0x118] sm:$0xff]
    %v3495 = vld [vmem:[#allocation11 + $0x120] sm:$0xff]
    %v3496 = vld [vmem:[#allocation11 + $0x128] sm:$0xff]
    %v3497 = vld [vmem:[#allocation11 + $0x130] sm:$0xff]
    %v3498 = vld [vmem:[#allocation11 + $0x138] sm:$0xff]
    %v3499 = vld [vmem:[#allocation11 + $0x140] sm:$0xff]
    %v3500 = vld [vmem:[#allocation11 + $0x148] sm:$0xff]
    %v3501 = vld [vmem:[#allocation11 + $0x150] sm:$0xff]
    %v3502 = vld [vmem:[#allocation11 + $0x158] sm:$0xff]
    %v3503 = vld [vmem:[#allocation11 + $0x160] sm:$0xff]
    %v3504 = vld [vmem:[#allocation11 + $0x168] sm:$0xff]
    %v3505 = vld [vmem:[#allocation11 + $0x170] sm:$0xff]
    %v3506 = vld [vmem:[#allocation11 + $0x178] sm:$0xff]
    %v3507 = vld [vmem:[#allocation11 + $0x180] sm:$0xff]
    %v3508 = vld [vmem:[#allocation11 + $0x188] sm:$0xff]
    %v3509 = vld [vmem:[#allocation11 + $0x190] sm:$0xff]
    %v3510 = vld [vmem:[#allocation11 + $0x198] sm:$0xff]
    %v3511 = vld [vmem:[#allocation11 + $0x1a0] sm:$0xff]
    %v3512 = vld [vmem:[#allocation11 + $0x1a8] sm:$0xff]
    %v3513 = vld [vmem:[#allocation11 + $0x1b0] sm:$0xff]
    %v3514 = vld [vmem:[#allocation11 + $0x1b8] sm:$0xff]
    %v3515 = vld [vmem:[#allocation11 + $0x1c0] sm:$0xff]
    %v3516 = vld [vmem:[#allocation11 + $0x1c8] sm:$0xff]
    %v3517 = vld [vmem:[#allocation11 + $0x1d0] sm:$0xff]
    %v3518 = vld [vmem:[#allocation11 + $0x1d8] sm:$0xff]
    %v3519 = vld [vmem:[#allocation11 + $0x1e0] sm:$0xff]
    %v3520 = vld [vmem:[#allocation11 + $0x1e8] sm:$0xff]
    %v3521 = vld [vmem:[#allocation11 + $0x1f0] sm:$0xff]
    %v3522 = vld [vmem:[#allocation11 + $0x1f8] sm:$0xff]
    %v3523 = vld [vmem:[#allocation11 + $0x200] sm:$0xff]
    %v3524 = vld [vmem:[#allocation11 + $0x208] sm:$0xff]
    %v3525 = vld [vmem:[#allocation11 + $0x210] sm:$0xff]
    %v3526 = vld [vmem:[#allocation11 + $0x218] sm:$0xff]
    %v3527 = vld [vmem:[#allocation11 + $0x220] sm:$0xff]
    %v3528 = vld [vmem:[#allocation11 + $0x228] sm:$0xff]
    %v3529 = vld [vmem:[#allocation11 + $0x230] sm:$0xff]
    %v3530 = vld [vmem:[#allocation11 + $0x238] sm:$0xff]
    %v3531 = vld [vmem:[#allocation11 + $0x240] sm:$0xff]
    %v3532 = vld [vmem:[#allocation11 + $0x248] sm:$0xff]
    %v3533 = vld [vmem:[#allocation11 + $0x250] sm:$0xff]
    %v3534 = vld [vmem:[#allocation11 + $0x258] sm:$0xff]
    %v3535 = vld [vmem:[#allocation11 + $0x260] sm:$0xff]
    %v3536 = vld [vmem:[#allocation11 + $0x268] sm:$0xff]
    %v3537 = vld [vmem:[#allocation11 + $0x270] sm:$0xff]
    %v3538 = vld [vmem:[#allocation11 + $0x278] sm:$0xff]
    %v3539 = vld [vmem:[#allocation11 + $0x280] sm:$0xff]
    %v3540 = vld [vmem:[#allocation11 + $0x288] sm:$0xff]
    %v3541 = vld [vmem:[#allocation11 + $0x290] sm:$0xff]
    %v3542 = vld [vmem:[#allocation11 + $0x298] sm:$0xff]
    %v3543 = vld [vmem:[#allocation11 + $0x2a0] sm:$0xff]
    %v3544 = vld [vmem:[#allocation11 + $0x2a8] sm:$0xff]
    %v3545 = vld [vmem:[#allocation11 + $0x2b0] sm:$0xff]
    %v3546 = vld [vmem:[#allocation11 + $0x2b8] sm:$0xff]
    %v3547 = vld [vmem:[#allocation11 + $0x2c0] sm:$0xff]
    %v3548 = vld [vmem:[#allocation11 + $0x2c8] sm:$0xff]
    %v3549 = vld [vmem:[#allocation11 + $0x2d0] sm:$0xff]
    %v3550 = vld [vmem:[#allocation11 + $0x2d8] sm:$0xff]
    %v3551 = vld [vmem:[#allocation11 + $0x2e0] sm:$0xff]
    %v3552 = vld [vmem:[#allocation11 + $0x2e8] sm:$0xff]
    %v3553 = vld [vmem:[#allocation11 + $0x2f0] sm:$0xff]
    %v3554 = vld [vmem:[#allocation11 + $0x2f8] sm:$0xff]
    %v3555 = vld [vmem:[#allocation11 + $0x300] sm:$0xff]
    %v3556 = vld [vmem:[#allocation11 + $0x308] sm:$0xff]
    %v3557 = vld [vmem:[#allocation11 + $0x310] sm:$0xff]
    %v3558 = vld [vmem:[#allocation11 + $0x318] sm:$0xff]
    %v3559 = vld [vmem:[#allocation11 + $0x320] sm:$0xff]
    %v3560 = vld [vmem:[#allocation11 + $0x328] sm:$0xff]
    %v3561 = vld [vmem:[#allocation11 + $0x330] sm:$0xff]
    %v3562 = vld [vmem:[#allocation11 + $0x338] sm:$0xff]
    %v3563 = vld [vmem:[#allocation11 + $0x340] sm:$0xff]
    %v3564 = vld [vmem:[#allocation11 + $0x348] sm:$0xff]
    %v3565 = vld [vmem:[#allocation11 + $0x350] sm:$0xff]
    %v3566 = vld [vmem:[#allocation11 + $0x358] sm:$0xff]
    %v3567 = vld [vmem:[#allocation11 + $0x360] sm:$0xff]
    %v3568 = vld [vmem:[#allocation11 + $0x368] sm:$0xff]
    %v3569 = vld [vmem:[#allocation11 + $0x370] sm:$0xff]
    %v3570 = vld [vmem:[#allocation11 + $0x378] sm:$0xff]
    %v3571 = vld [vmem:[#allocation11 + $0x380] sm:$0xff]
    %v3572 = vld [vmem:[#allocation11 + $0x388] sm:$0xff]
    %v3573 = vld [vmem:[#allocation11 + $0x390] sm:$0xff]
    %v3574 = vld [vmem:[#allocation11 + $0x398] sm:$0xff]
    %v3575 = vld [vmem:[#allocation11 + $0x3a0] sm:$0xff]
    %v3576 = vld [vmem:[#allocation11 + $0x3a8] sm:$0xff]
    %v3577 = vld [vmem:[#allocation11 + $0x3b0] sm:$0xff]
    %v3578 = vld [vmem:[#allocation11 + $0x3b8] sm:$0xff]
    %v3579 = vld [vmem:[#allocation11 + $0x3c0] sm:$0xff]
    %v3580 = vld [vmem:[#allocation11 + $0x3c8] sm:$0xff]
    %v3581 = vld [vmem:[#allocation11 + $0x3d0] sm:$0xff]
    %v3582 = vld [vmem:[#allocation11 + $0x3d8] sm:$0xff]
    %v3583 = vld [vmem:[#allocation11 + $0x3e0] sm:$0xff]
    %v3584 = vld [vmem:[#allocation11 + $0x3e8] sm:$0xff]
    %v3585 = vld [vmem:[#allocation11 + $0x3f0] sm:$0xff]
    %v3586 = vld [vmem:[#allocation11 + $0x3f8] sm:$0xff]
    %v3587 = vld [vmem:[#allocation11 + $0x400] sm:$0xff]
    %v3588 = vld [vmem:[#allocation11 + $0x408] sm:$0xff]
    %v3589 = vld [vmem:[#allocation11 + $0x410] sm:$0xff]
    %v3590 = vld [vmem:[#allocation11 + $0x418] sm:$0xff]
    %v3591 = vld [vmem:[#allocation11 + $0x420] sm:$0xff]
    %v3592 = vld [vmem:[#allocation11 + $0x428] sm:$0xff]
    %v3593 = vld [vmem:[#allocation11 + $0x430] sm:$0xff]
    %v3594 = vld [vmem:[#allocation11 + $0x438] sm:$0xff]
    %v3595 = vld [vmem:[#allocation11 + $0x440] sm:$0xff]
    %v3596 = vld [vmem:[#allocation11 + $0x448] sm:$0xff]
    %v3597 = vld [vmem:[#allocation11 + $0x450] sm:$0xff]
    %v3598 = vld [vmem:[#allocation11 + $0x458] sm:$0xff]
    %v3599 = vld [vmem:[#allocation11 + $0x460] sm:$0xff]
    %v3600 = vld [vmem:[#allocation11 + $0x468] sm:$0xff]
    %v3601 = vld [vmem:[#allocation11 + $0x470] sm:$0xff]
    %v3602 = vld [vmem:[#allocation11 + $0x478] sm:$0xff]
    %v3603 = vld [vmem:[#allocation11 + $0x480] sm:$0xff]
    %v3604 = vld [vmem:[#allocation11 + $0x488] sm:$0xff]
    %v3605 = vld [vmem:[#allocation11 + $0x490] sm:$0xff]
    %v3606 = vld [vmem:[#allocation11 + $0x498] sm:$0xff]
    %v3607 = vld [vmem:[#allocation11 + $0x4a0] sm:$0xff]
    %v3608 = vld [vmem:[#allocation11 + $0x4a8] sm:$0xff]
    %v3609 = vld [vmem:[#allocation11 + $0x4b0] sm:$0xff]
    %v3610 = vld [vmem:[#allocation11 + $0x4b8] sm:$0xff]
    %v3611 = vld [vmem:[#allocation11 + $0x4c0] sm:$0xff]
    %v3612 = vld [vmem:[#allocation11 + $0x4c8] sm:$0xff]
    %v3613 = vld [vmem:[#allocation11 + $0x4d0] sm:$0xff]
    %v3614 = vld [vmem:[#allocation11 + $0x4d8] sm:$0xff]
    %v3615 = vld [vmem:[#allocation11 + $0x4e0] sm:$0xff]
    %v3616 = vld [vmem:[#allocation11 + $0x4e8] sm:$0xff]
    %v3617 = vld [vmem:[#allocation11 + $0x4f0] sm:$0xff]
    %v3618 = vld [vmem:[#allocation11 + $0x4f8] sm:$0xff]
    %v3619 = vld [vmem:[#allocation11 + $0x500] sm:$0xff]
    %v3620 = vld [vmem:[#allocation11 + $0x508] sm:$0xff]
    %v3621 = vld [vmem:[#allocation11 + $0x510] sm:$0xff]
    %v3622 = vld [vmem:[#allocation11 + $0x518] sm:$0xff]
    %v3623 = vld [vmem:[#allocation11 + $0x520] sm:$0xff]
    %v3624 = vld [vmem:[#allocation11 + $0x528] sm:$0xff]
    %v3625 = vld [vmem:[#allocation11 + $0x530] sm:$0xff]
    %v3626 = vld [vmem:[#allocation11 + $0x538] sm:$0xff]
    %v3627 = vld [vmem:[#allocation11 + $0x540] sm:$0xff]
    %v3628 = vld [vmem:[#allocation11 + $0x548] sm:$0xff]
    %v3629 = vld [vmem:[#allocation11 + $0x550] sm:$0xff]
    %v3630 = vld [vmem:[#allocation11 + $0x558] sm:$0xff]
    %v3631 = vld [vmem:[#allocation11 + $0x560] sm:$0xff]
    %v3632 = vld [vmem:[#allocation11 + $0x568] sm:$0xff]
    %v3633 = vld [vmem:[#allocation11 + $0x570] sm:$0xff]
    %v3634 = vld [vmem:[#allocation11 + $0x578] sm:$0xff]
    %v3635 = vld [vmem:[#allocation11 + $0x580] sm:$0xff]
    %v3636 = vld [vmem:[#allocation11 + $0x588] sm:$0xff]
    %v3637 = vld [vmem:[#allocation11 + $0x590] sm:$0xff]
    %v3638 = vld [vmem:[#allocation11 + $0x598] sm:$0xff]
    %v3639 = vld [vmem:[#allocation11 + $0x5a0] sm:$0xff]
    %v3640 = vld [vmem:[#allocation11 + $0x5a8] sm:$0xff]
    %v3641 = vld [vmem:[#allocation11 + $0x5b0] sm:$0xff]
    %v3642 = vld [vmem:[#allocation11 + $0x5b8] sm:$0xff]
    %v3643 = vld [vmem:[#allocation11 + $0x5c0] sm:$0xff]
    %v3644 = vld [vmem:[#allocation11 + $0x5c8] sm:$0xff]
    %v3645 = vld [vmem:[#allocation11 + $0x5d0] sm:$0xff]
    %v3646 = vld [vmem:[#allocation11 + $0x5d8] sm:$0xff]
    %v3647 = vld [vmem:[#allocation11 + $0x5e0] sm:$0xff]
    %v3648 = vld [vmem:[#allocation11 + $0x5e8] sm:$0xff]
    %v3649 = vld [vmem:[#allocation11 + $0x5f0] sm:$0xff]
    %v3650 = vld [vmem:[#allocation11 + $0x5f8] sm:$0xff]
    %v3651 = vld [vmem:[#allocation11 + $0x600] sm:$0xff]
    %v3652 = vld [vmem:[#allocation11 + $0x608] sm:$0xff]
    %v3653 = vld [vmem:[#allocation11 + $0x610] sm:$0xff]
    %v3654 = vld [vmem:[#allocation11 + $0x618] sm:$0xff]
    %v3655 = vld [vmem:[#allocation11 + $0x620] sm:$0xff]
    %v3656 = vld [vmem:[#allocation11 + $0x628] sm:$0xff]
    %v3657 = vld [vmem:[#allocation11 + $0x630] sm:$0xff]
    %v3658 = vld [vmem:[#allocation11 + $0x638] sm:$0xff]
    %v3659 = vld [vmem:[#allocation11 + $0x640] sm:$0xff]
    %v3660 = vld [vmem:[#allocation11 + $0x648] sm:$0xff]
    %v3661 = vld [vmem:[#allocation11 + $0x650] sm:$0xff]
    %v3662 = vld [vmem:[#allocation11 + $0x658] sm:$0xff]
    %v3663 = vld [vmem:[#allocation11 + $0x660] sm:$0xff]
    %v3664 = vld [vmem:[#allocation11 + $0x668] sm:$0xff]
    %v3665 = vld [vmem:[#allocation11 + $0x670] sm:$0xff]
    %v3666 = vld [vmem:[#allocation11 + $0x678] sm:$0xff]
    %v3667 = vld [vmem:[#allocation11 + $0x680] sm:$0xff]
    %v3668 = vld [vmem:[#allocation11 + $0x688] sm:$0xff]
    %v3669 = vld [vmem:[#allocation11 + $0x690] sm:$0xff]
    %v3670 = vld [vmem:[#allocation11 + $0x698] sm:$0xff]
    %v3671 = vld [vmem:[#allocation11 + $0x6a0] sm:$0xff]
    %v3672 = vld [vmem:[#allocation11 + $0x6a8] sm:$0xff]
    %v3673 = vld [vmem:[#allocation11 + $0x6b0] sm:$0xff]
    %v3674 = vld [vmem:[#allocation11 + $0x6b8] sm:$0xff]
    %v3675 = vld [vmem:[#allocation11 + $0x6c0] sm:$0xff]
    %v3676 = vld [vmem:[#allocation11 + $0x6c8] sm:$0xff]
    %v3677 = vld [vmem:[#allocation11 + $0x6d0] sm:$0xff]
    %v3678 = vld [vmem:[#allocation11 + $0x6d8] sm:$0xff]
    %v3679 = vld [vmem:[#allocation11 + $0x6e0] sm:$0xff]
    %v3680 = vld [vmem:[#allocation11 + $0x6e8] sm:$0xff]
    %v3681 = vld [vmem:[#allocation11 + $0x6f0] sm:$0xff]
    %v3682 = vld [vmem:[#allocation11 + $0x6f8] sm:$0xff]
    %v3683 = vld [vmem:[#allocation11 + $0x700] sm:$0xff]
    %v3684 = vld [vmem:[#allocation11 + $0x708] sm:$0xff]
    %v3685 = vld [vmem:[#allocation11 + $0x710] sm:$0xff]
    %v3686 = vld [vmem:[#allocation11 + $0x718] sm:$0xff]
    %v3687 = vld [vmem:[#allocation11 + $0x720] sm:$0xff]
    %v3688 = vld [vmem:[#allocation11 + $0x728] sm:$0xff]
    %v3689 = vld [vmem:[#allocation11 + $0x730] sm:$0xff]
    %v3690 = vld [vmem:[#allocation11 + $0x738] sm:$0xff]
    %v3691 = vld [vmem:[#allocation11 + $0x740] sm:$0xff]
    %v3692 = vld [vmem:[#allocation11 + $0x748] sm:$0xff]
    %v3693 = vld [vmem:[#allocation11 + $0x750] sm:$0xff]
    %v3694 = vld [vmem:[#allocation11 + $0x758] sm:$0xff]
    %v3695 = vld [vmem:[#allocation11 + $0x760] sm:$0xff]
    %v3696 = vld [vmem:[#allocation11 + $0x768] sm:$0xff]
    %v3697 = vld [vmem:[#allocation11 + $0x770] sm:$0xff]
    %v3698 = vld [vmem:[#allocation11 + $0x778] sm:$0xff]
    %v3699 = vld [vmem:[#allocation11 + $0x780] sm:$0xff]
    %v3700 = vld [vmem:[#allocation11 + $0x788] sm:$0xff]
    %v3701 = vld [vmem:[#allocation11 + $0x790] sm:$0xff]
    %v3702 = vld [vmem:[#allocation11 + $0x798] sm:$0xff]
    %v3703 = vld [vmem:[#allocation11 + $0x7a0] sm:$0xff]
    %v3704 = vld [vmem:[#allocation11 + $0x7a8] sm:$0xff]
    %v3705 = vld [vmem:[#allocation11 + $0x7b0] sm:$0xff]
    %v3706 = vld [vmem:[#allocation11 + $0x7b8] sm:$0xff]
    %v3707 = vld [vmem:[#allocation11 + $0x7c0] sm:$0xff]
    %v3708 = vld [vmem:[#allocation11 + $0x7c8] sm:$0xff]
    %v3709 = vld [vmem:[#allocation11 + $0x7d0] sm:$0xff]
    %v3710 = vld [vmem:[#allocation11 + $0x7d8] sm:$0xff]
    %v3711 = vld [vmem:[#allocation11 + $0x7e0] sm:$0xff]
    %v3712 = vld [vmem:[#allocation11 + $0x7e8] sm:$0xff]
    %v3713 = vld [vmem:[#allocation11 + $0x7f0] sm:$0xff]
    %v3714 = vld [vmem:[#allocation11 + $0x7f8] sm:$0xff]
    %v3715 = vld [vmem:[#allocation11 + $0x800] sm:$0xff]
    %v3716 = vld [vmem:[#allocation11 + $0x808] sm:$0xff]
    %v3717 = vld [vmem:[#allocation11 + $0x810] sm:$0xff]
    %v3718 = vld [vmem:[#allocation11 + $0x818] sm:$0xff]
    %v3719 = vld [vmem:[#allocation11 + $0x820] sm:$0xff]
    %v3720 = vld [vmem:[#allocation11 + $0x828] sm:$0xff]
    %v3721 = vld [vmem:[#allocation11 + $0x830] sm:$0xff]
    %v3722 = vld [vmem:[#allocation11 + $0x838] sm:$0xff]
    %v3723 = vld [vmem:[#allocation11 + $0x840] sm:$0xff]
    %v3724 = vld [vmem:[#allocation11 + $0x848] sm:$0xff]
    %v3725 = vld [vmem:[#allocation11 + $0x850] sm:$0xff]
    %v3726 = vld [vmem:[#allocation11 + $0x858] sm:$0xff]
    %v3727 = vld [vmem:[#allocation11 + $0x860] sm:$0xff]
    %v3728 = vld [vmem:[#allocation11 + $0x868] sm:$0xff]
    %v3729 = vld [vmem:[#allocation11 + $0x870] sm:$0xff]
    %v3730 = vld [vmem:[#allocation11 + $0x878] sm:$0xff]
    %v3731 = vld [vmem:[#allocation11 + $0x880] sm:$0xff]
    %v3732 = vld [vmem:[#allocation11 + $0x888] sm:$0xff]
    %v3733 = vld [vmem:[#allocation11 + $0x890] sm:$0xff]
    %v3734 = vld [vmem:[#allocation11 + $0x898] sm:$0xff]
    %v3735 = vld [vmem:[#allocation11 + $0x8a0] sm:$0xff]
    %v3736 = vld [vmem:[#allocation11 + $0x8a8] sm:$0xff]
    %v3737 = vld [vmem:[#allocation11 + $0x8b0] sm:$0xff]
    %v3738 = vld [vmem:[#allocation11 + $0x8b8] sm:$0xff]
    %v3739 = vld [vmem:[#allocation11 + $0x8c0] sm:$0xff]
    %v3740 = vld [vmem:[#allocation11 + $0x8c8] sm:$0xff]
    %v3741 = vld [vmem:[#allocation11 + $0x8d0] sm:$0xff]
    %v3742 = vld [vmem:[#allocation11 + $0x8d8] sm:$0xff]
    %v3743 = vld [vmem:[#allocation11 + $0x8e0] sm:$0xff]
    %v3744 = vld [vmem:[#allocation11 + $0x8e8] sm:$0xff]
    %v3745 = vld [vmem:[#allocation11 + $0x8f0] sm:$0xff]
    %v3746 = vld [vmem:[#allocation11 + $0x8f8] sm:$0xff]
    %v3747 = vld [vmem:[#allocation13] sm:$0x3f]
    %v3749 = vlaneseq
    %v3750 = vshrl.u32 %v3749, 7
    %v3751 = vsub.s32 0, %v3750
    %v3752 = vrot.slane %v3747, %v3751
    %v3753 = vlaneseq
    %v3754 = vshrl.u32 %v3753, 7
    %v3755 = vsub.s32 1, %v3754
    %v3756 = vrot.slane %v3747, %v3755
    %v3757 = vlaneseq
    %v3758 = vshrl.u32 %v3757, 7
    %v3759 = vsub.s32 2, %v3758
    %v3760 = vrot.slane %v3747, %v3759
    %v3761 = vlaneseq
    %v3762 = vshrl.u32 %v3761, 7
    %v3763 = vsub.s32 3, %v3762
    %v3764 = vrot.slane %v3747, %v3763
    %v3765 = vlaneseq
    %v3766 = vshrl.u32 %v3765, 7
    %v3767 = vsub.s32 4, %v3766
    %v3768 = vrot.slane %v3747, %v3767
    %v3769 = vlaneseq
    %v3770 = vshrl.u32 %v3769, 7
    %v3771 = vsub.s32 5, %v3770
    %v3772 = vrot.slane %v3747, %v3771
    %v4067 = vunpack.c.l.b16 %v3459
    %v4068 = vunpack.c.h.b16 %v3459
    %v4069 = vunpack.c.l.b16 %v3460
    %v4070 = vunpack.c.h.b16 %v3460
    %v4071 = vunpack.c.l.b16 %v3461
    %v4072 = vunpack.c.h.b16 %v3461
    %v4073 = vunpack.c.l.b16 %v3462
    %v4074 = vunpack.c.h.b16 %v3462
    %v4075 = vunpack.c.l.b16 %v3463
    %v4076 = vunpack.c.h.b16 %v3463
    %v4077 = vunpack.c.l.b16 %v3464
    %v4078 = vunpack.c.h.b16 %v3464
    %v4079 = vunpack.c.l.b16 %v3465
    %v4080 = vunpack.c.h.b16 %v3465
    %v4081 = vunpack.c.l.b16 %v3466
    %v4082 = vunpack.c.h.b16 %v3466
    %v4083 = vunpack.c.l.b16 %v3467
    %v4084 = vunpack.c.h.b16 %v3467
    %v4085 = vunpack.c.l.b16 %v3468
    %v4086 = vunpack.c.h.b16 %v3468
    %v4087 = vunpack.c.l.b16 %v3469
    %v4088 = vunpack.c.h.b16 %v3469
    %v4089 = vunpack.c.l.b16 %v3470
    %v4090 = vunpack.c.h.b16 %v3470
    %v4091 = vunpack.c.l.b16 %v3471
    %v4092 = vunpack.c.h.b16 %v3471
    %v4093 = vunpack.c.l.b16 %v3472
    %v4094 = vunpack.c.h.b16 %v3472
    %v4095 = vunpack.c.l.b16 %v3473
    %v4096 = vunpack.c.h.b16 %v3473
    %v4097 = vunpack.c.l.b16 %v3474
    %v4098 = vunpack.c.h.b16 %v3474
    %v4099 = vunpack.c.l.b16 %v3475
    %v4100 = vunpack.c.h.b16 %v3475
    %v4101 = vunpack.c.l.b16 %v3476
    %v4102 = vunpack.c.h.b16 %v3476
    %v4103 = vunpack.c.l.b16 %v3477
    %v4104 = vunpack.c.h.b16 %v3477
    %v4105 = vunpack.c.l.b16 %v3478
    %v4106 = vunpack.c.h.b16 %v3478
    %v4107 = vunpack.c.l.b16 %v3479
    %v4108 = vunpack.c.h.b16 %v3479
    %v4109 = vunpack.c.l.b16 %v3480
    %v4110 = vunpack.c.h.b16 %v3480
    %v4111 = vunpack.c.l.b16 %v3481
    %v4112 = vunpack.c.h.b16 %v3481
    %v4113 = vunpack.c.l.b16 %v3482
    %v4114 = vunpack.c.h.b16 %v3482
    %v4115 = vunpack.c.l.b16 %v3483
    %v4116 = vunpack.c.h.b16 %v3483
    %v4117 = vunpack.c.l.b16 %v3484
    %v4118 = vunpack.c.h.b16 %v3484
    %v4119 = vunpack.c.l.b16 %v3485
    %v4120 = vunpack.c.h.b16 %v3485
    %v4121 = vunpack.c.l.b16 %v3486
    %v4122 = vunpack.c.h.b16 %v3486
    %v4123 = vunpack.c.l.b16 %v3487
    %v4124 = vunpack.c.h.b16 %v3487
    %v4125 = vunpack.c.l.b16 %v3488
    %v4126 = vunpack.c.h.b16 %v3488
    %v4127 = vunpack.c.l.b16 %v3489
    %v4128 = vunpack.c.h.b16 %v3489
    %v4129 = vunpack.c.l.b16 %v3490
    %v4130 = vunpack.c.h.b16 %v3490
    %v4131 = vunpack.c.l.b16 %v3491
    %v4132 = vunpack.c.h.b16 %v3491
    %v4133 = vunpack.c.l.b16 %v3492
    %v4134 = vunpack.c.h.b16 %v3492
    %v4135 = vunpack.c.l.b16 %v3493
    %v4136 = vunpack.c.h.b16 %v3493
    %v4137 = vunpack.c.l.b16 %v3494
    %v4138 = vunpack.c.h.b16 %v3494
    %v4139 = vunpack.c.l.b16 %v3495
    %v4140 = vunpack.c.h.b16 %v3495
    %v4141 = vunpack.c.l.b16 %v3496
    %v4142 = vunpack.c.h.b16 %v3496
    %v4143 = vunpack.c.l.b16 %v3497
    %v4144 = vunpack.c.h.b16 %v3497
    %v4145 = vunpack.c.l.b16 %v3498
    %v4146 = vunpack.c.h.b16 %v3498
    %v4147 = vunpack.c.l.b16 %v3499
    %v4148 = vunpack.c.h.b16 %v3499
    %v4149 = vunpack.c.l.b16 %v3500
    %v4150 = vunpack.c.h.b16 %v3500
    %v4151 = vunpack.c.l.b16 %v3501
    %v4152 = vunpack.c.h.b16 %v3501
    %v4153 = vunpack.c.l.b16 %v3502
    %v4154 = vunpack.c.h.b16 %v3502
    %v4155 = vunpack.c.l.b16 %v3503
    %v4156 = vunpack.c.h.b16 %v3503
    %v4157 = vunpack.c.l.b16 %v3504
    %v4158 = vunpack.c.h.b16 %v3504
    %v4159 = vunpack.c.l.b16 %v3505
    %v4160 = vunpack.c.h.b16 %v3505
    %v4161 = vunpack.c.l.b16 %v3506
    %v4162 = vunpack.c.h.b16 %v3506
    %v4163 = vunpack.c.l.b16 %v3507
    %v4164 = vunpack.c.h.b16 %v3507
    %v4165 = vunpack.c.l.b16 %v3508
    %v4166 = vunpack.c.h.b16 %v3508
    %v4167 = vunpack.c.l.b16 %v3509
    %v4168 = vunpack.c.h.b16 %v3509
    %v4169 = vunpack.c.l.b16 %v3510
    %v4170 = vunpack.c.h.b16 %v3510
    %v4171 = vunpack.c.l.b16 %v3511
    %v4172 = vunpack.c.h.b16 %v3511
    %v4173 = vunpack.c.l.b16 %v3512
    %v4174 = vunpack.c.h.b16 %v3512
    %v4175 = vunpack.c.l.b16 %v3513
    %v4176 = vunpack.c.h.b16 %v3513
    %v4177 = vunpack.c.l.b16 %v3514
    %v4178 = vunpack.c.h.b16 %v3514
    %v4179 = vunpack.c.l.b16 %v3515
    %v4180 = vunpack.c.h.b16 %v3515
    %v4181 = vunpack.c.l.b16 %v3516
    %v4182 = vunpack.c.h.b16 %v3516
    %v4183 = vunpack.c.l.b16 %v3517
    %v4184 = vunpack.c.h.b16 %v3517
    %v4185 = vunpack.c.l.b16 %v3518
    %v4186 = vunpack.c.h.b16 %v3518
    %v4187 = vunpack.c.l.b16 %v3519
    %v4188 = vunpack.c.h.b16 %v3519
    %v4189 = vunpack.c.l.b16 %v3520
    %v4190 = vunpack.c.h.b16 %v3520
    %v4191 = vunpack.c.l.b16 %v3521
    %v4192 = vunpack.c.h.b16 %v3521
    %v4193 = vunpack.c.l.b16 %v3522
    %v4194 = vunpack.c.h.b16 %v3522
    %v4195 = vunpack.c.l.b16 %v3523
    %v4196 = vunpack.c.h.b16 %v3523
    %v4197 = vunpack.c.l.b16 %v3524
    %v4198 = vunpack.c.h.b16 %v3524
    %v4199 = vunpack.c.l.b16 %v3525
    %v4200 = vunpack.c.h.b16 %v3525
    %v4201 = vunpack.c.l.b16 %v3526
    %v4202 = vunpack.c.h.b16 %v3526
    %v4203 = vunpack.c.l.b16 %v3527
    %v4204 = vunpack.c.h.b16 %v3527
    %v4205 = vunpack.c.l.b16 %v3528
    %v4206 = vunpack.c.h.b16 %v3528
    %v4207 = vunpack.c.l.b16 %v3529
    %v4208 = vunpack.c.h.b16 %v3529
    %v4209 = vunpack.c.l.b16 %v3530
    %v4210 = vunpack.c.h.b16 %v3530
    %v4211 = vunpack.c.l.b16 %v3531
    %v4212 = vunpack.c.h.b16 %v3531
    %v4213 = vunpack.c.l.b16 %v3532
    %v4214 = vunpack.c.h.b16 %v3532
    %v4215 = vunpack.c.l.b16 %v3533
    %v4216 = vunpack.c.h.b16 %v3533
    %v4217 = vunpack.c.l.b16 %v3534
    %v4218 = vunpack.c.h.b16 %v3534
    %v4219 = vunpack.c.l.b16 %v3535
    %v4220 = vunpack.c.h.b16 %v3535
    %v4221 = vunpack.c.l.b16 %v3536
    %v4222 = vunpack.c.h.b16 %v3536
    %v4223 = vunpack.c.l.b16 %v3537
    %v4224 = vunpack.c.h.b16 %v3537
    %v4225 = vunpack.c.l.b16 %v3538
    %v4226 = vunpack.c.h.b16 %v3538
    %v4227 = vunpack.c.l.b16 %v3539
    %v4228 = vunpack.c.h.b16 %v3539
    %v4229 = vunpack.c.l.b16 %v3540
    %v4230 = vunpack.c.h.b16 %v3540
    %v4231 = vunpack.c.l.b16 %v3541
    %v4232 = vunpack.c.h.b16 %v3541
    %v4233 = vunpack.c.l.b16 %v3542
    %v4234 = vunpack.c.h.b16 %v3542
    %v4235 = vunpack.c.l.b16 %v3543
    %v4236 = vunpack.c.h.b16 %v3543
    %v4237 = vunpack.c.l.b16 %v3544
    %v4238 = vunpack.c.h.b16 %v3544
    %v4239 = vunpack.c.l.b16 %v3545
    %v4240 = vunpack.c.h.b16 %v3545
    %v4241 = vunpack.c.l.b16 %v3546
    %v4242 = vunpack.c.h.b16 %v3546
    %v4243 = vunpack.c.l.b16 %v3547
    %v4244 = vunpack.c.h.b16 %v3547
    %v4245 = vunpack.c.l.b16 %v3548
    %v4246 = vunpack.c.h.b16 %v3548
    %v4247 = vunpack.c.l.b16 %v3549
    %v4248 = vunpack.c.h.b16 %v3549
    %v4249 = vunpack.c.l.b16 %v3550
    %v4250 = vunpack.c.h.b16 %v3550
    %v4251 = vunpack.c.l.b16 %v3551
    %v4252 = vunpack.c.h.b16 %v3551
    %v4253 = vunpack.c.l.b16 %v3552
    %v4254 = vunpack.c.h.b16 %v3552
    %v4255 = vunpack.c.l.b16 %v3553
    %v4256 = vunpack.c.h.b16 %v3553
    %v4257 = vunpack.c.l.b16 %v3554
    %v4258 = vunpack.c.h.b16 %v3554
    %v4259 = vunpack.c.l.b16 %v3555
    %v4260 = vunpack.c.h.b16 %v3555
    %v4261 = vunpack.c.l.b16 %v3556
    %v4262 = vunpack.c.h.b16 %v3556
    %v4263 = vunpack.c.l.b16 %v3557
    %v4264 = vunpack.c.h.b16 %v3557
    %v4265 = vunpack.c.l.b16 %v3558
    %v4266 = vunpack.c.h.b16 %v3558
    %v4267 = vunpack.c.l.b16 %v3559
    %v4268 = vunpack.c.h.b16 %v3559
    %v4269 = vunpack.c.l.b16 %v3560
    %v4270 = vunpack.c.h.b16 %v3560
    %v4271 = vunpack.c.l.b16 %v3561
    %v4272 = vunpack.c.h.b16 %v3561
    %v4273 = vunpack.c.l.b16 %v3562
    %v4274 = vunpack.c.h.b16 %v3562
    %v4275 = vunpack.c.l.b16 %v3563
    %v4276 = vunpack.c.h.b16 %v3563
    %v4277 = vunpack.c.l.b16 %v3564
    %v4278 = vunpack.c.h.b16 %v3564
    %v4279 = vunpack.c.l.b16 %v3565
    %v4280 = vunpack.c.h.b16 %v3565
    %v4281 = vunpack.c.l.b16 %v3566
    %v4282 = vunpack.c.h.b16 %v3566
    %v4283 = vunpack.c.l.b16 %v3567
    %v4284 = vunpack.c.h.b16 %v3567
    %v4285 = vunpack.c.l.b16 %v3568
    %v4286 = vunpack.c.h.b16 %v3568
    %v4287 = vunpack.c.l.b16 %v3569
    %v4288 = vunpack.c.h.b16 %v3569
    %v4289 = vunpack.c.l.b16 %v3570
    %v4290 = vunpack.c.h.b16 %v3570
    %v4291 = vunpack.c.l.b16 %v3571
    %v4292 = vunpack.c.h.b16 %v3571
    %v4293 = vunpack.c.l.b16 %v3572
    %v4294 = vunpack.c.h.b16 %v3572
    %v4295 = vunpack.c.l.b16 %v3573
    %v4296 = vunpack.c.h.b16 %v3573
    %v4297 = vunpack.c.l.b16 %v3574
    %v4298 = vunpack.c.h.b16 %v3574
    %v4299 = vunpack.c.l.b16 %v3575
    %v4300 = vunpack.c.h.b16 %v3575
    %v4301 = vunpack.c.l.b16 %v3576
    %v4302 = vunpack.c.h.b16 %v3576
    %v4303 = vunpack.c.l.b16 %v3577
    %v4304 = vunpack.c.h.b16 %v3577
    %v4305 = vunpack.c.l.b16 %v3578
    %v4306 = vunpack.c.h.b16 %v3578
    %v4307 = vunpack.c.l.b16 %v3579
    %v4308 = vunpack.c.h.b16 %v3579
    %v4309 = vunpack.c.l.b16 %v3580
    %v4310 = vunpack.c.h.b16 %v3580
    %v4311 = vunpack.c.l.b16 %v3581
    %v4312 = vunpack.c.h.b16 %v3581
    %v4313 = vunpack.c.l.b16 %v3582
    %v4314 = vunpack.c.h.b16 %v3582
    %v4315 = vunpack.c.l.b16 %v3583
    %v4316 = vunpack.c.h.b16 %v3583
    %v4317 = vunpack.c.l.b16 %v3584
    %v4318 = vunpack.c.h.b16 %v3584
    %v4319 = vunpack.c.l.b16 %v3585
    %v4320 = vunpack.c.h.b16 %v3585
    %v4321 = vunpack.c.l.b16 %v3586
    %v4322 = vunpack.c.h.b16 %v3586
    %v4323 = vunpack.c.l.b16 %v3587
    %v4324 = vunpack.c.h.b16 %v3587
    %v4325 = vunpack.c.l.b16 %v3588
    %v4326 = vunpack.c.h.b16 %v3588
    %v4327 = vunpack.c.l.b16 %v3589
    %v4328 = vunpack.c.h.b16 %v3589
    %v4329 = vunpack.c.l.b16 %v3590
    %v4330 = vunpack.c.h.b16 %v3590
    %v4331 = vunpack.c.l.b16 %v3591
    %v4332 = vunpack.c.h.b16 %v3591
    %v4333 = vunpack.c.l.b16 %v3592
    %v4334 = vunpack.c.h.b16 %v3592
    %v4335 = vunpack.c.l.b16 %v3593
    %v4336 = vunpack.c.h.b16 %v3593
    %v4337 = vunpack.c.l.b16 %v3594
    %v4338 = vunpack.c.h.b16 %v3594
    %v4339 = vunpack.c.l.b16 %v3595
    %v4340 = vunpack.c.h.b16 %v3595
    %v4341 = vunpack.c.l.b16 %v3596
    %v4342 = vunpack.c.h.b16 %v3596
    %v4343 = vunpack.c.l.b16 %v3597
    %v4344 = vunpack.c.h.b16 %v3597
    %v4345 = vunpack.c.l.b16 %v3598
    %v4346 = vunpack.c.h.b16 %v3598
    %v4347 = vunpack.c.l.b16 %v3599
    %v4348 = vunpack.c.h.b16 %v3599
    %v4349 = vunpack.c.l.b16 %v3600
    %v4350 = vunpack.c.h.b16 %v3600
    %v4351 = vunpack.c.l.b16 %v3601
    %v4352 = vunpack.c.h.b16 %v3601
    %v4353 = vunpack.c.l.b16 %v3602
    %v4354 = vunpack.c.h.b16 %v3602
    %v4355 = vunpack.c.l.b16 %v3603
    %v4356 = vunpack.c.h.b16 %v3603
    %v4357 = vunpack.c.l.b16 %v3604
    %v4358 = vunpack.c.h.b16 %v3604
    %v4359 = vunpack.c.l.b16 %v3605
    %v4360 = vunpack.c.h.b16 %v3605
    %v4361 = vunpack.c.l.b16 %v3606
    %v4362 = vunpack.c.h.b16 %v3606
    %v4363 = vunpack.c.l.b16 %v3607
    %v4364 = vunpack.c.h.b16 %v3607
    %v4365 = vunpack.c.l.b16 %v3608
    %v4366 = vunpack.c.h.b16 %v3608
    %v4367 = vunpack.c.l.b16 %v3609
    %v4368 = vunpack.c.h.b16 %v3609
    %v4369 = vunpack.c.l.b16 %v3610
    %v4370 = vunpack.c.h.b16 %v3610
    %v4371 = vunpack.c.l.b16 %v3611
    %v4372 = vunpack.c.h.b16 %v3611
    %v4373 = vunpack.c.l.b16 %v3612
    %v4374 = vunpack.c.h.b16 %v3612
    %v4375 = vunpack.c.l.b16 %v3613
    %v4376 = vunpack.c.h.b16 %v3613
    %v4377 = vunpack.c.l.b16 %v3614
    %v4378 = vunpack.c.h.b16 %v3614
    %v4379 = vunpack.c.l.b16 %v3615
    %v4380 = vunpack.c.h.b16 %v3615
    %v4381 = vunpack.c.l.b16 %v3616
    %v4382 = vunpack.c.h.b16 %v3616
    %v4383 = vunpack.c.l.b16 %v3617
    %v4384 = vunpack.c.h.b16 %v3617
    %v4385 = vunpack.c.l.b16 %v3618
    %v4386 = vunpack.c.h.b16 %v3618
    %v4387 = vunpack.c.l.b16 %v3619
    %v4388 = vunpack.c.h.b16 %v3619
    %v4389 = vunpack.c.l.b16 %v3620
    %v4390 = vunpack.c.h.b16 %v3620
    %v4391 = vunpack.c.l.b16 %v3621
    %v4392 = vunpack.c.h.b16 %v3621
    %v4393 = vunpack.c.l.b16 %v3622
    %v4394 = vunpack.c.h.b16 %v3622
    %v4395 = vunpack.c.l.b16 %v3623
    %v4396 = vunpack.c.h.b16 %v3623
    %v4397 = vunpack.c.l.b16 %v3624
    %v4398 = vunpack.c.h.b16 %v3624
    %v4399 = vunpack.c.l.b16 %v3625
    %v4400 = vunpack.c.h.b16 %v3625
    %v4401 = vunpack.c.l.b16 %v3626
    %v4402 = vunpack.c.h.b16 %v3626
    %v4403 = vunpack.c.l.b16 %v3627
    %v4404 = vunpack.c.h.b16 %v3627
    %v4405 = vunpack.c.l.b16 %v3628
    %v4406 = vunpack.c.h.b16 %v3628
    %v4407 = vunpack.c.l.b16 %v3629
    %v4408 = vunpack.c.h.b16 %v3629
    %v4409 = vunpack.c.l.b16 %v3630
    %v4410 = vunpack.c.h.b16 %v3630
    %v4411 = vunpack.c.l.b16 %v3631
    %v4412 = vunpack.c.h.b16 %v3631
    %v4413 = vunpack.c.l.b16 %v3632
    %v4414 = vunpack.c.h.b16 %v3632
    %v4415 = vunpack.c.l.b16 %v3633
    %v4416 = vunpack.c.h.b16 %v3633
    %v4417 = vunpack.c.l.b16 %v3634
    %v4418 = vunpack.c.h.b16 %v3634
    %v4419 = vunpack.c.l.b16 %v3635
    %v4420 = vunpack.c.h.b16 %v3635
    %v4421 = vunpack.c.l.b16 %v3636
    %v4422 = vunpack.c.h.b16 %v3636
    %v4423 = vunpack.c.l.b16 %v3637
    %v4424 = vunpack.c.h.b16 %v3637
    %v4425 = vunpack.c.l.b16 %v3638
    %v4426 = vunpack.c.h.b16 %v3638
    %v4427 = vunpack.c.l.b16 %v3639
    %v4428 = vunpack.c.h.b16 %v3639
    %v4429 = vunpack.c.l.b16 %v3640
    %v4430 = vunpack.c.h.b16 %v3640
    %v4431 = vunpack.c.l.b16 %v3641
    %v4432 = vunpack.c.h.b16 %v3641
    %v4433 = vunpack.c.l.b16 %v3642
    %v4434 = vunpack.c.h.b16 %v3642
    %v4435 = vunpack.c.l.b16 %v3643
    %v4436 = vunpack.c.h.b16 %v3643
    %v4437 = vunpack.c.l.b16 %v3644
    %v4438 = vunpack.c.h.b16 %v3644
    %v4439 = vunpack.c.l.b16 %v3645
    %v4440 = vunpack.c.h.b16 %v3645
    %v4441 = vunpack.c.l.b16 %v3646
    %v4442 = vunpack.c.h.b16 %v3646
    %v4443 = vunpack.c.l.b16 %v3647
    %v4444 = vunpack.c.h.b16 %v3647
    %v4445 = vunpack.c.l.b16 %v3648
    %v4446 = vunpack.c.h.b16 %v3648
    %v4447 = vunpack.c.l.b16 %v3649
    %v4448 = vunpack.c.h.b16 %v3649
    %v4449 = vunpack.c.l.b16 %v3650
    %v4450 = vunpack.c.h.b16 %v3650
    %v4451 = vunpack.c.l.b16 %v3651
    %v4452 = vunpack.c.h.b16 %v3651
    %v4453 = vunpack.c.l.b16 %v3652
    %v4454 = vunpack.c.h.b16 %v3652
    %v4455 = vunpack.c.l.b16 %v3653
    %v4456 = vunpack.c.h.b16 %v3653
    %v4457 = vunpack.c.l.b16 %v3654
    %v4458 = vunpack.c.h.b16 %v3654
    %v4459 = vunpack.c.l.b16 %v3655
    %v4460 = vunpack.c.h.b16 %v3655
    %v4461 = vunpack.c.l.b16 %v3656
    %v4462 = vunpack.c.h.b16 %v3656
    %v4463 = vunpack.c.l.b16 %v3657
    %v4464 = vunpack.c.h.b16 %v3657
    %v4465 = vunpack.c.l.b16 %v3658
    %v4466 = vunpack.c.h.b16 %v3658
    %v4467 = vunpack.c.l.b16 %v3659
    %v4468 = vunpack.c.h.b16 %v3659
    %v4469 = vunpack.c.l.b16 %v3660
    %v4470 = vunpack.c.h.b16 %v3660
    %v4471 = vunpack.c.l.b16 %v3661
    %v4472 = vunpack.c.h.b16 %v3661
    %v4473 = vunpack.c.l.b16 %v3662
    %v4474 = vunpack.c.h.b16 %v3662
    %v4475 = vunpack.c.l.b16 %v3663
    %v4476 = vunpack.c.h.b16 %v3663
    %v4477 = vunpack.c.l.b16 %v3664
    %v4478 = vunpack.c.h.b16 %v3664
    %v4479 = vunpack.c.l.b16 %v3665
    %v4480 = vunpack.c.h.b16 %v3665
    %v4481 = vunpack.c.l.b16 %v3666
    %v4482 = vunpack.c.h.b16 %v3666
    %v4483 = vunpack.c.l.b16 %v3667
    %v4484 = vunpack.c.h.b16 %v3667
    %v4485 = vunpack.c.l.b16 %v3668
    %v4486 = vunpack.c.h.b16 %v3668
    %v4487 = vunpack.c.l.b16 %v3669
    %v4488 = vunpack.c.h.b16 %v3669
    %v4489 = vunpack.c.l.b16 %v3670
    %v4490 = vunpack.c.h.b16 %v3670
    %v4491 = vunpack.c.l.b16 %v3671
    %v4492 = vunpack.c.h.b16 %v3671
    %v4493 = vunpack.c.l.b16 %v3672
    %v4494 = vunpack.c.h.b16 %v3672
    %v4495 = vunpack.c.l.b16 %v3673
    %v4496 = vunpack.c.h.b16 %v3673
    %v4497 = vunpack.c.l.b16 %v3674
    %v4498 = vunpack.c.h.b16 %v3674
    %v4499 = vunpack.c.l.b16 %v3675
    %v4500 = vunpack.c.h.b16 %v3675
    %v4501 = vunpack.c.l.b16 %v3676
    %v4502 = vunpack.c.h.b16 %v3676
    %v4503 = vunpack.c.l.b16 %v3677
    %v4504 = vunpack.c.h.b16 %v3677
    %v4505 = vunpack.c.l.b16 %v3678
    %v4506 = vunpack.c.h.b16 %v3678
    %v4507 = vunpack.c.l.b16 %v3679
    %v4508 = vunpack.c.h.b16 %v3679
    %v4509 = vunpack.c.l.b16 %v3680
    %v4510 = vunpack.c.h.b16 %v3680
    %v4511 = vunpack.c.l.b16 %v3681
    %v4512 = vunpack.c.h.b16 %v3681
    %v4513 = vunpack.c.l.b16 %v3682
    %v4514 = vunpack.c.h.b16 %v3682
    %v4515 = vunpack.c.l.b16 %v3683
    %v4516 = vunpack.c.h.b16 %v3683
    %v4517 = vunpack.c.l.b16 %v3684
    %v4518 = vunpack.c.h.b16 %v3684
    %v4519 = vunpack.c.l.b16 %v3685
    %v4520 = vunpack.c.h.b16 %v3685
    %v4521 = vunpack.c.l.b16 %v3686
    %v4522 = vunpack.c.h.b16 %v3686
    %v4523 = vunpack.c.l.b16 %v3687
    %v4524 = vunpack.c.h.b16 %v3687
    %v4525 = vunpack.c.l.b16 %v3688
    %v4526 = vunpack.c.h.b16 %v3688
    %v4527 = vunpack.c.l.b16 %v3689
    %v4528 = vunpack.c.h.b16 %v3689
    %v4529 = vunpack.c.l.b16 %v3690
    %v4530 = vunpack.c.h.b16 %v3690
    %v4531 = vunpack.c.l.b16 %v3691
    %v4532 = vunpack.c.h.b16 %v3691
    %v4533 = vunpack.c.l.b16 %v3692
    %v4534 = vunpack.c.h.b16 %v3692
    %v4535 = vunpack.c.l.b16 %v3693
    %v4536 = vunpack.c.h.b16 %v3693
    %v4537 = vunpack.c.l.b16 %v3694
    %v4538 = vunpack.c.h.b16 %v3694
    %v4539 = vunpack.c.l.b16 %v3695
    %v4540 = vunpack.c.h.b16 %v3695
    %v4541 = vunpack.c.l.b16 %v3696
    %v4542 = vunpack.c.h.b16 %v3696
    %v4543 = vunpack.c.l.b16 %v3697
    %v4544 = vunpack.c.h.b16 %v3697
    %v4545 = vunpack.c.l.b16 %v3698
    %v4546 = vunpack.c.h.b16 %v3698
    %v4547 = vunpack.c.l.b16 %v3699
    %v4548 = vunpack.c.h.b16 %v3699
    %v4549 = vunpack.c.l.b16 %v3700
    %v4550 = vunpack.c.h.b16 %v3700
    %v4551 = vunpack.c.l.b16 %v3701
    %v4552 = vunpack.c.h.b16 %v3701
    %v4553 = vunpack.c.l.b16 %v3702
    %v4554 = vunpack.c.h.b16 %v3702
    %v4555 = vunpack.c.l.b16 %v3703
    %v4556 = vunpack.c.h.b16 %v3703
    %v4557 = vunpack.c.l.b16 %v3704
    %v4558 = vunpack.c.h.b16 %v3704
    %v4559 = vunpack.c.l.b16 %v3705
    %v4560 = vunpack.c.h.b16 %v3705
    %v4561 = vunpack.c.l.b16 %v3706
    %v4562 = vunpack.c.h.b16 %v3706
    %v4563 = vunpack.c.l.b16 %v3707
    %v4564 = vunpack.c.h.b16 %v3707
    %v4565 = vunpack.c.l.b16 %v3708
    %v4566 = vunpack.c.h.b16 %v3708
    %v4567 = vunpack.c.l.b16 %v3709
    %v4568 = vunpack.c.h.b16 %v3709
    %v4569 = vunpack.c.l.b16 %v3710
    %v4570 = vunpack.c.h.b16 %v3710
    %v4571 = vunpack.c.l.b16 %v3711
    %v4572 = vunpack.c.h.b16 %v3711
    %v4573 = vunpack.c.l.b16 %v3712
    %v4574 = vunpack.c.h.b16 %v3712
    %v4575 = vunpack.c.l.b16 %v3713
    %v4576 = vunpack.c.h.b16 %v3713
    %v4577 = vunpack.c.l.b16 %v3714
    %v4578 = vunpack.c.h.b16 %v3714
    %v4579 = vunpack.c.l.b16 %v3715
    %v4580 = vunpack.c.h.b16 %v3715
    %v4581 = vunpack.c.l.b16 %v3716
    %v4582 = vunpack.c.h.b16 %v3716
    %v4583 = vunpack.c.l.b16 %v3717
    %v4584 = vunpack.c.h.b16 %v3717
    %v4585 = vunpack.c.l.b16 %v3718
    %v4586 = vunpack.c.h.b16 %v3718
    %v4587 = vunpack.c.l.b16 %v3719
    %v4588 = vunpack.c.h.b16 %v3719
    %v4589 = vunpack.c.l.b16 %v3720
    %v4590 = vunpack.c.h.b16 %v3720
    %v4591 = vunpack.c.l.b16 %v3721
    %v4592 = vunpack.c.h.b16 %v3721
    %v4593 = vunpack.c.l.b16 %v3722
    %v4594 = vunpack.c.h.b16 %v3722
    %v4595 = vunpack.c.l.b16 %v3723
    %v4596 = vunpack.c.h.b16 %v3723
    %v4597 = vunpack.c.l.b16 %v3724
    %v4598 = vunpack.c.h.b16 %v3724
    %v4599 = vunpack.c.l.b16 %v3725
    %v4600 = vunpack.c.h.b16 %v3725
    %v4601 = vunpack.c.l.b16 %v3726
    %v4602 = vunpack.c.h.b16 %v3726
    %v4603 = vunpack.c.l.b16 %v3727
    %v4604 = vunpack.c.h.b16 %v3727
    %v4605 = vunpack.c.l.b16 %v3728
    %v4606 = vunpack.c.h.b16 %v3728
    %v4607 = vunpack.c.l.b16 %v3729
    %v4608 = vunpack.c.h.b16 %v3729
    %v4609 = vunpack.c.l.b16 %v3730
    %v4610 = vunpack.c.h.b16 %v3730
    %v4611 = vunpack.c.l.b16 %v3731
    %v4612 = vunpack.c.h.b16 %v3731
    %v4613 = vunpack.c.l.b16 %v3732
    %v4614 = vunpack.c.h.b16 %v3732
    %v4615 = vunpack.c.l.b16 %v3733
    %v4616 = vunpack.c.h.b16 %v3733
    %v4617 = vunpack.c.l.b16 %v3734
    %v4618 = vunpack.c.h.b16 %v3734
    %v4619 = vunpack.c.l.b16 %v3735
    %v4620 = vunpack.c.h.b16 %v3735
    %v4621 = vunpack.c.l.b16 %v3736
    %v4622 = vunpack.c.h.b16 %v3736
    %v4623 = vunpack.c.l.b16 %v3737
    %v4624 = vunpack.c.h.b16 %v3737
    %v4625 = vunpack.c.l.b16 %v3738
    %v4626 = vunpack.c.h.b16 %v3738
    %v4627 = vunpack.c.l.b16 %v3739
    %v4628 = vunpack.c.h.b16 %v3739
    %v4629 = vunpack.c.l.b16 %v3740
    %v4630 = vunpack.c.h.b16 %v3740
    %v4631 = vunpack.c.l.b16 %v3741
    %v4632 = vunpack.c.h.b16 %v3741
    %v4633 = vunpack.c.l.b16 %v3742
    %v4634 = vunpack.c.h.b16 %v3742
    %v4635 = vunpack.c.l.b16 %v3743
    %v4636 = vunpack.c.h.b16 %v3743
    %v4637 = vunpack.c.l.b16 %v3744
    %v4638 = vunpack.c.h.b16 %v3744
    %v4639 = vunpack.c.l.b16 %v3745
    %v4640 = vunpack.c.h.b16 %v3745
    %v4641 = vunpack.c.l.b16 %v3746
    %v4642 = vunpack.c.h.b16 %v3746
    %v4643 = vpack.c.b16 %v4073, %v4067
    %v4644 = vpack.c.b16 %v4074, %v4068
    %v4645 = vpack.c.b16 %v4075, %v4069
    %v4646 = vpack.c.b16 %v4076, %v4070
    %v4647 = vpack.c.b16 %v4077, %v4071
    %v4648 = vpack.c.b16 %v4078, %v4072
    %v4649 = vpack.c.b16 %v4085, %v4079
    %v4650 = vpack.c.b16 %v4086, %v4080
    %v4651 = vpack.c.b16 %v4087, %v4081
    %v4652 = vpack.c.b16 %v4088, %v4082
    %v4653 = vpack.c.b16 %v4089, %v4083
    %v4654 = vpack.c.b16 %v4090, %v4084
    %v4655 = vpack.c.b16 %v4097, %v4091
    %v4656 = vpack.c.b16 %v4098, %v4092
    %v4657 = vpack.c.b16 %v4099, %v4093
    %v4658 = vpack.c.b16 %v4100, %v4094
    %v4659 = vpack.c.b16 %v4101, %v4095
    %v4660 = vpack.c.b16 %v4102, %v4096
    %v4661 = vpack.c.b16 %v4109, %v4103
    %v4662 = vpack.c.b16 %v4110, %v4104
    %v4663 = vpack.c.b16 %v4111, %v4105
    %v4664 = vpack.c.b16 %v4112, %v4106
    %v4665 = vpack.c.b16 %v4113, %v4107
    %v4666 = vpack.c.b16 %v4114, %v4108
    %v4667 = vpack.c.b16 %v4121, %v4115
    %v4668 = vpack.c.b16 %v4122, %v4116
    %v4669 = vpack.c.b16 %v4123, %v4117
    %v4670 = vpack.c.b16 %v4124, %v4118
    %v4671 = vpack.c.b16 %v4125, %v4119
    %v4672 = vpack.c.b16 %v4126, %v4120
    %v4673 = vpack.c.b16 %v4133, %v4127
    %v4674 = vpack.c.b16 %v4134, %v4128
    %v4675 = vpack.c.b16 %v4135, %v4129
    %v4676 = vpack.c.b16 %v4136, %v4130
    %v4677 = vpack.c.b16 %v4137, %v4131
    %v4678 = vpack.c.b16 %v4138, %v4132
    %v4679 = vpack.c.b16 %v4145, %v4139
    %v4680 = vpack.c.b16 %v4146, %v4140
    %v4681 = vpack.c.b16 %v4147, %v4141
    %v4682 = vpack.c.b16 %v4148, %v4142
    %v4683 = vpack.c.b16 %v4149, %v4143
    %v4684 = vpack.c.b16 %v4150, %v4144
    %v4685 = vpack.c.b16 %v4157, %v4151
    %v4686 = vpack.c.b16 %v4158, %v4152
    %v4687 = vpack.c.b16 %v4159, %v4153
    %v4688 = vpack.c.b16 %v4160, %v4154
    %v4689 = vpack.c.b16 %v4161, %v4155
    %v4690 = vpack.c.b16 %v4162, %v4156
    %v4691 = vpack.c.b16 %v4169, %v4163
    %v4692 = vpack.c.b16 %v4170, %v4164
    %v4693 = vpack.c.b16 %v4171, %v4165
    %v4694 = vpack.c.b16 %v4172, %v4166
    %v4695 = vpack.c.b16 %v4173, %v4167
    %v4696 = vpack.c.b16 %v4174, %v4168
    %v4697 = vpack.c.b16 %v4181, %v4175
    %v4698 = vpack.c.b16 %v4182, %v4176
    %v4699 = vpack.c.b16 %v4183, %v4177
    %v4700 = vpack.c.b16 %v4184, %v4178
    %v4701 = vpack.c.b16 %v4185, %v4179
    %v4702 = vpack.c.b16 %v4186, %v4180
    %v4703 = vpack.c.b16 %v4193, %v4187
    %v4704 = vpack.c.b16 %v4194, %v4188
    %v4705 = vpack.c.b16 %v4195, %v4189
    %v4706 = vpack.c.b16 %v4196, %v4190
    %v4707 = vpack.c.b16 %v4197, %v4191
    %v4708 = vpack.c.b16 %v4198, %v4192
    %v4709 = vpack.c.b16 %v4205, %v4199
    %v4710 = vpack.c.b16 %v4206, %v4200
    %v4711 = vpack.c.b16 %v4207, %v4201
    %v4712 = vpack.c.b16 %v4208, %v4202
    %v4713 = vpack.c.b16 %v4209, %v4203
    %v4714 = vpack.c.b16 %v4210, %v4204
    %v4715 = vpack.c.b16 %v4217, %v4211
    %v4716 = vpack.c.b16 %v4218, %v4212
    %v4717 = vpack.c.b16 %v4219, %v4213
    %v4718 = vpack.c.b16 %v4220, %v4214
    %v4719 = vpack.c.b16 %v4221, %v4215
    %v4720 = vpack.c.b16 %v4222, %v4216
    %v4721 = vpack.c.b16 %v4229, %v4223
    %v4722 = vpack.c.b16 %v4230, %v4224
    %v4723 = vpack.c.b16 %v4231, %v4225
    %v4724 = vpack.c.b16 %v4232, %v4226
    %v4725 = vpack.c.b16 %v4233, %v4227
    %v4726 = vpack.c.b16 %v4234, %v4228
    %v4727 = vpack.c.b16 %v4241, %v4235
    %v4728 = vpack.c.b16 %v4242, %v4236
    %v4729 = vpack.c.b16 %v4243, %v4237
    %v4730 = vpack.c.b16 %v4244, %v4238
    %v4731 = vpack.c.b16 %v4245, %v4239
    %v4732 = vpack.c.b16 %v4246, %v4240
    %v4733 = vpack.c.b16 %v4253, %v4247
    %v4734 = vpack.c.b16 %v4254, %v4248
    %v4735 = vpack.c.b16 %v4255, %v4249
    %v4736 = vpack.c.b16 %v4256, %v4250
    %v4737 = vpack.c.b16 %v4257, %v4251
    %v4738 = vpack.c.b16 %v4258, %v4252
    %v4739 = vpack.c.b16 %v4265, %v4259
    %v4740 = vpack.c.b16 %v4266, %v4260
    %v4741 = vpack.c.b16 %v4267, %v4261
    %v4742 = vpack.c.b16 %v4268, %v4262
    %v4743 = vpack.c.b16 %v4269, %v4263
    %v4744 = vpack.c.b16 %v4270, %v4264
    %v4745 = vpack.c.b16 %v4277, %v4271
    %v4746 = vpack.c.b16 %v4278, %v4272
    %v4747 = vpack.c.b16 %v4279, %v4273
    %v4748 = vpack.c.b16 %v4280, %v4274
    %v4749 = vpack.c.b16 %v4281, %v4275
    %v4750 = vpack.c.b16 %v4282, %v4276
    %v4751 = vpack.c.b16 %v4289, %v4283
    %v4752 = vpack.c.b16 %v4290, %v4284
    %v4753 = vpack.c.b16 %v4291, %v4285
    %v4754 = vpack.c.b16 %v4292, %v4286
    %v4755 = vpack.c.b16 %v4293, %v4287
    %v4756 = vpack.c.b16 %v4294, %v4288
    %v4757 = vpack.c.b16 %v4301, %v4295
    %v4758 = vpack.c.b16 %v4302, %v4296
    %v4759 = vpack.c.b16 %v4303, %v4297
    %v4760 = vpack.c.b16 %v4304, %v4298
    %v4761 = vpack.c.b16 %v4305, %v4299
    %v4762 = vpack.c.b16 %v4306, %v4300
    %v4763 = vpack.c.b16 %v4313, %v4307
    %v4764 = vpack.c.b16 %v4314, %v4308
    %v4765 = vpack.c.b16 %v4315, %v4309
    %v4766 = vpack.c.b16 %v4316, %v4310
    %v4767 = vpack.c.b16 %v4317, %v4311
    %v4768 = vpack.c.b16 %v4318, %v4312
    %v4769 = vpack.c.b16 %v4325, %v4319
    %v4770 = vpack.c.b16 %v4326, %v4320
    %v4771 = vpack.c.b16 %v4327, %v4321
    %v4772 = vpack.c.b16 %v4328, %v4322
    %v4773 = vpack.c.b16 %v4329, %v4323
    %v4774 = vpack.c.b16 %v4330, %v4324
    %v4775 = vpack.c.b16 %v4337, %v4331
    %v4776 = vpack.c.b16 %v4338, %v4332
    %v4777 = vpack.c.b16 %v4339, %v4333
    %v4778 = vpack.c.b16 %v4340, %v4334
    %v4779 = vpack.c.b16 %v4341, %v4335
    %v4780 = vpack.c.b16 %v4342, %v4336
    %v4781 = vpack.c.b16 %v4349, %v4343
    %v4782 = vpack.c.b16 %v4350, %v4344
    %v4783 = vpack.c.b16 %v4351, %v4345
    %v4784 = vpack.c.b16 %v4352, %v4346
    %v4785 = vpack.c.b16 %v4353, %v4347
    %v4786 = vpack.c.b16 %v4354, %v4348
    %v4787 = vpack.c.b16 %v4361, %v4355
    %v4788 = vpack.c.b16 %v4362, %v4356
    %v4789 = vpack.c.b16 %v4363, %v4357
    %v4790 = vpack.c.b16 %v4364, %v4358
    %v4791 = vpack.c.b16 %v4365, %v4359
    %v4792 = vpack.c.b16 %v4366, %v4360
    %v4793 = vpack.c.b16 %v4373, %v4367
    %v4794 = vpack.c.b16 %v4374, %v4368
    %v4795 = vpack.c.b16 %v4375, %v4369
    %v4796 = vpack.c.b16 %v4376, %v4370
    %v4797 = vpack.c.b16 %v4377, %v4371
    %v4798 = vpack.c.b16 %v4378, %v4372
    %v4799 = vpack.c.b16 %v4385, %v4379
    %v4800 = vpack.c.b16 %v4386, %v4380
    %v4801 = vpack.c.b16 %v4387, %v4381
    %v4802 = vpack.c.b16 %v4388, %v4382
    %v4803 = vpack.c.b16 %v4389, %v4383
    %v4804 = vpack.c.b16 %v4390, %v4384
    %v4805 = vpack.c.b16 %v4397, %v4391
    %v4806 = vpack.c.b16 %v4398, %v4392
    %v4807 = vpack.c.b16 %v4399, %v4393
    %v4808 = vpack.c.b16 %v4400, %v4394
    %v4809 = vpack.c.b16 %v4401, %v4395
    %v4810 = vpack.c.b16 %v4402, %v4396
    %v4811 = vpack.c.b16 %v4409, %v4403
    %v4812 = vpack.c.b16 %v4410, %v4404
    %v4813 = vpack.c.b16 %v4411, %v4405
    %v4814 = vpack.c.b16 %v4412, %v4406
    %v4815 = vpack.c.b16 %v4413, %v4407
    %v4816 = vpack.c.b16 %v4414, %v4408
    %v4817 = vpack.c.b16 %v4421, %v4415
    %v4818 = vpack.c.b16 %v4422, %v4416
    %v4819 = vpack.c.b16 %v4423, %v4417
    %v4820 = vpack.c.b16 %v4424, %v4418
    %v4821 = vpack.c.b16 %v4425, %v4419
    %v4822 = vpack.c.b16 %v4426, %v4420
    %v4823 = vpack.c.b16 %v4433, %v4427
    %v4824 = vpack.c.b16 %v4434, %v4428
    %v4825 = vpack.c.b16 %v4435, %v4429
    %v4826 = vpack.c.b16 %v4436, %v4430
    %v4827 = vpack.c.b16 %v4437, %v4431
    %v4828 = vpack.c.b16 %v4438, %v4432
    %v4829 = vpack.c.b16 %v4445, %v4439
    %v4830 = vpack.c.b16 %v4446, %v4440
    %v4831 = vpack.c.b16 %v4447, %v4441
    %v4832 = vpack.c.b16 %v4448, %v4442
    %v4833 = vpack.c.b16 %v4449, %v4443
    %v4834 = vpack.c.b16 %v4450, %v4444
    %v4835 = vpack.c.b16 %v4457, %v4451
    %v4836 = vpack.c.b16 %v4458, %v4452
    %v4837 = vpack.c.b16 %v4459, %v4453
    %v4838 = vpack.c.b16 %v4460, %v4454
    %v4839 = vpack.c.b16 %v4461, %v4455
    %v4840 = vpack.c.b16 %v4462, %v4456
    %v4841 = vpack.c.b16 %v4469, %v4463
    %v4842 = vpack.c.b16 %v4470, %v4464
    %v4843 = vpack.c.b16 %v4471, %v4465
    %v4844 = vpack.c.b16 %v4472, %v4466
    %v4845 = vpack.c.b16 %v4473, %v4467
    %v4846 = vpack.c.b16 %v4474, %v4468
    %v4847 = vpack.c.b16 %v4481, %v4475
    %v4848 = vpack.c.b16 %v4482, %v4476
    %v4849 = vpack.c.b16 %v4483, %v4477
    %v4850 = vpack.c.b16 %v4484, %v4478
    %v4851 = vpack.c.b16 %v4485, %v4479
    %v4852 = vpack.c.b16 %v4486, %v4480
    %v4853 = vpack.c.b16 %v4493, %v4487
    %v4854 = vpack.c.b16 %v4494, %v4488
    %v4855 = vpack.c.b16 %v4495, %v4489
    %v4856 = vpack.c.b16 %v4496, %v4490
    %v4857 = vpack.c.b16 %v4497, %v4491
    %v4858 = vpack.c.b16 %v4498, %v4492
    %v4859 = vpack.c.b16 %v4505, %v4499
    %v4860 = vpack.c.b16 %v4506, %v4500
    %v4861 = vpack.c.b16 %v4507, %v4501
    %v4862 = vpack.c.b16 %v4508, %v4502
    %v4863 = vpack.c.b16 %v4509, %v4503
    %v4864 = vpack.c.b16 %v4510, %v4504
    %v4865 = vpack.c.b16 %v4517, %v4511
    %v4866 = vpack.c.b16 %v4518, %v4512
    %v4867 = vpack.c.b16 %v4519, %v4513
    %v4868 = vpack.c.b16 %v4520, %v4514
    %v4869 = vpack.c.b16 %v4521, %v4515
    %v4870 = vpack.c.b16 %v4522, %v4516
    %v4871 = vpack.c.b16 %v4529, %v4523
    %v4872 = vpack.c.b16 %v4530, %v4524
    %v4873 = vpack.c.b16 %v4531, %v4525
    %v4874 = vpack.c.b16 %v4532, %v4526
    %v4875 = vpack.c.b16 %v4533, %v4527
    %v4876 = vpack.c.b16 %v4534, %v4528
    %v4877 = vpack.c.b16 %v4541, %v4535
    %v4878 = vpack.c.b16 %v4542, %v4536
    %v4879 = vpack.c.b16 %v4543, %v4537
    %v4880 = vpack.c.b16 %v4544, %v4538
    %v4881 = vpack.c.b16 %v4545, %v4539
    %v4882 = vpack.c.b16 %v4546, %v4540
    %v4883 = vpack.c.b16 %v4553, %v4547
    %v4884 = vpack.c.b16 %v4554, %v4548
    %v4885 = vpack.c.b16 %v4555, %v4549
    %v4886 = vpack.c.b16 %v4556, %v4550
    %v4887 = vpack.c.b16 %v4557, %v4551
    %v4888 = vpack.c.b16 %v4558, %v4552
    %v4889 = vpack.c.b16 %v4565, %v4559
    %v4890 = vpack.c.b16 %v4566, %v4560
    %v4891 = vpack.c.b16 %v4567, %v4561
    %v4892 = vpack.c.b16 %v4568, %v4562
    %v4893 = vpack.c.b16 %v4569, %v4563
    %v4894 = vpack.c.b16 %v4570, %v4564
    %v4895 = vpack.c.b16 %v4577, %v4571
    %v4896 = vpack.c.b16 %v4578, %v4572
    %v4897 = vpack.c.b16 %v4579, %v4573
    %v4898 = vpack.c.b16 %v4580, %v4574
    %v4899 = vpack.c.b16 %v4581, %v4575
    %v4900 = vpack.c.b16 %v4582, %v4576
    %v4901 = vpack.c.b16 %v4589, %v4583
    %v4902 = vpack.c.b16 %v4590, %v4584
    %v4903 = vpack.c.b16 %v4591, %v4585
    %v4904 = vpack.c.b16 %v4592, %v4586
    %v4905 = vpack.c.b16 %v4593, %v4587
    %v4906 = vpack.c.b16 %v4594, %v4588
    %v4907 = vpack.c.b16 %v4601, %v4595
    %v4908 = vpack.c.b16 %v4602, %v4596
    %v4909 = vpack.c.b16 %v4603, %v4597
    %v4910 = vpack.c.b16 %v4604, %v4598
    %v4911 = vpack.c.b16 %v4605, %v4599
    %v4912 = vpack.c.b16 %v4606, %v4600
    %v4913 = vpack.c.b16 %v4613, %v4607
    %v4914 = vpack.c.b16 %v4614, %v4608
    %v4915 = vpack.c.b16 %v4615, %v4609
    %v4916 = vpack.c.b16 %v4616, %v4610
    %v4917 = vpack.c.b16 %v4617, %v4611
    %v4918 = vpack.c.b16 %v4618, %v4612
    %v4919 = vpack.c.b16 %v4625, %v4619
    %v4920 = vpack.c.b16 %v4626, %v4620
    %v4921 = vpack.c.b16 %v4627, %v4621
    %v4922 = vpack.c.b16 %v4628, %v4622
    %v4923 = vpack.c.b16 %v4629, %v4623
    %v4924 = vpack.c.b16 %v4630, %v4624
    %v4925 = vpack.c.b16 %v4637, %v4631
    %v4926 = vpack.c.b16 %v4638, %v4632
    %v4927 = vpack.c.b16 %v4639, %v4633
    %v4928 = vpack.c.b16 %v4640, %v4634
    %v4929 = vpack.c.b16 %v4641, %v4635
    %v4930 = vpack.c.b16 %v4642, %v4636
    %5219 = vmatprep.subr.bf16.mxu0 %v4644
    %5220 = vmatpush1.bf16.msra.mxu0 %v4643
    %5221 = vmatprep.subr.bf16.mxu0 %v4650
    %5222 = vmatpush1.bf16.msra.mxu0 %v4649
    %5223 = vmatprep.subr.bf16.mxu0 %v4656
    %5224 = vmatpush1.bf16.msra.mxu0 %v4655
    %5225 = vmatprep.subr.bf16.mxu0 %v4662
    %5226 = vmatpush1.bf16.msra.mxu0 %v4661
    %5227 = vmatprep.subr.bf16.mxu0 %v4668
    %5228 = vmatpush1.bf16.msra.mxu0 %v4667
    %5229 = vmatprep.subr.bf16.mxu0 %v4674
    %5230 = vmatpush1.bf16.msra.mxu0 %v4673
    %5231 = vmatprep.subr.bf16.mxu0 %v4680
    %5232 = vmatpush1.bf16.msra.mxu0 %v4679
    %5233 = vmatprep.subr.bf16.mxu0 %v4686
    %5234 = vmatpush1.bf16.msra.mxu0 %v4685
    %5235 = vmatprep.subr.bf16.mxu0 %v4692
    %5236 = vmatpush1.bf16.msra.mxu0 %v4691
    %5237 = vmatprep.subr.bf16.mxu0 %v4698
    %5238 = vmatpush1.bf16.msra.mxu0 %v4697
    %5239 = vmatprep.subr.bf16.mxu0 %v4704
    %5240 = vmatpush1.bf16.msra.mxu0 %v4703
    %5241 = vmatprep.subr.bf16.mxu0 %v4710
    %5242 = vmatpush1.bf16.msra.mxu0 %v4709
    %5243 = vmatprep.subr.bf16.mxu0 %v4716
    %5244 = vmatpush1.bf16.msra.mxu0 %v4715
    %5245 = vmatprep.subr.bf16.mxu0 %v4722
    %5246 = vmatpush1.bf16.msra.mxu0 %v4721
    %5247 = vmatprep.subr.bf16.mxu0 %v4728
    %5248 = vmatpush1.bf16.msra.mxu0 %v4727
    %5249 = vmatprep.subr.bf16.mxu0 %v4734
    %5250 = vmatpush1.bf16.msra.mxu0 %v4733
    %5251 = vmatprep.mubr.bf16.mxu0 %v3454
    %5252 = vmatmul.mubr.bf16.gmra.mrb[0].mxu0 %v3453
    %v5253 = vpop.f32.mrb[0].mxu0
    %v5254 = vadd.f32 %v3752, %v5253
    %v5255 = vpop.f32.mrb[0].mxu0
    %v5256 = vadd.f32 %v3756, %v5255
    %v5257 = vpop.f32.mrb[0].mxu0
    %v5258 = vpop.f32.mrb[0].mxu0
    %5259 = vdwg.mxu0
    %5260 = vmatprep.subr.bf16.mxu0 %v4740
    %5261 = vmatpush1.bf16.msra.mxu0 %v4739
    %5262 = vmatprep.subr.bf16.mxu0 %v4746
    %5263 = vmatpush1.bf16.msra.mxu0 %v4745
    %5264 = vmatprep.subr.bf16.mxu0 %v4752
    %5265 = vmatpush1.bf16.msra.mxu0 %v4751
    %5266 = vmatprep.subr.bf16.mxu0 %v4758
    %5267 = vmatpush1.bf16.msra.mxu0 %v4757
    %5268 = vmatprep.subr.bf16.mxu0 %v4764
    %5269 = vmatpush1.bf16.msra.mxu0 %v4763
    %5270 = vmatprep.subr.bf16.mxu0 %v4770
    %5271 = vmatpush1.bf16.msra.mxu0 %v4769
    %5272 = vmatprep.subr.bf16.mxu0 %v4776
    %5273 = vmatpush1.bf16.msra.mxu0 %v4775
    %5274 = vmatprep.subr.bf16.mxu0 %v4782
    %5275 = vmatpush1.bf16.msra.mxu0 %v4781
    %5276 = vmatprep.subr.bf16.mxu0 %v4788
    %5277 = vmatpush1.bf16.msra.mxu0 %v4787
    %5278 = vmatprep.subr.bf16.mxu0 %v4794
    %5279 = vmatpush1.bf16.msra.mxu0 %v4793
    %5280 = vmatprep.subr.bf16.mxu0 %v4800
    %5281 = vmatpush1.bf16.msra.mxu0 %v4799
    %5282 = vmatprep.subr.bf16.mxu0 %v4806
    %5283 = vmatpush1.bf16.msra.mxu0 %v4805
    %5284 = vmatprep.subr.bf16.mxu0 %v4812
    %5285 = vmatpush1.bf16.msra.mxu0 %v4811
    %5286 = vmatprep.subr.bf16.mxu0 %v4818
    %5287 = vmatpush1.bf16.msra.mxu0 %v4817
    %5288 = vmatprep.subr.bf16.mxu0 %v4824
    %5289 = vmatpush1.bf16.msra.mxu0 %v4823
    %5290 = vmatprep.subr.bf16.mxu0 %v4830
    %5291 = vmatpush1.bf16.msra.mxu0 %v4829
    %5292 = vmatprep.mubr.bf16.mxu0 %v3456
    %5293 = vmatmul.mubr.bf16.gmra.mrb[0].mxu0 %v3455
    %v5294 = vpop.f32.mrb[0].mxu0
    %v5295 = vadd.f32 %v5254, %v5294
    %v5296 = vpop.f32.mrb[0].mxu0
    %v5297 = vadd.f32 %v5256, %v5296
    %v5298 = vpop.f32.mrb[0].mxu0
    %v5299 = vpop.f32.mrb[0].mxu0
    %5300 = vdwg.mxu0
    %5301 = vmatprep.subr.bf16.mxu0 %v4836
    %5302 = vmatpush1.bf16.msra.mxu0 %v4835
    %5303 = vmatprep.subr.bf16.mxu0 %v4842
    %5304 = vmatpush1.bf16.msra.mxu0 %v4841
    %5305 = vmatprep.subr.bf16.mxu0 %v4848
    %5306 = vmatpush1.bf16.msra.mxu0 %v4847
    %5307 = vmatprep.subr.bf16.mxu0 %v4854
    %5308 = vmatpush1.bf16.msra.mxu0 %v4853
    %5309 = vmatprep.subr.bf16.mxu0 %v4860
    %5310 = vmatpush1.bf16.msra.mxu0 %v4859
    %5311 = vmatprep.subr.bf16.mxu0 %v4866
    %5312 = vmatpush1.bf16.msra.mxu0 %v4865
    %5313 = vmatprep.subr.bf16.mxu0 %v4872
    %5314 = vmatpush1.bf16.msra.mxu0 %v4871
    %5315 = vmatprep.subr.bf16.mxu0 %v4878
    %5316 = vmatpush1.bf16.msra.mxu0 %v4877
    %5317 = vmatprep.subr.bf16.mxu0 %v4884
    %5318 = vmatpush1.bf16.msra.mxu0 %v4883
    %5319 = vmatprep.subr.bf16.mxu0 %v4890
    %5320 = vmatpush1.bf16.msra.mxu0 %v4889
    %5321 = vmatprep.subr.bf16.mxu0 %v4896
    %5322 = vmatpush1.bf16.msra.mxu0 %v4895
    %5323 = vmatprep.subr.bf16.mxu0 %v4902
    %5324 = vmatpush1.bf16.msra.mxu0 %v4901
    %5325 = vmatprep.subr.bf16.mxu0 %v4908
    %5326 = vmatpush1.bf16.msra.mxu0 %v4907
    %5327 = vmatprep.subr.bf16.mxu0 %v4914
    %5328 = vmatpush1.bf16.msra.mxu0 %v4913
    %5329 = vmatprep.subr.bf16.mxu0 %v4920
    %5330 = vmatpush1.bf16.msra.mxu0 %v4919
    %5331 = vmatprep.subr.bf16.mxu0 %v4926
    %5332 = vmatpush1.bf16.msra.mxu0 %v4925
    %5333 = vmatprep.mubr.bf16.mxu0 %v3458
    %5334 = vmatmul.mubr.bf16.gmra.mrb[0].mxu0 %v3457
    %v5335 = vpop.f32.mrb[0].mxu0
    %v5336 = vadd.f32 %v5295, %v5335
    %v5337 = vpop.f32.mrb[0].mxu0
    %v5338 = vadd.f32 %v5297, %v5337
    %v5339 = vpop.f32.mrb[0].mxu0
    %v5340 = vpop.f32.mrb[0].mxu0
    %5341 = vdwg.mxu0
    %5342 = vmatprep.subr.bf16.mxu0 %v4646
    %5343 = vmatpush1.bf16.msra.mxu0 %v4645
    %5344 = vmatprep.subr.bf16.mxu0 %v4652
    %5345 = vmatpush1.bf16.msra.mxu0 %v4651
    %5346 = vmatprep.subr.bf16.mxu0 %v4658
    %5347 = vmatpush1.bf16.msra.mxu0 %v4657
    %5348 = vmatprep.subr.bf16.mxu0 %v4664
    %5349 = vmatpush1.bf16.msra.mxu0 %v4663
    %5350 = vmatprep.subr.bf16.mxu0 %v4670
    %5351 = vmatpush1.bf16.msra.mxu0 %v4669
    %5352 = vmatprep.subr.bf16.mxu0 %v4676
    %5353 = vmatpush1.bf16.msra.mxu0 %v4675
    %5354 = vmatprep.subr.bf16.mxu0 %v4682
    %5355 = vmatpush1.bf16.msra.mxu0 %v4681
    %5356 = vmatprep.subr.bf16.mxu0 %v4688
    %5357 = vmatpush1.bf16.msra.mxu0 %v4687
    %5358 = vmatprep.subr.bf16.mxu0 %v4694
    %5359 = vmatpush1.bf16.msra.mxu0 %v4693
    %5360 = vmatprep.subr.bf16.mxu0 %v4700
    %5361 = vmatpush1.bf16.msra.mxu0 %v4699
    %5362 = vmatprep.subr.bf16.mxu0 %v4706
    %5363 = vmatpush1.bf16.msra.mxu0 %v4705
    %5364 = vmatprep.subr.bf16.mxu0 %v4712
    %5365 = vmatpush1.bf16.msra.mxu0 %v4711
    %5366 = vmatprep.subr.bf16.mxu0 %v4718
    %5367 = vmatpush1.bf16.msra.mxu0 %v4717
    %5368 = vmatprep.subr.bf16.mxu0 %v4724
    %5369 = vmatpush1.bf16.msra.mxu0 %v4723
    %5370 = vmatprep.subr.bf16.mxu0 %v4730
    %5371 = vmatpush1.bf16.msra.mxu0 %v4729
    %5372 = vmatprep.subr.bf16.mxu0 %v4736
    %5373 = vmatpush1.bf16.msra.mxu0 %v4735
    %5374 = vmatprep.mubr.bf16.mxu0 %v3454
    %5375 = vmatmul.mubr.bf16.gmra.mrb[0].mxu0 %v3453
    %v5376 = vpop.f32.mrb[0].mxu0
    %v5377 = vadd.f32 %v3760, %v5376
    %v5378 = vpop.f32.mrb[0].mxu0
    %v5379 = vadd.f32 %v3764, %v5378
    %v5380 = vpop.f32.mrb[0].mxu0
    %v5381 = vpop.f32.mrb[0].mxu0
    %5382 = vdwg.mxu0
    %5383 = vmatprep.subr.bf16.mxu0 %v4742
    %5384 = vmatpush1.bf16.msra.mxu0 %v4741
    %5385 = vmatprep.subr.bf16.mxu0 %v4748
    %5386 = vmatpush1.bf16.msra.mxu0 %v4747
    %5387 = vmatprep.subr.bf16.mxu0 %v4754
    %5388 = vmatpush1.bf16.msra.mxu0 %v4753
    %5389 = vmatprep.subr.bf16.mxu0 %v4760
    %5390 = vmatpush1.bf16.msra.mxu0 %v4759
    %5391 = vmatprep.subr.bf16.mxu0 %v4766
    %5392 = vmatpush1.bf16.msra.mxu0 %v4765
    %5393 = vmatprep.subr.bf16.mxu0 %v4772
    %5394 = vmatpush1.bf16.msra.mxu0 %v4771
    %5395 = vmatprep.subr.bf16.mxu0 %v4778
    %5396 = vmatpush1.bf16.msra.mxu0 %v4777
    %5397 = vmatprep.subr.bf16.mxu0 %v4784
    %5398 = vmatpush1.bf16.msra.mxu0 %v4783
    %5399 = vmatprep.subr.bf16.mxu0 %v4790
    %5400 = vmatpush1.bf16.msra.mxu0 %v4789
    %5401 = vmatprep.subr.bf16.mxu0 %v4796
    %5402 = vmatpush1.bf16.msra.mxu0 %v4795
    %5403 = vmatprep.subr.bf16.mxu0 %v4802
    %5404 = vmatpush1.bf16.msra.mxu0 %v4801
    %5405 = vmatprep.subr.bf16.mxu0 %v4808
    %5406 = vmatpush1.bf16.msra.mxu0 %v4807
    %5407 = vmatprep.subr.bf16.mxu0 %v4814
    %5408 = vmatpush1.bf16.msra.mxu0 %v4813
    %5409 = vmatprep.subr.bf16.mxu0 %v4820
    %5410 = vmatpush1.bf16.msra.mxu0 %v4819
    %5411 = vmatprep.subr.bf16.mxu0 %v4826
    %5412 = vmatpush1.bf16.msra.mxu0 %v4825
    %5413 = vmatprep.subr.bf16.mxu0 %v4832
    %5414 = vmatpush1.bf16.msra.mxu0 %v4831
    %5415 = vmatprep.mubr.bf16.mxu0 %v3456
    %5416 = vmatmul.mubr.bf16.gmra.mrb[0].mxu0 %v3455
    %v5417 = vpop.f32.mrb[0].mxu0
    %v5418 = vadd.f32 %v5377, %v5417
    %v5419 = vpop.f32.mrb[0].mxu0
    %v5420 = vadd.f32 %v5379, %v5419
    %v5421 = vpop.f32.mrb[0].mxu0
    %v5422 = vpop.f32.mrb[0].mxu0
    %5423 = vdwg.mxu0
    %5424 = vmatprep.subr.bf16.mxu0 %v4838
    %5425 = vmatpush1.bf16.msra.mxu0 %v4837
    %5426 = vmatprep.subr.bf16.mxu0 %v4844
    %5427 = vmatpush1.bf16.msra.mxu0 %v4843
    %5428 = vmatprep.subr.bf16.mxu0 %v4850
    %5429 = vmatpush1.bf16.msra.mxu0 %v4849
    %5430 = vmatprep.subr.bf16.mxu0 %v4856
    %5431 = vmatpush1.bf16.msra.mxu0 %v4855
    %5432 = vmatprep.subr.bf16.mxu0 %v4862
    %5433 = vmatpush1.bf16.msra.mxu0 %v4861
    %5434 = vmatprep.subr.bf16.mxu0 %v4868
    %5435 = vmatpush1.bf16.msra.mxu0 %v4867
    %5436 = vmatprep.subr.bf16.mxu0 %v4874
    %5437 = vmatpush1.bf16.msra.mxu0 %v4873
    %5438 = vmatprep.subr.bf16.mxu0 %v4880
    %5439 = vmatpush1.bf16.msra.mxu0 %v4879
    %5440 = vmatprep.subr.bf16.mxu0 %v4886
    %5441 = vmatpush1.bf16.msra.mxu0 %v4885
    %5442 = vmatprep.subr.bf16.mxu0 %v4892
    %5443 = vmatpush1.bf16.msra.mxu0 %v4891
    %5444 = vmatprep.subr.bf16.mxu0 %v4898
    %5445 = vmatpush1.bf16.msra.mxu0 %v4897
    %5446 = vmatprep.subr.bf16.mxu0 %v4904
    %5447 = vmatpush1.bf16.msra.mxu0 %v4903
    %5448 = vmatprep.subr.bf16.mxu0 %v4910
    %5449 = vmatpush1.bf16.msra.mxu0 %v4909
    %5450 = vmatprep.subr.bf16.mxu0 %v4916
    %5451 = vmatpush1.bf16.msra.mxu0 %v4915
    %5452 = vmatprep.subr.bf16.mxu0 %v4922
    %5453 = vmatpush1.bf16.msra.mxu0 %v4921
    %5454 = vmatprep.subr.bf16.mxu0 %v4928
    %5455 = vmatpush1.bf16.msra.mxu0 %v4927
    %5456 = vmatprep.mubr.bf16.mxu0 %v3458
    %5457 = vmatmul.mubr.bf16.gmra.mrb[0].mxu0 %v3457
    %v5458 = vpop.f32.mrb[0].mxu0
    %v5459 = vadd.f32 %v5418, %v5458
    %v5460 = vpop.f32.mrb[0].mxu0
    %v5461 = vadd.f32 %v5420, %v5460
    %v5462 = vpop.f32.mrb[0].mxu0
    %v5463 = vpop.f32.mrb[0].mxu0
    %5464 = vdwg.mxu0
    %5465 = vmatprep.subr.bf16.mxu0 %v4648
    %5466 = vmatpush1.bf16.msra.mxu0 %v4647
    %5467 = vmatprep.subr.bf16.mxu0 %v4654
    %5468 = vmatpush1.bf16.msra.mxu0 %v4653
    %5469 = vmatprep.subr.bf16.mxu0 %v4660
    %5470 = vmatpush1.bf16.msra.mxu0 %v4659
    %5471 = vmatprep.subr.bf16.mxu0 %v4666
    %5472 = vmatpush1.bf16.msra.mxu0 %v4665
    %5473 = vmatprep.subr.bf16.mxu0 %v4672
    %5474 = vmatpush1.bf16.msra.mxu0 %v4671
    %5475 = vmatprep.subr.bf16.mxu0 %v4678
    %5476 = vmatpush1.bf16.msra.mxu0 %v4677
    %5477 = vmatprep.subr.bf16.mxu0 %v4684
    %5478 = vmatpush1.bf16.msra.mxu0 %v4683
    %5479 = vmatprep.subr.bf16.mxu0 %v4690
    %5480 = vmatpush1.bf16.msra.mxu0 %v4689
    %5481 = vmatprep.subr.bf16.mxu0 %v4696
    %5482 = vmatpush1.bf16.msra.mxu0 %v4695
    %5483 = vmatprep.subr.bf16.mxu0 %v4702
    %5484 = vmatpush1.bf16.msra.mxu0 %v4701
    %5485 = vmatprep.subr.bf16.mxu0 %v4708
    %5486 = vmatpush1.bf16.msra.mxu0 %v4707
    %5487 = vmatprep.subr.bf16.mxu0 %v4714
    %5488 = vmatpush1.bf16.msra.mxu0 %v4713
    %5489 = vmatprep.subr.bf16.mxu0 %v4720
    %5490 = vmatpush1.bf16.msra.mxu0 %v4719
    %5491 = vmatprep.subr.bf16.mxu0 %v4726
    %5492 = vmatpush1.bf16.msra.mxu0 %v4725
    %5493 = vmatprep.subr.bf16.mxu0 %v4732
    %5494 = vmatpush1.bf16.msra.mxu0 %v4731
    %5495 = vmatprep.subr.bf16.mxu0 %v4738
    %5496 = vmatpush1.bf16.msra.mxu0 %v4737
    %5497 = vmatprep.mubr.bf16.mxu0 %v3454
    %5498 = vmatmul.mubr.bf16.gmra.mrb[0].mxu0 %v3453
    %v5499 = vpop.f32.mrb[0].mxu0
    %v5500 = vadd.f32 %v3768, %v5499
    %v5501 = vpop.f32.mrb[0].mxu0
    %v5502 = vadd.f32 %v3772, %v5501
    %v5503 = vpop.f32.mrb[0].mxu0
    %v5504 = vpop.f32.mrb[0].mxu0
    %5505 = vdwg.mxu0
    %5506 = vmatprep.subr.bf16.mxu0 %v4744
    %5507 = vmatpush1.bf16.msra.mxu0 %v4743
    %5508 = vmatprep.subr.bf16.mxu0 %v4750
    %5509 = vmatpush1.bf16.msra.mxu0 %v4749
    %5510 = vmatprep.subr.bf16.mxu0 %v4756
    %5511 = vmatpush1.bf16.msra.mxu0 %v4755
    %5512 = vmatprep.subr.bf16.mxu0 %v4762
    %5513 = vmatpush1.bf16.msra.mxu0 %v4761
    %5514 = vmatprep.subr.bf16.mxu0 %v4768
    %5515 = vmatpush1.bf16.msra.mxu0 %v4767
    %5516 = vmatprep.subr.bf16.mxu0 %v4774
    %5517 = vmatpush1.bf16.msra.mxu0 %v4773
    %5518 = vmatprep.subr.bf16.mxu0 %v4780
    %5519 = vmatpush1.bf16.msra.mxu0 %v4779
    %5520 = vmatprep.subr.bf16.mxu0 %v4786
    %5521 = vmatpush1.bf16.msra.mxu0 %v4785
    %5522 = vmatprep.subr.bf16.mxu0 %v4792
    %5523 = vmatpush1.bf16.msra.mxu0 %v4791
    %5524 = vmatprep.subr.bf16.mxu0 %v4798
    %5525 = vmatpush1.bf16.msra.mxu0 %v4797
    %5526 = vmatprep.subr.bf16.mxu0 %v4804
    %5527 = vmatpush1.bf16.msra.mxu0 %v4803
    %5528 = vmatprep.subr.bf16.mxu0 %v4810
    %5529 = vmatpush1.bf16.msra.mxu0 %v4809
    %5530 = vmatprep.subr.bf16.mxu0 %v4816
    %5531 = vmatpush1.bf16.msra.mxu0 %v4815
    %5532 = vmatprep.subr.bf16.mxu0 %v4822
    %5533 = vmatpush1.bf16.msra.mxu0 %v4821
    %5534 = vmatprep.subr.bf16.mxu0 %v4828
    %5535 = vmatpush1.bf16.msra.mxu0 %v4827
    %5536 = vmatprep.subr.bf16.mxu0 %v4834
    %5537 = vmatpush1.bf16.msra.mxu0 %v4833
    %5538 = vmatprep.mubr.bf16.mxu0 %v3456
    %5539 = vmatmul.mubr.bf16.gmra.mrb[0].mxu0 %v3455
    %v5540 = vpop.f32.mrb[0].mxu0
    %v5541 = vadd.f32 %v5500, %v5540
    %v5542 = vpop.f32.mrb[0].mxu0
    %v5543 = vadd.f32 %v5502, %v5542
    %v5544 = vpop.f32.mrb[0].mxu0
    %v5545 = vpop.f32.mrb[0].mxu0
    %5546 = vdwg.mxu0
    %5547 = vmatprep.subr.bf16.mxu0 %v4840
    %5548 = vmatpush1.bf16.msra.mxu0 %v4839
    %5549 = vmatprep.subr.bf16.mxu0 %v4846
    %5550 = vmatpush1.bf16.msra.mxu0 %v4845
    %5551 = vmatprep.subr.bf16.mxu0 %v4852
    %5552 = vmatpush1.bf16.msra.mxu0 %v4851
    %5553 = vmatprep.subr.bf16.mxu0 %v4858
    %5554 = vmatpush1.bf16.msra.mxu0 %v4857
    %5555 = vmatprep.subr.bf16.mxu0 %v4864
    %5556 = vmatpush1.bf16.msra.mxu0 %v4863
    %5557 = vmatprep.subr.bf16.mxu0 %v4870
    %5558 = vmatpush1.bf16.msra.mxu0 %v4869
    %5559 = vmatprep.subr.bf16.mxu0 %v4876
    %5560 = vmatpush1.bf16.msra.mxu0 %v4875
    %5561 = vmatprep.subr.bf16.mxu0 %v4882
    %5562 = vmatpush1.bf16.msra.mxu0 %v4881
    %5563 = vmatprep.subr.bf16.mxu0 %v4888
    %5564 = vmatpush1.bf16.msra.mxu0 %v4887
    %5565 = vmatprep.subr.bf16.mxu0 %v4894
    %5566 = vmatpush1.bf16.msra.mxu0 %v4893
    %5567 = vmatprep.subr.bf16.mxu0 %v4900
    %5568 = vmatpush1.bf16.msra.mxu0 %v4899
    %5569 = vmatprep.subr.bf16.mxu0 %v4906
    %5570 = vmatpush1.bf16.msra.mxu0 %v4905
    %5571 = vmatprep.subr.bf16.mxu0 %v4912
    %5572 = vmatpush1.bf16.msra.mxu0 %v4911
    %5573 = vmatprep.subr.bf16.mxu0 %v4918
    %5574 = vmatpush1.bf16.msra.mxu0 %v4917
    %5575 = vmatprep.subr.bf16.mxu0 %v4924
    %5576 = vmatpush1.bf16.msra.mxu0 %v4923
    %5577 = vmatprep.subr.bf16.mxu0 %v4930
    %5578 = vmatpush1.bf16.msra.mxu0 %v4929
    %5579 = vmatprep.mubr.bf16.mxu0 %v3458
    %5580 = vmatmul.mubr.bf16.gmra.mrb[0].mxu0 %v3457
    %v5581 = vpop.f32.mrb[0].mxu0
    %v5582 = vadd.f32 %v5541, %v5581
    %v5583 = vpop.f32.mrb[0].mxu0
    %v5584 = vadd.f32 %v5543, %v5583
    %v5585 = vpop.f32.mrb[0].mxu0
    %v5586 = vpop.f32.mrb[0].mxu0
    %5587 = vdwg.mxu0
    %v5588 = vtanh.pop %v5336
    %v5589 = vtanh.pop %v5338
    %v5590 = vtanh.pop %v5459
    %v5591 = vtanh.pop %v5461
    %v5592 = vtanh.pop %v5582
    %v5593 = vtanh.pop %v5584
    %v5594 = vpack.c.bf16 %v5588, %v5588
    %v5595 = vpack.c.bf16 %v5589, %v5589
    %v5596 = vpack.c.bf16 %v5590, %v5590
    %v5597 = vpack.c.bf16 %v5591, %v5591
    %v5598 = vpack.c.bf16 %v5592, %v5592
    %v5599 = vpack.c.bf16 %v5593, %v5593
    %v5600 = vld [vmem:[#allocation14] sm:$0xff]
    %v5601 = vld [vmem:[#allocation14 + $0x8] sm:$0xff]
    %v5602 = vld [vmem:[#allocation14 + $0x10] sm:$0xff]
    %v5603 = vld [vmem:[#allocation14 + $0x18] sm:$0xff]
    %v5604 = vld [vmem:[#allocation14 + $0x20] sm:$0xff]
    %v5605 = vld [vmem:[#allocation14 + $0x28] sm:$0xff]
    %v5606 = vld [vmem:[#allocation14 + $0x30] sm:$0xff]
    %v5607 = vld [vmem:[#allocation14 + $0x38] sm:$0xff]
    %v5608 = vld [vmem:[#allocation14 + $0x40] sm:$0xff]
    %v5609 = vld [vmem:[#allocation14 + $0x48] sm:$0xff]
    %v5610 = vld [vmem:[#allocation14 + $0x50] sm:$0xff]
    %v5611 = vld [vmem:[#allocation14 + $0x58] sm:$0xff]
    %v5612 = vld [vmem:[#allocation14 + $0x60] sm:$0xff]
    %v5613 = vld [vmem:[#allocation14 + $0x68] sm:$0xff]
    %v5614 = vld [vmem:[#allocation14 + $0x70] sm:$0xff]
    %v5615 = vld [vmem:[#allocation14 + $0x78] sm:$0xff]
    %v5616 = vld [vmem:[#allocation14 + $0x80] sm:$0xff]
    %v5617 = vld [vmem:[#allocation14 + $0x88] sm:$0xff]
    %v5618 = vld [vmem:[#allocation14 + $0x90] sm:$0xff]
    %v5619 = vld [vmem:[#allocation14 + $0x98] sm:$0xff]
    %v5620 = vld [vmem:[#allocation14 + $0xa0] sm:$0xff]
    %v5621 = vld [vmem:[#allocation14 + $0xa8] sm:$0xff]
    %v5622 = vld [vmem:[#allocation14 + $0xb0] sm:$0xff]
    %v5623 = vld [vmem:[#allocation14 + $0xb8] sm:$0xff]
    %v5624 = vld [vmem:[#allocation14 + $0xc0] sm:$0xff]
    %v5625 = vld [vmem:[#allocation14 + $0xc8] sm:$0xff]
    %v5626 = vld [vmem:[#allocation14 + $0xd0] sm:$0xff]
    %v5627 = vld [vmem:[#allocation14 + $0xd8] sm:$0xff]
    %v5628 = vld [vmem:[#allocation14 + $0xe0] sm:$0xff]
    %v5629 = vld [vmem:[#allocation14 + $0xe8] sm:$0xff]
    %v5630 = vld [vmem:[#allocation14 + $0xf0] sm:$0xff]
    %v5631 = vld [vmem:[#allocation14 + $0xf8] sm:$0xff]
    %v5632 = vld [vmem:[#allocation14 + $0x100] sm:$0xff]
    %v5633 = vld [vmem:[#allocation14 + $0x108] sm:$0xff]
    %v5634 = vld [vmem:[#allocation14 + $0x110] sm:$0xff]
    %v5635 = vld [vmem:[#allocation14 + $0x118] sm:$0xff]
    %v5636 = vld [vmem:[#allocation14 + $0x120] sm:$0xff]
    %v5637 = vld [vmem:[#allocation14 + $0x128] sm:$0xff]
    %v5638 = vld [vmem:[#allocation14 + $0x130] sm:$0xff]
    %v5639 = vld [vmem:[#allocation14 + $0x138] sm:$0xff]
    %v5640 = vld [vmem:[#allocation14 + $0x140] sm:$0xff]
    %v5641 = vld [vmem:[#allocation14 + $0x148] sm:$0xff]
    %v5642 = vld [vmem:[#allocation14 + $0x150] sm:$0xff]
    %v5643 = vld [vmem:[#allocation14 + $0x158] sm:$0xff]
    %v5644 = vld [vmem:[#allocation14 + $0x160] sm:$0xff]
    %v5645 = vld [vmem:[#allocation14 + $0x168] sm:$0xff]
    %v5646 = vld [vmem:[#allocation14 + $0x170] sm:$0xff]
    %v5647 = vld [vmem:[#allocation14 + $0x178] sm:$0xff]
    %v5648 = vld [vmem:[#allocation14 + $0x180] sm:$0xff]
    %v5649 = vld [vmem:[#allocation14 + $0x188] sm:$0xff]
    %v5650 = vld [vmem:[#allocation14 + $0x190] sm:$0xff]
    %v5651 = vld [vmem:[#allocation14 + $0x198] sm:$0xff]
    %v5652 = vld [vmem:[#allocation14 + $0x1a0] sm:$0xff]
    %v5653 = vld [vmem:[#allocation14 + $0x1a8] sm:$0xff]
    %v5654 = vld [vmem:[#allocation14 + $0x1b0] sm:$0xff]
    %v5655 = vld [vmem:[#allocation14 + $0x1b8] sm:$0xff]
    %v5656 = vld [vmem:[#allocation14 + $0x1c0] sm:$0xff]
    %v5657 = vld [vmem:[#allocation14 + $0x1c8] sm:$0xff]
    %v5658 = vld [vmem:[#allocation14 + $0x1d0] sm:$0xff]
    %v5659 = vld [vmem:[#allocation14 + $0x1d8] sm:$0xff]
    %v5660 = vld [vmem:[#allocation14 + $0x1e0] sm:$0xff]
    %v5661 = vld [vmem:[#allocation14 + $0x1e8] sm:$0xff]
    %v5662 = vld [vmem:[#allocation14 + $0x1f0] sm:$0xff]
    %v5663 = vld [vmem:[#allocation14 + $0x1f8] sm:$0xff]
    %v5664 = vld [vmem:[#allocation14 + $0x200] sm:$0xff]
    %v5665 = vld [vmem:[#allocation14 + $0x208] sm:$0xff]
    %v5666 = vld [vmem:[#allocation14 + $0x210] sm:$0xff]
    %v5667 = vld [vmem:[#allocation14 + $0x218] sm:$0xff]
    %v5668 = vld [vmem:[#allocation14 + $0x220] sm:$0xff]
    %v5669 = vld [vmem:[#allocation14 + $0x228] sm:$0xff]
    %v5670 = vld [vmem:[#allocation14 + $0x230] sm:$0xff]
    %v5671 = vld [vmem:[#allocation14 + $0x238] sm:$0xff]
    %v5672 = vld [vmem:[#allocation14 + $0x240] sm:$0xff]
    %v5673 = vld [vmem:[#allocation14 + $0x248] sm:$0xff]
    %v5674 = vld [vmem:[#allocation14 + $0x250] sm:$0xff]
    %v5675 = vld [vmem:[#allocation14 + $0x258] sm:$0xff]
    %v5676 = vld [vmem:[#allocation14 + $0x260] sm:$0xff]
    %v5677 = vld [vmem:[#allocation14 + $0x268] sm:$0xff]
    %v5678 = vld [vmem:[#allocation14 + $0x270] sm:$0xff]
    %v5679 = vld [vmem:[#allocation14 + $0x278] sm:$0xff]
    %v5680 = vld [vmem:[#allocation14 + $0x280] sm:$0xff]
    %v5681 = vld [vmem:[#allocation14 + $0x288] sm:$0xff]
    %v5682 = vld [vmem:[#allocation14 + $0x290] sm:$0xff]
    %v5683 = vld [vmem:[#allocation14 + $0x298] sm:$0xff]
    %v5684 = vld [vmem:[#allocation14 + $0x2a0] sm:$0xff]
    %v5685 = vld [vmem:[#allocation14 + $0x2a8] sm:$0xff]
    %v5686 = vld [vmem:[#allocation14 + $0x2b0] sm:$0xff]
    %v5687 = vld [vmem:[#allocation14 + $0x2b8] sm:$0xff]
    %v5688 = vld [vmem:[#allocation14 + $0x2c0] sm:$0xff]
    %v5689 = vld [vmem:[#allocation14 + $0x2c8] sm:$0xff]
    %v5690 = vld [vmem:[#allocation14 + $0x2d0] sm:$0xff]
    %v5691 = vld [vmem:[#allocation14 + $0x2d8] sm:$0xff]
    %v5692 = vld [vmem:[#allocation14 + $0x2e0] sm:$0xff]
    %v5693 = vld [vmem:[#allocation14 + $0x2e8] sm:$0xff]
    %v5694 = vld [vmem:[#allocation14 + $0x2f0] sm:$0xff]
    %v5695 = vld [vmem:[#allocation14 + $0x2f8] sm:$0xff]
    %v5696 = vld [vmem:[#allocation14 + $0x300] sm:$0xff]
    %v5697 = vld [vmem:[#allocation14 + $0x308] sm:$0xff]
    %v5698 = vld [vmem:[#allocation14 + $0x310] sm:$0xff]
    %v5699 = vld [vmem:[#allocation14 + $0x318] sm:$0xff]
    %v5700 = vld [vmem:[#allocation14 + $0x320] sm:$0xff]
    %v5701 = vld [vmem:[#allocation14 + $0x328] sm:$0xff]
    %v5702 = vld [vmem:[#allocation14 + $0x330] sm:$0xff]
    %v5703 = vld [vmem:[#allocation14 + $0x338] sm:$0xff]
    %v5704 = vld [vmem:[#allocation14 + $0x340] sm:$0xff]
    %v5705 = vld [vmem:[#allocation14 + $0x348] sm:$0xff]
    %v5706 = vld [vmem:[#allocation14 + $0x350] sm:$0xff]
    %v5707 = vld [vmem:[#allocation14 + $0x358] sm:$0xff]
    %v5708 = vld [vmem:[#allocation14 + $0x360] sm:$0xff]
    %v5709 = vld [vmem:[#allocation14 + $0x368] sm:$0xff]
    %v5710 = vld [vmem:[#allocation14 + $0x370] sm:$0xff]
    %v5711 = vld [vmem:[#allocation14 + $0x378] sm:$0xff]
    %v5712 = vld [vmem:[#allocation14 + $0x380] sm:$0xff]
    %v5713 = vld [vmem:[#allocation14 + $0x388] sm:$0xff]
    %v5714 = vld [vmem:[#allocation14 + $0x390] sm:$0xff]
    %v5715 = vld [vmem:[#allocation14 + $0x398] sm:$0xff]
    %v5716 = vld [vmem:[#allocation14 + $0x3a0] sm:$0xff]
    %v5717 = vld [vmem:[#allocation14 + $0x3a8] sm:$0xff]
    %v5718 = vld [vmem:[#allocation14 + $0x3b0] sm:$0xff]
    %v5719 = vld [vmem:[#allocation14 + $0x3b8] sm:$0xff]
    %v5720 = vld [vmem:[#allocation14 + $0x3c0] sm:$0xff]
    %v5721 = vld [vmem:[#allocation14 + $0x3c8] sm:$0xff]
    %v5722 = vld [vmem:[#allocation14 + $0x3d0] sm:$0xff]
    %v5723 = vld [vmem:[#allocation14 + $0x3d8] sm:$0xff]
    %v5724 = vld [vmem:[#allocation14 + $0x3e0] sm:$0xff]
    %v5725 = vld [vmem:[#allocation14 + $0x3e8] sm:$0xff]
    %v5726 = vld [vmem:[#allocation14 + $0x3f0] sm:$0xff]
    %v5727 = vld [vmem:[#allocation14 + $0x3f8] sm:$0xff]
    %v5728 = vld [vmem:[#allocation14 + $0x400] sm:$0xff]
    %v5729 = vld [vmem:[#allocation14 + $0x408] sm:$0xff]
    %v5730 = vld [vmem:[#allocation14 + $0x410] sm:$0xff]
    %v5731 = vld [vmem:[#allocation14 + $0x418] sm:$0xff]
    %v5732 = vld [vmem:[#allocation14 + $0x420] sm:$0xff]
    %v5733 = vld [vmem:[#allocation14 + $0x428] sm:$0xff]
    %v5734 = vld [vmem:[#allocation14 + $0x430] sm:$0xff]
    %v5735 = vld [vmem:[#allocation14 + $0x438] sm:$0xff]
    %v5736 = vld [vmem:[#allocation14 + $0x440] sm:$0xff]
    %v5737 = vld [vmem:[#allocation14 + $0x448] sm:$0xff]
    %v5738 = vld [vmem:[#allocation14 + $0x450] sm:$0xff]
    %v5739 = vld [vmem:[#allocation14 + $0x458] sm:$0xff]
    %v5740 = vld [vmem:[#allocation14 + $0x460] sm:$0xff]
    %v5741 = vld [vmem:[#allocation14 + $0x468] sm:$0xff]
    %v5742 = vld [vmem:[#allocation14 + $0x470] sm:$0xff]
    %v5743 = vld [vmem:[#allocation14 + $0x478] sm:$0xff]
    %v5744 = vld [vmem:[#allocation14 + $0x480] sm:$0xff]
    %v5745 = vld [vmem:[#allocation14 + $0x488] sm:$0xff]
    %v5746 = vld [vmem:[#allocation14 + $0x490] sm:$0xff]
    %v5747 = vld [vmem:[#allocation14 + $0x498] sm:$0xff]
    %v5748 = vld [vmem:[#allocation14 + $0x4a0] sm:$0xff]
    %v5749 = vld [vmem:[#allocation14 + $0x4a8] sm:$0xff]
    %v5750 = vld [vmem:[#allocation14 + $0x4b0] sm:$0xff]
    %v5751 = vld [vmem:[#allocation14 + $0x4b8] sm:$0xff]
    %v5752 = vld [vmem:[#allocation14 + $0x4c0] sm:$0xff]
    %v5753 = vld [vmem:[#allocation14 + $0x4c8] sm:$0xff]
    %v5754 = vld [vmem:[#allocation14 + $0x4d0] sm:$0xff]
    %v5755 = vld [vmem:[#allocation14 + $0x4d8] sm:$0xff]
    %v5756 = vld [vmem:[#allocation14 + $0x4e0] sm:$0xff]
    %v5757 = vld [vmem:[#allocation14 + $0x4e8] sm:$0xff]
    %v5758 = vld [vmem:[#allocation14 + $0x4f0] sm:$0xff]
    %v5759 = vld [vmem:[#allocation14 + $0x4f8] sm:$0xff]
    %v5760 = vld [vmem:[#allocation14 + $0x500] sm:$0xff]
    %v5761 = vld [vmem:[#allocation14 + $0x508] sm:$0xff]
    %v5762 = vld [vmem:[#allocation14 + $0x510] sm:$0xff]
    %v5763 = vld [vmem:[#allocation14 + $0x518] sm:$0xff]
    %v5764 = vld [vmem:[#allocation14 + $0x520] sm:$0xff]
    %v5765 = vld [vmem:[#allocation14 + $0x528] sm:$0xff]
    %v5766 = vld [vmem:[#allocation14 + $0x530] sm:$0xff]
    %v5767 = vld [vmem:[#allocation14 + $0x538] sm:$0xff]
    %v5768 = vld [vmem:[#allocation14 + $0x540] sm:$0xff]
    %v5769 = vld [vmem:[#allocation14 + $0x548] sm:$0xff]
    %v5770 = vld [vmem:[#allocation14 + $0x550] sm:$0xff]
    %v5771 = vld [vmem:[#allocation14 + $0x558] sm:$0xff]
    %v5772 = vld [vmem:[#allocation14 + $0x560] sm:$0xff]
    %v5773 = vld [vmem:[#allocation14 + $0x568] sm:$0xff]
    %v5774 = vld [vmem:[#allocation14 + $0x570] sm:$0xff]
    %v5775 = vld [vmem:[#allocation14 + $0x578] sm:$0xff]
    %v5776 = vld [vmem:[#allocation14 + $0x580] sm:$0xff]
    %v5777 = vld [vmem:[#allocation14 + $0x588] sm:$0xff]
    %v5778 = vld [vmem:[#allocation14 + $0x590] sm:$0xff]
    %v5779 = vld [vmem:[#allocation14 + $0x598] sm:$0xff]
    %v5780 = vld [vmem:[#allocation14 + $0x5a0] sm:$0xff]
    %v5781 = vld [vmem:[#allocation14 + $0x5a8] sm:$0xff]
    %v5782 = vld [vmem:[#allocation14 + $0x5b0] sm:$0xff]
    %v5783 = vld [vmem:[#allocation14 + $0x5b8] sm:$0xff]
    %v5784 = vld [vmem:[#allocation14 + $0x5c0] sm:$0xff]
    %v5785 = vld [vmem:[#allocation14 + $0x5c8] sm:$0xff]
    %v5786 = vld [vmem:[#allocation14 + $0x5d0] sm:$0xff]
    %v5787 = vld [vmem:[#allocation14 + $0x5d8] sm:$0xff]
    %v5788 = vld [vmem:[#allocation14 + $0x5e0] sm:$0xff]
    %v5789 = vld [vmem:[#allocation14 + $0x5e8] sm:$0xff]
    %v5790 = vld [vmem:[#allocation14 + $0x5f0] sm:$0xff]
    %v5791 = vld [vmem:[#allocation14 + $0x5f8] sm:$0xff]
    %v5792 = vld [vmem:[#allocation14 + $0x600] sm:$0xff]
    %v5793 = vld [vmem:[#allocation14 + $0x608] sm:$0xff]
    %v5794 = vld [vmem:[#allocation14 + $0x610] sm:$0xff]
    %v5795 = vld [vmem:[#allocation14 + $0x618] sm:$0xff]
    %v5796 = vld [vmem:[#allocation14 + $0x620] sm:$0xff]
    %v5797 = vld [vmem:[#allocation14 + $0x628] sm:$0xff]
    %v5798 = vld [vmem:[#allocation14 + $0x630] sm:$0xff]
    %v5799 = vld [vmem:[#allocation14 + $0x638] sm:$0xff]
    %v5800 = vld [vmem:[#allocation14 + $0x640] sm:$0xff]
    %v5801 = vld [vmem:[#allocation14 + $0x648] sm:$0xff]
    %v5802 = vld [vmem:[#allocation14 + $0x650] sm:$0xff]
    %v5803 = vld [vmem:[#allocation14 + $0x658] sm:$0xff]
    %v5804 = vld [vmem:[#allocation14 + $0x660] sm:$0xff]
    %v5805 = vld [vmem:[#allocation14 + $0x668] sm:$0xff]
    %v5806 = vld [vmem:[#allocation14 + $0x670] sm:$0xff]
    %v5807 = vld [vmem:[#allocation14 + $0x678] sm:$0xff]
    %v5808 = vld [vmem:[#allocation14 + $0x680] sm:$0xff]
    %v5809 = vld [vmem:[#allocation14 + $0x688] sm:$0xff]
    %v5810 = vld [vmem:[#allocation14 + $0x690] sm:$0xff]
    %v5811 = vld [vmem:[#allocation14 + $0x698] sm:$0xff]
    %v5812 = vld [vmem:[#allocation14 + $0x6a0] sm:$0xff]
    %v5813 = vld [vmem:[#allocation14 + $0x6a8] sm:$0xff]
    %v5814 = vld [vmem:[#allocation14 + $0x6b0] sm:$0xff]
    %v5815 = vld [vmem:[#allocation14 + $0x6b8] sm:$0xff]
    %v5816 = vld [vmem:[#allocation14 + $0x6c0] sm:$0xff]
    %v5817 = vld [vmem:[#allocation14 + $0x6c8] sm:$0xff]
    %v5818 = vld [vmem:[#allocation14 + $0x6d0] sm:$0xff]
    %v5819 = vld [vmem:[#allocation14 + $0x6d8] sm:$0xff]
    %v5820 = vld [vmem:[#allocation14 + $0x6e0] sm:$0xff]
    %v5821 = vld [vmem:[#allocation14 + $0x6e8] sm:$0xff]
    %v5822 = vld [vmem:[#allocation14 + $0x6f0] sm:$0xff]
    %v5823 = vld [vmem:[#allocation14 + $0x6f8] sm:$0xff]
    %v5824 = vld [vmem:[#allocation14 + $0x700] sm:$0xff]
    %v5825 = vld [vmem:[#allocation14 + $0x708] sm:$0xff]
    %v5826 = vld [vmem:[#allocation14 + $0x710] sm:$0xff]
    %v5827 = vld [vmem:[#allocation14 + $0x718] sm:$0xff]
    %v5828 = vld [vmem:[#allocation14 + $0x720] sm:$0xff]
    %v5829 = vld [vmem:[#allocation14 + $0x728] sm:$0xff]
    %v5830 = vld [vmem:[#allocation14 + $0x730] sm:$0xff]
    %v5831 = vld [vmem:[#allocation14 + $0x738] sm:$0xff]
    %v5832 = vld [vmem:[#allocation14 + $0x740] sm:$0xff]
    %v5833 = vld [vmem:[#allocation14 + $0x748] sm:$0xff]
    %v5834 = vld [vmem:[#allocation14 + $0x750] sm:$0xff]
    %v5835 = vld [vmem:[#allocation14 + $0x758] sm:$0xff]
    %v5836 = vld [vmem:[#allocation14 + $0x760] sm:$0xff]
    %v5837 = vld [vmem:[#allocation14 + $0x768] sm:$0xff]
    %v5838 = vld [vmem:[#allocation14 + $0x770] sm:$0xff]
    %v5839 = vld [vmem:[#allocation14 + $0x778] sm:$0xff]
    %v5840 = vld [vmem:[#allocation14 + $0x780] sm:$0xff]
    %v5841 = vld [vmem:[#allocation14 + $0x788] sm:$0xff]
    %v5842 = vld [vmem:[#allocation14 + $0x790] sm:$0xff]
    %v5843 = vld [vmem:[#allocation14 + $0x798] sm:$0xff]
    %v5844 = vld [vmem:[#allocation14 + $0x7a0] sm:$0xff]
    %v5845 = vld [vmem:[#allocation14 + $0x7a8] sm:$0xff]
    %v5846 = vld [vmem:[#allocation14 + $0x7b0] sm:$0xff]
    %v5847 = vld [vmem:[#allocation14 + $0x7b8] sm:$0xff]
    %v5848 = vld [vmem:[#allocation14 + $0x7c0] sm:$0xff]
    %v5849 = vld [vmem:[#allocation14 + $0x7c8] sm:$0xff]
    %v5850 = vld [vmem:[#allocation14 + $0x7d0] sm:$0xff]
    %v5851 = vld [vmem:[#allocation14 + $0x7d8] sm:$0xff]
    %v5852 = vld [vmem:[#allocation14 + $0x7e0] sm:$0xff]
    %v5853 = vld [vmem:[#allocation14 + $0x7e8] sm:$0xff]
    %v5854 = vld [vmem:[#allocation14 + $0x7f0] sm:$0xff]
    %v5855 = vld [vmem:[#allocation14 + $0x7f8] sm:$0xff]
    %v5856 = vld [vmem:[#allocation14 + $0x800] sm:$0xff]
    %v5857 = vld [vmem:[#allocation14 + $0x808] sm:$0xff]
    %v5858 = vld [vmem:[#allocation14 + $0x810] sm:$0xff]
    %v5859 = vld [vmem:[#allocation14 + $0x818] sm:$0xff]
    %v5860 = vld [vmem:[#allocation14 + $0x820] sm:$0xff]
    %v5861 = vld [vmem:[#allocation14 + $0x828] sm:$0xff]
    %v5862 = vld [vmem:[#allocation14 + $0x830] sm:$0xff]
    %v5863 = vld [vmem:[#allocation14 + $0x838] sm:$0xff]
    %v5864 = vld [vmem:[#allocation14 + $0x840] sm:$0xff]
    %v5865 = vld [vmem:[#allocation14 + $0x848] sm:$0xff]
    %v5866 = vld [vmem:[#allocation14 + $0x850] sm:$0xff]
    %v5867 = vld [vmem:[#allocation14 + $0x858] sm:$0xff]
    %v5868 = vld [vmem:[#allocation14 + $0x860] sm:$0xff]
    %v5869 = vld [vmem:[#allocation14 + $0x868] sm:$0xff]
    %v5870 = vld [vmem:[#allocation14 + $0x870] sm:$0xff]
    %v5871 = vld [vmem:[#allocation14 + $0x878] sm:$0xff]
    %v5872 = vld [vmem:[#allocation14 + $0x880] sm:$0xff]
    %v5873 = vld [vmem:[#allocation14 + $0x888] sm:$0xff]
    %v5874 = vld [vmem:[#allocation14 + $0x890] sm:$0xff]
    %v5875 = vld [vmem:[#allocation14 + $0x898] sm:$0xff]
    %v5876 = vld [vmem:[#allocation14 + $0x8a0] sm:$0xff]
    %v5877 = vld [vmem:[#allocation14 + $0x8a8] sm:$0xff]
    %v5878 = vld [vmem:[#allocation14 + $0x8b0] sm:$0xff]
    %v5879 = vld [vmem:[#allocation14 + $0x8b8] sm:$0xff]
    %v5880 = vld [vmem:[#allocation14 + $0x8c0] sm:$0xff]
    %v5881 = vld [vmem:[#allocation14 + $0x8c8] sm:$0xff]
    %v5882 = vld [vmem:[#allocation14 + $0x8d0] sm:$0xff]
    %v5883 = vld [vmem:[#allocation14 + $0x8d8] sm:$0xff]
    %v5884 = vld [vmem:[#allocation14 + $0x8e0] sm:$0xff]
    %v5885 = vld [vmem:[#allocation14 + $0x8e8] sm:$0xff]
    %v5886 = vld [vmem:[#allocation14 + $0x8f0] sm:$0xff]
    %v5887 = vld [vmem:[#allocation14 + $0x8f8] sm:$0xff]
    %v5888 = vld [vmem:[#allocation14 + $0x900] sm:$0xff]
    %v5889 = vld [vmem:[#allocation14 + $0x908] sm:$0xff]
    %v5890 = vld [vmem:[#allocation14 + $0x910] sm:$0xff]
    %v5891 = vld [vmem:[#allocation14 + $0x918] sm:$0xff]
    %v5892 = vld [vmem:[#allocation14 + $0x920] sm:$0xff]
    %v5893 = vld [vmem:[#allocation14 + $0x928] sm:$0xff]
    %v5894 = vld [vmem:[#allocation14 + $0x930] sm:$0xff]
    %v5895 = vld [vmem:[#allocation14 + $0x938] sm:$0xff]
    %v5896 = vld [vmem:[#allocation14 + $0x940] sm:$0xff]
    %v5897 = vld [vmem:[#allocation14 + $0x948] sm:$0xff]
    %v5898 = vld [vmem:[#allocation14 + $0x950] sm:$0xff]
    %v5899 = vld [vmem:[#allocation14 + $0x958] sm:$0xff]
    %v5900 = vld [vmem:[#allocation14 + $0x960] sm:$0xff]
    %v5901 = vld [vmem:[#allocation14 + $0x968] sm:$0xff]
    %v5902 = vld [vmem:[#allocation14 + $0x970] sm:$0xff]
    %v5903 = vld [vmem:[#allocation14 + $0x978] sm:$0xff]
    %v5904 = vld [vmem:[#allocation14 + $0x980] sm:$0xff]
    %v5905 = vld [vmem:[#allocation14 + $0x988] sm:$0xff]
    %v5906 = vld [vmem:[#allocation14 + $0x990] sm:$0xff]
    %v5907 = vld [vmem:[#allocation14 + $0x998] sm:$0xff]
    %v5908 = vld [vmem:[#allocation14 + $0x9a0] sm:$0xff]
    %v5909 = vld [vmem:[#allocation14 + $0x9a8] sm:$0xff]
    %v5910 = vld [vmem:[#allocation14 + $0x9b0] sm:$0xff]
    %v5911 = vld [vmem:[#allocation14 + $0x9b8] sm:$0xff]
    %v5912 = vld [vmem:[#allocation14 + $0x9c0] sm:$0xff]
    %v5913 = vld [vmem:[#allocation14 + $0x9c8] sm:$0xff]
    %v5914 = vld [vmem:[#allocation14 + $0x9d0] sm:$0xff]
    %v5915 = vld [vmem:[#allocation14 + $0x9d8] sm:$0xff]
    %v5916 = vld [vmem:[#allocation14 + $0x9e0] sm:$0xff]
    %v5917 = vld [vmem:[#allocation14 + $0x9e8] sm:$0xff]
    %v5918 = vld [vmem:[#allocation14 + $0x9f0] sm:$0xff]
    %v5919 = vld [vmem:[#allocation14 + $0x9f8] sm:$0xff]
    %v5920 = vld [vmem:[#allocation14 + $0xa00] sm:$0xff]
    %v5921 = vld [vmem:[#allocation14 + $0xa08] sm:$0xff]
    %v5922 = vld [vmem:[#allocation14 + $0xa10] sm:$0xff]
    %v5923 = vld [vmem:[#allocation14 + $0xa18] sm:$0xff]
    %v5924 = vld [vmem:[#allocation14 + $0xa20] sm:$0xff]
    %v5925 = vld [vmem:[#allocation14 + $0xa28] sm:$0xff]
    %v5926 = vld [vmem:[#allocation14 + $0xa30] sm:$0xff]
    %v5927 = vld [vmem:[#allocation14 + $0xa38] sm:$0xff]
    %v5928 = vld [vmem:[#allocation14 + $0xa40] sm:$0xff]
    %v5929 = vld [vmem:[#allocation14 + $0xa48] sm:$0xff]
    %v5930 = vld [vmem:[#allocation14 + $0xa50] sm:$0xff]
    %v5931 = vld [vmem:[#allocation14 + $0xa58] sm:$0xff]
    %v5932 = vld [vmem:[#allocation14 + $0xa60] sm:$0xff]
    %v5933 = vld [vmem:[#allocation14 + $0xa68] sm:$0xff]
    %v5934 = vld [vmem:[#allocation14 + $0xa70] sm:$0xff]
    %v5935 = vld [vmem:[#allocation14 + $0xa78] sm:$0xff]
    %v5936 = vld [vmem:[#allocation14 + $0xa80] sm:$0xff]
    %v5937 = vld [vmem:[#allocation14 + $0xa88] sm:$0xff]
    %v5938 = vld [vmem:[#allocation14 + $0xa90] sm:$0xff]
    %v5939 = vld [vmem:[#allocation14 + $0xa98] sm:$0xff]
    %v5940 = vld [vmem:[#allocation14 + $0xaa0] sm:$0xff]
    %v5941 = vld [vmem:[#allocation14 + $0xaa8] sm:$0xff]
    %v5942 = vld [vmem:[#allocation14 + $0xab0] sm:$0xff]
    %v5943 = vld [vmem:[#allocation14 + $0xab8] sm:$0xff]
    %v5944 = vld [vmem:[#allocation14 + $0xac0] sm:$0xff]
    %v5945 = vld [vmem:[#allocation14 + $0xac8] sm:$0xff]
    %v5946 = vld [vmem:[#allocation14 + $0xad0] sm:$0xff]
    %v5947 = vld [vmem:[#allocation14 + $0xad8] sm:$0xff]
    %v5948 = vld [vmem:[#allocation14 + $0xae0] sm:$0xff]
    %v5949 = vld [vmem:[#allocation14 + $0xae8] sm:$0xff]
    %v5950 = vld [vmem:[#allocation14 + $0xaf0] sm:$0xff]
    %v5951 = vld [vmem:[#allocation14 + $0xaf8] sm:$0xff]
    %v5952 = vld [vmem:[#allocation14 + $0xb00] sm:$0xff]
    %v5953 = vld [vmem:[#allocation14 + $0xb08] sm:$0xff]
    %v5954 = vld [vmem:[#allocation14 + $0xb10] sm:$0xff]
    %v5955 = vld [vmem:[#allocation14 + $0xb18] sm:$0xff]
    %v5956 = vld [vmem:[#allocation14 + $0xb20] sm:$0xff]
    %v5957 = vld [vmem:[#allocation14 + $0xb28] sm:$0xff]
    %v5958 = vld [vmem:[#allocation14 + $0xb30] sm:$0xff]
    %v5959 = vld [vmem:[#allocation14 + $0xb38] sm:$0xff]
    %v5960 = vld [vmem:[#allocation14 + $0xb40] sm:$0xff]
    %v5961 = vld [vmem:[#allocation14 + $0xb48] sm:$0xff]
    %v5962 = vld [vmem:[#allocation14 + $0xb50] sm:$0xff]
    %v5963 = vld [vmem:[#allocation14 + $0xb58] sm:$0xff]
    %v5964 = vld [vmem:[#allocation14 + $0xb60] sm:$0xff]
    %v5965 = vld [vmem:[#allocation14 + $0xb68] sm:$0xff]
    %v5966 = vld [vmem:[#allocation14 + $0xb70] sm:$0xff]
    %v5967 = vld [vmem:[#allocation14 + $0xb78] sm:$0xff]
    %v5968 = vld [vmem:[#allocation14 + $0xb80] sm:$0xff]
    %v5969 = vld [vmem:[#allocation14 + $0xb88] sm:$0xff]
    %v5970 = vld [vmem:[#allocation14 + $0xb90] sm:$0xff]
    %v5971 = vld [vmem:[#allocation14 + $0xb98] sm:$0xff]
    %v5972 = vld [vmem:[#allocation14 + $0xba0] sm:$0xff]
    %v5973 = vld [vmem:[#allocation14 + $0xba8] sm:$0xff]
    %v5974 = vld [vmem:[#allocation14 + $0xbb0] sm:$0xff]
    %v5975 = vld [vmem:[#allocation14 + $0xbb8] sm:$0xff]
    %v5976 = vld [vmem:[#allocation14 + $0xbc0] sm:$0xff]
    %v5977 = vld [vmem:[#allocation14 + $0xbc8] sm:$0xff]
    %v5978 = vld [vmem:[#allocation14 + $0xbd0] sm:$0xff]
    %v5979 = vld [vmem:[#allocation14 + $0xbd8] sm:$0xff]
    %v5980 = vld [vmem:[#allocation14 + $0xbe0] sm:$0xff]
    %v5981 = vld [vmem:[#allocation14 + $0xbe8] sm:$0xff]
    %v5982 = vld [vmem:[#allocation14 + $0xbf0] sm:$0xff]
    %v5983 = vld [vmem:[#allocation14 + $0xbf8] sm:$0xff]
    %v5984 = vld [vmem:[#allocation14 + $0xc00] sm:$0xff]
    %v5985 = vld [vmem:[#allocation14 + $0xc08] sm:$0xff]
    %v5986 = vld [vmem:[#allocation14 + $0xc10] sm:$0xff]
    %v5987 = vld [vmem:[#allocation14 + $0xc18] sm:$0xff]
    %v5988 = vld [vmem:[#allocation14 + $0xc20] sm:$0xff]
    %v5989 = vld [vmem:[#allocation14 + $0xc28] sm:$0xff]
    %v5990 = vld [vmem:[#allocation14 + $0xc30] sm:$0xff]
    %v5991 = vld [vmem:[#allocation14 + $0xc38] sm:$0xff]
    %v5992 = vld [vmem:[#allocation14 + $0xc40] sm:$0xff]
    %v5993 = vld [vmem:[#allocation14 + $0xc48] sm:$0xff]
    %v5994 = vld [vmem:[#allocation14 + $0xc50] sm:$0xff]
    %v5995 = vld [vmem:[#allocation14 + $0xc58] sm:$0xff]
    %v5996 = vld [vmem:[#allocation14 + $0xc60] sm:$0xff]
    %v5997 = vld [vmem:[#allocation14 + $0xc68] sm:$0xff]
    %v5998 = vld [vmem:[#allocation14 + $0xc70] sm:$0xff]
    %v5999 = vld [vmem:[#allocation14 + $0xc78] sm:$0xff]
    %v6000 = vld [vmem:[#allocation14 + $0xc80] sm:$0xff]
    %v6001 = vld [vmem:[#allocation14 + $0xc88] sm:$0xff]
    %v6002 = vld [vmem:[#allocation14 + $0xc90] sm:$0xff]
    %v6003 = vld [vmem:[#allocation14 + $0xc98] sm:$0xff]
    %v6004 = vld [vmem:[#allocation14 + $0xca0] sm:$0xff]
    %v6005 = vld [vmem:[#allocation14 + $0xca8] sm:$0xff]
    %v6006 = vld [vmem:[#allocation14 + $0xcb0] sm:$0xff]
    %v6007 = vld [vmem:[#allocation14 + $0xcb8] sm:$0xff]
    %v6008 = vld [vmem:[#allocation14 + $0xcc0] sm:$0xff]
    %v6009 = vld [vmem:[#allocation14 + $0xcc8] sm:$0xff]
    %v6010 = vld [vmem:[#allocation14 + $0xcd0] sm:$0xff]
    %v6011 = vld [vmem:[#allocation14 + $0xcd8] sm:$0xff]
    %v6012 = vld [vmem:[#allocation14 + $0xce0] sm:$0xff]
    %v6013 = vld [vmem:[#allocation14 + $0xce8] sm:$0xff]
    %v6014 = vld [vmem:[#allocation14 + $0xcf0] sm:$0xff]
    %v6015 = vld [vmem:[#allocation14 + $0xcf8] sm:$0xff]
    %v6016 = vld [vmem:[#allocation14 + $0xd00] sm:$0xff]
    %v6017 = vld [vmem:[#allocation14 + $0xd08] sm:$0xff]
    %v6018 = vld [vmem:[#allocation14 + $0xd10] sm:$0xff]
    %v6019 = vld [vmem:[#allocation14 + $0xd18] sm:$0xff]
    %v6020 = vld [vmem:[#allocation14 + $0xd20] sm:$0xff]
    %v6021 = vld [vmem:[#allocation14 + $0xd28] sm:$0xff]
    %v6022 = vld [vmem:[#allocation14 + $0xd30] sm:$0xff]
    %v6023 = vld [vmem:[#allocation14 + $0xd38] sm:$0xff]
    %v6024 = vld [vmem:[#allocation14 + $0xd40] sm:$0xff]
    %v6025 = vld [vmem:[#allocation14 + $0xd48] sm:$0xff]
    %v6026 = vld [vmem:[#allocation14 + $0xd50] sm:$0xff]
    %v6027 = vld [vmem:[#allocation14 + $0xd58] sm:$0xff]
    %v6028 = vld [vmem:[#allocation14 + $0xd60] sm:$0xff]
    %v6029 = vld [vmem:[#allocation14 + $0xd68] sm:$0xff]
    %v6030 = vld [vmem:[#allocation14 + $0xd70] sm:$0xff]
    %v6031 = vld [vmem:[#allocation14 + $0xd78] sm:$0xff]
    %v6032 = vld [vmem:[#allocation14 + $0xd80] sm:$0xff]
    %v6033 = vld [vmem:[#allocation14 + $0xd88] sm:$0xff]
    %v6034 = vld [vmem:[#allocation14 + $0xd90] sm:$0xff]
    %v6035 = vld [vmem:[#allocation14 + $0xd98] sm:$0xff]
    %v6036 = vld [vmem:[#allocation14 + $0xda0] sm:$0xff]
    %v6037 = vld [vmem:[#allocation14 + $0xda8] sm:$0xff]
    %v6038 = vld [vmem:[#allocation14 + $0xdb0] sm:$0xff]
    %v6039 = vld [vmem:[#allocation14 + $0xdb8] sm:$0xff]
    %v6040 = vld [vmem:[#allocation14 + $0xdc0] sm:$0xff]
    %v6041 = vld [vmem:[#allocation14 + $0xdc8] sm:$0xff]
    %v6042 = vld [vmem:[#allocation14 + $0xdd0] sm:$0xff]
    %v6043 = vld [vmem:[#allocation14 + $0xdd8] sm:$0xff]
    %v6044 = vld [vmem:[#allocation14 + $0xde0] sm:$0xff]
    %v6045 = vld [vmem:[#allocation14 + $0xde8] sm:$0xff]
    %v6046 = vld [vmem:[#allocation14 + $0xdf0] sm:$0xff]
    %v6047 = vld [vmem:[#allocation14 + $0xdf8] sm:$0xff]
    %v6048 = vld [vmem:[#allocation14 + $0xe00] sm:$0xff]
    %v6049 = vld [vmem:[#allocation14 + $0xe08] sm:$0xff]
    %v6050 = vld [vmem:[#allocation14 + $0xe10] sm:$0xff]
    %v6051 = vld [vmem:[#allocation14 + $0xe18] sm:$0xff]
    %v6052 = vld [vmem:[#allocation14 + $0xe20] sm:$0xff]
    %v6053 = vld [vmem:[#allocation14 + $0xe28] sm:$0xff]
    %v6054 = vld [vmem:[#allocation14 + $0xe30] sm:$0xff]
    %v6055 = vld [vmem:[#allocation14 + $0xe38] sm:$0xff]
    %v6056 = vld [vmem:[#allocation14 + $0xe40] sm:$0xff]
    %v6057 = vld [vmem:[#allocation14 + $0xe48] sm:$0xff]
    %v6058 = vld [vmem:[#allocation14 + $0xe50] sm:$0xff]
    %v6059 = vld [vmem:[#allocation14 + $0xe58] sm:$0xff]
    %v6060 = vld [vmem:[#allocation14 + $0xe60] sm:$0xff]
    %v6061 = vld [vmem:[#allocation14 + $0xe68] sm:$0xff]
    %v6062 = vld [vmem:[#allocation14 + $0xe70] sm:$0xff]
    %v6063 = vld [vmem:[#allocation14 + $0xe78] sm:$0xff]
    %v6064 = vld [vmem:[#allocation14 + $0xe80] sm:$0xff]
    %v6065 = vld [vmem:[#allocation14 + $0xe88] sm:$0xff]
    %v6066 = vld [vmem:[#allocation14 + $0xe90] sm:$0xff]
    %v6067 = vld [vmem:[#allocation14 + $0xe98] sm:$0xff]
    %v6068 = vld [vmem:[#allocation14 + $0xea0] sm:$0xff]
    %v6069 = vld [vmem:[#allocation14 + $0xea8] sm:$0xff]
    %v6070 = vld [vmem:[#allocation14 + $0xeb0] sm:$0xff]
    %v6071 = vld [vmem:[#allocation14 + $0xeb8] sm:$0xff]
    %v6072 = vld [vmem:[#allocation14 + $0xec0] sm:$0xff]
    %v6073 = vld [vmem:[#allocation14 + $0xec8] sm:$0xff]
    %v6074 = vld [vmem:[#allocation14 + $0xed0] sm:$0xff]
    %v6075 = vld [vmem:[#allocation14 + $0xed8] sm:$0xff]
    %v6076 = vld [vmem:[#allocation14 + $0xee0] sm:$0xff]
    %v6077 = vld [vmem:[#allocation14 + $0xee8] sm:$0xff]
    %v6078 = vld [vmem:[#allocation14 + $0xef0] sm:$0xff]
    %v6079 = vld [vmem:[#allocation14 + $0xef8] sm:$0xff]
    %v6080 = vld [vmem:[#allocation14 + $0xf00] sm:$0xff]
    %v6081 = vld [vmem:[#allocation14 + $0xf08] sm:$0xff]
    %v6082 = vld [vmem:[#allocation14 + $0xf10] sm:$0xff]
    %v6083 = vld [vmem:[#allocation14 + $0xf18] sm:$0xff]
    %v6084 = vld [vmem:[#allocation14 + $0xf20] sm:$0xff]
    %v6085 = vld [vmem:[#allocation14 + $0xf28] sm:$0xff]
    %v6086 = vld [vmem:[#allocation14 + $0xf30] sm:$0xff]
    %v6087 = vld [vmem:[#allocation14 + $0xf38] sm:$0xff]
    %v6088 = vld [vmem:[#allocation14 + $0xf40] sm:$0xff]
    %v6089 = vld [vmem:[#allocation14 + $0xf48] sm:$0xff]
    %v6090 = vld [vmem:[#allocation14 + $0xf50] sm:$0xff]
    %v6091 = vld [vmem:[#allocation14 + $0xf58] sm:$0xff]
    %v6092 = vld [vmem:[#allocation14 + $0xf60] sm:$0xff]
    %v6093 = vld [vmem:[#allocation14 + $0xf68] sm:$0xff]
    %v6094 = vld [vmem:[#allocation14 + $0xf70] sm:$0xff]
    %v6095 = vld [vmem:[#allocation14 + $0xf78] sm:$0xff]
    %v6096 = vld [vmem:[#allocation14 + $0xf80] sm:$0xff]
    %v6097 = vld [vmem:[#allocation14 + $0xf88] sm:$0xff]
    %v6098 = vld [vmem:[#allocation14 + $0xf90] sm:$0xff]
    %v6099 = vld [vmem:[#allocation14 + $0xf98] sm:$0xff]
    %v6100 = vld [vmem:[#allocation14 + $0xfa0] sm:$0xff]
    %v6101 = vld [vmem:[#allocation14 + $0xfa8] sm:$0xff]
    %v6102 = vld [vmem:[#allocation14 + $0xfb0] sm:$0xff]
    %v6103 = vld [vmem:[#allocation14 + $0xfb8] sm:$0xff]
    %v6104 = vld [vmem:[#allocation14 + $0xfc0] sm:$0xff]
    %v6105 = vld [vmem:[#allocation14 + $0xfc8] sm:$0xff]
    %v6106 = vld [vmem:[#allocation14 + $0xfd0] sm:$0xff]
    %v6107 = vld [vmem:[#allocation14 + $0xfd8] sm:$0xff]
    %v6108 = vld [vmem:[#allocation14 + $0xfe0] sm:$0xff]
    %v6109 = vld [vmem:[#allocation14 + $0xfe8] sm:$0xff]
    %v6110 = vld [vmem:[#allocation14 + $0xff0] sm:$0xff]
    %v6111 = vld [vmem:[#allocation14 + $0xff8] sm:$0xff]
    %v6112 = vld [vmem:[#allocation14 + $0x1000] sm:$0xff]
    %v6113 = vld [vmem:[#allocation14 + $0x1008] sm:$0xff]
    %v6114 = vld [vmem:[#allocation14 + $0x1010] sm:$0xff]
    %v6115 = vld [vmem:[#allocation14 + $0x1018] sm:$0xff]
    %v6116 = vld [vmem:[#allocation14 + $0x1020] sm:$0xff]
    %v6117 = vld [vmem:[#allocation14 + $0x1028] sm:$0xff]
    %v6118 = vld [vmem:[#allocation14 + $0x1030] sm:$0xff]
    %v6119 = vld [vmem:[#allocation14 + $0x1038] sm:$0xff]
    %v6120 = vld [vmem:[#allocation14 + $0x1040] sm:$0xff]
    %v6121 = vld [vmem:[#allocation14 + $0x1048] sm:$0xff]
    %v6122 = vld [vmem:[#allocation14 + $0x1050] sm:$0xff]
    %v6123 = vld [vmem:[#allocation14 + $0x1058] sm:$0xff]
    %v6124 = vld [vmem:[#allocation14 + $0x1060] sm:$0xff]
    %v6125 = vld [vmem:[#allocation14 + $0x1068] sm:$0xff]
    %v6126 = vld [vmem:[#allocation14 + $0x1070] sm:$0xff]
    %v6127 = vld [vmem:[#allocation14 + $0x1078] sm:$0xff]
    %v6128 = vld [vmem:[#allocation14 + $0x1080] sm:$0xff]
    %v6129 = vld [vmem:[#allocation14 + $0x1088] sm:$0xff]
    %v6130 = vld [vmem:[#allocation14 + $0x1090] sm:$0xff]
    %v6131 = vld [vmem:[#allocation14 + $0x1098] sm:$0xff]
    %v6132 = vld [vmem:[#allocation14 + $0x10a0] sm:$0xff]
    %v6133 = vld [vmem:[#allocation14 + $0x10a8] sm:$0xff]
    %v6134 = vld [vmem:[#allocation14 + $0x10b0] sm:$0xff]
    %v6135 = vld [vmem:[#allocation14 + $0x10b8] sm:$0xff]
    %v6136 = vld [vmem:[#allocation14 + $0x10c0] sm:$0xff]
    %v6137 = vld [vmem:[#allocation14 + $0x10c8] sm:$0xff]
    %v6138 = vld [vmem:[#allocation14 + $0x10d0] sm:$0xff]
    %v6139 = vld [vmem:[#allocation14 + $0x10d8] sm:$0xff]
    %v6140 = vld [vmem:[#allocation14 + $0x10e0] sm:$0xff]
    %v6141 = vld [vmem:[#allocation14 + $0x10e8] sm:$0xff]
    %v6142 = vld [vmem:[#allocation14 + $0x10f0] sm:$0xff]
    %v6143 = vld [vmem:[#allocation14 + $0x10f8] sm:$0xff]
    %v6144 = vld [vmem:[#allocation14 + $0x1100] sm:$0xff]
    %v6145 = vld [vmem:[#allocation14 + $0x1108] sm:$0xff]
    %v6146 = vld [vmem:[#allocation14 + $0x1110] sm:$0xff]
    %v6147 = vld [vmem:[#allocation14 + $0x1118] sm:$0xff]
    %v6148 = vld [vmem:[#allocation14 + $0x1120] sm:$0xff]
    %v6149 = vld [vmem:[#allocation14 + $0x1128] sm:$0xff]
    %v6150 = vld [vmem:[#allocation14 + $0x1130] sm:$0xff]
    %v6151 = vld [vmem:[#allocation14 + $0x1138] sm:$0xff]
    %v6152 = vld [vmem:[#allocation14 + $0x1140] sm:$0xff]
    %v6153 = vld [vmem:[#allocation14 + $0x1148] sm:$0xff]
    %v6154 = vld [vmem:[#allocation14 + $0x1150] sm:$0xff]
    %v6155 = vld [vmem:[#allocation14 + $0x1158] sm:$0xff]
    %v6156 = vld [vmem:[#allocation14 + $0x1160] sm:$0xff]
    %v6157 = vld [vmem:[#allocation14 + $0x1168] sm:$0xff]
    %v6158 = vld [vmem:[#allocation14 + $0x1170] sm:$0xff]
    %v6159 = vld [vmem:[#allocation14 + $0x1178] sm:$0xff]
    %v6160 = vld [vmem:[#allocation14 + $0x1180] sm:$0xff]
    %v6161 = vld [vmem:[#allocation14 + $0x1188] sm:$0xff]
    %v6162 = vld [vmem:[#allocation14 + $0x1190] sm:$0xff]
    %v6163 = vld [vmem:[#allocation14 + $0x1198] sm:$0xff]
    %v6164 = vld [vmem:[#allocation14 + $0x11a0] sm:$0xff]
    %v6165 = vld [vmem:[#allocation14 + $0x11a8] sm:$0xff]
    %v6166 = vld [vmem:[#allocation14 + $0x11b0] sm:$0xff]
    %v6167 = vld [vmem:[#allocation14 + $0x11b8] sm:$0xff]
    %v6168 = vld [vmem:[#allocation14 + $0x11c0] sm:$0xff]
    %v6169 = vld [vmem:[#allocation14 + $0x11c8] sm:$0xff]
    %v6170 = vld [vmem:[#allocation14 + $0x11d0] sm:$0xff]
    %v6171 = vld [vmem:[#allocation14 + $0x11d8] sm:$0xff]
    %v6172 = vld [vmem:[#allocation14 + $0x11e0] sm:$0xff]
    %v6173 = vld [vmem:[#allocation14 + $0x11e8] sm:$0xff]
    %v6174 = vld [vmem:[#allocation14 + $0x11f0] sm:$0xff]
    %v6175 = vld [vmem:[#allocation14 + $0x11f8] sm:$0xff]
    %v6176 = vld [vmem:[#allocation16] sm:$0xff]
    %v6177 = vld [vmem:[#allocation16 + $0x8] sm:$0xf]
    %v6180 = vlaneseq
    %v6181 = vshrl.u32 %v6180, 7
    %v6182 = vsub.s32 0, %v6181
    %v6183 = vrot.slane %v6176, %v6182
    %v6184 = vlaneseq
    %v6185 = vshrl.u32 %v6184, 7
    %v6186 = vsub.s32 1, %v6185
    %v6187 = vrot.slane %v6176, %v6186
    %v6188 = vlaneseq
    %v6189 = vshrl.u32 %v6188, 7
    %v6190 = vsub.s32 2, %v6189
    %v6191 = vrot.slane %v6176, %v6190
    %v6192 = vlaneseq
    %v6193 = vshrl.u32 %v6192, 7
    %v6194 = vsub.s32 3, %v6193
    %v6195 = vrot.slane %v6176, %v6194
    %v6196 = vlaneseq
    %v6197 = vshrl.u32 %v6196, 7
    %v6198 = vsub.s32 4, %v6197
    %v6199 = vrot.slane %v6176, %v6198
    %v6200 = vlaneseq
    %v6201 = vshrl.u32 %v6200, 7
    %v6202 = vsub.s32 5, %v6201
    %v6203 = vrot.slane %v6176, %v6202
    %v6204 = vlaneseq
    %v6205 = vshrl.u32 %v6204, 7
    %v6206 = vsub.s32 6, %v6205
    %v6207 = vrot.slane %v6176, %v6206
    %v6208 = vlaneseq
    %v6209 = vshrl.u32 %v6208, 7
    %v6210 = vsub.s32 7, %v6209
    %v6211 = vrot.slane %v6176, %v6210
    %v6212 = vlaneseq
    %v6213 = vshrl.u32 %v6212, 7
    %v6214 = vsub.s32 0, %v6213
    %v6215 = vrot.slane %v6177, %v6214
    %v6216 = vlaneseq
    %v6217 = vshrl.u32 %v6216, 7
    %v6218 = vsub.s32 1, %v6217
    %v6219 = vrot.slane %v6177, %v6218
    %v6220 = vlaneseq
    %v6221 = vshrl.u32 %v6220, 7
    %v6222 = vsub.s32 2, %v6221
    %v6223 = vrot.slane %v6177, %v6222
    %v6224 = vlaneseq
    %v6225 = vshrl.u32 %v6224, 7
    %v6226 = vsub.s32 3, %v6225
    %v6227 = vrot.slane %v6177, %v6226
    %v6816 = vunpack.c.l.b16 %v5600
    %v6817 = vunpack.c.h.b16 %v5600
    %v6818 = vunpack.c.l.b16 %v5601
    %v6819 = vunpack.c.h.b16 %v5601
    %v6820 = vunpack.c.l.b16 %v5602
    %v6821 = vunpack.c.h.b16 %v5602
    %v6822 = vunpack.c.l.b16 %v5603
    %v6823 = vunpack.c.h.b16 %v5603
    %v6824 = vunpack.c.l.b16 %v5604
    %v6825 = vunpack.c.h.b16 %v5604
    %v6826 = vunpack.c.l.b16 %v5605
    %v6827 = vunpack.c.h.b16 %v5605
    %v6828 = vunpack.c.l.b16 %v5606
    %v6829 = vunpack.c.h.b16 %v5606
    %v6830 = vunpack.c.l.b16 %v5607
    %v6831 = vunpack.c.h.b16 %v5607
    %v6832 = vunpack.c.l.b16 %v5608
    %v6833 = vunpack.c.h.b16 %v5608
    %v6834 = vunpack.c.l.b16 %v5609
    %v6835 = vunpack.c.h.b16 %v5609
    %v6836 = vunpack.c.l.b16 %v5610
    %v6837 = vunpack.c.h.b16 %v5610
    %v6838 = vunpack.c.l.b16 %v5611
    %v6839 = vunpack.c.h.b16 %v5611
    %v6840 = vunpack.c.l.b16 %v5612
    %v6841 = vunpack.c.h.b16 %v5612
    %v6842 = vunpack.c.l.b16 %v5613
    %v6843 = vunpack.c.h.b16 %v5613
    %v6844 = vunpack.c.l.b16 %v5614
    %v6845 = vunpack.c.h.b16 %v5614
    %v6846 = vunpack.c.l.b16 %v5615
    %v6847 = vunpack.c.h.b16 %v5615
    %v6848 = vunpack.c.l.b16 %v5616
    %v6849 = vunpack.c.h.b16 %v5616
    %v6850 = vunpack.c.l.b16 %v5617
    %v6851 = vunpack.c.h.b16 %v5617
    %v6852 = vunpack.c.l.b16 %v5618
    %v6853 = vunpack.c.h.b16 %v5618
    %v6854 = vunpack.c.l.b16 %v5619
    %v6855 = vunpack.c.h.b16 %v5619
    %v6856 = vunpack.c.l.b16 %v5620
    %v6857 = vunpack.c.h.b16 %v5620
    %v6858 = vunpack.c.l.b16 %v5621
    %v6859 = vunpack.c.h.b16 %v5621
    %v6860 = vunpack.c.l.b16 %v5622
    %v6861 = vunpack.c.h.b16 %v5622
    %v6862 = vunpack.c.l.b16 %v5623
    %v6863 = vunpack.c.h.b16 %v5623
    %v6864 = vunpack.c.l.b16 %v5624
    %v6865 = vunpack.c.h.b16 %v5624
    %v6866 = vunpack.c.l.b16 %v5625
    %v6867 = vunpack.c.h.b16 %v5625
    %v6868 = vunpack.c.l.b16 %v5626
    %v6869 = vunpack.c.h.b16 %v5626
    %v6870 = vunpack.c.l.b16 %v5627
    %v6871 = vunpack.c.h.b16 %v5627
    %v6872 = vunpack.c.l.b16 %v5628
    %v6873 = vunpack.c.h.b16 %v5628
    %v6874 = vunpack.c.l.b16 %v5629
    %v6875 = vunpack.c.h.b16 %v5629
    %v6876 = vunpack.c.l.b16 %v5630
    %v6877 = vunpack.c.h.b16 %v5630
    %v6878 = vunpack.c.l.b16 %v5631
    %v6879 = vunpack.c.h.b16 %v5631
    %v6880 = vunpack.c.l.b16 %v5632
    %v6881 = vunpack.c.h.b16 %v5632
    %v6882 = vunpack.c.l.b16 %v5633
    %v6883 = vunpack.c.h.b16 %v5633
    %v6884 = vunpack.c.l.b16 %v5634
    %v6885 = vunpack.c.h.b16 %v5634
    %v6886 = vunpack.c.l.b16 %v5635
    %v6887 = vunpack.c.h.b16 %v5635
    %v6888 = vunpack.c.l.b16 %v5636
    %v6889 = vunpack.c.h.b16 %v5636
    %v6890 = vunpack.c.l.b16 %v5637
    %v6891 = vunpack.c.h.b16 %v5637
    %v6892 = vunpack.c.l.b16 %v5638
    %v6893 = vunpack.c.h.b16 %v5638
    %v6894 = vunpack.c.l.b16 %v5639
    %v6895 = vunpack.c.h.b16 %v5639
    %v6896 = vunpack.c.l.b16 %v5640
    %v6897 = vunpack.c.h.b16 %v5640
    %v6898 = vunpack.c.l.b16 %v5641
    %v6899 = vunpack.c.h.b16 %v5641
    %v6900 = vunpack.c.l.b16 %v5642
    %v6901 = vunpack.c.h.b16 %v5642
    %v6902 = vunpack.c.l.b16 %v5643
    %v6903 = vunpack.c.h.b16 %v5643
    %v6904 = vunpack.c.l.b16 %v5644
    %v6905 = vunpack.c.h.b16 %v5644
    %v6906 = vunpack.c.l.b16 %v5645
    %v6907 = vunpack.c.h.b16 %v5645
    %v6908 = vunpack.c.l.b16 %v5646
    %v6909 = vunpack.c.h.b16 %v5646
    %v6910 = vunpack.c.l.b16 %v5647
    %v6911 = vunpack.c.h.b16 %v5647
    %v6912 = vunpack.c.l.b16 %v5648
    %v6913 = vunpack.c.h.b16 %v5648
    %v6914 = vunpack.c.l.b16 %v5649
    %v6915 = vunpack.c.h.b16 %v5649
    %v6916 = vunpack.c.l.b16 %v5650
    %v6917 = vunpack.c.h.b16 %v5650
    %v6918 = vunpack.c.l.b16 %v5651
    %v6919 = vunpack.c.h.b16 %v5651
    %v6920 = vunpack.c.l.b16 %v5652
    %v6921 = vunpack.c.h.b16 %v5652
    %v6922 = vunpack.c.l.b16 %v5653
    %v6923 = vunpack.c.h.b16 %v5653
    %v6924 = vunpack.c.l.b16 %v5654
    %v6925 = vunpack.c.h.b16 %v5654
    %v6926 = vunpack.c.l.b16 %v5655
    %v6927 = vunpack.c.h.b16 %v5655
    %v6928 = vunpack.c.l.b16 %v5656
    %v6929 = vunpack.c.h.b16 %v5656
    %v6930 = vunpack.c.l.b16 %v5657
    %v6931 = vunpack.c.h.b16 %v5657
    %v6932 = vunpack.c.l.b16 %v5658
    %v6933 = vunpack.c.h.b16 %v5658
    %v6934 = vunpack.c.l.b16 %v5659
    %v6935 = vunpack.c.h.b16 %v5659
    %v6936 = vunpack.c.l.b16 %v5660
    %v6937 = vunpack.c.h.b16 %v5660
    %v6938 = vunpack.c.l.b16 %v5661
    %v6939 = vunpack.c.h.b16 %v5661
    %v6940 = vunpack.c.l.b16 %v5662
    %v6941 = vunpack.c.h.b16 %v5662
    %v6942 = vunpack.c.l.b16 %v5663
    %v6943 = vunpack.c.h.b16 %v5663
    %v6944 = vunpack.c.l.b16 %v5664
    %v6945 = vunpack.c.h.b16 %v5664
    %v6946 = vunpack.c.l.b16 %v5665
    %v6947 = vunpack.c.h.b16 %v5665
    %v6948 = vunpack.c.l.b16 %v5666
    %v6949 = vunpack.c.h.b16 %v5666
    %v6950 = vunpack.c.l.b16 %v5667
    %v6951 = vunpack.c.h.b16 %v5667
    %v6952 = vunpack.c.l.b16 %v5668
    %v6953 = vunpack.c.h.b16 %v5668
    %v6954 = vunpack.c.l.b16 %v5669
    %v6955 = vunpack.c.h.b16 %v5669
    %v6956 = vunpack.c.l.b16 %v5670
    %v6957 = vunpack.c.h.b16 %v5670
    %v6958 = vunpack.c.l.b16 %v5671
    %v6959 = vunpack.c.h.b16 %v5671
    %v6960 = vunpack.c.l.b16 %v5672
    %v6961 = vunpack.c.h.b16 %v5672
    %v6962 = vunpack.c.l.b16 %v5673
    %v6963 = vunpack.c.h.b16 %v5673
    %v6964 = vunpack.c.l.b16 %v5674
    %v6965 = vunpack.c.h.b16 %v5674
    %v6966 = vunpack.c.l.b16 %v5675
    %v6967 = vunpack.c.h.b16 %v5675
    %v6968 = vunpack.c.l.b16 %v5676
    %v6969 = vunpack.c.h.b16 %v5676
    %v6970 = vunpack.c.l.b16 %v5677
    %v6971 = vunpack.c.h.b16 %v5677
    %v6972 = vunpack.c.l.b16 %v5678
    %v6973 = vunpack.c.h.b16 %v5678
    %v6974 = vunpack.c.l.b16 %v5679
    %v6975 = vunpack.c.h.b16 %v5679
    %v6976 = vunpack.c.l.b16 %v5680
    %v6977 = vunpack.c.h.b16 %v5680
    %v6978 = vunpack.c.l.b16 %v5681
    %v6979 = vunpack.c.h.b16 %v5681
    %v6980 = vunpack.c.l.b16 %v5682
    %v6981 = vunpack.c.h.b16 %v5682
    %v6982 = vunpack.c.l.b16 %v5683
    %v6983 = vunpack.c.h.b16 %v5683
    %v6984 = vunpack.c.l.b16 %v5684
    %v6985 = vunpack.c.h.b16 %v5684
    %v6986 = vunpack.c.l.b16 %v5685
    %v6987 = vunpack.c.h.b16 %v5685
    %v6988 = vunpack.c.l.b16 %v5686
    %v6989 = vunpack.c.h.b16 %v5686
    %v6990 = vunpack.c.l.b16 %v5687
    %v6991 = vunpack.c.h.b16 %v5687
    %v6992 = vunpack.c.l.b16 %v5688
    %v6993 = vunpack.c.h.b16 %v5688
    %v6994 = vunpack.c.l.b16 %v5689
    %v6995 = vunpack.c.h.b16 %v5689
    %v6996 = vunpack.c.l.b16 %v5690
    %v6997 = vunpack.c.h.b16 %v5690
    %v6998 = vunpack.c.l.b16 %v5691
    %v6999 = vunpack.c.h.b16 %v5691
    %v7000 = vunpack.c.l.b16 %v5692
    %v7001 = vunpack.c.h.b16 %v5692
    %v7002 = vunpack.c.l.b16 %v5693
    %v7003 = vunpack.c.h.b16 %v5693
    %v7004 = vunpack.c.l.b16 %v5694
    %v7005 = vunpack.c.h.b16 %v5694
    %v7006 = vunpack.c.l.b16 %v5695
    %v7007 = vunpack.c.h.b16 %v5695
    %v7008 = vunpack.c.l.b16 %v5696
    %v7009 = vunpack.c.h.b16 %v5696
    %v7010 = vunpack.c.l.b16 %v5697
    %v7011 = vunpack.c.h.b16 %v5697
    %v7012 = vunpack.c.l.b16 %v5698
    %v7013 = vunpack.c.h.b16 %v5698
    %v7014 = vunpack.c.l.b16 %v5699
    %v7015 = vunpack.c.h.b16 %v5699
    %v7016 = vunpack.c.l.b16 %v5700
    %v7017 = vunpack.c.h.b16 %v5700
    %v7018 = vunpack.c.l.b16 %v5701
    %v7019 = vunpack.c.h.b16 %v5701
    %v7020 = vunpack.c.l.b16 %v5702
    %v7021 = vunpack.c.h.b16 %v5702
    %v7022 = vunpack.c.l.b16 %v5703
    %v7023 = vunpack.c.h.b16 %v5703
    %v7024 = vunpack.c.l.b16 %v5704
    %v7025 = vunpack.c.h.b16 %v5704
    %v7026 = vunpack.c.l.b16 %v5705
    %v7027 = vunpack.c.h.b16 %v5705
    %v7028 = vunpack.c.l.b16 %v5706
    %v7029 = vunpack.c.h.b16 %v5706
    %v7030 = vunpack.c.l.b16 %v5707
    %v7031 = vunpack.c.h.b16 %v5707
    %v7032 = vunpack.c.l.b16 %v5708
    %v7033 = vunpack.c.h.b16 %v5708
    %v7034 = vunpack.c.l.b16 %v5709
    %v7035 = vunpack.c.h.b16 %v5709
    %v7036 = vunpack.c.l.b16 %v5710
    %v7037 = vunpack.c.h.b16 %v5710
    %v7038 = vunpack.c.l.b16 %v5711
    %v7039 = vunpack.c.h.b16 %v5711
    %v7040 = vunpack.c.l.b16 %v5712
    %v7041 = vunpack.c.h.b16 %v5712
    %v7042 = vunpack.c.l.b16 %v5713
    %v7043 = vunpack.c.h.b16 %v5713
    %v7044 = vunpack.c.l.b16 %v5714
    %v7045 = vunpack.c.h.b16 %v5714
    %v7046 = vunpack.c.l.b16 %v5715
    %v7047 = vunpack.c.h.b16 %v5715
    %v7048 = vunpack.c.l.b16 %v5716
    %v7049 = vunpack.c.h.b16 %v5716
    %v7050 = vunpack.c.l.b16 %v5717
    %v7051 = vunpack.c.h.b16 %v5717
    %v7052 = vunpack.c.l.b16 %v5718
    %v7053 = vunpack.c.h.b16 %v5718
    %v7054 = vunpack.c.l.b16 %v5719
    %v7055 = vunpack.c.h.b16 %v5719
    %v7056 = vunpack.c.l.b16 %v5720
    %v7057 = vunpack.c.h.b16 %v5720
    %v7058 = vunpack.c.l.b16 %v5721
    %v7059 = vunpack.c.h.b16 %v5721
    %v7060 = vunpack.c.l.b16 %v5722
    %v7061 = vunpack.c.h.b16 %v5722
    %v7062 = vunpack.c.l.b16 %v5723
    %v7063 = vunpack.c.h.b16 %v5723
    %v7064 = vunpack.c.l.b16 %v5724
    %v7065 = vunpack.c.h.b16 %v5724
    %v7066 = vunpack.c.l.b16 %v5725
    %v7067 = vunpack.c.h.b16 %v5725
    %v7068 = vunpack.c.l.b16 %v5726
    %v7069 = vunpack.c.h.b16 %v5726
    %v7070 = vunpack.c.l.b16 %v5727
    %v7071 = vunpack.c.h.b16 %v5727
    %v7072 = vunpack.c.l.b16 %v5728
    %v7073 = vunpack.c.h.b16 %v5728
    %v7074 = vunpack.c.l.b16 %v5729
    %v7075 = vunpack.c.h.b16 %v5729
    %v7076 = vunpack.c.l.b16 %v5730
    %v7077 = vunpack.c.h.b16 %v5730
    %v7078 = vunpack.c.l.b16 %v5731
    %v7079 = vunpack.c.h.b16 %v5731
    %v7080 = vunpack.c.l.b16 %v5732
    %v7081 = vunpack.c.h.b16 %v5732
    %v7082 = vunpack.c.l.b16 %v5733
    %v7083 = vunpack.c.h.b16 %v5733
    %v7084 = vunpack.c.l.b16 %v5734
    %v7085 = vunpack.c.h.b16 %v5734
    %v7086 = vunpack.c.l.b16 %v5735
    %v7087 = vunpack.c.h.b16 %v5735
    %v7088 = vunpack.c.l.b16 %v5736
    %v7089 = vunpack.c.h.b16 %v5736
    %v7090 = vunpack.c.l.b16 %v5737
    %v7091 = vunpack.c.h.b16 %v5737
    %v7092 = vunpack.c.l.b16 %v5738
    %v7093 = vunpack.c.h.b16 %v5738
    %v7094 = vunpack.c.l.b16 %v5739
    %v7095 = vunpack.c.h.b16 %v5739
    %v7096 = vunpack.c.l.b16 %v5740
    %v7097 = vunpack.c.h.b16 %v5740
    %v7098 = vunpack.c.l.b16 %v5741
    %v7099 = vunpack.c.h.b16 %v5741
    %v7100 = vunpack.c.l.b16 %v5742
    %v7101 = vunpack.c.h.b16 %v5742
    %v7102 = vunpack.c.l.b16 %v5743
    %v7103 = vunpack.c.h.b16 %v5743
    %v7104 = vunpack.c.l.b16 %v5744
    %v7105 = vunpack.c.h.b16 %v5744
    %v7106 = vunpack.c.l.b16 %v5745
    %v7107 = vunpack.c.h.b16 %v5745
    %v7108 = vunpack.c.l.b16 %v5746
    %v7109 = vunpack.c.h.b16 %v5746
    %v7110 = vunpack.c.l.b16 %v5747
    %v7111 = vunpack.c.h.b16 %v5747
    %v7112 = vunpack.c.l.b16 %v5748
    %v7113 = vunpack.c.h.b16 %v5748
    %v7114 = vunpack.c.l.b16 %v5749
    %v7115 = vunpack.c.h.b16 %v5749
    %v7116 = vunpack.c.l.b16 %v5750
    %v7117 = vunpack.c.h.b16 %v5750
    %v7118 = vunpack.c.l.b16 %v5751
    %v7119 = vunpack.c.h.b16 %v5751
    %v7120 = vunpack.c.l.b16 %v5752
    %v7121 = vunpack.c.h.b16 %v5752
    %v7122 = vunpack.c.l.b16 %v5753
    %v7123 = vunpack.c.h.b16 %v5753
    %v7124 = vunpack.c.l.b16 %v5754
    %v7125 = vunpack.c.h.b16 %v5754
    %v7126 = vunpack.c.l.b16 %v5755
    %v7127 = vunpack.c.h.b16 %v5755
    %v7128 = vunpack.c.l.b16 %v5756
    %v7129 = vunpack.c.h.b16 %v5756
    %v7130 = vunpack.c.l.b16 %v5757
    %v7131 = vunpack.c.h.b16 %v5757
    %v7132 = vunpack.c.l.b16 %v5758
    %v7133 = vunpack.c.h.b16 %v5758
    %v7134 = vunpack.c.l.b16 %v5759
    %v7135 = vunpack.c.h.b16 %v5759
    %v7136 = vunpack.c.l.b16 %v5760
    %v7137 = vunpack.c.h.b16 %v5760
    %v7138 = vunpack.c.l.b16 %v5761
    %v7139 = vunpack.c.h.b16 %v5761
    %v7140 = vunpack.c.l.b16 %v5762
    %v7141 = vunpack.c.h.b16 %v5762
    %v7142 = vunpack.c.l.b16 %v5763
    %v7143 = vunpack.c.h.b16 %v5763
    %v7144 = vunpack.c.l.b16 %v5764
    %v7145 = vunpack.c.h.b16 %v5764
    %v7146 = vunpack.c.l.b16 %v5765
    %v7147 = vunpack.c.h.b16 %v5765
    %v7148 = vunpack.c.l.b16 %v5766
    %v7149 = vunpack.c.h.b16 %v5766
    %v7150 = vunpack.c.l.b16 %v5767
    %v7151 = vunpack.c.h.b16 %v5767
    %v7152 = vunpack.c.l.b16 %v5768
    %v7153 = vunpack.c.h.b16 %v5768
    %v7154 = vunpack.c.l.b16 %v5769
    %v7155 = vunpack.c.h.b16 %v5769
    %v7156 = vunpack.c.l.b16 %v5770
    %v7157 = vunpack.c.h.b16 %v5770
    %v7158 = vunpack.c.l.b16 %v5771
    %v7159 = vunpack.c.h.b16 %v5771
    %v7160 = vunpack.c.l.b16 %v5772
    %v7161 = vunpack.c.h.b16 %v5772
    %v7162 = vunpack.c.l.b16 %v5773
    %v7163 = vunpack.c.h.b16 %v5773
    %v7164 = vunpack.c.l.b16 %v5774
    %v7165 = vunpack.c.h.b16 %v5774
    %v7166 = vunpack.c.l.b16 %v5775
    %v7167 = vunpack.c.h.b16 %v5775
    %v7168 = vunpack.c.l.b16 %v5776
    %v7169 = vunpack.c.h.b16 %v5776
    %v7170 = vunpack.c.l.b16 %v5777
    %v7171 = vunpack.c.h.b16 %v5777
    %v7172 = vunpack.c.l.b16 %v5778
    %v7173 = vunpack.c.h.b16 %v5778
    %v7174 = vunpack.c.l.b16 %v5779
    %v7175 = vunpack.c.h.b16 %v5779
    %v7176 = vunpack.c.l.b16 %v5780
    %v7177 = vunpack.c.h.b16 %v5780
    %v7178 = vunpack.c.l.b16 %v5781
    %v7179 = vunpack.c.h.b16 %v5781
    %v7180 = vunpack.c.l.b16 %v5782
    %v7181 = vunpack.c.h.b16 %v5782
    %v7182 = vunpack.c.l.b16 %v5783
    %v7183 = vunpack.c.h.b16 %v5783
    %v7184 = vunpack.c.l.b16 %v5784
    %v7185 = vunpack.c.h.b16 %v5784
    %v7186 = vunpack.c.l.b16 %v5785
    %v7187 = vunpack.c.h.b16 %v5785
    %v7188 = vunpack.c.l.b16 %v5786
    %v7189 = vunpack.c.h.b16 %v5786
    %v7190 = vunpack.c.l.b16 %v5787
    %v7191 = vunpack.c.h.b16 %v5787
    %v7192 = vunpack.c.l.b16 %v5788
    %v7193 = vunpack.c.h.b16 %v5788
    %v7194 = vunpack.c.l.b16 %v5789
    %v7195 = vunpack.c.h.b16 %v5789
    %v7196 = vunpack.c.l.b16 %v5790
    %v7197 = vunpack.c.h.b16 %v5790
    %v7198 = vunpack.c.l.b16 %v5791
    %v7199 = vunpack.c.h.b16 %v5791
    %v7200 = vunpack.c.l.b16 %v5792
    %v7201 = vunpack.c.h.b16 %v5792
    %v7202 = vunpack.c.l.b16 %v5793
    %v7203 = vunpack.c.h.b16 %v5793
    %v7204 = vunpack.c.l.b16 %v5794
    %v7205 = vunpack.c.h.b16 %v5794
    %v7206 = vunpack.c.l.b16 %v5795
    %v7207 = vunpack.c.h.b16 %v5795
    %v7208 = vunpack.c.l.b16 %v5796
    %v7209 = vunpack.c.h.b16 %v5796
    %v7210 = vunpack.c.l.b16 %v5797
    %v7211 = vunpack.c.h.b16 %v5797
    %v7212 = vunpack.c.l.b16 %v5798
    %v7213 = vunpack.c.h.b16 %v5798
    %v7214 = vunpack.c.l.b16 %v5799
    %v7215 = vunpack.c.h.b16 %v5799
    %v7216 = vunpack.c.l.b16 %v5800
    %v7217 = vunpack.c.h.b16 %v5800
    %v7218 = vunpack.c.l.b16 %v5801
    %v7219 = vunpack.c.h.b16 %v5801
    %v7220 = vunpack.c.l.b16 %v5802
    %v7221 = vunpack.c.h.b16 %v5802
    %v7222 = vunpack.c.l.b16 %v5803
    %v7223 = vunpack.c.h.b16 %v5803
    %v7224 = vunpack.c.l.b16 %v5804
    %v7225 = vunpack.c.h.b16 %v5804
    %v7226 = vunpack.c.l.b16 %v5805
    %v7227 = vunpack.c.h.b16 %v5805
    %v7228 = vunpack.c.l.b16 %v5806
    %v7229 = vunpack.c.h.b16 %v5806
    %v7230 = vunpack.c.l.b16 %v5807
    %v7231 = vunpack.c.h.b16 %v5807
    %v7232 = vunpack.c.l.b16 %v5808
    %v7233 = vunpack.c.h.b16 %v5808
    %v7234 = vunpack.c.l.b16 %v5809
    %v7235 = vunpack.c.h.b16 %v5809
    %v7236 = vunpack.c.l.b16 %v5810
    %v7237 = vunpack.c.h.b16 %v5810
    %v7238 = vunpack.c.l.b16 %v5811
    %v7239 = vunpack.c.h.b16 %v5811
    %v7240 = vunpack.c.l.b16 %v5812
    %v7241 = vunpack.c.h.b16 %v5812
    %v7242 = vunpack.c.l.b16 %v5813
    %v7243 = vunpack.c.h.b16 %v5813
    %v7244 = vunpack.c.l.b16 %v5814
    %v7245 = vunpack.c.h.b16 %v5814
    %v7246 = vunpack.c.l.b16 %v5815
    %v7247 = vunpack.c.h.b16 %v5815
    %v7248 = vunpack.c.l.b16 %v5816
    %v7249 = vunpack.c.h.b16 %v5816
    %v7250 = vunpack.c.l.b16 %v5817
    %v7251 = vunpack.c.h.b16 %v5817
    %v7252 = vunpack.c.l.b16 %v5818
    %v7253 = vunpack.c.h.b16 %v5818
    %v7254 = vunpack.c.l.b16 %v5819
    %v7255 = vunpack.c.h.b16 %v5819
    %v7256 = vunpack.c.l.b16 %v5820
    %v7257 = vunpack.c.h.b16 %v5820
    %v7258 = vunpack.c.l.b16 %v5821
    %v7259 = vunpack.c.h.b16 %v5821
    %v7260 = vunpack.c.l.b16 %v5822
    %v7261 = vunpack.c.h.b16 %v5822
    %v7262 = vunpack.c.l.b16 %v5823
    %v7263 = vunpack.c.h.b16 %v5823
    %v7264 = vunpack.c.l.b16 %v5824
    %v7265 = vunpack.c.h.b16 %v5824
    %v7266 = vunpack.c.l.b16 %v5825
    %v7267 = vunpack.c.h.b16 %v5825
    %v7268 = vunpack.c.l.b16 %v5826
    %v7269 = vunpack.c.h.b16 %v5826
    %v7270 = vunpack.c.l.b16 %v5827
    %v7271 = vunpack.c.h.b16 %v5827
    %v7272 = vunpack.c.l.b16 %v5828
    %v7273 = vunpack.c.h.b16 %v5828
    %v7274 = vunpack.c.l.b16 %v5829
    %v7275 = vunpack.c.h.b16 %v5829
    %v7276 = vunpack.c.l.b16 %v5830
    %v7277 = vunpack.c.h.b16 %v5830
    %v7278 = vunpack.c.l.b16 %v5831
    %v7279 = vunpack.c.h.b16 %v5831
    %v7280 = vunpack.c.l.b16 %v5832
    %v7281 = vunpack.c.h.b16 %v5832
    %v7282 = vunpack.c.l.b16 %v5833
    %v7283 = vunpack.c.h.b16 %v5833
    %v7284 = vunpack.c.l.b16 %v5834
    %v7285 = vunpack.c.h.b16 %v5834
    %v7286 = vunpack.c.l.b16 %v5835
    %v7287 = vunpack.c.h.b16 %v5835
    %v7288 = vunpack.c.l.b16 %v5836
    %v7289 = vunpack.c.h.b16 %v5836
    %v7290 = vunpack.c.l.b16 %v5837
    %v7291 = vunpack.c.h.b16 %v5837
    %v7292 = vunpack.c.l.b16 %v5838
    %v7293 = vunpack.c.h.b16 %v5838
    %v7294 = vunpack.c.l.b16 %v5839
    %v7295 = vunpack.c.h.b16 %v5839
    %v7296 = vunpack.c.l.b16 %v5840
    %v7297 = vunpack.c.h.b16 %v5840
    %v7298 = vunpack.c.l.b16 %v5841
    %v7299 = vunpack.c.h.b16 %v5841
    %v7300 = vunpack.c.l.b16 %v5842
    %v7301 = vunpack.c.h.b16 %v5842
    %v7302 = vunpack.c.l.b16 %v5843
    %v7303 = vunpack.c.h.b16 %v5843
    %v7304 = vunpack.c.l.b16 %v5844
    %v7305 = vunpack.c.h.b16 %v5844
    %v7306 = vunpack.c.l.b16 %v5845
    %v7307 = vunpack.c.h.b16 %v5845
    %v7308 = vunpack.c.l.b16 %v5846
    %v7309 = vunpack.c.h.b16 %v5846
    %v7310 = vunpack.c.l.b16 %v5847
    %v7311 = vunpack.c.h.b16 %v5847
    %v7312 = vunpack.c.l.b16 %v5848
    %v7313 = vunpack.c.h.b16 %v5848
    %v7314 = vunpack.c.l.b16 %v5849
    %v7315 = vunpack.c.h.b16 %v5849
    %v7316 = vunpack.c.l.b16 %v5850
    %v7317 = vunpack.c.h.b16 %v5850
    %v7318 = vunpack.c.l.b16 %v5851
    %v7319 = vunpack.c.h.b16 %v5851
    %v7320 = vunpack.c.l.b16 %v5852
    %v7321 = vunpack.c.h.b16 %v5852
    %v7322 = vunpack.c.l.b16 %v5853
    %v7323 = vunpack.c.h.b16 %v5853
    %v7324 = vunpack.c.l.b16 %v5854
    %v7325 = vunpack.c.h.b16 %v5854
    %v7326 = vunpack.c.l.b16 %v5855
    %v7327 = vunpack.c.h.b16 %v5855
    %v7328 = vunpack.c.l.b16 %v5856
    %v7329 = vunpack.c.h.b16 %v5856
    %v7330 = vunpack.c.l.b16 %v5857
    %v7331 = vunpack.c.h.b16 %v5857
    %v7332 = vunpack.c.l.b16 %v5858
    %v7333 = vunpack.c.h.b16 %v5858
    %v7334 = vunpack.c.l.b16 %v5859
    %v7335 = vunpack.c.h.b16 %v5859
    %v7336 = vunpack.c.l.b16 %v5860
    %v7337 = vunpack.c.h.b16 %v5860
    %v7338 = vunpack.c.l.b16 %v5861
    %v7339 = vunpack.c.h.b16 %v5861
    %v7340 = vunpack.c.l.b16 %v5862
    %v7341 = vunpack.c.h.b16 %v5862
    %v7342 = vunpack.c.l.b16 %v5863
    %v7343 = vunpack.c.h.b16 %v5863
    %v7344 = vunpack.c.l.b16 %v5864
    %v7345 = vunpack.c.h.b16 %v5864
    %v7346 = vunpack.c.l.b16 %v5865
    %v7347 = vunpack.c.h.b16 %v5865
    %v7348 = vunpack.c.l.b16 %v5866
    %v7349 = vunpack.c.h.b16 %v5866
    %v7350 = vunpack.c.l.b16 %v5867
    %v7351 = vunpack.c.h.b16 %v5867
    %v7352 = vunpack.c.l.b16 %v5868
    %v7353 = vunpack.c.h.b16 %v5868
    %v7354 = vunpack.c.l.b16 %v5869
    %v7355 = vunpack.c.h.b16 %v5869
    %v7356 = vunpack.c.l.b16 %v5870
    %v7357 = vunpack.c.h.b16 %v5870
    %v7358 = vunpack.c.l.b16 %v5871
    %v7359 = vunpack.c.h.b16 %v5871
    %v7360 = vunpack.c.l.b16 %v5872
    %v7361 = vunpack.c.h.b16 %v5872
    %v7362 = vunpack.c.l.b16 %v5873
    %v7363 = vunpack.c.h.b16 %v5873
    %v7364 = vunpack.c.l.b16 %v5874
    %v7365 = vunpack.c.h.b16 %v5874
    %v7366 = vunpack.c.l.b16 %v5875
    %v7367 = vunpack.c.h.b16 %v5875
    %v7368 = vunpack.c.l.b16 %v5876
    %v7369 = vunpack.c.h.b16 %v5876
    %v7370 = vunpack.c.l.b16 %v5877
    %v7371 = vunpack.c.h.b16 %v5877
    %v7372 = vunpack.c.l.b16 %v5878
    %v7373 = vunpack.c.h.b16 %v5878
    %v7374 = vunpack.c.l.b16 %v5879
    %v7375 = vunpack.c.h.b16 %v5879
    %v7376 = vunpack.c.l.b16 %v5880
    %v7377 = vunpack.c.h.b16 %v5880
    %v7378 = vunpack.c.l.b16 %v5881
    %v7379 = vunpack.c.h.b16 %v5881
    %v7380 = vunpack.c.l.b16 %v5882
    %v7381 = vunpack.c.h.b16 %v5882
    %v7382 = vunpack.c.l.b16 %v5883
    %v7383 = vunpack.c.h.b16 %v5883
    %v7384 = vunpack.c.l.b16 %v5884
    %v7385 = vunpack.c.h.b16 %v5884
    %v7386 = vunpack.c.l.b16 %v5885
    %v7387 = vunpack.c.h.b16 %v5885
    %v7388 = vunpack.c.l.b16 %v5886
    %v7389 = vunpack.c.h.b16 %v5886
    %v7390 = vunpack.c.l.b16 %v5887
    %v7391 = vunpack.c.h.b16 %v5887
    %v7392 = vunpack.c.l.b16 %v5888
    %v7393 = vunpack.c.h.b16 %v5888
    %v7394 = vunpack.c.l.b16 %v5889
    %v7395 = vunpack.c.h.b16 %v5889
    %v7396 = vunpack.c.l.b16 %v5890
    %v7397 = vunpack.c.h.b16 %v5890
    %v7398 = vunpack.c.l.b16 %v5891
    %v7399 = vunpack.c.h.b16 %v5891
    %v7400 = vunpack.c.l.b16 %v5892
    %v7401 = vunpack.c.h.b16 %v5892
    %v7402 = vunpack.c.l.b16 %v5893
    %v7403 = vunpack.c.h.b16 %v5893
    %v7404 = vunpack.c.l.b16 %v5894
    %v7405 = vunpack.c.h.b16 %v5894
    %v7406 = vunpack.c.l.b16 %v5895
    %v7407 = vunpack.c.h.b16 %v5895
    %v7408 = vunpack.c.l.b16 %v5896
    %v7409 = vunpack.c.h.b16 %v5896
    %v7410 = vunpack.c.l.b16 %v5897
    %v7411 = vunpack.c.h.b16 %v5897
    %v7412 = vunpack.c.l.b16 %v5898
    %v7413 = vunpack.c.h.b16 %v5898
    %v7414 = vunpack.c.l.b16 %v5899
    %v7415 = vunpack.c.h.b16 %v5899
    %v7416 = vunpack.c.l.b16 %v5900
    %v7417 = vunpack.c.h.b16 %v5900
    %v7418 = vunpack.c.l.b16 %v5901
    %v7419 = vunpack.c.h.b16 %v5901
    %v7420 = vunpack.c.l.b16 %v5902
    %v7421 = vunpack.c.h.b16 %v5902
    %v7422 = vunpack.c.l.b16 %v5903
    %v7423 = vunpack.c.h.b16 %v5903
    %v7424 = vunpack.c.l.b16 %v5904
    %v7425 = vunpack.c.h.b16 %v5904
    %v7426 = vunpack.c.l.b16 %v5905
    %v7427 = vunpack.c.h.b16 %v5905
    %v7428 = vunpack.c.l.b16 %v5906
    %v7429 = vunpack.c.h.b16 %v5906
    %v7430 = vunpack.c.l.b16 %v5907
    %v7431 = vunpack.c.h.b16 %v5907
    %v7432 = vunpack.c.l.b16 %v5908
    %v7433 = vunpack.c.h.b16 %v5908
    %v7434 = vunpack.c.l.b16 %v5909
    %v7435 = vunpack.c.h.b16 %v5909
    %v7436 = vunpack.c.l.b16 %v5910
    %v7437 = vunpack.c.h.b16 %v5910
    %v7438 = vunpack.c.l.b16 %v5911
    %v7439 = vunpack.c.h.b16 %v5911
    %v7440 = vunpack.c.l.b16 %v5912
    %v7441 = vunpack.c.h.b16 %v5912
    %v7442 = vunpack.c.l.b16 %v5913
    %v7443 = vunpack.c.h.b16 %v5913
    %v7444 = vunpack.c.l.b16 %v5914
    %v7445 = vunpack.c.h.b16 %v5914
    %v7446 = vunpack.c.l.b16 %v5915
    %v7447 = vunpack.c.h.b16 %v5915
    %v7448 = vunpack.c.l.b16 %v5916
    %v7449 = vunpack.c.h.b16 %v5916
    %v7450 = vunpack.c.l.b16 %v5917
    %v7451 = vunpack.c.h.b16 %v5917
    %v7452 = vunpack.c.l.b16 %v5918
    %v7453 = vunpack.c.h.b16 %v5918
    %v7454 = vunpack.c.l.b16 %v5919
    %v7455 = vunpack.c.h.b16 %v5919
    %v7456 = vunpack.c.l.b16 %v5920
    %v7457 = vunpack.c.h.b16 %v5920
    %v7458 = vunpack.c.l.b16 %v5921
    %v7459 = vunpack.c.h.b16 %v5921
    %v7460 = vunpack.c.l.b16 %v5922
    %v7461 = vunpack.c.h.b16 %v5922
    %v7462 = vunpack.c.l.b16 %v5923
    %v7463 = vunpack.c.h.b16 %v5923
    %v7464 = vunpack.c.l.b16 %v5924
    %v7465 = vunpack.c.h.b16 %v5924
    %v7466 = vunpack.c.l.b16 %v5925
    %v7467 = vunpack.c.h.b16 %v5925
    %v7468 = vunpack.c.l.b16 %v5926
    %v7469 = vunpack.c.h.b16 %v5926
    %v7470 = vunpack.c.l.b16 %v5927
    %v7471 = vunpack.c.h.b16 %v5927
    %v7472 = vunpack.c.l.b16 %v5928
    %v7473 = vunpack.c.h.b16 %v5928
    %v7474 = vunpack.c.l.b16 %v5929
    %v7475 = vunpack.c.h.b16 %v5929
    %v7476 = vunpack.c.l.b16 %v5930
    %v7477 = vunpack.c.h.b16 %v5930
    %v7478 = vunpack.c.l.b16 %v5931
    %v7479 = vunpack.c.h.b16 %v5931
    %v7480 = vunpack.c.l.b16 %v5932
    %v7481 = vunpack.c.h.b16 %v5932
    %v7482 = vunpack.c.l.b16 %v5933
    %v7483 = vunpack.c.h.b16 %v5933
    %v7484 = vunpack.c.l.b16 %v5934
    %v7485 = vunpack.c.h.b16 %v5934
    %v7486 = vunpack.c.l.b16 %v5935
    %v7487 = vunpack.c.h.b16 %v5935
    %v7488 = vunpack.c.l.b16 %v5936
    %v7489 = vunpack.c.h.b16 %v5936
    %v7490 = vunpack.c.l.b16 %v5937
    %v7491 = vunpack.c.h.b16 %v5937
    %v7492 = vunpack.c.l.b16 %v5938
    %v7493 = vunpack.c.h.b16 %v5938
    %v7494 = vunpack.c.l.b16 %v5939
    %v7495 = vunpack.c.h.b16 %v5939
    %v7496 = vunpack.c.l.b16 %v5940
    %v7497 = vunpack.c.h.b16 %v5940
    %v7498 = vunpack.c.l.b16 %v5941
    %v7499 = vunpack.c.h.b16 %v5941
    %v7500 = vunpack.c.l.b16 %v5942
    %v7501 = vunpack.c.h.b16 %v5942
    %v7502 = vunpack.c.l.b16 %v5943
    %v7503 = vunpack.c.h.b16 %v5943
    %v7504 = vunpack.c.l.b16 %v5944
    %v7505 = vunpack.c.h.b16 %v5944
    %v7506 = vunpack.c.l.b16 %v5945
    %v7507 = vunpack.c.h.b16 %v5945
    %v7508 = vunpack.c.l.b16 %v5946
    %v7509 = vunpack.c.h.b16 %v5946
    %v7510 = vunpack.c.l.b16 %v5947
    %v7511 = vunpack.c.h.b16 %v5947
    %v7512 = vunpack.c.l.b16 %v5948
    %v7513 = vunpack.c.h.b16 %v5948
    %v7514 = vunpack.c.l.b16 %v5949
    %v7515 = vunpack.c.h.b16 %v5949
    %v7516 = vunpack.c.l.b16 %v5950
    %v7517 = vunpack.c.h.b16 %v5950
    %v7518 = vunpack.c.l.b16 %v5951
    %v7519 = vunpack.c.h.b16 %v5951
    %v7520 = vunpack.c.l.b16 %v5952
    %v7521 = vunpack.c.h.b16 %v5952
    %v7522 = vunpack.c.l.b16 %v5953
    %v7523 = vunpack.c.h.b16 %v5953
    %v7524 = vunpack.c.l.b16 %v5954
    %v7525 = vunpack.c.h.b16 %v5954
    %v7526 = vunpack.c.l.b16 %v5955
    %v7527 = vunpack.c.h.b16 %v5955
    %v7528 = vunpack.c.l.b16 %v5956
    %v7529 = vunpack.c.h.b16 %v5956
    %v7530 = vunpack.c.l.b16 %v5957
    %v7531 = vunpack.c.h.b16 %v5957
    %v7532 = vunpack.c.l.b16 %v5958
    %v7533 = vunpack.c.h.b16 %v5958
    %v7534 = vunpack.c.l.b16 %v5959
    %v7535 = vunpack.c.h.b16 %v5959
    %v7536 = vunpack.c.l.b16 %v5960
    %v7537 = vunpack.c.h.b16 %v5960
    %v7538 = vunpack.c.l.b16 %v5961
    %v7539 = vunpack.c.h.b16 %v5961
    %v7540 = vunpack.c.l.b16 %v5962
    %v7541 = vunpack.c.h.b16 %v5962
    %v7542 = vunpack.c.l.b16 %v5963
    %v7543 = vunpack.c.h.b16 %v5963
    %v7544 = vunpack.c.l.b16 %v5964
    %v7545 = vunpack.c.h.b16 %v5964
    %v7546 = vunpack.c.l.b16 %v5965
    %v7547 = vunpack.c.h.b16 %v5965
    %v7548 = vunpack.c.l.b16 %v5966
    %v7549 = vunpack.c.h.b16 %v5966
    %v7550 = vunpack.c.l.b16 %v5967
    %v7551 = vunpack.c.h.b16 %v5967
    %v7552 = vunpack.c.l.b16 %v5968
    %v7553 = vunpack.c.h.b16 %v5968
    %v7554 = vunpack.c.l.b16 %v5969
    %v7555 = vunpack.c.h.b16 %v5969
    %v7556 = vunpack.c.l.b16 %v5970
    %v7557 = vunpack.c.h.b16 %v5970
    %v7558 = vunpack.c.l.b16 %v5971
    %v7559 = vunpack.c.h.b16 %v5971
    %v7560 = vunpack.c.l.b16 %v5972
    %v7561 = vunpack.c.h.b16 %v5972
    %v7562 = vunpack.c.l.b16 %v5973
    %v7563 = vunpack.c.h.b16 %v5973
    %v7564 = vunpack.c.l.b16 %v5974
    %v7565 = vunpack.c.h.b16 %v5974
    %v7566 = vunpack.c.l.b16 %v5975
    %v7567 = vunpack.c.h.b16 %v5975
    %v7568 = vunpack.c.l.b16 %v5976
    %v7569 = vunpack.c.h.b16 %v5976
    %v7570 = vunpack.c.l.b16 %v5977
    %v7571 = vunpack.c.h.b16 %v5977
    %v7572 = vunpack.c.l.b16 %v5978
    %v7573 = vunpack.c.h.b16 %v5978
    %v7574 = vunpack.c.l.b16 %v5979
    %v7575 = vunpack.c.h.b16 %v5979
    %v7576 = vunpack.c.l.b16 %v5980
    %v7577 = vunpack.c.h.b16 %v5980
    %v7578 = vunpack.c.l.b16 %v5981
    %v7579 = vunpack.c.h.b16 %v5981
    %v7580 = vunpack.c.l.b16 %v5982
    %v7581 = vunpack.c.h.b16 %v5982
    %v7582 = vunpack.c.l.b16 %v5983
    %v7583 = vunpack.c.h.b16 %v5983
    %v7584 = vunpack.c.l.b16 %v5984
    %v7585 = vunpack.c.h.b16 %v5984
    %v7586 = vunpack.c.l.b16 %v5985
    %v7587 = vunpack.c.h.b16 %v5985
    %v7588 = vunpack.c.l.b16 %v5986
    %v7589 = vunpack.c.h.b16 %v5986
    %v7590 = vunpack.c.l.b16 %v5987
    %v7591 = vunpack.c.h.b16 %v5987
    %v7592 = vunpack.c.l.b16 %v5988
    %v7593 = vunpack.c.h.b16 %v5988
    %v7594 = vunpack.c.l.b16 %v5989
    %v7595 = vunpack.c.h.b16 %v5989
    %v7596 = vunpack.c.l.b16 %v5990
    %v7597 = vunpack.c.h.b16 %v5990
    %v7598 = vunpack.c.l.b16 %v5991
    %v7599 = vunpack.c.h.b16 %v5991
    %v7600 = vunpack.c.l.b16 %v5992
    %v7601 = vunpack.c.h.b16 %v5992
    %v7602 = vunpack.c.l.b16 %v5993
    %v7603 = vunpack.c.h.b16 %v5993
    %v7604 = vunpack.c.l.b16 %v5994
    %v7605 = vunpack.c.h.b16 %v5994
    %v7606 = vunpack.c.l.b16 %v5995
    %v7607 = vunpack.c.h.b16 %v5995
    %v7608 = vunpack.c.l.b16 %v5996
    %v7609 = vunpack.c.h.b16 %v5996
    %v7610 = vunpack.c.l.b16 %v5997
    %v7611 = vunpack.c.h.b16 %v5997
    %v7612 = vunpack.c.l.b16 %v5998
    %v7613 = vunpack.c.h.b16 %v5998
    %v7614 = vunpack.c.l.b16 %v5999
    %v7615 = vunpack.c.h.b16 %v5999
    %v7616 = vunpack.c.l.b16 %v6000
    %v7617 = vunpack.c.h.b16 %v6000
    %v7618 = vunpack.c.l.b16 %v6001
    %v7619 = vunpack.c.h.b16 %v6001
    %v7620 = vunpack.c.l.b16 %v6002
    %v7621 = vunpack.c.h.b16 %v6002
    %v7622 = vunpack.c.l.b16 %v6003
    %v7623 = vunpack.c.h.b16 %v6003
    %v7624 = vunpack.c.l.b16 %v6004
    %v7625 = vunpack.c.h.b16 %v6004
    %v7626 = vunpack.c.l.b16 %v6005
    %v7627 = vunpack.c.h.b16 %v6005
    %v7628 = vunpack.c.l.b16 %v6006
    %v7629 = vunpack.c.h.b16 %v6006
    %v7630 = vunpack.c.l.b16 %v6007
    %v7631 = vunpack.c.h.b16 %v6007
    %v7632 = vunpack.c.l.b16 %v6008
    %v7633 = vunpack.c.h.b16 %v6008
    %v7634 = vunpack.c.l.b16 %v6009
    %v7635 = vunpack.c.h.b16 %v6009
    %v7636 = vunpack.c.l.b16 %v6010
    %v7637 = vunpack.c.h.b16 %v6010
    %v7638 = vunpack.c.l.b16 %v6011
    %v7639 = vunpack.c.h.b16 %v6011
    %v7640 = vunpack.c.l.b16 %v6012
    %v7641 = vunpack.c.h.b16 %v6012
    %v7642 = vunpack.c.l.b16 %v6013
    %v7643 = vunpack.c.h.b16 %v6013
    %v7644 = vunpack.c.l.b16 %v6014
    %v7645 = vunpack.c.h.b16 %v6014
    %v7646 = vunpack.c.l.b16 %v6015
    %v7647 = vunpack.c.h.b16 %v6015
    %v7648 = vunpack.c.l.b16 %v6016
    %v7649 = vunpack.c.h.b16 %v6016
    %v7650 = vunpack.c.l.b16 %v6017
    %v7651 = vunpack.c.h.b16 %v6017
    %v7652 = vunpack.c.l.b16 %v6018
    %v7653 = vunpack.c.h.b16 %v6018
    %v7654 = vunpack.c.l.b16 %v6019
    %v7655 = vunpack.c.h.b16 %v6019
    %v7656 = vunpack.c.l.b16 %v6020
    %v7657 = vunpack.c.h.b16 %v6020
    %v7658 = vunpack.c.l.b16 %v6021
    %v7659 = vunpack.c.h.b16 %v6021
    %v7660 = vunpack.c.l.b16 %v6022
    %v7661 = vunpack.c.h.b16 %v6022
    %v7662 = vunpack.c.l.b16 %v6023
    %v7663 = vunpack.c.h.b16 %v6023
    %v7664 = vunpack.c.l.b16 %v6024
    %v7665 = vunpack.c.h.b16 %v6024
    %v7666 = vunpack.c.l.b16 %v6025
    %v7667 = vunpack.c.h.b16 %v6025
    %v7668 = vunpack.c.l.b16 %v6026
    %v7669 = vunpack.c.h.b16 %v6026
    %v7670 = vunpack.c.l.b16 %v6027
    %v7671 = vunpack.c.h.b16 %v6027
    %v7672 = vunpack.c.l.b16 %v6028
    %v7673 = vunpack.c.h.b16 %v6028
    %v7674 = vunpack.c.l.b16 %v6029
    %v7675 = vunpack.c.h.b16 %v6029
    %v7676 = vunpack.c.l.b16 %v6030
    %v7677 = vunpack.c.h.b16 %v6030
    %v7678 = vunpack.c.l.b16 %v6031
    %v7679 = vunpack.c.h.b16 %v6031
    %v7680 = vunpack.c.l.b16 %v6032
    %v7681 = vunpack.c.h.b16 %v6032
    %v7682 = vunpack.c.l.b16 %v6033
    %v7683 = vunpack.c.h.b16 %v6033
    %v7684 = vunpack.c.l.b16 %v6034
    %v7685 = vunpack.c.h.b16 %v6034
    %v7686 = vunpack.c.l.b16 %v6035
    %v7687 = vunpack.c.h.b16 %v6035
    %v7688 = vunpack.c.l.b16 %v6036
    %v7689 = vunpack.c.h.b16 %v6036
    %v7690 = vunpack.c.l.b16 %v6037
    %v7691 = vunpack.c.h.b16 %v6037
    %v7692 = vunpack.c.l.b16 %v6038
    %v7693 = vunpack.c.h.b16 %v6038
    %v7694 = vunpack.c.l.b16 %v6039
    %v7695 = vunpack.c.h.b16 %v6039
    %v7696 = vunpack.c.l.b16 %v6040
    %v7697 = vunpack.c.h.b16 %v6040
    %v7698 = vunpack.c.l.b16 %v6041
    %v7699 = vunpack.c.h.b16 %v6041
    %v7700 = vunpack.c.l.b16 %v6042
    %v7701 = vunpack.c.h.b16 %v6042
    %v7702 = vunpack.c.l.b16 %v6043
    %v7703 = vunpack.c.h.b16 %v6043
    %v7704 = vunpack.c.l.b16 %v6044
    %v7705 = vunpack.c.h.b16 %v6044
    %v7706 = vunpack.c.l.b16 %v6045
    %v7707 = vunpack.c.h.b16 %v6045
    %v7708 = vunpack.c.l.b16 %v6046
    %v7709 = vunpack.c.h.b16 %v6046
    %v7710 = vunpack.c.l.b16 %v6047
    %v7711 = vunpack.c.h.b16 %v6047
    %v7712 = vunpack.c.l.b16 %v6048
    %v7713 = vunpack.c.h.b16 %v6048
    %v7714 = vunpack.c.l.b16 %v6049
    %v7715 = vunpack.c.h.b16 %v6049
    %v7716 = vunpack.c.l.b16 %v6050
    %v7717 = vunpack.c.h.b16 %v6050
    %v7718 = vunpack.c.l.b16 %v6051
    %v7719 = vunpack.c.h.b16 %v6051
    %v7720 = vunpack.c.l.b16 %v6052
    %v7721 = vunpack.c.h.b16 %v6052
    %v7722 = vunpack.c.l.b16 %v6053
    %v7723 = vunpack.c.h.b16 %v6053
    %v7724 = vunpack.c.l.b16 %v6054
    %v7725 = vunpack.c.h.b16 %v6054
    %v7726 = vunpack.c.l.b16 %v6055
    %v7727 = vunpack.c.h.b16 %v6055
    %v7728 = vunpack.c.l.b16 %v6056
    %v7729 = vunpack.c.h.b16 %v6056
    %v7730 = vunpack.c.l.b16 %v6057
    %v7731 = vunpack.c.h.b16 %v6057
    %v7732 = vunpack.c.l.b16 %v6058
    %v7733 = vunpack.c.h.b16 %v6058
    %v7734 = vunpack.c.l.b16 %v6059
    %v7735 = vunpack.c.h.b16 %v6059
    %v7736 = vunpack.c.l.b16 %v6060
    %v7737 = vunpack.c.h.b16 %v6060
    %v7738 = vunpack.c.l.b16 %v6061
    %v7739 = vunpack.c.h.b16 %v6061
    %v7740 = vunpack.c.l.b16 %v6062
    %v7741 = vunpack.c.h.b16 %v6062
    %v7742 = vunpack.c.l.b16 %v6063
    %v7743 = vunpack.c.h.b16 %v6063
    %v7744 = vunpack.c.l.b16 %v6064
    %v7745 = vunpack.c.h.b16 %v6064
    %v7746 = vunpack.c.l.b16 %v6065
    %v7747 = vunpack.c.h.b16 %v6065
    %v7748 = vunpack.c.l.b16 %v6066
    %v7749 = vunpack.c.h.b16 %v6066
    %v7750 = vunpack.c.l.b16 %v6067
    %v7751 = vunpack.c.h.b16 %v6067
    %v7752 = vunpack.c.l.b16 %v6068
    %v7753 = vunpack.c.h.b16 %v6068
    %v7754 = vunpack.c.l.b16 %v6069
    %v7755 = vunpack.c.h.b16 %v6069
    %v7756 = vunpack.c.l.b16 %v6070
    %v7757 = vunpack.c.h.b16 %v6070
    %v7758 = vunpack.c.l.b16 %v6071
    %v7759 = vunpack.c.h.b16 %v6071
    %v7760 = vunpack.c.l.b16 %v6072
    %v7761 = vunpack.c.h.b16 %v6072
    %v7762 = vunpack.c.l.b16 %v6073
    %v7763 = vunpack.c.h.b16 %v6073
    %v7764 = vunpack.c.l.b16 %v6074
    %v7765 = vunpack.c.h.b16 %v6074
    %v7766 = vunpack.c.l.b16 %v6075
    %v7767 = vunpack.c.h.b16 %v6075
    %v7768 = vunpack.c.l.b16 %v6076
    %v7769 = vunpack.c.h.b16 %v6076
    %v7770 = vunpack.c.l.b16 %v6077
    %v7771 = vunpack.c.h.b16 %v6077
    %v7772 = vunpack.c.l.b16 %v6078
    %v7773 = vunpack.c.h.b16 %v6078
    %v7774 = vunpack.c.l.b16 %v6079
    %v7775 = vunpack.c.h.b16 %v6079
    %v7776 = vunpack.c.l.b16 %v6080
    %v7777 = vunpack.c.h.b16 %v6080
    %v7778 = vunpack.c.l.b16 %v6081
    %v7779 = vunpack.c.h.b16 %v6081
    %v7780 = vunpack.c.l.b16 %v6082
    %v7781 = vunpack.c.h.b16 %v6082
    %v7782 = vunpack.c.l.b16 %v6083
    %v7783 = vunpack.c.h.b16 %v6083
    %v7784 = vunpack.c.l.b16 %v6084
    %v7785 = vunpack.c.h.b16 %v6084
    %v7786 = vunpack.c.l.b16 %v6085
    %v7787 = vunpack.c.h.b16 %v6085
    %v7788 = vunpack.c.l.b16 %v6086
    %v7789 = vunpack.c.h.b16 %v6086
    %v7790 = vunpack.c.l.b16 %v6087
    %v7791 = vunpack.c.h.b16 %v6087
    %v7792 = vunpack.c.l.b16 %v6088
    %v7793 = vunpack.c.h.b16 %v6088
    %v7794 = vunpack.c.l.b16 %v6089
    %v7795 = vunpack.c.h.b16 %v6089
    %v7796 = vunpack.c.l.b16 %v6090
    %v7797 = vunpack.c.h.b16 %v6090
    %v7798 = vunpack.c.l.b16 %v6091
    %v7799 = vunpack.c.h.b16 %v6091
    %v7800 = vunpack.c.l.b16 %v6092
    %v7801 = vunpack.c.h.b16 %v6092
    %v7802 = vunpack.c.l.b16 %v6093
    %v7803 = vunpack.c.h.b16 %v6093
    %v7804 = vunpack.c.l.b16 %v6094
    %v7805 = vunpack.c.h.b16 %v6094
    %v7806 = vunpack.c.l.b16 %v6095
    %v7807 = vunpack.c.h.b16 %v6095
    %v7808 = vunpack.c.l.b16 %v6096
    %v7809 = vunpack.c.h.b16 %v6096
    %v7810 = vunpack.c.l.b16 %v6097
    %v7811 = vunpack.c.h.b16 %v6097
    %v7812 = vunpack.c.l.b16 %v6098
    %v7813 = vunpack.c.h.b16 %v6098
    %v7814 = vunpack.c.l.b16 %v6099
    %v7815 = vunpack.c.h.b16 %v6099
    %v7816 = vunpack.c.l.b16 %v6100
    %v7817 = vunpack.c.h.b16 %v6100
    %v7818 = vunpack.c.l.b16 %v6101
    %v7819 = vunpack.c.h.b16 %v6101
    %v7820 = vunpack.c.l.b16 %v6102
    %v7821 = vunpack.c.h.b16 %v6102
    %v7822 = vunpack.c.l.b16 %v6103
    %v7823 = vunpack.c.h.b16 %v6103
    %v7824 = vunpack.c.l.b16 %v6104
    %v7825 = vunpack.c.h.b16 %v6104
    %v7826 = vunpack.c.l.b16 %v6105
    %v7827 = vunpack.c.h.b16 %v6105
    %v7828 = vunpack.c.l.b16 %v6106
    %v7829 = vunpack.c.h.b16 %v6106
    %v7830 = vunpack.c.l.b16 %v6107
    %v7831 = vunpack.c.h.b16 %v6107
    %v7832 = vunpack.c.l.b16 %v6108
    %v7833 = vunpack.c.h.b16 %v6108
    %v7834 = vunpack.c.l.b16 %v6109
    %v7835 = vunpack.c.h.b16 %v6109
    %v7836 = vunpack.c.l.b16 %v6110
    %v7837 = vunpack.c.h.b16 %v6110
    %v7838 = vunpack.c.l.b16 %v6111
    %v7839 = vunpack.c.h.b16 %v6111
    %v7840 = vunpack.c.l.b16 %v6112
    %v7841 = vunpack.c.h.b16 %v6112
    %v7842 = vunpack.c.l.b16 %v6113
    %v7843 = vunpack.c.h.b16 %v6113
    %v7844 = vunpack.c.l.b16 %v6114
    %v7845 = vunpack.c.h.b16 %v6114
    %v7846 = vunpack.c.l.b16 %v6115
    %v7847 = vunpack.c.h.b16 %v6115
    %v7848 = vunpack.c.l.b16 %v6116
    %v7849 = vunpack.c.h.b16 %v6116
    %v7850 = vunpack.c.l.b16 %v6117
    %v7851 = vunpack.c.h.b16 %v6117
    %v7852 = vunpack.c.l.b16 %v6118
    %v7853 = vunpack.c.h.b16 %v6118
    %v7854 = vunpack.c.l.b16 %v6119
    %v7855 = vunpack.c.h.b16 %v6119
    %v7856 = vunpack.c.l.b16 %v6120
    %v7857 = vunpack.c.h.b16 %v6120
    %v7858 = vunpack.c.l.b16 %v6121
    %v7859 = vunpack.c.h.b16 %v6121
    %v7860 = vunpack.c.l.b16 %v6122
    %v7861 = vunpack.c.h.b16 %v6122
    %v7862 = vunpack.c.l.b16 %v6123
    %v7863 = vunpack.c.h.b16 %v6123
    %v7864 = vunpack.c.l.b16 %v6124
    %v7865 = vunpack.c.h.b16 %v6124
    %v7866 = vunpack.c.l.b16 %v6125
    %v7867 = vunpack.c.h.b16 %v6125
    %v7868 = vunpack.c.l.b16 %v6126
    %v7869 = vunpack.c.h.b16 %v6126
    %v7870 = vunpack.c.l.b16 %v6127
    %v7871 = vunpack.c.h.b16 %v6127
    %v7872 = vunpack.c.l.b16 %v6128
    %v7873 = vunpack.c.h.b16 %v6128
    %v7874 = vunpack.c.l.b16 %v6129
    %v7875 = vunpack.c.h.b16 %v6129
    %v7876 = vunpack.c.l.b16 %v6130
    %v7877 = vunpack.c.h.b16 %v6130
    %v7878 = vunpack.c.l.b16 %v6131
    %v7879 = vunpack.c.h.b16 %v6131
    %v7880 = vunpack.c.l.b16 %v6132
    %v7881 = vunpack.c.h.b16 %v6132
    %v7882 = vunpack.c.l.b16 %v6133
    %v7883 = vunpack.c.h.b16 %v6133
    %v7884 = vunpack.c.l.b16 %v6134
    %v7885 = vunpack.c.h.b16 %v6134
    %v7886 = vunpack.c.l.b16 %v6135
    %v7887 = vunpack.c.h.b16 %v6135
    %v7888 = vunpack.c.l.b16 %v6136
    %v7889 = vunpack.c.h.b16 %v6136
    %v7890 = vunpack.c.l.b16 %v6137
    %v7891 = vunpack.c.h.b16 %v6137
    %v7892 = vunpack.c.l.b16 %v6138
    %v7893 = vunpack.c.h.b16 %v6138
    %v7894 = vunpack.c.l.b16 %v6139
    %v7895 = vunpack.c.h.b16 %v6139
    %v7896 = vunpack.c.l.b16 %v6140
    %v7897 = vunpack.c.h.b16 %v6140
    %v7898 = vunpack.c.l.b16 %v6141
    %v7899 = vunpack.c.h.b16 %v6141
    %v7900 = vunpack.c.l.b16 %v6142
    %v7901 = vunpack.c.h.b16 %v6142
    %v7902 = vunpack.c.l.b16 %v6143
    %v7903 = vunpack.c.h.b16 %v6143
    %v7904 = vunpack.c.l.b16 %v6144
    %v7905 = vunpack.c.h.b16 %v6144
    %v7906 = vunpack.c.l.b16 %v6145
    %v7907 = vunpack.c.h.b16 %v6145
    %v7908 = vunpack.c.l.b16 %v6146
    %v7909 = vunpack.c.h.b16 %v6146
    %v7910 = vunpack.c.l.b16 %v6147
    %v7911 = vunpack.c.h.b16 %v6147
    %v7912 = vunpack.c.l.b16 %v6148
    %v7913 = vunpack.c.h.b16 %v6148
    %v7914 = vunpack.c.l.b16 %v6149
    %v7915 = vunpack.c.h.b16 %v6149
    %v7916 = vunpack.c.l.b16 %v6150
    %v7917 = vunpack.c.h.b16 %v6150
    %v7918 = vunpack.c.l.b16 %v6151
    %v7919 = vunpack.c.h.b16 %v6151
    %v7920 = vunpack.c.l.b16 %v6152
    %v7921 = vunpack.c.h.b16 %v6152
    %v7922 = vunpack.c.l.b16 %v6153
    %v7923 = vunpack.c.h.b16 %v6153
    %v7924 = vunpack.c.l.b16 %v6154
    %v7925 = vunpack.c.h.b16 %v6154
    %v7926 = vunpack.c.l.b16 %v6155
    %v7927 = vunpack.c.h.b16 %v6155
    %v7928 = vunpack.c.l.b16 %v6156
    %v7929 = vunpack.c.h.b16 %v6156
    %v7930 = vunpack.c.l.b16 %v6157
    %v7931 = vunpack.c.h.b16 %v6157
    %v7932 = vunpack.c.l.b16 %v6158
    %v7933 = vunpack.c.h.b16 %v6158
    %v7934 = vunpack.c.l.b16 %v6159
    %v7935 = vunpack.c.h.b16 %v6159
    %v7936 = vunpack.c.l.b16 %v6160
    %v7937 = vunpack.c.h.b16 %v6160
    %v7938 = vunpack.c.l.b16 %v6161
    %v7939 = vunpack.c.h.b16 %v6161
    %v7940 = vunpack.c.l.b16 %v6162
    %v7941 = vunpack.c.h.b16 %v6162
    %v7942 = vunpack.c.l.b16 %v6163
    %v7943 = vunpack.c.h.b16 %v6163
    %v7944 = vunpack.c.l.b16 %v6164
    %v7945 = vunpack.c.h.b16 %v6164
    %v7946 = vunpack.c.l.b16 %v6165
    %v7947 = vunpack.c.h.b16 %v6165
    %v7948 = vunpack.c.l.b16 %v6166
    %v7949 = vunpack.c.h.b16 %v6166
    %v7950 = vunpack.c.l.b16 %v6167
    %v7951 = vunpack.c.h.b16 %v6167
    %v7952 = vunpack.c.l.b16 %v6168
    %v7953 = vunpack.c.h.b16 %v6168
    %v7954 = vunpack.c.l.b16 %v6169
    %v7955 = vunpack.c.h.b16 %v6169
    %v7956 = vunpack.c.l.b16 %v6170
    %v7957 = vunpack.c.h.b16 %v6170
    %v7958 = vunpack.c.l.b16 %v6171
    %v7959 = vunpack.c.h.b16 %v6171
    %v7960 = vunpack.c.l.b16 %v6172
    %v7961 = vunpack.c.h.b16 %v6172
    %v7962 = vunpack.c.l.b16 %v6173
    %v7963 = vunpack.c.h.b16 %v6173
    %v7964 = vunpack.c.l.b16 %v6174
    %v7965 = vunpack.c.h.b16 %v6174
    %v7966 = vunpack.c.l.b16 %v6175
    %v7967 = vunpack.c.h.b16 %v6175
    %v7968 = vpack.c.b16 %v6828, %v6816
    %v7969 = vpack.c.b16 %v6829, %v6817
    %v7970 = vpack.c.b16 %v6830, %v6818
    %v7971 = vpack.c.b16 %v6831, %v6819
    %v7972 = vpack.c.b16 %v6832, %v6820
    %v7973 = vpack.c.b16 %v6833, %v6821
    %v7974 = vpack.c.b16 %v6834, %v6822
    %v7975 = vpack.c.b16 %v6835, %v6823
    %v7976 = vpack.c.b16 %v6836, %v6824
    %v7977 = vpack.c.b16 %v6837, %v6825
    %v7978 = vpack.c.b16 %v6838, %v6826
    %v7979 = vpack.c.b16 %v6839, %v6827
    %v7980 = vpack.c.b16 %v6852, %v6840
    %v7981 = vpack.c.b16 %v6853, %v6841
    %v7982 = vpack.c.b16 %v6854, %v6842
    %v7983 = vpack.c.b16 %v6855, %v6843
    %v7984 = vpack.c.b16 %v6856, %v6844
    %v7985 = vpack.c.b16 %v6857, %v6845
    %v7986 = vpack.c.b16 %v6858, %v6846
    %v7987 = vpack.c.b16 %v6859, %v6847
    %v7988 = vpack.c.b16 %v6860, %v6848
    %v7989 = vpack.c.b16 %v6861, %v6849
    %v7990 = vpack.c.b16 %v6862, %v6850
    %v7991 = vpack.c.b16 %v6863, %v6851
    %v7992 = vpack.c.b16 %v6876, %v6864
    %v7993 = vpack.c.b16 %v6877, %v6865
    %v7994 = vpack.c.b16 %v6878, %v6866
    %v7995 = vpack.c.b16 %v6879, %v6867
    %v7996 = vpack.c.b16 %v6880, %v6868
    %v7997 = vpack.c.b16 %v6881, %v6869
    %v7998 = vpack.c.b16 %v6882, %v6870
    %v7999 = vpack.c.b16 %v6883, %v6871
    %v8000 = vpack.c.b16 %v6884, %v6872
    %v8001 = vpack.c.b16 %v6885, %v6873
    %v8002 = vpack.c.b16 %v6886, %v6874
    %v8003 = vpack.c.b16 %v6887, %v6875
    %v8004 = vpack.c.b16 %v6900, %v6888
    %v8005 = vpack.c.b16 %v6901, %v6889
    %v8006 = vpack.c.b16 %v6902, %v6890
    %v8007 = vpack.c.b16 %v6903, %v6891
    %v8008 = vpack.c.b16 %v6904, %v6892
    %v8009 = vpack.c.b16 %v6905, %v6893
    %v8010 = vpack.c.b16 %v6906, %v6894
    %v8011 = vpack.c.b16 %v6907, %v6895
    %v8012 = vpack.c.b16 %v6908, %v6896
    %v8013 = vpack.c.b16 %v6909, %v6897
    %v8014 = vpack.c.b16 %v6910, %v6898
    %v8015 = vpack.c.b16 %v6911, %v6899
    %v8016 = vpack.c.b16 %v6924, %v6912
    %v8017 = vpack.c.b16 %v6925, %v6913
    %v8018 = vpack.c.b16 %v6926, %v6914
    %v8019 = vpack.c.b16 %v6927, %v6915
    %v8020 = vpack.c.b16 %v6928, %v6916
    %v8021 = vpack.c.b16 %v6929, %v6917
    %v8022 = vpack.c.b16 %v6930, %v6918
    %v8023 = vpack.c.b16 %v6931, %v6919
    %v8024 = vpack.c.b16 %v6932, %v6920
    %v8025 = vpack.c.b16 %v6933, %v6921
    %v8026 = vpack.c.b16 %v6934, %v6922
    %v8027 = vpack.c.b16 %v6935, %v6923
    %v8028 = vpack.c.b16 %v6948, %v6936
    %v8029 = vpack.c.b16 %v6949, %v6937
    %v8030 = vpack.c.b16 %v6950, %v6938
    %v8031 = vpack.c.b16 %v6951, %v6939
    %v8032 = vpack.c.b16 %v6952, %v6940
    %v8033 = vpack.c.b16 %v6953, %v6941
    %v8034 = vpack.c.b16 %v6954, %v6942
    %v8035 = vpack.c.b16 %v6955, %v6943
    %v8036 = vpack.c.b16 %v6956, %v6944
    %v8037 = vpack.c.b16 %v6957, %v6945
    %v8038 = vpack.c.b16 %v6958, %v6946
    %v8039 = vpack.c.b16 %v6959, %v6947
    %v8040 = vpack.c.b16 %v6972, %v6960
    %v8041 = vpack.c.b16 %v6973, %v6961
    %v8042 = vpack.c.b16 %v6974, %v6962
    %v8043 = vpack.c.b16 %v6975, %v6963
    %v8044 = vpack.c.b16 %v6976, %v6964
    %v8045 = vpack.c.b16 %v6977, %v6965
    %v8046 = vpack.c.b16 %v6978, %v6966
    %v8047 = vpack.c.b16 %v6979, %v6967
    %v8048 = vpack.c.b16 %v6980, %v6968
    %v8049 = vpack.c.b16 %v6981, %v6969
    %v8050 = vpack.c.b16 %v6982, %v6970
    %v8051 = vpack.c.b16 %v6983, %v6971
    %v8052 = vpack.c.b16 %v6996, %v6984
    %v8053 = vpack.c.b16 %v6997, %v6985
    %v8054 = vpack.c.b16 %v6998, %v6986
    %v8055 = vpack.c.b16 %v6999, %v6987
    %v8056 = vpack.c.b16 %v7000, %v6988
    %v8057 = vpack.c.b16 %v7001, %v6989
    %v8058 = vpack.c.b16 %v7002, %v6990
    %v8059 = vpack.c.b16 %v7003, %v6991
    %v8060 = vpack.c.b16 %v7004, %v6992
    %v8061 = vpack.c.b16 %v7005, %v6993
    %v8062 = vpack.c.b16 %v7006, %v6994
    %v8063 = vpack.c.b16 %v7007, %v6995
    %v8064 = vpack.c.b16 %v7020, %v7008
    %v8065 = vpack.c.b16 %v7021, %v7009
    %v8066 = vpack.c.b16 %v7022, %v7010
    %v8067 = vpack.c.b16 %v7023, %v7011
    %v8068 = vpack.c.b16 %v7024, %v7012
    %v8069 = vpack.c.b16 %v7025, %v7013
    %v8070 = vpack.c.b16 %v7026, %v7014
    %v8071 = vpack.c.b16 %v7027, %v7015
    %v8072 = vpack.c.b16 %v7028, %v7016
    %v8073 = vpack.c.b16 %v7029, %v7017
    %v8074 = vpack.c.b16 %v7030, %v7018
    %v8075 = vpack.c.b16 %v7031, %v7019
    %v8076 = vpack.c.b16 %v7044, %v7032
    %v8077 = vpack.c.b16 %v7045, %v7033
    %v8078 = vpack.c.b16 %v7046, %v7034
    %v8079 = vpack.c.b16 %v7047, %v7035
    %v8080 = vpack.c.b16 %v7048, %v7036
    %v8081 = vpack.c.b16 %v7049, %v7037
    %v8082 = vpack.c.b16 %v7050, %v7038
    %v8083 = vpack.c.b16 %v7051, %v7039
    %v8084 = vpack.c.b16 %v7052, %v7040
    %v8085 = vpack.c.b16 %v7053, %v7041
    %v8086 = vpack.c.b16 %v7054, %v7042
    %v8087 = vpack.c.b16 %v7055, %v7043
    %v8088 = vpack.c.b16 %v7068, %v7056
    %v8089 = vpack.c.b16 %v7069, %v7057
    %v8090 = vpack.c.b16 %v7070, %v7058
    %v8091 = vpack.c.b16 %v7071, %v7059
    %v8092 = vpack.c.b16 %v7072, %v7060
    %v8093 = vpack.c.b16 %v7073, %v7061
    %v8094 = vpack.c.b16 %v7074, %v7062
    %v8095 = vpack.c.b16 %v7075, %v7063
    %v8096 = vpack.c.b16 %v7076, %v7064
    %v8097 = vpack.c.b16 %v7077, %v7065
    %v8098 = vpack.c.b16 %v7078, %v7066
    %v8099 = vpack.c.b16 %v7079, %v7067
    %v8100 = vpack.c.b16 %v7092, %v7080
    %v8101 = vpack.c.b16 %v7093, %v7081
    %v8102 = vpack.c.b16 %v7094, %v7082
    %v8103 = vpack.c.b16 %v7095, %v7083
    %v8104 = vpack.c.b16 %v7096, %v7084
    %v8105 = vpack.c.b16 %v7097, %v7085
    %v8106 = vpack.c.b16 %v7098, %v7086
    %v8107 = vpack.c.b16 %v7099, %v7087
    %v8108 = vpack.c.b16 %v7100, %v7088
    %v8109 = vpack.c.b16 %v7101, %v7089
    %v8110 = vpack.c.b16 %v7102, %v7090
    %v8111 = vpack.c.b16 %v7103, %v7091
    %v8112 = vpack.c.b16 %v7116, %v7104
    %v8113 = vpack.c.b16 %v7117, %v7105
    %v8114 = vpack.c.b16 %v7118, %v7106
    %v8115 = vpack.c.b16 %v7119, %v7107
    %v8116 = vpack.c.b16 %v7120, %v7108
    %v8117 = vpack.c.b16 %v7121, %v7109
    %v8118 = vpack.c.b16 %v7122, %v7110
    %v8119 = vpack.c.b16 %v7123, %v7111
    %v8120 = vpack.c.b16 %v7124, %v7112
    %v8121 = vpack.c.b16 %v7125, %v7113
    %v8122 = vpack.c.b16 %v7126, %v7114
    %v8123 = vpack.c.b16 %v7127, %v7115
    %v8124 = vpack.c.b16 %v7140, %v7128
    %v8125 = vpack.c.b16 %v7141, %v7129
    %v8126 = vpack.c.b16 %v7142, %v7130
    %v8127 = vpack.c.b16 %v7143, %v7131
    %v8128 = vpack.c.b16 %v7144, %v7132
    %v8129 = vpack.c.b16 %v7145, %v7133
    %v8130 = vpack.c.b16 %v7146, %v7134
    %v8131 = vpack.c.b16 %v7147, %v7135
    %v8132 = vpack.c.b16 %v7148, %v7136
    %v8133 = vpack.c.b16 %v7149, %v7137
    %v8134 = vpack.c.b16 %v7150, %v7138
    %v8135 = vpack.c.b16 %v7151, %v7139
    %v8136 = vpack.c.b16 %v7164, %v7152
    %v8137 = vpack.c.b16 %v7165, %v7153
    %v8138 = vpack.c.b16 %v7166, %v7154
    %v8139 = vpack.c.b16 %v7167, %v7155
    %v8140 = vpack.c.b16 %v7168, %v7156
    %v8141 = vpack.c.b16 %v7169, %v7157
    %v8142 = vpack.c.b16 %v7170, %v7158
    %v8143 = vpack.c.b16 %v7171, %v7159
    %v8144 = vpack.c.b16 %v7172, %v7160
    %v8145 = vpack.c.b16 %v7173, %v7161
    %v8146 = vpack.c.b16 %v7174, %v7162
    %v8147 = vpack.c.b16 %v7175, %v7163
    %v8148 = vpack.c.b16 %v7188, %v7176
    %v8149 = vpack.c.b16 %v7189, %v7177
    %v8150 = vpack.c.b16 %v7190, %v7178
    %v8151 = vpack.c.b16 %v7191, %v7179
    %v8152 = vpack.c.b16 %v7192, %v7180
    %v8153 = vpack.c.b16 %v7193, %v7181
    %v8154 = vpack.c.b16 %v7194, %v7182
    %v8155 = vpack.c.b16 %v7195, %v7183
    %v8156 = vpack.c.b16 %v7196, %v7184
    %v8157 = vpack.c.b16 %v7197, %v7185
    %v8158 = vpack.c.b16 %v7198, %v7186
    %v8159 = vpack.c.b16 %v7199, %v7187
    %v8160 = vpack.c.b16 %v7212, %v7200
    %v8161 = vpack.c.b16 %v7213, %v7201
    %v8162 = vpack.c.b16 %v7214, %v7202
    %v8163 = vpack.c.b16 %v7215, %v7203
    %v8164 = vpack.c.b16 %v7216, %v7204
    %v8165 = vpack.c.b16 %v7217, %v7205
    %v8166 = vpack.c.b16 %v7218, %v7206
    %v8167 = vpack.c.b16 %v7219, %v7207
    %v8168 = vpack.c.b16 %v7220, %v7208
    %v8169 = vpack.c.b16 %v7221, %v7209
    %v8170 = vpack.c.b16 %v7222, %v7210
    %v8171 = vpack.c.b16 %v7223, %v7211
    %v8172 = vpack.c.b16 %v7236, %v7224
    %v8173 = vpack.c.b16 %v7237, %v7225
    %v8174 = vpack.c.b16 %v7238, %v7226
    %v8175 = vpack.c.b16 %v7239, %v7227
    %v8176 = vpack.c.b16 %v7240, %v7228
    %v8177 = vpack.c.b16 %v7241, %v7229
    %v8178 = vpack.c.b16 %v7242, %v7230
    %v8179 = vpack.c.b16 %v7243, %v7231
    %v8180 = vpack.c.b16 %v7244, %v7232
    %v8181 = vpack.c.b16 %v7245, %v7233
    %v8182 = vpack.c.b16 %v7246, %v7234
    %v8183 = vpack.c.b16 %v7247, %v7235
    %v8184 = vpack.c.b16 %v7260, %v7248
    %v8185 = vpack.c.b16 %v7261, %v7249
    %v8186 = vpack.c.b16 %v7262, %v7250
    %v8187 = vpack.c.b16 %v7263, %v7251
    %v8188 = vpack.c.b16 %v7264, %v7252
    %v8189 = vpack.c.b16 %v7265, %v7253
    %v8190 = vpack.c.b16 %v7266, %v7254
    %v8191 = vpack.c.b16 %v7267, %v7255
    %v8192 = vpack.c.b16 %v7268, %v7256
    %v8193 = vpack.c.b16 %v7269, %v7257
    %v8194 = vpack.c.b16 %v7270, %v7258
    %v8195 = vpack.c.b16 %v7271, %v7259
    %v8196 = vpack.c.b16 %v7284, %v7272
    %v8197 = vpack.c.b16 %v7285, %v7273
    %v8198 = vpack.c.b16 %v7286, %v7274
    %v8199 = vpack.c.b16 %v7287, %v7275
    %v8200 = vpack.c.b16 %v7288, %v7276
    %v8201 = vpack.c.b16 %v7289, %v7277
    %v8202 = vpack.c.b16 %v7290, %v7278
    %v8203 = vpack.c.b16 %v7291, %v7279
    %v8204 = vpack.c.b16 %v7292, %v7280
    %v8205 = vpack.c.b16 %v7293, %v7281
    %v8206 = vpack.c.b16 %v7294, %v7282
    %v8207 = vpack.c.b16 %v7295, %v7283
    %v8208 = vpack.c.b16 %v7308, %v7296
    %v8209 = vpack.c.b16 %v7309, %v7297
    %v8210 = vpack.c.b16 %v7310, %v7298
    %v8211 = vpack.c.b16 %v7311, %v7299
    %v8212 = vpack.c.b16 %v7312, %v7300
    %v8213 = vpack.c.b16 %v7313, %v7301
    %v8214 = vpack.c.b16 %v7314, %v7302
    %v8215 = vpack.c.b16 %v7315, %v7303
    %v8216 = vpack.c.b16 %v7316, %v7304
    %v8217 = vpack.c.b16 %v7317, %v7305
    %v8218 = vpack.c.b16 %v7318, %v7306
    %v8219 = vpack.c.b16 %v7319, %v7307
    %v8220 = vpack.c.b16 %v7332, %v7320
    %v8221 = vpack.c.b16 %v7333, %v7321
    %v8222 = vpack.c.b16 %v7334, %v7322
    %v8223 = vpack.c.b16 %v7335, %v7323
    %v8224 = vpack.c.b16 %v7336, %v7324
    %v8225 = vpack.c.b16 %v7337, %v7325
    %v8226 = vpack.c.b16 %v7338, %v7326
    %v8227 = vpack.c.b16 %v7339, %v7327
    %v8228 = vpack.c.b16 %v7340, %v7328
    %v8229 = vpack.c.b16 %v7341, %v7329
    %v8230 = vpack.c.b16 %v7342, %v7330
    %v8231 = vpack.c.b16 %v7343, %v7331
    %v8232 = vpack.c.b16 %v7356, %v7344
    %v8233 = vpack.c.b16 %v7357, %v7345
    %v8234 = vpack.c.b16 %v7358, %v7346
    %v8235 = vpack.c.b16 %v7359, %v7347
    %v8236 = vpack.c.b16 %v7360, %v7348
    %v8237 = vpack.c.b16 %v7361, %v7349
    %v8238 = vpack.c.b16 %v7362, %v7350
    %v8239 = vpack.c.b16 %v7363, %v7351
    %v8240 = vpack.c.b16 %v7364, %v7352
    %v8241 = vpack.c.b16 %v7365, %v7353
    %v8242 = vpack.c.b16 %v7366, %v7354
    %v8243 = vpack.c.b16 %v7367, %v7355
    %v8244 = vpack.c.b16 %v7380, %v7368
    %v8245 = vpack.c.b16 %v7381, %v7369
    %v8246 = vpack.c.b16 %v7382, %v7370
    %v8247 = vpack.c.b16 %v7383, %v7371
    %v8248 = vpack.c.b16 %v7384, %v7372
    %v8249 = vpack.c.b16 %v7385, %v7373
    %v8250 = vpack.c.b16 %v7386, %v7374
    %v8251 = vpack.c.b16 %v7387, %v7375
    %v8252 = vpack.c.b16 %v7388, %v7376
    %v8253 = vpack.c.b16 %v7389, %v7377
    %v8254 = vpack.c.b16 %v7390, %v7378
    %v8255 = vpack.c.b16 %v7391, %v7379
    %v8256 = vpack.c.b16 %v7404, %v7392
    %v8257 = vpack.c.b16 %v7405, %v7393
    %v8258 = vpack.c.b16 %v7406, %v7394
    %v8259 = vpack.c.b16 %v7407, %v7395
    %v8260 = vpack.c.b16 %v7408, %v7396
    %v8261 = vpack.c.b16 %v7409, %v7397
    %v8262 = vpack.c.b16 %v7410, %v7398
    %v8263 = vpack.c.b16 %v7411, %v7399
    %v8264 = vpack.c.b16 %v7412, %v7400
    %v8265 = vpack.c.b16 %v7413, %v7401
    %v8266 = vpack.c.b16 %v7414, %v7402
    %v8267 = vpack.c.b16 %v7415, %v7403
    %v8268 = vpack.c.b16 %v7428, %v7416
    %v8269 = vpack.c.b16 %v7429, %v7417
    %v8270 = vpack.c.b16 %v7430, %v7418
    %v8271 = vpack.c.b16 %v7431, %v7419
    %v8272 = vpack.c.b16 %v7432, %v7420
    %v8273 = vpack.c.b16 %v7433, %v7421
    %v8274 = vpack.c.b16 %v7434, %v7422
    %v8275 = vpack.c.b16 %v7435, %v7423
    %v8276 = vpack.c.b16 %v7436, %v7424
    %v8277 = vpack.c.b16 %v7437, %v7425
    %v8278 = vpack.c.b16 %v7438, %v7426
    %v8279 = vpack.c.b16 %v7439, %v7427
    %v8280 = vpack.c.b16 %v7452, %v7440
    %v8281 = vpack.c.b16 %v7453, %v7441
    %v8282 = vpack.c.b16 %v7454, %v7442
    %v8283 = vpack.c.b16 %v7455, %v7443
    %v8284 = vpack.c.b16 %v7456, %v7444
    %v8285 = vpack.c.b16 %v7457, %v7445
    %v8286 = vpack.c.b16 %v7458, %v7446
    %v8287 = vpack.c.b16 %v7459, %v7447
    %v8288 = vpack.c.b16 %v7460, %v7448
    %v8289 = vpack.c.b16 %v7461, %v7449
    %v8290 = vpack.c.b16 %v7462, %v7450
    %v8291 = vpack.c.b16 %v7463, %v7451
    %v8292 = vpack.c.b16 %v7476, %v7464
    %v8293 = vpack.c.b16 %v7477, %v7465
    %v8294 = vpack.c.b16 %v7478, %v7466
    %v8295 = vpack.c.b16 %v7479, %v7467
    %v8296 = vpack.c.b16 %v7480, %v7468
    %v8297 = vpack.c.b16 %v7481, %v7469
    %v8298 = vpack.c.b16 %v7482, %v7470
    %v8299 = vpack.c.b16 %v7483, %v7471
    %v8300 = vpack.c.b16 %v7484, %v7472
    %v8301 = vpack.c.b16 %v7485, %v7473
    %v8302 = vpack.c.b16 %v7486, %v7474
    %v8303 = vpack.c.b16 %v7487, %v7475
    %v8304 = vpack.c.b16 %v7500, %v7488
    %v8305 = vpack.c.b16 %v7501, %v7489
    %v8306 = vpack.c.b16 %v7502, %v7490
    %v8307 = vpack.c.b16 %v7503, %v7491
    %v8308 = vpack.c.b16 %v7504, %v7492
    %v8309 = vpack.c.b16 %v7505, %v7493
    %v8310 = vpack.c.b16 %v7506, %v7494
    %v8311 = vpack.c.b16 %v7507, %v7495
    %v8312 = vpack.c.b16 %v7508, %v7496
    %v8313 = vpack.c.b16 %v7509, %v7497
    %v8314 = vpack.c.b16 %v7510, %v7498
    %v8315 = vpack.c.b16 %v7511, %v7499
    %v8316 = vpack.c.b16 %v7524, %v7512
    %v8317 = vpack.c.b16 %v7525, %v7513
    %v8318 = vpack.c.b16 %v7526, %v7514
    %v8319 = vpack.c.b16 %v7527, %v7515
    %v8320 = vpack.c.b16 %v7528, %v7516
    %v8321 = vpack.c.b16 %v7529, %v7517
    %v8322 = vpack.c.b16 %v7530, %v7518
    %v8323 = vpack.c.b16 %v7531, %v7519
    %v8324 = vpack.c.b16 %v7532, %v7520
    %v8325 = vpack.c.b16 %v7533, %v7521
    %v8326 = vpack.c.b16 %v7534, %v7522
    %v8327 = vpack.c.b16 %v7535, %v7523
    %v8328 = vpack.c.b16 %v7548, %v7536
    %v8329 = vpack.c.b16 %v7549, %v7537
    %v8330 = vpack.c.b16 %v7550, %v7538
    %v8331 = vpack.c.b16 %v7551, %v7539
    %v8332 = vpack.c.b16 %v7552, %v7540
    %v8333 = vpack.c.b16 %v7553, %v7541
    %v8334 = vpack.c.b16 %v7554, %v7542
    %v8335 = vpack.c.b16 %v7555, %v7543
    %v8336 = vpack.c.b16 %v7556, %v7544
    %v8337 = vpack.c.b16 %v7557, %v7545
    %v8338 = vpack.c.b16 %v7558, %v7546
    %v8339 = vpack.c.b16 %v7559, %v7547
    %v8340 = vpack.c.b16 %v7572, %v7560
    %v8341 = vpack.c.b16 %v7573, %v7561
    %v8342 = vpack.c.b16 %v7574, %v7562
    %v8343 = vpack.c.b16 %v7575, %v7563
    %v8344 = vpack.c.b16 %v7576, %v7564
    %v8345 = vpack.c.b16 %v7577, %v7565
    %v8346 = vpack.c.b16 %v7578, %v7566
    %v8347 = vpack.c.b16 %v7579, %v7567
    %v8348 = vpack.c.b16 %v7580, %v7568
    %v8349 = vpack.c.b16 %v7581, %v7569
    %v8350 = vpack.c.b16 %v7582, %v7570
    %v8351 = vpack.c.b16 %v7583, %v7571
    %v8352 = vpack.c.b16 %v7596, %v7584
    %v8353 = vpack.c.b16 %v7597, %v7585
    %v8354 = vpack.c.b16 %v7598, %v7586
    %v8355 = vpack.c.b16 %v7599, %v7587
    %v8356 = vpack.c.b16 %v7600, %v7588
    %v8357 = vpack.c.b16 %v7601, %v7589
    %v8358 = vpack.c.b16 %v7602, %v7590
    %v8359 = vpack.c.b16 %v7603, %v7591
    %v8360 = vpack.c.b16 %v7604, %v7592
    %v8361 = vpack.c.b16 %v7605, %v7593
    %v8362 = vpack.c.b16 %v7606, %v7594
    %v8363 = vpack.c.b16 %v7607, %v7595
    %v8364 = vpack.c.b16 %v7620, %v7608
    %v8365 = vpack.c.b16 %v7621, %v7609
    %v8366 = vpack.c.b16 %v7622, %v7610
    %v8367 = vpack.c.b16 %v7623, %v7611
    %v8368 = vpack.c.b16 %v7624, %v7612
    %v8369 = vpack.c.b16 %v7625, %v7613
    %v8370 = vpack.c.b16 %v7626, %v7614
    %v8371 = vpack.c.b16 %v7627, %v7615
    %v8372 = vpack.c.b16 %v7628, %v7616
    %v8373 = vpack.c.b16 %v7629, %v7617
    %v8374 = vpack.c.b16 %v7630, %v7618
    %v8375 = vpack.c.b16 %v7631, %v7619
    %v8376 = vpack.c.b16 %v7644, %v7632
    %v8377 = vpack.c.b16 %v7645, %v7633
    %v8378 = vpack.c.b16 %v7646, %v7634
    %v8379 = vpack.c.b16 %v7647, %v7635
    %v8380 = vpack.c.b16 %v7648, %v7636
    %v8381 = vpack.c.b16 %v7649, %v7637
    %v8382 = vpack.c.b16 %v7650, %v7638
    %v8383 = vpack.c.b16 %v7651, %v7639
    %v8384 = vpack.c.b16 %v7652, %v7640
    %v8385 = vpack.c.b16 %v7653, %v7641
    %v8386 = vpack.c.b16 %v7654, %v7642
    %v8387 = vpack.c.b16 %v7655, %v7643
    %v8388 = vpack.c.b16 %v7668, %v7656
    %v8389 = vpack.c.b16 %v7669, %v7657
    %v8390 = vpack.c.b16 %v7670, %v7658
    %v8391 = vpack.c.b16 %v7671, %v7659
    %v8392 = vpack.c.b16 %v7672, %v7660
    %v8393 = vpack.c.b16 %v7673, %v7661
    %v8394 = vpack.c.b16 %v7674, %v7662
    %v8395 = vpack.c.b16 %v7675, %v7663
    %v8396 = vpack.c.b16 %v7676, %v7664
    %v8397 = vpack.c.b16 %v7677, %v7665
    %v8398 = vpack.c.b16 %v7678, %v7666
    %v8399 = vpack.c.b16 %v7679, %v7667
    %v8400 = vpack.c.b16 %v7692, %v7680
    %v8401 = vpack.c.b16 %v7693, %v7681
    %v8402 = vpack.c.b16 %v7694, %v7682
    %v8403 = vpack.c.b16 %v7695, %v7683
    %v8404 = vpack.c.b16 %v7696, %v7684
    %v8405 = vpack.c.b16 %v7697, %v7685
    %v8406 = vpack.c.b16 %v7698, %v7686
    %v8407 = vpack.c.b16 %v7699, %v7687
    %v8408 = vpack.c.b16 %v7700, %v7688
    %v8409 = vpack.c.b16 %v7701, %v7689
    %v8410 = vpack.c.b16 %v7702, %v7690
    %v8411 = vpack.c.b16 %v7703, %v7691
    %v8412 = vpack.c.b16 %v7716, %v7704
    %v8413 = vpack.c.b16 %v7717, %v7705
    %v8414 = vpack.c.b16 %v7718, %v7706
    %v8415 = vpack.c.b16 %v7719, %v7707
    %v8416 = vpack.c.b16 %v7720, %v7708
    %v8417 = vpack.c.b16 %v7721, %v7709
    %v8418 = vpack.c.b16 %v7722, %v7710
    %v8419 = vpack.c.b16 %v7723, %v7711
    %v8420 = vpack.c.b16 %v7724, %v7712
    %v8421 = vpack.c.b16 %v7725, %v7713
    %v8422 = vpack.c.b16 %v7726, %v7714
    %v8423 = vpack.c.b16 %v7727, %v7715
    %v8424 = vpack.c.b16 %v7740, %v7728
    %v8425 = vpack.c.b16 %v7741, %v7729
    %v8426 = vpack.c.b16 %v7742, %v7730
    %v8427 = vpack.c.b16 %v7743, %v7731
    %v8428 = vpack.c.b16 %v7744, %v7732
    %v8429 = vpack.c.b16 %v7745, %v7733
    %v8430 = vpack.c.b16 %v7746, %v7734
    %v8431 = vpack.c.b16 %v7747, %v7735
    %v8432 = vpack.c.b16 %v7748, %v7736
    %v8433 = vpack.c.b16 %v7749, %v7737
    %v8434 = vpack.c.b16 %v7750, %v7738
    %v8435 = vpack.c.b16 %v7751, %v7739
    %v8436 = vpack.c.b16 %v7764, %v7752
    %v8437 = vpack.c.b16 %v7765, %v7753
    %v8438 = vpack.c.b16 %v7766, %v7754
    %v8439 = vpack.c.b16 %v7767, %v7755
    %v8440 = vpack.c.b16 %v7768, %v7756
    %v8441 = vpack.c.b16 %v7769, %v7757
    %v8442 = vpack.c.b16 %v7770, %v7758
    %v8443 = vpack.c.b16 %v7771, %v7759
    %v8444 = vpack.c.b16 %v7772, %v7760
    %v8445 = vpack.c.b16 %v7773, %v7761
    %v8446 = vpack.c.b16 %v7774, %v7762
    %v8447 = vpack.c.b16 %v7775, %v7763
    %v8448 = vpack.c.b16 %v7788, %v7776
    %v8449 = vpack.c.b16 %v7789, %v7777
    %v8450 = vpack.c.b16 %v7790, %v7778
    %v8451 = vpack.c.b16 %v7791, %v7779
    %v8452 = vpack.c.b16 %v7792, %v7780
    %v8453 = vpack.c.b16 %v7793, %v7781
    %v8454 = vpack.c.b16 %v7794, %v7782
    %v8455 = vpack.c.b16 %v7795, %v7783
    %v8456 = vpack.c.b16 %v7796, %v7784
    %v8457 = vpack.c.b16 %v7797, %v7785
    %v8458 = vpack.c.b16 %v7798, %v7786
    %v8459 = vpack.c.b16 %v7799, %v7787
    %v8460 = vpack.c.b16 %v7812, %v7800
    %v8461 = vpack.c.b16 %v7813, %v7801
    %v8462 = vpack.c.b16 %v7814, %v7802
    %v8463 = vpack.c.b16 %v7815, %v7803
    %v8464 = vpack.c.b16 %v7816, %v7804
    %v8465 = vpack.c.b16 %v7817, %v7805
    %v8466 = vpack.c.b16 %v7818, %v7806
    %v8467 = vpack.c.b16 %v7819, %v7807
    %v8468 = vpack.c.b16 %v7820, %v7808
    %v8469 = vpack.c.b16 %v7821, %v7809
    %v8470 = vpack.c.b16 %v7822, %v7810
    %v8471 = vpack.c.b16 %v7823, %v7811
    %v8472 = vpack.c.b16 %v7836, %v7824
    %v8473 = vpack.c.b16 %v7837, %v7825
    %v8474 = vpack.c.b16 %v7838, %v7826
    %v8475 = vpack.c.b16 %v7839, %v7827
    %v8476 = vpack.c.b16 %v7840, %v7828
    %v8477 = vpack.c.b16 %v7841, %v7829
    %v8478 = vpack.c.b16 %v7842, %v7830
    %v8479 = vpack.c.b16 %v7843, %v7831
    %v8480 = vpack.c.b16 %v7844, %v7832
    %v8481 = vpack.c.b16 %v7845, %v7833
    %v8482 = vpack.c.b16 %v7846, %v7834
    %v8483 = vpack.c.b16 %v7847, %v7835
    %v8484 = vpack.c.b16 %v7860, %v7848
    %v8485 = vpack.c.b16 %v7861, %v7849
    %v8486 = vpack.c.b16 %v7862, %v7850
    %v8487 = vpack.c.b16 %v7863, %v7851
    %v8488 = vpack.c.b16 %v7864, %v7852
    %v8489 = vpack.c.b16 %v7865, %v7853
    %v8490 = vpack.c.b16 %v7866, %v7854
    %v8491 = vpack.c.b16 %v7867, %v7855
    %v8492 = vpack.c.b16 %v7868, %v7856
    %v8493 = vpack.c.b16 %v7869, %v7857
    %v8494 = vpack.c.b16 %v7870, %v7858
    %v8495 = vpack.c.b16 %v7871, %v7859
    %v8496 = vpack.c.b16 %v7884, %v7872
    %v8497 = vpack.c.b16 %v7885, %v7873
    %v8498 = vpack.c.b16 %v7886, %v7874
    %v8499 = vpack.c.b16 %v7887, %v7875
    %v8500 = vpack.c.b16 %v7888, %v7876
    %v8501 = vpack.c.b16 %v7889, %v7877
    %v8502 = vpack.c.b16 %v7890, %v7878
    %v8503 = vpack.c.b16 %v7891, %v7879
    %v8504 = vpack.c.b16 %v7892, %v7880
    %v8505 = vpack.c.b16 %v7893, %v7881
    %v8506 = vpack.c.b16 %v7894, %v7882
    %v8507 = vpack.c.b16 %v7895, %v7883
    %v8508 = vpack.c.b16 %v7908, %v7896
    %v8509 = vpack.c.b16 %v7909, %v7897
    %v8510 = vpack.c.b16 %v7910, %v7898
    %v8511 = vpack.c.b16 %v7911, %v7899
    %v8512 = vpack.c.b16 %v7912, %v7900
    %v8513 = vpack.c.b16 %v7913, %v7901
    %v8514 = vpack.c.b16 %v7914, %v7902
    %v8515 = vpack.c.b16 %v7915, %v7903
    %v8516 = vpack.c.b16 %v7916, %v7904
    %v8517 = vpack.c.b16 %v7917, %v7905
    %v8518 = vpack.c.b16 %v7918, %v7906
    %v8519 = vpack.c.b16 %v7919, %v7907
    %v8520 = vpack.c.b16 %v7932, %v7920
    %v8521 = vpack.c.b16 %v7933, %v7921
    %v8522 = vpack.c.b16 %v7934, %v7922
    %v8523 = vpack.c.b16 %v7935, %v7923
    %v8524 = vpack.c.b16 %v7936, %v7924
    %v8525 = vpack.c.b16 %v7937, %v7925
    %v8526 = vpack.c.b16 %v7938, %v7926
    %v8527 = vpack.c.b16 %v7939, %v7927
    %v8528 = vpack.c.b16 %v7940, %v7928
    %v8529 = vpack.c.b16 %v7941, %v7929
    %v8530 = vpack.c.b16 %v7942, %v7930
    %v8531 = vpack.c.b16 %v7943, %v7931
    %v8532 = vpack.c.b16 %v7956, %v7944
    %v8533 = vpack.c.b16 %v7957, %v7945
    %v8534 = vpack.c.b16 %v7958, %v7946
    %v8535 = vpack.c.b16 %v7959, %v7947
    %v8536 = vpack.c.b16 %v7960, %v7948
    %v8537 = vpack.c.b16 %v7961, %v7949
    %v8538 = vpack.c.b16 %v7962, %v7950
    %v8539 = vpack.c.b16 %v7963, %v7951
    %v8540 = vpack.c.b16 %v7964, %v7952
    %v8541 = vpack.c.b16 %v7965, %v7953
    %v8542 = vpack.c.b16 %v7966, %v7954
    %v8543 = vpack.c.b16 %v7967, %v7955
    %9120 = vmatprep.subr.bf16.mxu0 %v7969
    %9121 = vmatpush1.bf16.msra.mxu0 %v7968
    %9122 = vmatprep.subr.bf16.mxu0 %v7981
    %9123 = vmatpush1.bf16.msra.mxu0 %v7980
    %9124 = vmatprep.subr.bf16.mxu0 %v7993
    %9125 = vmatpush1.bf16.msra.mxu0 %v7992
    %9126 = vmatprep.subr.bf16.mxu0 %v8005
    %9127 = vmatpush1.bf16.msra.mxu0 %v8004
    %9128 = vmatprep.subr.bf16.mxu0 %v8017
    %9129 = vmatpush1.bf16.msra.mxu0 %v8016
    %9130 = vmatprep.subr.bf16.mxu0 %v8029
    %9131 = vmatpush1.bf16.msra.mxu0 %v8028
    %9132 = vmatprep.subr.bf16.mxu0 %v8041
    %9133 = vmatpush1.bf16.msra.mxu0 %v8040
    %9134 = vmatprep.subr.bf16.mxu0 %v8053
    %9135 = vmatpush1.bf16.msra.mxu0 %v8052
    %9136 = vmatprep.subr.bf16.mxu0 %v8065
    %9137 = vmatpush1.bf16.msra.mxu0 %v8064
    %9138 = vmatprep.subr.bf16.mxu0 %v8077
    %9139 = vmatpush1.bf16.msra.mxu0 %v8076
    %9140 = vmatprep.subr.bf16.mxu0 %v8089
    %9141 = vmatpush1.bf16.msra.mxu0 %v8088
    %9142 = vmatprep.subr.bf16.mxu0 %v8101
    %9143 = vmatpush1.bf16.msra.mxu0 %v8100
    %9144 = vmatprep.subr.bf16.mxu0 %v8113
    %9145 = vmatpush1.bf16.msra.mxu0 %v8112
    %9146 = vmatprep.subr.bf16.mxu0 %v8125
    %9147 = vmatpush1.bf16.msra.mxu0 %v8124
    %9148 = vmatprep.subr.bf16.mxu0 %v8137
    %9149 = vmatpush1.bf16.msra.mxu0 %v8136
    %9150 = vmatprep.subr.bf16.mxu0 %v8149
    %9151 = vmatpush1.bf16.msra.mxu0 %v8148
    %9152 = vmatprep.mubr.bf16.mxu0 %v5595
    %9153 = vmatmul.mubr.bf16.gmra.mrb[0].mxu0 %v5594
    %v9154 = vpop.f32.mrb[0].mxu0
    %v9155 = vadd.f32 %v6183, %v9154
    %v9156 = vpop.f32.mrb[0].mxu0
    %v9157 = vadd.f32 %v6187, %v9156
    %v9158 = vpop.f32.mrb[0].mxu0
    %v9159 = vpop.f32.mrb[0].mxu0
    %9160 = vdwg.mxu0
    %9161 = vmatprep.subr.bf16.mxu0 %v8161
    %9162 = vmatpush1.bf16.msra.mxu0 %v8160
    %9163 = vmatprep.subr.bf16.mxu0 %v8173
    %9164 = vmatpush1.bf16.msra.mxu0 %v8172
    %9165 = vmatprep.subr.bf16.mxu0 %v8185
    %9166 = vmatpush1.bf16.msra.mxu0 %v8184
    %9167 = vmatprep.subr.bf16.mxu0 %v8197
    %9168 = vmatpush1.bf16.msra.mxu0 %v8196
    %9169 = vmatprep.subr.bf16.mxu0 %v8209
    %9170 = vmatpush1.bf16.msra.mxu0 %v8208
    %9171 = vmatprep.subr.bf16.mxu0 %v8221
    %9172 = vmatpush1.bf16.msra.mxu0 %v8220
    %9173 = vmatprep.subr.bf16.mxu0 %v8233
    %9174 = vmatpush1.bf16.msra.mxu0 %v8232
    %9175 = vmatprep.subr.bf16.mxu0 %v8245
    %9176 = vmatpush1.bf16.msra.mxu0 %v8244
    %9177 = vmatprep.subr.bf16.mxu0 %v8257
    %9178 = vmatpush1.bf16.msra.mxu0 %v8256
    %9179 = vmatprep.subr.bf16.mxu0 %v8269
    %9180 = vmatpush1.bf16.msra.mxu0 %v8268
    %9181 = vmatprep.subr.bf16.mxu0 %v8281
    %9182 = vmatpush1.bf16.msra.mxu0 %v8280
    %9183 = vmatprep.subr.bf16.mxu0 %v8293
    %9184 = vmatpush1.bf16.msra.mxu0 %v8292
    %9185 = vmatprep.subr.bf16.mxu0 %v8305
    %9186 = vmatpush1.bf16.msra.mxu0 %v8304
    %9187 = vmatprep.subr.bf16.mxu0 %v8317
    %9188 = vmatpush1.bf16.msra.mxu0 %v8316
    %9189 = vmatprep.subr.bf16.mxu0 %v8329
    %9190 = vmatpush1.bf16.msra.mxu0 %v8328
    %9191 = vmatprep.subr.bf16.mxu0 %v8341
    %9192 = vmatpush1.bf16.msra.mxu0 %v8340
    %9193 = vmatprep.mubr.bf16.mxu0 %v5597
    %9194 = vmatmul.mubr.bf16.gmra.mrb[0].mxu0 %v5596
    %v9195 = vpop.f32.mrb[0].mxu0
    %v9196 = vadd.f32 %v9155, %v9195
    %v9197 = vpop.f32.mrb[0].mxu0
    %v9198 = vadd.f32 %v9157, %v9197
    %v9199 = vpop.f32.mrb[0].mxu0
    %v9200 = vpop.f32.mrb[0].mxu0
    %9201 = vdwg.mxu0
    %9202 = vmatprep.subr.bf16.mxu0 %v8353
    %9203 = vmatpush1.bf16.msra.mxu0 %v8352
    %9204 = vmatprep.subr.bf16.mxu0 %v8365
    %9205 = vmatpush1.bf16.msra.mxu0 %v8364
    %9206 = vmatprep.subr.bf16.mxu0 %v8377
    %9207 = vmatpush1.bf16.msra.mxu0 %v8376
    %9208 = vmatprep.subr.bf16.mxu0 %v8389
    %9209 = vmatpush1.bf16.msra.mxu0 %v8388
    %9210 = vmatprep.subr.bf16.mxu0 %v8401
    %9211 = vmatpush1.bf16.msra.mxu0 %v8400
    %9212 = vmatprep.subr.bf16.mxu0 %v8413
    %9213 = vmatpush1.bf16.msra.mxu0 %v8412
    %9214 = vmatprep.subr.bf16.mxu0 %v8425
    %9215 = vmatpush1.bf16.msra.mxu0 %v8424
    %9216 = vmatprep.subr.bf16.mxu0 %v8437
    %9217 = vmatpush1.bf16.msra.mxu0 %v8436
    %9218 = vmatprep.subr.bf16.mxu0 %v8449
    %9219 = vmatpush1.bf16.msra.mxu0 %v8448
    %9220 = vmatprep.subr.bf16.mxu0 %v8461
    %9221 = vmatpush1.bf16.msra.mxu0 %v8460
    %9222 = vmatprep.subr.bf16.mxu0 %v8473
    %9223 = vmatpush1.bf16.msra.mxu0 %v8472
    %9224 = vmatprep.subr.bf16.mxu0 %v8485
    %9225 = vmatpush1.bf16.msra.mxu0 %v8484
    %9226 = vmatprep.subr.bf16.mxu0 %v8497
    %9227 = vmatpush1.bf16.msra.mxu0 %v8496
    %9228 = vmatprep.subr.bf16.mxu0 %v8509
    %9229 = vmatpush1.bf16.msra.mxu0 %v8508
    %9230 = vmatprep.subr.bf16.mxu0 %v8521
    %9231 = vmatpush1.bf16.msra.mxu0 %v8520
    %9232 = vmatprep.subr.bf16.mxu0 %v8533
    %9233 = vmatpush1.bf16.msra.mxu0 %v8532
    %9234 = vmatprep.mubr.bf16.mxu0 %v5599
    %9235 = vmatmul.mubr.bf16.gmra.mrb[0].mxu0 %v5598
    %v9236 = vpop.f32.mrb[0].mxu0
    %v9237 = vadd.f32 %v9196, %v9236
    %v9238 = vpop.f32.mrb[0].mxu0
    %v9239 = vadd.f32 %v9198, %v9238
    %v9240 = vpop.f32.mrb[0].mxu0
    %v9241 = vpop.f32.mrb[0].mxu0
    %9242 = vdwg.mxu0
    %9243 = vmatprep.subr.bf16.mxu0 %v7971
    %9244 = vmatpush1.bf16.msra.mxu0 %v7970
    %9245 = vmatprep.subr.bf16.mxu0 %v7983
    %9246 = vmatpush1.bf16.msra.mxu0 %v7982
    %9247 = vmatprep.subr.bf16.mxu0 %v7995
    %9248 = vmatpush1.bf16.msra.mxu0 %v7994
    %9249 = vmatprep.subr.bf16.mxu0 %v8007
    %9250 = vmatpush1.bf16.msra.mxu0 %v8006
    %9251 = vmatprep.subr.bf16.mxu0 %v8019
    %9252 = vmatpush1.bf16.msra.mxu0 %v8018
    %9253 = vmatprep.subr.bf16.mxu0 %v8031
    %9254 = vmatpush1.bf16.msra.mxu0 %v8030
    %9255 = vmatprep.subr.bf16.mxu0 %v8043
    %9256 = vmatpush1.bf16.msra.mxu0 %v8042
    %9257 = vmatprep.subr.bf16.mxu0 %v8055
    %9258 = vmatpush1.bf16.msra.mxu0 %v8054
    %9259 = vmatprep.subr.bf16.mxu0 %v8067
    %9260 = vmatpush1.bf16.msra.mxu0 %v8066
    %9261 = vmatprep.subr.bf16.mxu0 %v8079
    %9262 = vmatpush1.bf16.msra.mxu0 %v8078
    %9263 = vmatprep.subr.bf16.mxu0 %v8091
    %9264 = vmatpush1.bf16.msra.mxu0 %v8090
    %9265 = vmatprep.subr.bf16.mxu0 %v8103
    %9266 = vmatpush1.bf16.msra.mxu0 %v8102
    %9267 = vmatprep.subr.bf16.mxu0 %v8115
    %9268 = vmatpush1.bf16.msra.mxu0 %v8114
    %9269 = vmatprep.subr.bf16.mxu0 %v8127
    %9270 = vmatpush1.bf16.msra.mxu0 %v8126
    %9271 = vmatprep.subr.bf16.mxu0 %v8139
    %9272 = vmatpush1.bf16.msra.mxu0 %v8138
    %9273 = vmatprep.subr.bf16.mxu0 %v8151
    %9274 = vmatpush1.bf16.msra.mxu0 %v8150
    %9275 = vmatprep.mubr.bf16.mxu0 %v5595
    %9276 = vmatmul.mubr.bf16.gmra.mrb[0].mxu0 %v5594
    %v9277 = vpop.f32.mrb[0].mxu0
    %v9278 = vadd.f32 %v6191, %v9277
    %v9279 = vpop.f32.mrb[0].mxu0
    %v9280 = vadd.f32 %v6195, %v9279
    %v9281 = vpop.f32.mrb[0].mxu0
    %v9282 = vpop.f32.mrb[0].mxu0
    %9283 = vdwg.mxu0
    %9284 = vmatprep.subr.bf16.mxu0 %v8163
    %9285 = vmatpush1.bf16.msra.mxu0 %v8162
    %9286 = vmatprep.subr.bf16.mxu0 %v8175
    %9287 = vmatpush1.bf16.msra.mxu0 %v8174
    %9288 = vmatprep.subr.bf16.mxu0 %v8187
    %9289 = vmatpush1.bf16.msra.mxu0 %v8186
    %9290 = vmatprep.subr.bf16.mxu0 %v8199
    %9291 = vmatpush1.bf16.msra.mxu0 %v8198
    %9292 = vmatprep.subr.bf16.mxu0 %v8211
    %9293 = vmatpush1.bf16.msra.mxu0 %v8210
    %9294 = vmatprep.subr.bf16.mxu0 %v8223
    %9295 = vmatpush1.bf16.msra.mxu0 %v8222
    %9296 = vmatprep.subr.bf16.mxu0 %v8235
    %9297 = vmatpush1.bf16.msra.mxu0 %v8234
    %9298 = vmatprep.subr.bf16.mxu0 %v8247
    %9299 = vmatpush1.bf16.msra.mxu0 %v8246
    %9300 = vmatprep.subr.bf16.mxu0 %v8259
    %9301 = vmatpush1.bf16.msra.mxu0 %v8258
    %9302 = vmatprep.subr.bf16.mxu0 %v8271
    %9303 = vmatpush1.bf16.msra.mxu0 %v8270
    %9304 = vmatprep.subr.bf16.mxu0 %v8283
    %9305 = vmatpush1.bf16.msra.mxu0 %v8282
    %9306 = vmatprep.subr.bf16.mxu0 %v8295
    %9307 = vmatpush1.bf16.msra.mxu0 %v8294
    %9308 = vmatprep.subr.bf16.mxu0 %v8307
    %9309 = vmatpush1.bf16.msra.mxu0 %v8306
    %9310 = vmatprep.subr.bf16.mxu0 %v8319
    %9311 = vmatpush1.bf16.msra.mxu0 %v8318
    %9312 = vmatprep.subr.bf16.mxu0 %v8331
    %9313 = vmatpush1.bf16.msra.mxu0 %v8330
    %9314 = vmatprep.subr.bf16.mxu0 %v8343
    %9315 = vmatpush1.bf16.msra.mxu0 %v8342
    %9316 = vmatprep.mubr.bf16.mxu0 %v5597
    %9317 = vmatmul.mubr.bf16.gmra.mrb[0].mxu0 %v5596
    %v9318 = vpop.f32.mrb[0].mxu0
    %v9319 = vadd.f32 %v9278, %v9318
    %v9320 = vpop.f32.mrb[0].mxu0
    %v9321 = vadd.f32 %v9280, %v9320
    %v9322 = vpop.f32.mrb[0].mxu0
    %v9323 = vpop.f32.mrb[0].mxu0
    %9324 = vdwg.mxu0
    %9325 = vmatprep.subr.bf16.mxu0 %v8355
    %9326 = vmatpush1.bf16.msra.mxu0 %v8354
    %9327 = vmatprep.subr.bf16.mxu0 %v8367
    %9328 = vmatpush1.bf16.msra.mxu0 %v8366
    %9329 = vmatprep.subr.bf16.mxu0 %v8379
    %9330 = vmatpush1.bf16.msra.mxu0 %v8378
    %9331 = vmatprep.subr.bf16.mxu0 %v8391
    %9332 = vmatpush1.bf16.msra.mxu0 %v8390
    %9333 = vmatprep.subr.bf16.mxu0 %v8403
    %9334 = vmatpush1.bf16.msra.mxu0 %v8402
    %9335 = vmatprep.subr.bf16.mxu0 %v8415
    %9336 = vmatpush1.bf16.msra.mxu0 %v8414
    %9337 = vmatprep.subr.bf16.mxu0 %v8427
    %9338 = vmatpush1.bf16.msra.mxu0 %v8426
    %9339 = vmatprep.subr.bf16.mxu0 %v8439
    %9340 = vmatpush1.bf16.msra.mxu0 %v8438
    %9341 = vmatprep.subr.bf16.mxu0 %v8451
    %9342 = vmatpush1.bf16.msra.mxu0 %v8450
    %9343 = vmatprep.subr.bf16.mxu0 %v8463
    %9344 = vmatpush1.bf16.msra.mxu0 %v8462
    %9345 = vmatprep.subr.bf16.mxu0 %v8475
    %9346 = vmatpush1.bf16.msra.mxu0 %v8474
    %9347 = vmatprep.subr.bf16.mxu0 %v8487
    %9348 = vmatpush1.bf16.msra.mxu0 %v8486
    %9349 = vmatprep.subr.bf16.mxu0 %v8499
    %9350 = vmatpush1.bf16.msra.mxu0 %v8498
    %9351 = vmatprep.subr.bf16.mxu0 %v8511
    %9352 = vmatpush1.bf16.msra.mxu0 %v8510
    %9353 = vmatprep.subr.bf16.mxu0 %v8523
    %9354 = vmatpush1.bf16.msra.mxu0 %v8522
    %9355 = vmatprep.subr.bf16.mxu0 %v8535
    %9356 = vmatpush1.bf16.msra.mxu0 %v8534
    %9357 = vmatprep.mubr.bf16.mxu0 %v5599
    %9358 = vmatmul.mubr.bf16.gmra.mrb[0].mxu0 %v5598
    %v9359 = vpop.f32.mrb[0].mxu0
    %v9360 = vadd.f32 %v9319, %v9359
    %v9361 = vpop.f32.mrb[0].mxu0
    %v9362 = vadd.f32 %v9321, %v9361
    %v9363 = vpop.f32.mrb[0].mxu0
    %v9364 = vpop.f32.mrb[0].mxu0
    %9365 = vdwg.mxu0
    %9366 = vmatprep.subr.bf16.mxu0 %v7973
    %9367 = vmatpush1.bf16.msra.mxu0 %v7972
    %9368 = vmatprep.subr.bf16.mxu0 %v7985
    %9369 = vmatpush1.bf16.msra.mxu0 %v7984
    %9370 = vmatprep.subr.bf16.mxu0 %v7997
    %9371 = vmatpush1.bf16.msra.mxu0 %v7996
    %9372 = vmatprep.subr.bf16.mxu0 %v8009
    %9373 = vmatpush1.bf16.msra.mxu0 %v8008
    %9374 = vmatprep.subr.bf16.mxu0 %v8021
    %9375 = vmatpush1.bf16.msra.mxu0 %v8020
    %9376 = vmatprep.subr.bf16.mxu0 %v8033
    %9377 = vmatpush1.bf16.msra.mxu0 %v8032
    %9378 = vmatprep.subr.bf16.mxu0 %v8045
    %9379 = vmatpush1.bf16.msra.mxu0 %v8044
    %9380 = vmatprep.subr.bf16.mxu0 %v8057
    %9381 = vmatpush1.bf16.msra.mxu0 %v8056
    %9382 = vmatprep.subr.bf16.mxu0 %v8069
    %9383 = vmatpush1.bf16.msra.mxu0 %v8068
    %9384 = vmatprep.subr.bf16.mxu0 %v8081
    %9385 = vmatpush1.bf16.msra.mxu0 %v8080
    %9386 = vmatprep.subr.bf16.mxu0 %v8093
    %9387 = vmatpush1.bf16.msra.mxu0 %v8092
    %9388 = vmatprep.subr.bf16.mxu0 %v8105
    %9389 = vmatpush1.bf16.msra.mxu0 %v8104
    %9390 = vmatprep.subr.bf16.mxu0 %v8117
    %9391 = vmatpush1.bf16.msra.mxu0 %v8116
    %9392 = vmatprep.subr.bf16.mxu0 %v8129
    %9393 = vmatpush1.bf16.msra.mxu0 %v8128
    %9394 = vmatprep.subr.bf16.mxu0 %v8141
    %9395 = vmatpush1.bf16.msra.mxu0 %v8140
    %9396 = vmatprep.subr.bf16.mxu0 %v8153
    %9397 = vmatpush1.bf16.msra.mxu0 %v8152
    %9398 = vmatprep.mubr.bf16.mxu0 %v5595
    %9399 = vmatmul.mubr.bf16.gmra.mrb[0].mxu0 %v5594
    %v9400 = vpop.f32.mrb[0].mxu0
    %v9401 = vadd.f32 %v6199, %v9400
    %v9402 = vpop.f32.mrb[0].mxu0
    %v9403 = vadd.f32 %v6203, %v9402
    %v9404 = vpop.f32.mrb[0].mxu0
    %v9405 = vpop.f32.mrb[0].mxu0
    %9406 = vdwg.mxu0
    %9407 = vmatprep.subr.bf16.mxu0 %v8165
    %9408 = vmatpush1.bf16.msra.mxu0 %v8164
    %9409 = vmatprep.subr.bf16.mxu0 %v8177
    %9410 = vmatpush1.bf16.msra.mxu0 %v8176
    %9411 = vmatprep.subr.bf16.mxu0 %v8189
    %9412 = vmatpush1.bf16.msra.mxu0 %v8188
    %9413 = vmatprep.subr.bf16.mxu0 %v8201
    %9414 = vmatpush1.bf16.msra.mxu0 %v8200
    %9415 = vmatprep.subr.bf16.mxu0 %v8213
    %9416 = vmatpush1.bf16.msra.mxu0 %v8212
    %9417 = vmatprep.subr.bf16.mxu0 %v8225
    %9418 = vmatpush1.bf16.msra.mxu0 %v8224
    %9419 = vmatprep.subr.bf16.mxu0 %v8237
    %9420 = vmatpush1.bf16.msra.mxu0 %v8236
    %9421 = vmatprep.subr.bf16.mxu0 %v8249
    %9422 = vmatpush1.bf16.msra.mxu0 %v8248
    %9423 = vmatprep.subr.bf16.mxu0 %v8261
    %9424 = vmatpush1.bf16.msra.mxu0 %v8260
    %9425 = vmatprep.subr.bf16.mxu0 %v8273
    %9426 = vmatpush1.bf16.msra.mxu0 %v8272
    %9427 = vmatprep.subr.bf16.mxu0 %v8285
    %9428 = vmatpush1.bf16.msra.mxu0 %v8284
    %9429 = vmatprep.subr.bf16.mxu0 %v8297
    %9430 = vmatpush1.bf16.msra.mxu0 %v8296
    %9431 = vmatprep.subr.bf16.mxu0 %v8309
    %9432 = vmatpush1.bf16.msra.mxu0 %v8308
    %9433 = vmatprep.subr.bf16.mxu0 %v8321
    %9434 = vmatpush1.bf16.msra.mxu0 %v8320
    %9435 = vmatprep.subr.bf16.mxu0 %v8333
    %9436 = vmatpush1.bf16.msra.mxu0 %v8332
    %9437 = vmatprep.subr.bf16.mxu0 %v8345
    %9438 = vmatpush1.bf16.msra.mxu0 %v8344
    %9439 = vmatprep.mubr.bf16.mxu0 %v5597
    %9440 = vmatmul.mubr.bf16.gmra.mrb[0].mxu0 %v5596
    %v9441 = vpop.f32.mrb[0].mxu0
    %v9442 = vadd.f32 %v9401, %v9441
    %v9443 = vpop.f32.mrb[0].mxu0
    %v9444 = vadd.f32 %v9403, %v9443
    %v9445 = vpop.f32.mrb[0].mxu0
    %v9446 = vpop.f32.mrb[0].mxu0
    %9447 = vdwg.mxu0
    %9448 = vmatprep.subr.bf16.mxu0 %v8357
    %9449 = vmatpush1.bf16.msra.mxu0 %v8356
    %9450 = vmatprep.subr.bf16.mxu0 %v8369
    %9451 = vmatpush1.bf16.msra.mxu0 %v8368
    %9452 = vmatprep.subr.bf16.mxu0 %v8381
    %9453 = vmatpush1.bf16.msra.mxu0 %v8380
    %9454 = vmatprep.subr.bf16.mxu0 %v8393
    %9455 = vmatpush1.bf16.msra.mxu0 %v8392
    %9456 = vmatprep.subr.bf16.mxu0 %v8405
    %9457 = vmatpush1.bf16.msra.mxu0 %v8404
    %9458 = vmatprep.subr.bf16.mxu0 %v8417
    %9459 = vmatpush1.bf16.msra.mxu0 %v8416
    %9460 = vmatprep.subr.bf16.mxu0 %v8429
    %9461 = vmatpush1.bf16.msra.mxu0 %v8428
    %9462 = vmatprep.subr.bf16.mxu0 %v8441
    %9463 = vmatpush1.bf16.msra.mxu0 %v8440
    %9464 = vmatprep.subr.bf16.mxu0 %v8453
    %9465 = vmatpush1.bf16.msra.mxu0 %v8452
    %9466 = vmatprep.subr.bf16.mxu0 %v8465
    %9467 = vmatpush1.bf16.msra.mxu0 %v8464
    %9468 = vmatprep.subr.bf16.mxu0 %v8477
    %9469 = vmatpush1.bf16.msra.mxu0 %v8476
    %9470 = vmatprep.subr.bf16.mxu0 %v8489
    %9471 = vmatpush1.bf16.msra.mxu0 %v8488
    %9472 = vmatprep.subr.bf16.mxu0 %v8501
    %9473 = vmatpush1.bf16.msra.mxu0 %v8500
    %9474 = vmatprep.subr.bf16.mxu0 %v8513
    %9475 = vmatpush1.bf16.msra.mxu0 %v8512
    %9476 = vmatprep.subr.bf16.mxu0 %v8525
    %9477 = vmatpush1.bf16.msra.mxu0 %v8524
    %9478 = vmatprep.subr.bf16.mxu0 %v8537
    %9479 = vmatpush1.bf16.msra.mxu0 %v8536
    %9480 = vmatprep.mubr.bf16.mxu0 %v5599
    %9481 = vmatmul.mubr.bf16.gmra.mrb[0].mxu0 %v5598
    %v9482 = vpop.f32.mrb[0].mxu0
    %v9483 = vadd.f32 %v9442, %v9482
    %v9484 = vpop.f32.mrb[0].mxu0
    %v9485 = vadd.f32 %v9444, %v9484
    %v9486 = vpop.f32.mrb[0].mxu0
    %v9487 = vpop.f32.mrb[0].mxu0
    %9488 = vdwg.mxu0
    %9489 = vmatprep.subr.bf16.mxu0 %v7975
    %9490 = vmatpush1.bf16.msra.mxu0 %v7974
    %9491 = vmatprep.subr.bf16.mxu0 %v7987
    %9492 = vmatpush1.bf16.msra.mxu0 %v7986
    %9493 = vmatprep.subr.bf16.mxu0 %v7999
    %9494 = vmatpush1.bf16.msra.mxu0 %v7998
    %9495 = vmatprep.subr.bf16.mxu0 %v8011
    %9496 = vmatpush1.bf16.msra.mxu0 %v8010
    %9497 = vmatprep.subr.bf16.mxu0 %v8023
    %9498 = vmatpush1.bf16.msra.mxu0 %v8022
    %9499 = vmatprep.subr.bf16.mxu0 %v8035
    %9500 = vmatpush1.bf16.msra.mxu0 %v8034
    %9501 = vmatprep.subr.bf16.mxu0 %v8047
    %9502 = vmatpush1.bf16.msra.mxu0 %v8046
    %9503 = vmatprep.subr.bf16.mxu0 %v8059
    %9504 = vmatpush1.bf16.msra.mxu0 %v8058
    %9505 = vmatprep.subr.bf16.mxu0 %v8071
    %9506 = vmatpush1.bf16.msra.mxu0 %v8070
    %9507 = vmatprep.subr.bf16.mxu0 %v8083
    %9508 = vmatpush1.bf16.msra.mxu0 %v8082
    %9509 = vmatprep.subr.bf16.mxu0 %v8095
    %9510 = vmatpush1.bf16.msra.mxu0 %v8094
    %9511 = vmatprep.subr.bf16.mxu0 %v8107
    %9512 = vmatpush1.bf16.msra.mxu0 %v8106
    %9513 = vmatprep.subr.bf16.mxu0 %v8119
    %9514 = vmatpush1.bf16.msra.mxu0 %v8118
    %9515 = vmatprep.subr.bf16.mxu0 %v8131
    %9516 = vmatpush1.bf16.msra.mxu0 %v8130
    %9517 = vmatprep.subr.bf16.mxu0 %v8143
    %9518 = vmatpush1.bf16.msra.mxu0 %v8142
    %9519 = vmatprep.subr.bf16.mxu0 %v8155
    %9520 = vmatpush1.bf16.msra.mxu0 %v8154
    %9521 = vmatprep.mubr.bf16.mxu0 %v5595
    %9522 = vmatmul.mubr.bf16.gmra.mrb[0].mxu0 %v5594
    %v9523 = vpop.f32.mrb[0].mxu0
    %v9524 = vadd.f32 %v6207, %v9523
    %v9525 = vpop.f32.mrb[0].mxu0
    %v9526 = vadd.f32 %v6211, %v9525
    %v9527 = vpop.f32.mrb[0].mxu0
    %v9528 = vpop.f32.mrb[0].mxu0
    %9529 = vdwg.mxu0
    %9530 = vmatprep.subr.bf16.mxu0 %v8167
    %9531 = vmatpush1.bf16.msra.mxu0 %v8166
    %9532 = vmatprep.subr.bf16.mxu0 %v8179
    %9533 = vmatpush1.bf16.msra.mxu0 %v8178
    %9534 = vmatprep.subr.bf16.mxu0 %v8191
    %9535 = vmatpush1.bf16.msra.mxu0 %v8190
    %9536 = vmatprep.subr.bf16.mxu0 %v8203
    %9537 = vmatpush1.bf16.msra.mxu0 %v8202
    %9538 = vmatprep.subr.bf16.mxu0 %v8215
    %9539 = vmatpush1.bf16.msra.mxu0 %v8214
    %9540 = vmatprep.subr.bf16.mxu0 %v8227
    %9541 = vmatpush1.bf16.msra.mxu0 %v8226
    %9542 = vmatprep.subr.bf16.mxu0 %v8239
    %9543 = vmatpush1.bf16.msra.mxu0 %v8238
    %9544 = vmatprep.subr.bf16.mxu0 %v8251
    %9545 = vmatpush1.bf16.msra.mxu0 %v8250
    %9546 = vmatprep.subr.bf16.mxu0 %v8263
    %9547 = vmatpush1.bf16.msra.mxu0 %v8262
    %9548 = vmatprep.subr.bf16.mxu0 %v8275
    %9549 = vmatpush1.bf16.msra.mxu0 %v8274
    %9550 = vmatprep.subr.bf16.mxu0 %v8287
    %9551 = vmatpush1.bf16.msra.mxu0 %v8286
    %9552 = vmatprep.subr.bf16.mxu0 %v8299
    %9553 = vmatpush1.bf16.msra.mxu0 %v8298
    %9554 = vmatprep.subr.bf16.mxu0 %v8311
    %9555 = vmatpush1.bf16.msra.mxu0 %v8310
    %9556 = vmatprep.subr.bf16.mxu0 %v8323
    %9557 = vmatpush1.bf16.msra.mxu0 %v8322
    %9558 = vmatprep.subr.bf16.mxu0 %v8335
    %9559 = vmatpush1.bf16.msra.mxu0 %v8334
    %9560 = vmatprep.subr.bf16.mxu0 %v8347
    %9561 = vmatpush1.bf16.msra.mxu0 %v8346
    %9562 = vmatprep.mubr.bf16.mxu0 %v5597
    %9563 = vmatmul.mubr.bf16.gmra.mrb[0].mxu0 %v5596
    %v9564 = vpop.f32.mrb[0].mxu0
    %v9565 = vadd.f32 %v9524, %v9564
    %v9566 = vpop.f32.mrb[0].mxu0
    %v9567 = vadd.f32 %v9526, %v9566
    %v9568 = vpop.f32.mrb[0].mxu0
    %v9569 = vpop.f32.mrb[0].mxu0
    %9570 = vdwg.mxu0
    %9571 = vmatprep.subr.bf16.mxu0 %v8359
    %9572 = vmatpush1.bf16.msra.mxu0 %v8358
    %9573 = vmatprep.subr.bf16.mxu0 %v8371
    %9574 = vmatpush1.bf16.msra.mxu0 %v8370
    %9575 = vmatprep.subr.bf16.mxu0 %v8383
    %9576 = vmatpush1.bf16.msra.mxu0 %v8382
    %9577 = vmatprep.subr.bf16.mxu0 %v8395
    %9578 = vmatpush1.bf16.msra.mxu0 %v8394
    %9579 = vmatprep.subr.bf16.mxu0 %v8407
    %9580 = vmatpush1.bf16.msra.mxu0 %v8406
    %9581 = vmatprep.subr.bf16.mxu0 %v8419
    %9582 = vmatpush1.bf16.msra.mxu0 %v8418
    %9583 = vmatprep.subr.bf16.mxu0 %v8431
    %9584 = vmatpush1.bf16.msra.mxu0 %v8430
    %9585 = vmatprep.subr.bf16.mxu0 %v8443
    %9586 = vmatpush1.bf16.msra.mxu0 %v8442
    %9587 = vmatprep.subr.bf16.mxu0 %v8455
    %9588 = vmatpush1.bf16.msra.mxu0 %v8454
    %9589 = vmatprep.subr.bf16.mxu0 %v8467
    %9590 = vmatpush1.bf16.msra.mxu0 %v8466
    %9591 = vmatprep.subr.bf16.mxu0 %v8479
    %9592 = vmatpush1.bf16.msra.mxu0 %v8478
    %9593 = vmatprep.subr.bf16.mxu0 %v8491
    %9594 = vmatpush1.bf16.msra.mxu0 %v8490
    %9595 = vmatprep.subr.bf16.mxu0 %v8503
    %9596 = vmatpush1.bf16.msra.mxu0 %v8502
    %9597 = vmatprep.subr.bf16.mxu0 %v8515
    %9598 = vmatpush1.bf16.msra.mxu0 %v8514
    %9599 = vmatprep.subr.bf16.mxu0 %v8527
    %9600 = vmatpush1.bf16.msra.mxu0 %v8526
    %9601 = vmatprep.subr.bf16.mxu0 %v8539
    %9602 = vmatpush1.bf16.msra.mxu0 %v8538
    %9603 = vmatprep.mubr.bf16.mxu0 %v5599
    %9604 = vmatmul.mubr.bf16.gmra.mrb[0].mxu0 %v5598
    %v9605 = vpop.f32.mrb[0].mxu0
    %v9606 = vadd.f32 %v9565, %v9605
    %v9607 = vpop.f32.mrb[0].mxu0
    %v9608 = vadd.f32 %v9567, %v9607
    %v9609 = vpop.f32.mrb[0].mxu0
    %v9610 = vpop.f32.mrb[0].mxu0
    %9611 = vdwg.mxu0
    %9612 = vmatprep.subr.bf16.mxu0 %v7977
    %9613 = vmatpush1.bf16.msra.mxu0 %v7976
    %9614 = vmatprep.subr.bf16.mxu0 %v7989
    %9615 = vmatpush1.bf16.msra.mxu0 %v7988
    %9616 = vmatprep.subr.bf16.mxu0 %v8001
    %9617 = vmatpush1.bf16.msra.mxu0 %v8000
    %9618 = vmatprep.subr.bf16.mxu0 %v8013
    %9619 = vmatpush1.bf16.msra.mxu0 %v8012
    %9620 = vmatprep.subr.bf16.mxu0 %v8025
    %9621 = vmatpush1.bf16.msra.mxu0 %v8024
    %9622 = vmatprep.subr.bf16.mxu0 %v8037
    %9623 = vmatpush1.bf16.msra.mxu0 %v8036
    %9624 = vmatprep.subr.bf16.mxu0 %v8049
    %9625 = vmatpush1.bf16.msra.mxu0 %v8048
    %9626 = vmatprep.subr.bf16.mxu0 %v8061
    %9627 = vmatpush1.bf16.msra.mxu0 %v8060
    %9628 = vmatprep.subr.bf16.mxu0 %v8073
    %9629 = vmatpush1.bf16.msra.mxu0 %v8072
    %9630 = vmatprep.subr.bf16.mxu0 %v8085
    %9631 = vmatpush1.bf16.msra.mxu0 %v8084
    %9632 = vmatprep.subr.bf16.mxu0 %v8097
    %9633 = vmatpush1.bf16.msra.mxu0 %v8096
    %9634 = vmatprep.subr.bf16.mxu0 %v8109
    %9635 = vmatpush1.bf16.msra.mxu0 %v8108
    %9636 = vmatprep.subr.bf16.mxu0 %v8121
    %9637 = vmatpush1.bf16.msra.mxu0 %v8120
    %9638 = vmatprep.subr.bf16.mxu0 %v8133
    %9639 = vmatpush1.bf16.msra.mxu0 %v8132
    %9640 = vmatprep.subr.bf16.mxu0 %v8145
    %9641 = vmatpush1.bf16.msra.mxu0 %v8144
    %9642 = vmatprep.subr.bf16.mxu0 %v8157
    %9643 = vmatpush1.bf16.msra.mxu0 %v8156
    %9644 = vmatprep.mubr.bf16.mxu0 %v5595
    %9645 = vmatmul.mubr.bf16.gmra.mrb[0].mxu0 %v5594
    %v9646 = vpop.f32.mrb[0].mxu0
    %v9647 = vadd.f32 %v6215, %v9646
    %v9648 = vpop.f32.mrb[0].mxu0
    %v9649 = vadd.f32 %v6219, %v9648
    %v9650 = vpop.f32.mrb[0].mxu0
    %v9651 = vpop.f32.mrb[0].mxu0
    %9652 = vdwg.mxu0
    %9653 = vmatprep.subr.bf16.mxu0 %v8169
    %9654 = vmatpush1.bf16.msra.mxu0 %v8168
    %9655 = vmatprep.subr.bf16.mxu0 %v8181
    %9656 = vmatpush1.bf16.msra.mxu0 %v8180
    %9657 = vmatprep.subr.bf16.mxu0 %v8193
    %9658 = vmatpush1.bf16.msra.mxu0 %v8192
    %9659 = vmatprep.subr.bf16.mxu0 %v8205
    %9660 = vmatpush1.bf16.msra.mxu0 %v8204
    %9661 = vmatprep.subr.bf16.mxu0 %v8217
    %9662 = vmatpush1.bf16.msra.mxu0 %v8216
    %9663 = vmatprep.subr.bf16.mxu0 %v8229
    %9664 = vmatpush1.bf16.msra.mxu0 %v8228
    %9665 = vmatprep.subr.bf16.mxu0 %v8241
    %9666 = vmatpush1.bf16.msra.mxu0 %v8240
    %9667 = vmatprep.subr.bf16.mxu0 %v8253
    %9668 = vmatpush1.bf16.msra.mxu0 %v8252
    %9669 = vmatprep.subr.bf16.mxu0 %v8265
    %9670 = vmatpush1.bf16.msra.mxu0 %v8264
    %9671 = vmatprep.subr.bf16.mxu0 %v8277
    %9672 = vmatpush1.bf16.msra.mxu0 %v8276
    %9673 = vmatprep.subr.bf16.mxu0 %v8289
    %9674 = vmatpush1.bf16.msra.mxu0 %v8288
    %9675 = vmatprep.subr.bf16.mxu0 %v8301
    %9676 = vmatpush1.bf16.msra.mxu0 %v8300
    %9677 = vmatprep.subr.bf16.mxu0 %v8313
    %9678 = vmatpush1.bf16.msra.mxu0 %v8312
    %9679 = vmatprep.subr.bf16.mxu0 %v8325
    %9680 = vmatpush1.bf16.msra.mxu0 %v8324
    %9681 = vmatprep.subr.bf16.mxu0 %v8337
    %9682 = vmatpush1.bf16.msra.mxu0 %v8336
    %9683 = vmatprep.subr.bf16.mxu0 %v8349
    %9684 = vmatpush1.bf16.msra.mxu0 %v8348
    %9685 = vmatprep.mubr.bf16.mxu0 %v5597
    %9686 = vmatmul.mubr.bf16.gmra.mrb[0].mxu0 %v5596
    %v9687 = vpop.f32.mrb[0].mxu0
    %v9688 = vadd.f32 %v9647, %v9687
    %v9689 = vpop.f32.mrb[0].mxu0
    %v9690 = vadd.f32 %v9649, %v9689
    %v9691 = vpop.f32.mrb[0].mxu0
    %v9692 = vpop.f32.mrb[0].mxu0
    %9693 = vdwg.mxu0
    %9694 = vmatprep.subr.bf16.mxu0 %v8361
    %9695 = vmatpush1.bf16.msra.mxu0 %v8360
    %9696 = vmatprep.subr.bf16.mxu0 %v8373
    %9697 = vmatpush1.bf16.msra.mxu0 %v8372
    %9698 = vmatprep.subr.bf16.mxu0 %v8385
    %9699 = vmatpush1.bf16.msra.mxu0 %v8384
    %9700 = vmatprep.subr.bf16.mxu0 %v8397
    %9701 = vmatpush1.bf16.msra.mxu0 %v8396
    %9702 = vmatprep.subr.bf16.mxu0 %v8409
    %9703 = vmatpush1.bf16.msra.mxu0 %v8408
    %9704 = vmatprep.subr.bf16.mxu0 %v8421
    %9705 = vmatpush1.bf16.msra.mxu0 %v8420
    %9706 = vmatprep.subr.bf16.mxu0 %v8433
    %9707 = vmatpush1.bf16.msra.mxu0 %v8432
    %9708 = vmatprep.subr.bf16.mxu0 %v8445
    %9709 = vmatpush1.bf16.msra.mxu0 %v8444
    %9710 = vmatprep.subr.bf16.mxu0 %v8457
    %9711 = vmatpush1.bf16.msra.mxu0 %v8456
    %9712 = vmatprep.subr.bf16.mxu0 %v8469
    %9713 = vmatpush1.bf16.msra.mxu0 %v8468
    %9714 = vmatprep.subr.bf16.mxu0 %v8481
    %9715 = vmatpush1.bf16.msra.mxu0 %v8480
    %9716 = vmatprep.subr.bf16.mxu0 %v8493
    %9717 = vmatpush1.bf16.msra.mxu0 %v8492
    %9718 = vmatprep.subr.bf16.mxu0 %v8505
    %9719 = vmatpush1.bf16.msra.mxu0 %v8504
    %9720 = vmatprep.subr.bf16.mxu0 %v8517
    %9721 = vmatpush1.bf16.msra.mxu0 %v8516
    %9722 = vmatprep.subr.bf16.mxu0 %v8529
    %9723 = vmatpush1.bf16.msra.mxu0 %v8528
    %9724 = vmatprep.subr.bf16.mxu0 %v8541
    %9725 = vmatpush1.bf16.msra.mxu0 %v8540
    %9726 = vmatprep.mubr.bf16.mxu0 %v5599
    %9727 = vmatmul.mubr.bf16.gmra.mrb[0].mxu0 %v5598
    %v9728 = vpop.f32.mrb[0].mxu0
    %v9729 = vadd.f32 %v9688, %v9728
    %v9730 = vpop.f32.mrb[0].mxu0
    %v9731 = vadd.f32 %v9690, %v9730
    %v9732 = vpop.f32.mrb[0].mxu0
    %v9733 = vpop.f32.mrb[0].mxu0
    %9734 = vdwg.mxu0
    %9735 = vmatprep.subr.bf16.mxu0 %v7979
    %9736 = vmatpush1.bf16.msra.mxu0 %v7978
    %9737 = vmatprep.subr.bf16.mxu0 %v7991
    %9738 = vmatpush1.bf16.msra.mxu0 %v7990
    %9739 = vmatprep.subr.bf16.mxu0 %v8003
    %9740 = vmatpush1.bf16.msra.mxu0 %v8002
    %9741 = vmatprep.subr.bf16.mxu0 %v8015
    %9742 = vmatpush1.bf16.msra.mxu0 %v8014
    %9743 = vmatprep.subr.bf16.mxu0 %v8027
    %9744 = vmatpush1.bf16.msra.mxu0 %v8026
    %9745 = vmatprep.subr.bf16.mxu0 %v8039
    %9746 = vmatpush1.bf16.msra.mxu0 %v8038
    %9747 = vmatprep.subr.bf16.mxu0 %v8051
    %9748 = vmatpush1.bf16.msra.mxu0 %v8050
    %9749 = vmatprep.subr.bf16.mxu0 %v8063
    %9750 = vmatpush1.bf16.msra.mxu0 %v8062
    %9751 = vmatprep.subr.bf16.mxu0 %v8075
    %9752 = vmatpush1.bf16.msra.mxu0 %v8074
    %9753 = vmatprep.subr.bf16.mxu0 %v8087
    %9754 = vmatpush1.bf16.msra.mxu0 %v8086
    %9755 = vmatprep.subr.bf16.mxu0 %v8099
    %9756 = vmatpush1.bf16.msra.mxu0 %v8098
    %9757 = vmatprep.subr.bf16.mxu0 %v8111
    %9758 = vmatpush1.bf16.msra.mxu0 %v8110
    %9759 = vmatprep.subr.bf16.mxu0 %v8123
    %9760 = vmatpush1.bf16.msra.mxu0 %v8122
    %9761 = vmatprep.subr.bf16.mxu0 %v8135
    %9762 = vmatpush1.bf16.msra.mxu0 %v8134
    %9763 = vmatprep.subr.bf16.mxu0 %v8147
    %9764 = vmatpush1.bf16.msra.mxu0 %v8146
    %9765 = vmatprep.subr.bf16.mxu0 %v8159
    %9766 = vmatpush1.bf16.msra.mxu0 %v8158
    %9767 = vmatprep.mubr.bf16.mxu0 %v5595
    %9768 = vmatmul.mubr.bf16.gmra.mrb[0].mxu0 %v5594
    %v9769 = vpop.f32.mrb[0].mxu0
    %v9770 = vadd.f32 %v6223, %v9769
    %v9771 = vpop.f32.mrb[0].mxu0
    %v9772 = vadd.f32 %v6227, %v9771
    %v9773 = vpop.f32.mrb[0].mxu0
    %v9774 = vpop.f32.mrb[0].mxu0
    %9775 = vdwg.mxu0
    %9776 = vmatprep.subr.bf16.mxu0 %v8171
    %9777 = vmatpush1.bf16.msra.mxu0 %v8170
    %9778 = vmatprep.subr.bf16.mxu0 %v8183
    %9779 = vmatpush1.bf16.msra.mxu0 %v8182
    %9780 = vmatprep.subr.bf16.mxu0 %v8195
    %9781 = vmatpush1.bf16.msra.mxu0 %v8194
    %9782 = vmatprep.subr.bf16.mxu0 %v8207
    %9783 = vmatpush1.bf16.msra.mxu0 %v8206
    %9784 = vmatprep.subr.bf16.mxu0 %v8219
    %9785 = vmatpush1.bf16.msra.mxu0 %v8218
    %9786 = vmatprep.subr.bf16.mxu0 %v8231
    %9787 = vmatpush1.bf16.msra.mxu0 %v8230
    %9788 = vmatprep.subr.bf16.mxu0 %v8243
    %9789 = vmatpush1.bf16.msra.mxu0 %v8242
    %9790 = vmatprep.subr.bf16.mxu0 %v8255
    %9791 = vmatpush1.bf16.msra.mxu0 %v8254
    %9792 = vmatprep.subr.bf16.mxu0 %v8267
    %9793 = vmatpush1.bf16.msra.mxu0 %v8266
    %9794 = vmatprep.subr.bf16.mxu0 %v8279
    %9795 = vmatpush1.bf16.msra.mxu0 %v8278
    %9796 = vmatprep.subr.bf16.mxu0 %v8291
    %9797 = vmatpush1.bf16.msra.mxu0 %v8290
    %9798 = vmatprep.subr.bf16.mxu0 %v8303
    %9799 = vmatpush1.bf16.msra.mxu0 %v8302
    %9800 = vmatprep.subr.bf16.mxu0 %v8315
    %9801 = vmatpush1.bf16.msra.mxu0 %v8314
    %9802 = vmatprep.subr.bf16.mxu0 %v8327
    %9803 = vmatpush1.bf16.msra.mxu0 %v8326
    %9804 = vmatprep.subr.bf16.mxu0 %v8339
    %9805 = vmatpush1.bf16.msra.mxu0 %v8338
    %9806 = vmatprep.subr.bf16.mxu0 %v8351
    %9807 = vmatpush1.bf16.msra.mxu0 %v8350
    %9808 = vmatprep.mubr.bf16.mxu0 %v5597
    %9809 = vmatmul.mubr.bf16.gmra.mrb[0].mxu0 %v5596
    %v9810 = vpop.f32.mrb[0].mxu0
    %v9811 = vadd.f32 %v9770, %v9810
    %v9812 = vpop.f32.mrb[0].mxu0
    %v9813 = vadd.f32 %v9772, %v9812
    %v9814 = vpop.f32.mrb[0].mxu0
    %v9815 = vpop.f32.mrb[0].mxu0
    %9816 = vdwg.mxu0
    %9817 = vmatprep.subr.bf16.mxu0 %v8363
    %9818 = vmatpush1.bf16.msra.mxu0 %v8362
    %9819 = vmatprep.subr.bf16.mxu0 %v8375
    %9820 = vmatpush1.bf16.msra.mxu0 %v8374
    %9821 = vmatprep.subr.bf16.mxu0 %v8387
    %9822 = vmatpush1.bf16.msra.mxu0 %v8386
    %9823 = vmatprep.subr.bf16.mxu0 %v8399
    %9824 = vmatpush1.bf16.msra.mxu0 %v8398
    %9825 = vmatprep.subr.bf16.mxu0 %v8411
    %9826 = vmatpush1.bf16.msra.mxu0 %v8410
    %9827 = vmatprep.subr.bf16.mxu0 %v8423
    %9828 = vmatpush1.bf16.msra.mxu0 %v8422
    %9829 = vmatprep.subr.bf16.mxu0 %v8435
    %9830 = vmatpush1.bf16.msra.mxu0 %v8434
    %9831 = vmatprep.subr.bf16.mxu0 %v8447
    %9832 = vmatpush1.bf16.msra.mxu0 %v8446
    %9833 = vmatprep.subr.bf16.mxu0 %v8459
    %9834 = vmatpush1.bf16.msra.mxu0 %v8458
    %9835 = vmatprep.subr.bf16.mxu0 %v8471
    %9836 = vmatpush1.bf16.msra.mxu0 %v8470
    %9837 = vmatprep.subr.bf16.mxu0 %v8483
    %9838 = vmatpush1.bf16.msra.mxu0 %v8482
    %9839 = vmatprep.subr.bf16.mxu0 %v8495
    %9840 = vmatpush1.bf16.msra.mxu0 %v8494
    %9841 = vmatprep.subr.bf16.mxu0 %v8507
    %9842 = vmatpush1.bf16.msra.mxu0 %v8506
    %9843 = vmatprep.subr.bf16.mxu0 %v8519
    %9844 = vmatpush1.bf16.msra.mxu0 %v8518
    %9845 = vmatprep.subr.bf16.mxu0 %v8531
    %9846 = vmatpush1.bf16.msra.mxu0 %v8530
    %9847 = vmatprep.subr.bf16.mxu0 %v8543
    %9848 = vmatpush1.bf16.msra.mxu0 %v8542
    %9849 = vmatprep.mubr.bf16.mxu0 %v5599
    %9850 = vmatmul.mubr.bf16.gmra.mrb[0].mxu0 %v5598
    %v9851 = vpop.f32.mrb[0].mxu0
    %v9852 = vadd.f32 %v9811, %v9851
    %v9853 = vpop.f32.mrb[0].mxu0
    %v9854 = vadd.f32 %v9813, %v9853
    %v9855 = vpop.f32.mrb[0].mxu0
    %v9856 = vpop.f32.mrb[0].mxu0
    %9857 = vdwg.mxu0
    %v9858 = vmax.f32 %v9237, 0.0
    %v9859 = vmax.f32 %v9239, 0.0
    %v9860 = vmax.f32 %v9360, 0.0
    %v9861 = vmax.f32 %v9362, 0.0
    %v9862 = vmax.f32 %v9483, 0.0
    %v9863 = vmax.f32 %v9485, 0.0
    %v9864 = vmax.f32 %v9606, 0.0
    %v9865 = vmax.f32 %v9608, 0.0
    %v9866 = vmax.f32 %v9729, 0.0
    %v9867 = vmax.f32 %v9731, 0.0
    %v9868 = vmax.f32 %v9852, 0.0
    %v9869 = vmax.f32 %v9854, 0.0
    %v9870 = vld [vmem:[#allocation17] sm:$0xff]
    %v9871 = vld [vmem:[#allocation17 + $0x8] sm:$0xf]
    %v9874 = vlaneseq
    %v9875 = vshrl.u32 %v9874, 7
    %v9876 = vsub.s32 0, %v9875
    %v9877 = vrot.slane %v9870, %v9876
    %v9878 = vlaneseq
    %v9879 = vshrl.u32 %v9878, 7
    %v9880 = vsub.s32 1, %v9879
    %v9881 = vrot.slane %v9870, %v9880
    %v9882 = vlaneseq
    %v9883 = vshrl.u32 %v9882, 7
    %v9884 = vsub.s32 2, %v9883
    %v9885 = vrot.slane %v9870, %v9884
    %v9886 = vlaneseq
    %v9887 = vshrl.u32 %v9886, 7
    %v9888 = vsub.s32 3, %v9887
    %v9889 = vrot.slane %v9870, %v9888
    %v9890 = vlaneseq
    %v9891 = vshrl.u32 %v9890, 7
    %v9892 = vsub.s32 4, %v9891
    %v9893 = vrot.slane %v9870, %v9892
    %v9894 = vlaneseq
    %v9895 = vshrl.u32 %v9894, 7
    %v9896 = vsub.s32 5, %v9895
    %v9897 = vrot.slane %v9870, %v9896
    %v9898 = vlaneseq
    %v9899 = vshrl.u32 %v9898, 7
    %v9900 = vsub.s32 6, %v9899
    %v9901 = vrot.slane %v9870, %v9900
    %v9902 = vlaneseq
    %v9903 = vshrl.u32 %v9902, 7
    %v9904 = vsub.s32 7, %v9903
    %v9905 = vrot.slane %v9870, %v9904
    %v9906 = vlaneseq
    %v9907 = vshrl.u32 %v9906, 7
    %v9908 = vsub.s32 0, %v9907
    %v9909 = vrot.slane %v9871, %v9908
    %v9910 = vlaneseq
    %v9911 = vshrl.u32 %v9910, 7
    %v9912 = vsub.s32 1, %v9911
    %v9913 = vrot.slane %v9871, %v9912
    %v9914 = vlaneseq
    %v9915 = vshrl.u32 %v9914, 7
    %v9916 = vsub.s32 2, %v9915
    %v9917 = vrot.slane %v9871, %v9916
    %v9918 = vlaneseq
    %v9919 = vshrl.u32 %v9918, 7
    %v9920 = vsub.s32 3, %v9919
    %v9921 = vrot.slane %v9871, %v9920
    %v9934 = vmul.f32 %v9858, %v9877
    %v9935 = vmul.f32 %v9859, %v9881
    %v9936 = vmul.f32 %v9860, %v9885
    %v9937 = vmul.f32 %v9861, %v9889
    %v9938 = vmul.f32 %v9862, %v9893
    %v9939 = vmul.f32 %v9863, %v9897
    %v9940 = vmul.f32 %v9864, %v9901
    %v9941 = vmul.f32 %v9865, %v9905
    %v9942 = vmul.f32 %v9866, %v9909
    %v9943 = vmul.f32 %v9867, %v9913
    %v9944 = vmul.f32 %v9868, %v9917
    %v9945 = vmul.f32 %v9869, %v9921
    %v9946 = vadd.f32 %v9934, %v9935
    %v9947 = vadd.f32 %v9946, %v9936
    %v9948 = vadd.f32 %v9947, %v9937
    %v9949 = vadd.f32 %v9948, %v9938
    %v9950 = vadd.f32 %v9949, %v9939
    %v9951 = vadd.f32 %v9950, %v9940
    %v9952 = vadd.f32 %v9951, %v9941
    %v9953 = vadd.f32 %v9952, %v9942
    %v9954 = vadd.f32 %v9953, %v9943
    %v9955 = vadd.f32 %v9954, %v9944
    %v9956 = vadd.f32 %v9955, %v9945
    %9957 = vadd.xlane.f32.xlu0 %v9956
    %v9958 = vpop.xlane.xlu0 %9957
    %v9959 = vld [vmem:[#allocation2] sm:$0x1]
    %v9961 = vlaneseq
    %v9962 = vshrl.u32 %v9961, 7
    %v9963 = vsub.s32 0, %v9962
    %v9964 = vrot.slane %v9959, %v9963
    %v9966 = vadd.f32 %v9958, %v9964
    %v9967 = vld [vmem:[%s1] sm:$0x3]
    %v9968 = vld [vmem:[%s2] sm:$0xff]
    %9970 = vset.pattern.permute.xlu0 0
    %9971 = vperm.xlu0 %9970, %v9966
    %v9972 = vpop.permute.xlu0 %9971
    %v9974 = vmul.f32 %v9972, %v9968
    %vm9975 = vcmask 64512
    %v9977 = vsel %vm9975, %v9967, 0
    %9979 = vmatprep.subr.mxu0 0.0
    %9980 = vmatpush1.msra.mxu0 %v9974
    %9981 = vmatprep.subr.mxu0 0.0
    %9982 = vmatpush1.msra.mxu0 0.0
    %9983 = vmatprep.subr.mxu0 0.0
    %9984 = vmatpush1.msra.mxu0 0.0
    %9985 = vmatprep.subr.mxu0 0.0
    %9986 = vmatpush1.msra.mxu0 0.0
    %9987 = vmatprep.subr.mxu0 0.0
    %9988 = vmatpush1.msra.mxu0 0.0
    %9989 = vmatprep.subr.mxu0 0.0
    %9990 = vmatpush1.msra.mxu0 0.0
    %9991 = vmatprep.subr.mxu0 0.0
    %9992 = vmatpush1.msra.mxu0 0.0
    %9993 = vmatprep.subr.mxu0 0.0
    %9994 = vmatpush1.msra.mxu0 0.0
    %9995 = vmatprep.subr.mxu0 0.0
    %9996 = vmatpush1.msra.mxu0 0.0
    %9997 = vmatprep.subr.mxu0 0.0
    %9998 = vmatpush1.msra.mxu0 0.0
    %9999 = vmatprep.subr.mxu0 0.0
    %10000 = vmatpush1.msra.mxu0 0.0
    %10001 = vmatprep.subr.mxu0 0.0
    %10002 = vmatpush1.msra.mxu0 0.0
    %10003 = vmatprep.subr.mxu0 0.0
    %10004 = vmatpush1.msra.mxu0 0.0
    %10005 = vmatprep.subr.mxu0 0.0
    %10006 = vmatpush1.msra.mxu0 0.0
    %10007 = vmatprep.subr.mxu0 0.0
    %10008 = vmatpush1.msra.mxu0 0.0
    %10009 = vmatprep.subr.mxu0 0.0
    %10010 = vmatpush1.msra.mxu0 0.0
    %10011 = vmatprep.subr.mxu0 0.0
    %10012 = vmatpush1.msra.mxu0 0.0
    %10013 = vmatprep.subr.mxu0 0.0
    %10014 = vmatpush1.msra.mxu0 0.0
    %10015 = vmatprep.subr.mxu0 0.0
    %10016 = vmatpush1.msra.mxu0 0.0
    %10017 = vmatprep.subr.mxu0 0.0
    %10018 = vmatpush1.msra.mxu0 0.0
    %10019 = vmatprep.subr.mxu0 0.0
    %10020 = vmatpush1.msra.mxu0 0.0
    %10021 = vmatprep.subr.mxu0 0.0
    %10022 = vmatpush1.msra.mxu0 0.0
    %10023 = vmatprep.subr.mxu0 0.0
    %10024 = vmatpush1.msra.mxu0 0.0
    %10025 = vmatprep.subr.mxu0 0.0
    %10026 = vmatpush1.msra.mxu0 0.0
    %10027 = vmatprep.subr.mxu0 0.0
    %10028 = vmatpush1.msra.mxu0 0.0
    %10029 = vmatprep.subr.mxu0 0.0
    %10030 = vmatpush1.msra.mxu0 0.0
    %10031 = vmatprep.subr.mxu0 0.0
    %10032 = vmatpush1.msra.mxu0 0.0
    %10033 = vmatprep.subr.mxu0 0.0
    %10034 = vmatpush1.msra.mxu0 0.0
    %10035 = vmatprep.subr.mxu0 0.0
    %10036 = vmatpush1.msra.mxu0 0.0
    %10037 = vmatprep.subr.mxu0 0.0
    %10038 = vmatpush1.msra.mxu0 0.0
    %10039 = vmatprep.subr.mxu0 0.0
    %10040 = vmatpush1.msra.mxu0 0.0
    %10041 = vmatprep.subr.mxu0 0.0
    %10042 = vmatpush1.msra.mxu0 0.0
    %10043 = vmatprep.mubr.f32.mxu0 0.0
    %10044 = vmatmul.mubr.f32.gmra.mrb[0].mxu0 %v9977
    %v10045 = vpop.f32.mrb[0].mxu0
    %v10046 = vadd.f32 0.0, %v10045
    %v10047 = vpop.f32.mrb[0].mxu0
    %10048 = vdwg.mxu0
    %vm10049 = vcmask 25600
    %10050 = vst.msk [vmem:[#allocation20] sm:$0x3] %vm10049, %v10046
    %v10051 = vpack.c.bf16 %v9967, %v9967
    %v10053 = vsel %vm9975, %v10051, 0
    %vm10055 = vcmask 1043456
    %v10057 = vsel %vm10055, %v5594, 0
    %v10060 = vsel %vm10055, %v5595, 0
    %v10063 = vsel %vm10055, %v5596, 0
    %v10066 = vsel %vm10055, %v5597, 0
    %v10069 = vsel %vm10055, %v5598, 0
    %v10072 = vsel %vm10055, %v5599, 0
    %10074 = vmatprep.subr.bf16.mxu0 %v10060
    %10075 = vmatpush1.bf16.msra.mxu0 %v10057
    %10076 = vmatprep.subr.bf16.mxu0 0
    %10077 = vmatpush1.bf16.msra.mxu0 0
    %10078 = vmatprep.subr.bf16.mxu0 0
    %10079 = vmatpush1.bf16.msra.mxu0 0
    %10080 = vmatprep.subr.bf16.mxu0 0
    %10081 = vmatpush1.bf16.msra.mxu0 0
    %10082 = vmatprep.subr.bf16.mxu0 0
    %10083 = vmatpush1.bf16.msra.mxu0 0
    %10084 = vmatprep.subr.bf16.mxu0 0
    %10085 = vmatpush1.bf16.msra.mxu0 0
    %10086 = vmatprep.subr.bf16.mxu0 0
    %10087 = vmatpush1.bf16.msra.mxu0 0
    %10088 = vmatprep.subr.bf16.mxu0 0
    %10089 = vmatpush1.bf16.msra.mxu0 0
    %10090 = vmatprep.subr.bf16.mxu0 0
    %10091 = vmatpush1.bf16.msra.mxu0 0
    %10092 = vmatprep.subr.bf16.mxu0 0
    %10093 = vmatpush1.bf16.msra.mxu0 0
    %10094 = vmatprep.subr.bf16.mxu0 0
    %10095 = vmatpush1.bf16.msra.mxu0 0
    %10096 = vmatprep.subr.bf16.mxu0 0
    %10097 = vmatpush1.bf16.msra.mxu0 0
    %10098 = vmatprep.subr.bf16.mxu0 0
    %10099 = vmatpush1.bf16.msra.mxu0 0
    %10100 = vmatprep.subr.bf16.mxu0 0
    %10101 = vmatpush1.bf16.msra.mxu0 0
    %10102 = vmatprep.subr.bf16.mxu0 0
    %10103 = vmatpush1.bf16.msra.mxu0 0
    %10104 = vmatprep.subr.bf16.mxu0 0
    %10105 = vmatpush1.bf16.msra.mxu0 0
    %10106 = vmatprep.mubr.bf16.mxu0 0
    %10107 = vmatmul.mubr.bf16.gmra.mrb[0].mxu0 %v10053
    %v10108 = vpop.f32.mrb[0].mxu0
    %v10109 = vadd.f32 0.0, %v10108
    %v10110 = vpop.f32.mrb[0].mxu0
    %v10111 = vadd.f32 0.0, %v10110
    %v10112 = vpop.f32.mrb[0].mxu0
    %v10113 = vpop.f32.mrb[0].mxu0
    %10114 = vdwg.mxu0
    %10115 = vmatprep.subr.bf16.mxu0 %v10066
    %10116 = vmatpush1.bf16.msra.mxu0 %v10063
    %10117 = vmatprep.subr.bf16.mxu0 0
    %10118 = vmatpush1.bf16.msra.mxu0 0
    %10119 = vmatprep.subr.bf16.mxu0 0
    %10120 = vmatpush1.bf16.msra.mxu0 0
    %10121 = vmatprep.subr.bf16.mxu0 0
    %10122 = vmatpush1.bf16.msra.mxu0 0
    %10123 = vmatprep.subr.bf16.mxu0 0
    %10124 = vmatpush1.bf16.msra.mxu0 0
    %10125 = vmatprep.subr.bf16.mxu0 0
    %10126 = vmatpush1.bf16.msra.mxu0 0
    %10127 = vmatprep.subr.bf16.mxu0 0
    %10128 = vmatpush1.bf16.msra.mxu0 0
    %10129 = vmatprep.subr.bf16.mxu0 0
    %10130 = vmatpush1.bf16.msra.mxu0 0
    %10131 = vmatprep.subr.bf16.mxu0 0
    %10132 = vmatpush1.bf16.msra.mxu0 0
    %10133 = vmatprep.subr.bf16.mxu0 0
    %10134 = vmatpush1.bf16.msra.mxu0 0
    %10135 = vmatprep.subr.bf16.mxu0 0
    %10136 = vmatpush1.bf16.msra.mxu0 0
    %10137 = vmatprep.subr.bf16.mxu0 0
    %10138 = vmatpush1.bf16.msra.mxu0 0
    %10139 = vmatprep.subr.bf16.mxu0 0
    %10140 = vmatpush1.bf16.msra.mxu0 0
    %10141 = vmatprep.subr.bf16.mxu0 0
    %10142 = vmatpush1.bf16.msra.mxu0 0
    %10143 = vmatprep.subr.bf16.mxu0 0
    %10144 = vmatpush1.bf16.msra.mxu0 0
    %10145 = vmatprep.subr.bf16.mxu0 0
    %10146 = vmatpush1.bf16.msra.mxu0 0
    %10147 = vmatprep.mubr.bf16.mxu0 0
    %10148 = vmatmul.mubr.bf16.gmra.mrb[0].mxu0 %v10053
    %v10149 = vpop.f32.mrb[0].mxu0
    %v10150 = vadd.f32 0.0, %v10149
    %v10151 = vpop.f32.mrb[0].mxu0
    %v10152 = vadd.f32 0.0, %v10151
    %v10153 = vpop.f32.mrb[0].mxu0
    %v10154 = vpop.f32.mrb[0].mxu0
    %10155 = vdwg.mxu0
    %10156 = vmatprep.subr.bf16.mxu0 %v10072
    %10157 = vmatpush1.bf16.msra.mxu0 %v10069
    %10158 = vmatprep.subr.bf16.mxu0 0
    %10159 = vmatpush1.bf16.msra.mxu0 0
    %10160 = vmatprep.subr.bf16.mxu0 0
    %10161 = vmatpush1.bf16.msra.mxu0 0
    %10162 = vmatprep.subr.bf16.mxu0 0
    %10163 = vmatpush1.bf16.msra.mxu0 0
    %10164 = vmatprep.subr.bf16.mxu0 0
    %10165 = vmatpush1.bf16.msra.mxu0 0
    %10166 = vmatprep.subr.bf16.mxu0 0
    %10167 = vmatpush1.bf16.msra.mxu0 0
    %10168 = vmatprep.subr.bf16.mxu0 0
    %10169 = vmatpush1.bf16.msra.mxu0 0
    %10170 = vmatprep.subr.bf16.mxu0 0
    %10171 = vmatpush1.bf16.msra.mxu0 0
    %10172 = vmatprep.subr.bf16.mxu0 0
    %10173 = vmatpush1.bf16.msra.mxu0 0
    %10174 = vmatprep.subr.bf16.mxu0 0
    %10175 = vmatpush1.bf16.msra.mxu0 0
    %10176 = vmatprep.subr.bf16.mxu0 0
    %10177 = vmatpush1.bf16.msra.mxu0 0
    %10178 = vmatprep.subr.bf16.mxu0 0
    %10179 = vmatpush1.bf16.msra.mxu0 0
    %10180 = vmatprep.subr.bf16.mxu0 0
    %10181 = vmatpush1.bf16.msra.mxu0 0
    %10182 = vmatprep.subr.bf16.mxu0 0
    %10183 = vmatpush1.bf16.msra.mxu0 0
    %10184 = vmatprep.subr.bf16.mxu0 0
    %10185 = vmatpush1.bf16.msra.mxu0 0
    %10186 = vmatprep.subr.bf16.mxu0 0
    %10187 = vmatpush1.bf16.msra.mxu0 0
    %10188 = vmatprep.mubr.bf16.mxu0 0
    %10189 = vmatmul.mubr.bf16.gmra.mrb[0].mxu0 %v10053
    %v10190 = vpop.f32.mrb[0].mxu0
    %v10191 = vadd.f32 0.0, %v10190
    %v10192 = vpop.f32.mrb[0].mxu0
    %v10193 = vadd.f32 0.0, %v10192
    %v10194 = vpop.f32.mrb[0].mxu0
    %v10195 = vpop.f32.mrb[0].mxu0
    %10196 = vdwg.mxu0
    %v10197 = vmul.f32 %v10109, 0.25
    %v10198 = vmul.f32 %v10111, 0.25
    %v10199 = vmul.f32 %v10150, 0.25
    %v10200 = vmul.f32 %v10152, 0.25
    %v10201 = vmul.f32 %v10191, 0.25
    %v10202 = vmul.f32 %v10193, 0.25
    %v10203 = vld [vmem:[#allocation19] sm:$0x3f]
    %v10205 = vlaneseq
    %v10206 = vshrl.u32 %v10205, 7
    %v10207 = vsub.s32 0, %v10206
    %v10208 = vrot.slane %v10203, %v10207
    %v10209 = vlaneseq
    %v10210 = vshrl.u32 %v10209, 7
    %v10211 = vsub.s32 1, %v10210
    %v10212 = vrot.slane %v10203, %v10211
    %v10213 = vlaneseq
    %v10214 = vshrl.u32 %v10213, 7
    %v10215 = vsub.s32 2, %v10214
    %v10216 = vrot.slane %v10203, %v10215
    %v10217 = vlaneseq
    %v10218 = vshrl.u32 %v10217, 7
    %v10219 = vsub.s32 3, %v10218
    %v10220 = vrot.slane %v10203, %v10219
    %v10221 = vlaneseq
    %v10222 = vshrl.u32 %v10221, 7
    %v10223 = vsub.s32 4, %v10222
    %v10224 = vrot.slane %v10203, %v10223
    %v10225 = vlaneseq
    %v10226 = vshrl.u32 %v10225, 7
    %v10227 = vsub.s32 5, %v10226
    %v10228 = vrot.slane %v10203, %v10227
    %v10235 = vmul.f32 %v10197, %v10208
    %v10236 = vmul.f32 %v10198, %v10212
    %v10237 = vmul.f32 %v10199, %v10216
    %v10238 = vmul.f32 %v10200, %v10220
    %v10239 = vmul.f32 %v10201, %v10224
    %v10240 = vmul.f32 %v10202, %v10228
    %vm10241 = vcmask 1041408
    %v10242 = vsel %vm10241, %v10235, 0.0
    %v10243 = vsel %vm10241, %v10236, 0.0
    %v10244 = vadd.f32 %v10242, %v10243
    %v10245 = vsel %vm10241, %v10237, 0.0
    %v10246 = vadd.f32 %v10244, %v10245
    %v10247 = vsel %vm10241, %v10238, 0.0
    %v10248 = vadd.f32 %v10246, %v10247
    %v10249 = vsel %vm10241, %v10239, 0.0
    %v10250 = vadd.f32 %v10248, %v10249
    %v10251 = vsel %vm10241, %v10240, 0.0
    %v10252 = vadd.f32 %v10250, %v10251
    %10253 = vadd.xlane.f32.xlu0 %v10252
    %v10254 = vpop.xlane.xlu0 %10253
    %v10255 = vld [vmem:[#allocation3] sm:$0x1]
    %v10257 = vlaneseq
    %v10258 = vshrl.u32 %v10257, 7
    %v10259 = vsub.s32 0, %v10258
    %v10260 = vrot.slane %v10255, %v10259
    %v10262 = vadd.f32 %v10254, %v10260
    %v10263 = vmax.f32 %v10262, 0.0
    %v10264 = vand.u32 2147483647, %v10262
    %v10265 = vsub.f32 0.0, %v10264
    %v10266 = vmul.f32 %v10265, 1.442695
    %v10267 = vpow.pop %v10266
    %v10268 = vadd.f32 %v10267, 1.0
    %v10269 = vlog2.pop %v10268
    %v10270 = vmul.f32 %v10269, 0.6931472
    %v10271 = vadd.f32 %v10263, %v10270
    %v10272 = vld [vmem:[#allocation4] sm:$0x1]
    %v10273 = vsub.f32 0.0, %v10272
    %v10274 = vmul.f32 %v10273, 1.442695
    %v10275 = vpow.pop %v10274
    %v10276 = vadd.f32 %v10275, 1.0
    %v10277 = vrcp.pop %v10276
    %v10278 = vmul.f32 1.0, %v10277
    %v10279 = vld [vmem:[#allocation5] sm:$0x3]
    %v10280 = vld [vmem:[#allocation8] sm:$0x3]
    %v10282 = vlaneseq
    %v10283 = vshrl.u32 %v10282, 7
    %v10284 = vsub.s32 0, %v10283
    %v10285 = vrot.slane %v10278, %v10284
    %10286 = vset.pattern.permute.xlu0 0
    %10287 = vperm.xlu0 %10286, %v10285
    %v10288 = vpop.permute.xlu0 %10287
    %v10290 = vadd.f32 %v10279, %v10288
    %v10291 = vadd.f32 %v10290, 1e-12
    %v10292 = vlog2.pop %v10291
    %v10293 = vmul.f32 %v10292, 0.6931472
    %10295 = vset.pattern.permute.xlu0 0
    %10296 = vperm.xlu0 %10295, %v10271
    %v10297 = vpop.permute.xlu0 %10296
    %v10299 = vmul.f32 %v10293, %v10297
    %v10300 = vsel %vm10049, %v10299, -inf
    %10301 = vmax.xlane.f32.xlu0 %v10300
    %v10302 = vpop.xlane.xlu0 %10301
    %v10303 = vsub.f32 %v10299, %v10302
    %v10304 = vmul.f32 %v10303, 1.442695
    %v10305 = vpow.pop %v10304
    %v10306 = vsel %vm10049, %v10305, 0.0
    %10307 = vadd.xlane.f32.xlu0 %v10306
    %v10308 = vpop.xlane.xlu0 %10307
    %v10309 = vlog2.pop %v10308
    %v10310 = vmul.f32 %v10309, 0.6931472
    %v10311 = vsub.f32 %v10303, %v10310
    %v10312 = vmul.f32 %v10311, 1.442695
    %v10313 = vpow.pop %v10312
    %v10314 = vmul.f32 %v10313, %v10311
    %v10315 = vsel %vm10049, %v10314, 0.0
    %10316 = vadd.xlane.f32.xlu0 %v10315
    %v10317 = vpop.xlane.xlu0 %10316
    %v10318 = vsub.f32 0.0, %v10317
    %v10319 = vadd.f32 %v10046, %v10299
    %v10320 = vsel %vm10049, %v10319, -inf
    %10321 = vmax.xlane.f32.xlu0 %v10320
    %v10322 = vpop.xlane.xlu0 %10321
    %v10323 = vsub.f32 %v10319, %v10322
    %v10324 = vmul.f32 %v10323, 1.442695
    %v10325 = vpow.pop %v10324
    %v10326 = vsel %vm10049, %v10325, 0.0
    %10327 = vadd.xlane.f32.xlu0 %v10326
    %v10328 = vpop.xlane.xlu0 %10327
    %v10329 = vlog2.pop %v10328
    %v10330 = vmul.f32 %v10329, 0.6931472
    %v10331 = vsub.f32 %v10323, %v10330
    %v10332 = vmul.f32 %v10280, %v10331
    %v10333 = vsel %vm10049, %v10332, 0.0
    %10334 = vadd.xlane.f32.xlu0 %v10333
    %v10335 = vpop.xlane.xlu0 %10334
    %v10336 = vsub.f32 0.0, %v10335
    %v10337 = vmul.f32 %v10318, 0.36
    %v10338 = vadd.f32 %v10336, %v10337
    %vm10339 = vcmask 1024
    %10340 = vst.msk [vmem:[%s17] sm:$0x3] %vm10339, %v10338
    // Predicated region
    $region102: #{forward.1} parent=1 // pred_check
      _
    $region103: #{forward.1} parent=1 // pred_check_branch
      %10342 = sbr.rel (0) target = $region105
    $region104: #{forward.1} parent=1 // pred_region
      %s10344 = ssub.s32 32, 32
      %10345 = vsyncadd [#allocation7], %s10344
      %s10347 = sshll.u32 [#allocation20], 4
      %s10348 = int_to_ptr.vmem [resolvable:$true] %s10347
      %10350 = dma.vmem_to_hbm [thread:$0]  %s10348, 32, %s16, [#allocation7]
    $region105: #{forward.1} parent=1 // pred_fallthru
      _
    // Predicated region
    $region106: #{forward.1} parent=1 // pred_check
      _
    $region107: #{forward.1} parent=1 // pred_check_branch
      %10352 = sbr.rel (0) target = $region109
    $region108: #{forward.1} parent=1 // pred_region
      _
    $region109: #{forward.1} parent=1 // pred_fallthru
      _
    // Predicated region
    $region110: #{forward.1} parent=1 // pred_check
      _
    $region111: #{forward.1} parent=1 // pred_check_branch
      %10354 = sbr.rel (0) target = $region113
    $region112: #{forward.1} parent=1 // pred_region
      %10355 = dma.done [#allocation7], 32
    $region113: #{forward.1} parent=1 // pred_fallthru
      _
    // Predicated region
    $region114: #{forward.1} parent=1 // pred_check
      _
    $region115: #{forward.1} parent=1 // pred_check_branch
      %10357 = sbr.rel (0) target = $region117
    $region116: #{forward.1} parent=1 // pred_region
      _
    $region117: #{forward.1} parent=1 // pred_fallthru
      _
    %10358 = vsyncpa [#allocation6], 1
    %10359 = vsyncpa [#allocation9], 1
    %10360 = vsyncpa [#allocation12], 1
    %10361 = vsyncpa [#allocation15], 1
    %10362 = vsyncpa [#allocation18], 1
    %10363 = vsyncpa [#allocation7], 1

</llo_original>
